<compile_context>
chip_gen: v7x
topology: tpu7x:2x2x1
jax: 0.10.0
libtpu: 0.0.40
codegen_flags: <defaults>
</compile_context>

<pallas_src>
import functools

import jax
import jax.numpy as jnp
from jax import lax
from jax.experimental import pallas as pl
from jax.experimental.pallas import tpu as pltpu

# ----------------------------- small config -----------------------------
B = 2
NPTS = 256
GRID_H = GRID_W = 16
PT_FEATS = 4                        # x, y, z, intensity
HID = 32                            # cfg hid_dim // channel_reduction_factor (stand-in)
LAYER_NUMS = [3, 5]                 # rpn_conf['layer_nums']
DS_STRIDES = [2, 2]                 # rpn_conf['ds_layer_strides'] (reduce_receptive_field == 0)
DS_FILTERS = [HID, 64]              # rpn_conf['ds_num_filters'] == [hid, 128 // crf], crf=2
US_STRIDES = [0.5, 1]               # rpn_conf['us_layer_strides']
US_FILTERS = [64, 64]               # rpn_conf['us_num_filters'] == [128 // crf] * 2
HEAD_IN = sum(US_FILTERS)           # head_conf['in_channels'] == 128
HEAD_CONV = 64                      # CenterHead shared conv channels
# TODO(synk): get_num_dims_per_box_attr(cfg) source not provided; using the
# standard CenterPoint box attributes ('vector' rotation representation).
DIMS_PER_BOX_ATTR = {"pos": 2, "z": 1, "dims": 3, "rot": 2, "probs": 1}
COMMON_HEADS = {k: (v, 2) for k, v in DIMS_PER_BOX_ATTR.items()}
HEAD_OUT_DIMS = [v[0] for v in COMMON_HEADS.values()]
HEAD_OUT_TOTAL = sum(HEAD_OUT_DIMS)  # 9
N_HEADS = len(COMMON_HEADS)


# ----------------------- padded flat-buffer geometry -----------------------
def _pad_guard(W):
    # extra leading zero rows so the interior store starts on a sublane boundary
    return (-(W + 1)) % 8


def _interior_start(W):
    return _pad_guard(W) + W + 1


def _pad_rows(H, W):
    return _pad_guard(W) + (H + 2) * W + 2


# ----------------------- in-kernel building blocks -----------------------
def _mm_bn_act(x, w, s, b, relu=True):
    """y = act((x @ w) * scale + bias) — one MXU matmul with fused BN/ReLU."""
    y = jnp.dot(x, w, preferred_element_type=jnp.float32) * s + b
    return jnp.maximum(y, 0.0) if relu else y


def _zero_borders(pad_ref, base, R, W, trailing):
    """Zero only the border rows of a padded flat buffer (interior is always
    fully overwritten before use)."""
    C = pad_ref.shape[-1]
    pad_ref[pl.ds(0, base), :] = jnp.zeros((base, C), jnp.float32)
    if trailing:
        pad_ref[pl.ds(base + R, W + 1), :] = jnp.zeros((W + 1, C), jnp.float32)


def _patches_3x3(pad_ref, base, W, R, not_left, not_right):
    """Build the (H*W, 9*C) patch matrix of a stride-1 3x3 'same' conv from an
    H-padded flat buffer; W-wraparound taps masked to zero (masks hoisted)."""
    taps = []
    for kh in range(3):
        for kw in range(3):
            t = pad_ref[pl.ds(base + (kh - 1) * W + (kw - 1), R), :]
            if kw == 0:
                t = jnp.where(not_left, t, 0.0)
            elif kw == 2:
                t = jnp.where(not_right, t, 0.0)
            taps.append(t)
    return jnp.concatenate(taps, axis=-1)


def _conv3x3_s1(pad_ref, base, W, R, not_left, not_right, w, s, b):
    """3x3 stride-1 conv + BN + ReLU as ONE deep-K matmul."""
    return _mm_bn_act(_patches_3x3(pad_ref, base, W, R, not_left, not_right), w, s, b)


def _conv3x3_s2_phase(pad_ref, base, W, R, not_left, cin, w, s, b):
    """3x3 stride-2 (pad=1) conv + BN + ReLU, computed at OUTPUT resolution
    from the space-to-depth'd input held in pad_ref (4*cin channels).

    Identity used: out(ho,wo) tap (kh,kw) = x[2ho-1+kh, 2wo-1+kw], which is the
    phase image P[ph][pw] (= channel block 2*ph+pw of s2d(x)) at a unit shift
    of 0 or -1 in each axis.  Only 4 row-slices are loaded; left-edge wraps are
    masked; top edge falls in the zero guard rows.  One deep-K MXU matmul.
    """
    r00 = pad_ref[pl.ds(base, R), :]                                   # shift ( 0,  0)
    rm1 = jnp.where(not_left, pad_ref[pl.ds(base - 1, R), :], 0.0)     # shift ( 0, -1)
    ru0 = pad_ref[pl.ds(base - W, R), :]                               # shift (-1,  0)
    ru1 = jnp.where(not_left, pad_ref[pl.ds(base - W - 1, R), :], 0.0)  # shift (-1, -1)
    blk = lambda v, i: v[:, i * cin:(i + 1) * cin]
    # taps in (kh, kw) row-major order, matching the (3,3,cin,cout) weight reshape
    taps = [blk(ru1, 3), blk(ru0, 2), blk(ru0, 3),
            blk(rm1, 1), blk(r00, 0), blk(r00, 1),
            blk(rm1, 3), blk(r00, 2), blk(r00, 3)]
    return _mm_bn_act(jnp.concatenate(taps, axis=-1), w, s, b)


# ------------------------------ Pallas kernels ------------------------------
def _pfn_kernel(x_ref, w_ref, s_ref, b_ref, o_ref):
    """Per-point MLP, transposed: o (Cout, Npts) = relu(BN(wT @ xT)) —
    lane-dense store over the point axis."""
    y = jnp.dot(w_ref[...], x_ref[...], preferred_element_type=jnp.float32)
    o_ref[...] = jnp.maximum(y * s_ref[...] + b_ref[...], 0.0)


def _block0_kernel(x_ref, we, se, be, wr, sr, br, o_ref, pad_in, pad_act,
                   *, H, W, n_convs):
    """RPN block 0: in-kernel stride-2 entry conv (phase taps of s2d(bev)) +
    `n_convs` fused stride-1 3x3 convs, all VMEM-resident."""
    R = H * W
    base = _interior_start(W)
    _zero_borders(pad_in, base, R, W, trailing=False)   # entry conv only looks "up/left"
    _zero_borders(pad_act, base, R, W, trailing=True)
    col = lax.broadcasted_iota(jnp.int32, (R, 1), 0) % W      # hoisted edge masks
    not_left, not_right = col != 0, col != (W - 1)

    pad_in[pl.ds(base, R), :] = x_ref[...]
    cin = x_ref.shape[-1] // 4
    y = _conv3x3_s2_phase(pad_in, base, W, R, not_left, cin, we[...], se[...], be[...])
    for i in range(n_convs):
        pad_act[pl.ds(base, R), :] = y
        y = _conv3x3_s1(pad_act, base, W, R, not_left, not_right, wr[i], sr[i], br[i])
    o_ref[...] = y


def _block1_head_kernel(x_ref, we, se, be, wr, sr, br,
                        wd0, sd0, bd0, wd1, sd1, bd1,
                        wsh, ssh, bsh, wmid, smid, bmid, wfinT, bfinT,
                        o_ref, pad_in, pad_x1, pad_u, pad_sh, pad_mid,
                        *, H, W, n_convs):
    """Fused: RPN block 1 (stride-2 entry conv + 5 fused 3x3 convs) + both RPN
    deblocks (1x1 matmuls) + channel concat + CenterHead shared conv + all 5
    SepHeads (mid convs fused to Cout=5*HEAD_CONV, final convs fused to a
    block-diagonal Cout=9 conv stored transposed / lane-dense)."""
    R = H * W
    base = _interior_start(W)
    _zero_borders(pad_in, base, R, W, trailing=False)
    for p in (pad_x1, pad_u, pad_sh, pad_mid):
        _zero_borders(p, base, R, W, trailing=True)
    col = lax.broadcasted_iota(jnp.int32, (R, 1), 0) % W      # hoisted edge masks
    not_left, not_right = col != 0, col != (W - 1)

    s2d_x0 = x_ref[...]                                       # (R, 4*DS0)
    pad_in[pl.ds(base, R), :] = s2d_x0
    cin = s2d_x0.shape[-1] // 4

    # --- RPN block 1 ---
    y = _conv3x3_s2_phase(pad_in, base, W, R, not_left, cin, we[...], se[...], be[...])
    for i in range(n_convs):
        pad_x1[pl.ds(base, R), :] = y
        y = _conv3x3_s1(pad_x1, base, W, R, not_left, not_right, wr[i], sr[i], br[i])

    # --- deblocks + channel concat (all in VMEM) ---
    u0 = _mm_bn_act(s2d_x0, wd0[...], sd0[...], bd0[...])     # 2x2/s2 deblock as 1x1 on s2d(x0)
    u1 = _mm_bn_act(y, wd1[...], sd1[...], bd1[...])          # ConvTranspose(k=1) == 1x1 on x1
    pad_u[pl.ds(base, R), :] = jnp.concatenate([u0, u1], axis=-1)

    # --- CenterHead: shared conv + fused SepHead mid convs ---
    ysh = _conv3x3_s1(pad_u, base, W, R, not_left, not_right, wsh[...], ssh[...], bsh[...])
    pad_sh[pl.ds(base, R), :] = ysh
    ymid = _conv3x3_s1(pad_sh, base, W, R, not_left, not_right, wmid[...], smid[...], bmid[...])
    pad_mid[pl.ds(base, R), :] = ymid

    # --- fused block-diagonal SepHead final convs, computed transposed so the
    #     single output store is lane-dense over the spatial axis ---
    patches = _patches_3x3(pad_mid, base, W, R, not_left, not_right)   # (R, 9*mid_c)
    o_ref[...] = lax.dot_general(wfinT[...], patches,
                                 (((1,), (1,)), ((), ())),
                                 preferred_element_type=jnp.float32) + bfinT[...]


# ------------------------------ call wrappers ------------------------------
def _const_spec(a):
    zeros = (0,) * a.ndim
    return pl.BlockSpec(a.shape, lambda n, _z=zeros: _z)


def pfn_call(xT, pf):
    hid, R = pf["wT"].shape[0], xT.shape[1]
    return pl.pallas_call(
        _pfn_kernel,
        out_shape=jax.ShapeDtypeStruct((hid, R), jnp.float32),
        grid=(1,),
        in_specs=[pl.BlockSpec(xT.shape, lambda i: (0, 0)),
                  pl.BlockSpec(pf["wT"].shape, lambda i: (0, 0)),
                  pl.BlockSpec(pf["scale"].shape, lambda i: (0, 0)),
                  pl.BlockSpec(pf["bias"].shape, lambda i: (0, 0))],
        out_specs=pl.BlockSpec((hid, R), lambda i: (0, 0)),
    )(xT, pf["wT"], pf["scale"], pf["bias"])


def block0_call(x, bp, *, H, W):
    N, R, c4 = x.shape
    cout = bp["we"].shape[-1]
    kern = functools.partial(_block0_kernel, H=H, W=W, n_convs=bp["wr"].shape[0])
    weights = (bp["we"], bp["se"], bp["be"], bp["wr"], bp["sr"], bp["br"])
    P = _pad_rows(H, W)
    return pl.pallas_call(
        kern,
        out_shape=jax.ShapeDtypeStruct((N, R, cout), jnp.float32),
        grid=(N,),
        in_specs=[pl.BlockSpec((None, R, c4), lambda n: (n, 0, 0))]
                 + [_const_spec(a) for a in weights],
        out_specs=pl.BlockSpec((None, R, cout), lambda n: (n, 0, 0)),
        scratch_shapes=[pltpu.VMEM((P, c4), jnp.float32),      # s2d(bev) padded
                        pltpu.VMEM((P, cout), jnp.float32)],   # stride-1 activations
        compiler_params=pltpu.CompilerParams(dimension_semantics=("parallel",)),
    )(x, *weights)


def block1_head_call(x, bp, de0, de1, hd, *, H, W):
    N, R, c4 = x.shape
    ds1 = bp["wr"].shape[-1]
    head_in = hd["w_sh"].shape[0] // 9
    head_conv = hd["w_mid"].shape[0] // 9
    mid_c = hd["w_mid"].shape[-1]
    tot = hd["w_finT"].shape[0]
    kern = functools.partial(_block1_head_kernel, H=H, W=W, n_convs=bp["wr"].shape[0])
    weights = (bp["we"], bp["se"], bp["be"], bp["wr"], bp["sr"], bp["br"],
               de0["w"], de0["s"], de0["b"], de1["w"], de1["s"], de1["b"],
               hd["w_sh"], hd["s_sh"], hd["b_sh"],
               hd["w_mid"], hd["s_mid"], hd["b_mid"],
               hd["w_finT"], hd["b_finT"])
    P = _pad_rows(H, W)
    return pl.pallas_call(
        kern,
        out_shape=jax.ShapeDtypeStruct((N, tot, R), jnp.float32),   # transposed (lane-dense)
        grid=(N,),
        in_specs=[pl.BlockSpec((None, R, c4), lambda n: (n, 0, 0))]
                 + [_const_spec(a) for a in weights],
        out_specs=pl.BlockSpec((None, tot, R), lambda n: (n, 0, 0)),
        scratch_shapes=[pltpu.VMEM((P, c4), jnp.float32),        # s2d(x0) padded
                        pltpu.VMEM((P, ds1), jnp.float32),       # block1 activations
                        pltpu.VMEM((P, head_in), jnp.float32),   # deblock concat
                        pltpu.VMEM((P, head_conv), jnp.float32),  # shared conv out
                        pltpu.VMEM((P, mid_c), jnp.float32)],    # fused SepHead mid out
        compiler_params=pltpu.CompilerParams(dimension_semantics=("parallel",)),
    )(x, *weights)


# ------------------------------ JAX-side glue ------------------------------
def space_to_depth_2x2(x):
    """(N, H, W, C) -> (N, (H//2)*(W//2), 4*C); channel order (ph, pw, c).
    Pure layout (same bytes) — replaces the old 9x im2col HBM expansion."""
    N, H, W, C = x.shape
    x = x.reshape(N, H // 2, 2, W // 2, 2, C)
    x = jnp.transpose(x, (0, 1, 3, 2, 4, 5))
    return x.reshape(N, (H // 2) * (W // 2), 4 * C)


# --------------------------- parameter building ---------------------------
def _key_iter(seed):
    key = jax.random.PRNGKey(seed)
    while True:
        key, sub = jax.random.split(key)
        yield sub


def _fold_bn(conv_bias, gamma, beta, mean, var, eps=1e-5):
    scale = gamma / jnp.sqrt(var + eps)
    bias = (conv_bias - mean) * scale + beta
    return scale, bias


def make_conv(keys, kh, kw, cin, cout, *, with_bias=False, bn=True):
    w = 0.1 * jax.random.normal(next(keys), (kh, kw, cin, cout), jnp.float32)
    b = (0.05 * jax.random.normal(next(keys), (cout,), jnp.float32)
         if with_bias else jnp.zeros((cout,), jnp.float32))
    if bn:
        gamma = 1.0 + 0.05 * jax.random.normal(next(keys), (cout,), jnp.float32)
        beta = 0.05 * jax.random.normal(next(keys), (cout,), jnp.float32)
        mean = 0.05 * jax.random.normal(next(keys), (cout,), jnp.float32)
        var = 1.0 + 0.1 * jnp.abs(jax.random.normal(next(keys), (cout,), jnp.float32))
        scale, bias = _fold_bn(b, gamma, beta, mean, var)
    else:
        scale, bias = jnp.ones((cout,), jnp.float32), b
    return {"w": w, "scale": scale, "bias": bias}


def build_params(seed=42):
    assert DS_STRIDES == [2, 2] and US_STRIDES == [0.5, 1]
    keys = _key_iter(seed)
    P = {}

    # PFN: per-point Linear + BN + ReLU, stored transposed for a lane-dense output.
    pfn = make_conv(keys, 1, 1, PT_FEATS, HID)
    P["pfn"] = {"wT": jnp.transpose(pfn["w"].reshape(PT_FEATS, HID)),     # (HID, 4)
                "scale": pfn["scale"].reshape(HID, 1),
                "bias": pfn["bias"].reshape(HID, 1)}

    # RPN blocks (det3d-style: stride-2 entry conv + layer_num x (3x3 conv, BN, ReLU)).
    blocks = []
    in_ch = HID
    for layer_num, nf in zip(LAYER_NUMS, DS_FILTERS):
        entry = make_conv(keys, 3, 3, in_ch, nf)
        rest = [make_conv(keys, 3, 3, nf, nf) for _ in range(layer_num)]
        blocks.append({"we": entry["w"].reshape(9 * in_ch, nf),
                       "se": entry["scale"].reshape(1, nf),
                       "be": entry["bias"].reshape(1, nf),
                       "wr": jnp.stack([c["w"].reshape(9 * nf, nf) for c in rest]),
                       "sr": jnp.stack([c["scale"].reshape(1, nf) for c in rest]),
                       "br": jnp.stack([c["bias"].reshape(1, nf) for c in rest])})
        in_ch = nf
    P["block0"], P["block1"] = blocks

    # Deblocks: us=0.5 -> Conv2d(k=2,s=2) == 1x1 on space-to-depth(x0);
    #           us=1   -> ConvTranspose2d(k=1) == 1x1 on x1.
    # TODO(synk): real ConvTranspose2d(k=1) weights are laid out (Cin, Cout, 1, 1),
    # not Conv2d's (Cout, Cin, 1, 1); synthetic HWIO weights here make it moot.
    d0 = make_conv(keys, 2, 2, DS_FILTERS[0], US_FILTERS[0])
    d1 = make_conv(keys, 1, 1, DS_FILTERS[1], US_FILTERS[1])
    P["deblock0"] = {"w": d0["w"].reshape(4 * DS_FILTERS[0], US_FILTERS[0]),
                     "s": d0["scale"].reshape(1, US_FILTERS[0]),
                     "b": d0["bias"].reshape(1, US_FILTERS[0])}
    P["deblock1"] = {"w": d1["w"].reshape(DS_FILTERS[1], US_FILTERS[1]),
                     "s": d1["scale"].reshape(1, US_FILTERS[1]),
                     "b": d1["bias"].reshape(1, US_FILTERS[1])}

    # CenterHead: shared 3x3 conv + per-attribute SepHead (num_conv == 2),
    # fused across heads: mid convs -> Cout = 5*HEAD_CONV, final convs -> one
    # block-diagonal Cout=9 conv (stored pre-transposed for the lane-dense store).
    # TODO(synk): head_conf['stride'] (== 2 for the non-baseline config) has no
    # visible effect without the original CenterHead source; it is ignored.
    shared = make_conv(keys, 3, 3, HEAD_IN, HEAD_CONV, with_bias=True)
    mids, finals = [], []
    for name, (out_dim, num_conv) in COMMON_HEADS.items():
        assert num_conv == 2
        mids.append(make_conv(keys, 3, 3, HEAD_CONV, HEAD_CONV, with_bias=True))
        finals.append(make_conv(keys, 3, 3, HEAD_CONV, out_dim, with_bias=True, bn=False))
    mid_c = N_HEADS * HEAD_CONV
    w_mid = jnp.concatenate([m["w"] for m in mids], axis=-1).reshape(9 * HEAD_CONV, mid_c)
    s_mid = jnp.concatenate([m["scale"] for m in mids]).reshape(1, mid_c)
    b_mid = jnp.concatenate([m["bias"] for m in mids]).reshape(1, mid_c)
    w_fin = jnp.zeros((3, 3, mid_c, HEAD_OUT_TOTAL), jnp.float32)
    b_fin = jnp.zeros((HEAD_OUT_TOTAL,), jnp.float32)
    off = 0
    for h, (f, d) in enumerate(zip(finals, HEAD_OUT_DIMS)):
        w_fin = w_fin.at[:, :, h * HEAD_CONV:(h + 1) * HEAD_CONV, off:off + d].set(f["w"])
        b_fin = b_fin.at[off:off + d].set(f["bias"])
        off += d
    P["head"] = {"w_sh": shared["w"].reshape(9 * HEAD_IN, HEAD_CONV),
                 "s_sh": shared["scale"].reshape(1, HEAD_CONV),
                 "b_sh": shared["bias"].reshape(1, HEAD_CONV),
                 "w_mid": w_mid, "s_mid": s_mid, "b_mid": b_mid,
                 "w_finT": jnp.transpose(w_fin.reshape(9 * mid_c, HEAD_OUT_TOTAL)),
                 "b_finT": b_fin.reshape(HEAD_OUT_TOTAL, 1)}
    return P


# ------------------------------ forward pass ------------------------------
def pfn_forward(pcl, img_t0, pf):
    """Simplified PointsPillarFeatureNetWrapper: per-point MLP (Pallas matmul,
    transposed so points are lanes), then scatter-max onto the BEV grid."""
    # TODO(synk): full PointPillars feature augmentation (pillar/cluster
    # offsets) and the image branch are not reproduced (source not provided).
    del img_t0
    B_, N_, F_ = pcl.shape
    xT = jnp.transpose(pcl.reshape(B_ * N_, F_))            # (F, B*N)
    featsT = pfn_call(xT, pf)                               # (HID, B*N) — Pallas
    feats = jnp.transpose(featsT)                           # (B*N, HID)

    px = jnp.clip(jnp.floor(pcl[..., 0]), 0, GRID_W - 1).astype(jnp.int32)
    py = jnp.clip(jnp.floor(pcl[..., 1]), 0, GRID_H - 1).astype(jnp.int32)
    b_idx = jnp.broadcast_to(jnp.arange(B_)[:, None], (B_, N_))
    flat = (b_idx * GRID_H * GRID_W + py * GRID_W + px).reshape(-1)
    nseg = B_ * GRID_H * GRID_W
    # TODO(synk): pillar scatter-max is a data-dependent scatter; kept in JAX glue.
    seg_max = jax.ops.segment_max(feats, flat, num_segments=nseg)
    counts = jax.ops.segment_sum(jnp.ones((B_ * N_,), jnp.float32), flat,
                                 num_segments=nseg)
    occupied = counts > 0
    bev = jnp.where(occupied[:, None], seg_max, 0.0).reshape(B_, GRID_H, GRID_W, HID)
    occ = occupied.astype(jnp.float32).reshape(B_, GRID_H, GRID_W, 1)
    occ = jnp.transpose(occ, (0, 3, 1, 2))                  # debug output stays NCHW (as in torch)
    return bev, occ


def centerpoint_style_net_forward(img_t0, pcls, params):
    if img_t0 is not None:
        assert len(img_t0.shape) == 4, f"need batched gray image but got shape {img_t0.shape}"
    bev, occ = pfn_forward(pcls, img_t0, params["pfn"])
    aux_outputs = {"bev_net_input_dbg": occ}
    N = bev.shape[0]

    # RPN block 0: in-kernel stride-2 entry conv from s2d(bev) + 3 fused 3x3 convs.
    h0, w0 = GRID_H // 2, GRID_W // 2
    x0 = block0_call(space_to_depth_2x2(bev), params["block0"], H=h0, W=w0)

    # RPN block 1 + deblocks + channel concat + full CenterHead: one fused kernel.
    # s2d(x0) is pure layout glue (same bytes) and feeds BOTH block1's entry conv
    # (phase taps) and the folded 2x2/s2 deblock (1x1 matmul).
    h1, w1 = h0 // 2, w0 // 2
    s2d_x0 = space_to_depth_2x2(x0.reshape(N, h0, w0, DS_FILTERS[0]))
    outT = block1_head_call(s2d_x0, params["block1"], params["deblock0"],
                            params["deblock1"], params["head"], H=h1, W=w1)
    out = jnp.transpose(outT, (0, 2, 1)).reshape(N, h1, w1, HEAD_OUT_TOTAL)

    pred_dict = {}
    off = 0
    for name, (dim, _) in COMMON_HEADS.items():
        pred_dict[name] = out[..., off:off + dim]
        off += dim
    # Predictions are computed channels-last (== the module's permute(0, 2, 3, 1)).
    return pred_dict, aux_outputs


# ---------------------------------- main ----------------------------------
if __name__ == "__main__":
    key = jax.random.PRNGKey(0)
    kxy, kzi, kimg = jax.random.split(key, 3)
    pcls = jnp.concatenate(
        [jax.random.uniform(kxy, (B, NPTS, 2), minval=0.0, maxval=float(GRID_W)),
         jax.random.uniform(kzi, (B, NPTS, 2), minval=-1.0, maxval=1.0)],
        axis=-1)                                     # (B, NPTS, 4): x, y, z, intensity
    img_t0 = jax.random.uniform(kimg, (B, 1, 32, 32), dtype=jnp.float32)

    params = build_params(seed=42)
    fwd = jax.jit(centerpoint_style_net_forward)
    pred, aux = fwd(img_t0, pcls, params)
    jax.block_until_ready(pred)
    jax.block_until_ready(aux)

    # light sanity checks (channels-last predictions at 1/4 BEV resolution)
    for name, (out_dim, _) in COMMON_HEADS.items():
        assert pred[name].shape == (B, GRID_H // 4, GRID_W // 4, out_dim), pred[name].shape
        assert bool(jnp.all(jnp.isfinite(pred[name]))), name
    assert aux["bev_net_input_dbg"].shape == (B, 1, GRID_H, GRID_W)
    print("KERNEL_OK")
</pallas_src>

<mosaic_0001>
module attributes {stable_mosaic.version = 11 : i64} {
  func.func private @main(%arg0: i32) attributes {dimension_semantics = [#tpu.dimension_semantics<core_parallel>], iteration_bounds = array<i64: 2>, tpu.core_type = #tpu.core_type<sc_scalar_subcore>, window_params = []} {
    return
  }
}

module attributes {stable_mosaic.version = 11 : i64} {
  func.func private @main(%arg0: i32) attributes {dimension_semantics = [#tpu.dimension_semantics<core_parallel>], iteration_bounds = array<i64: 2>, tpu.core_type = #tpu.core_type<sc_scalar_subcore>, window_params = []} {
    return
  }
}

module attributes {stable_mosaic.version = 11 : i64} {
  func.func @_pfn_kernel(%arg0: i32, %arg1: memref<4x512xf32, #tpu.memory_space<vmem>>, %arg2: memref<32x4xf32, #tpu.memory_space<vmem>>, %arg3: memref<32x1xf32, #tpu.memory_space<vmem>>, %arg4: memref<32x1xf32, #tpu.memory_space<vmem>>, %arg5: memref<32x512xf32, #tpu.memory_space<vmem>>) attributes {dimension_semantics = [#tpu.dimension_semantics<arbitrary>], iteration_bounds = array<i64: 1>, scalar_prefetch = 0 : i64, scratch_operands = 0 : i64, tpu.core_type = #tpu.core_type<tc>, window_params = [{pipeline_mode = #tpu.pipeline_mode<synchronous>, transform_indices = @transform_0, window_bounds = array<i64: 4, 512>}, {pipeline_mode = #tpu.pipeline_mode<synchronous>, transform_indices = @transform_1, window_bounds = array<i64: 32, 4>}, {pipeline_mode = #tpu.pipeline_mode<synchronous>, transform_indices = @transform_2, window_bounds = array<i64: 32, 1>}, {pipeline_mode = #tpu.pipeline_mode<synchronous>, transform_indices = @transform_3, window_bounds = array<i64: 32, 1>}, {pipeline_mode = #tpu.pipeline_mode<synchronous>, transform_indices = @transform_4, window_bounds = array<i64: 32, 512>}]} {
    %c0 = arith.constant 0 : index
    %c0_0 = arith.constant 0 : index
    %0 = vector.load %arg2[%c0, %c0_0] : memref<32x4xf32, #tpu.memory_space<vmem>>, vector<32x4xf32>
    %c0_1 = arith.constant 0 : index
    %c0_2 = arith.constant 0 : index
    %1 = vector.load %arg1[%c0_1, %c0_2] : memref<4x512xf32, #tpu.memory_space<vmem>>, vector<4x512xf32>
    %cst = arith.constant dense<0.000000e+00> : vector<32x512xf32>
    %2 = tpu.matmul %0, %1, %cst {dimension_numbers = #tpu.dot_dimension_numbers<[1], [0], [0], [1], [0, 0, 1, 1], [], []>} : vector<32x4xf32>, vector<4x512xf32>, vector<32x512xf32> -> vector<32x512xf32>
    %c0_3 = arith.constant 0 : index
    %c0_4 = arith.constant 0 : index
    %3 = vector.load %arg3[%c0_3, %c0_4] : memref<32x1xf32, #tpu.memory_space<vmem>>, vector<32x1xf32>
    %4 = vector.broadcast %3 : vector<32x1xf32> to vector<32x512xf32>
    %5 = arith.mulf %2, %4 : vector<32x512xf32>
    %c0_5 = arith.constant 0 : index
    %c0_6 = arith.constant 0 : index
    %6 = vector.load %arg4[%c0_5, %c0_6] : memref<32x1xf32, #tpu.memory_space<vmem>>, vector<32x1xf32>
    %7 = vector.broadcast %6 : vector<32x1xf32> to vector<32x512xf32>
    %8 = arith.addf %5, %7 : vector<32x512xf32>
    %cst_7 = arith.constant 0.000000e+00 : f32
    %9 = vector.broadcast %cst_7 : f32 to vector<32x512xf32>
    %10 = arith.maximumf %8, %9 : vector<32x512xf32>
    %c0_8 = arith.constant 0 : index
    %c0_9 = arith.constant 0 : index
    %11 = vector.load %arg5[%c0_8, %c0_9] : memref<32x512xf32, #tpu.memory_space<vmem>>, vector<32x512xf32>
    tpu.vector_store %arg5[%c0_8, %c0_9], %10 {strides = array<i32>} : memref<32x512xf32, #tpu.memory_space<vmem>>, vector<32x512xf32>,
    return
  }
  func.func @transform_0(%arg0: i32) -> (i32, i32) {
    %c0_i32 = arith.constant 0 : i32
    %c0_i32_0 = arith.constant 0 : i32
    %c0_i32_1 = arith.constant 0 : i32
    return %c0_i32, %c0_i32_0 : i32, i32
  }
  func.func @transform_1(%arg0: i32) -> (i32, i32) {
    %c0_i32 = arith.constant 0 : i32
    %c0_i32_0 = arith.constant 0 : i32
    %c0_i32_1 = arith.constant 0 : i32
    return %c0_i32, %c0_i32_0 : i32, i32
  }
  func.func @transform_2(%arg0: i32) -> (i32, i32) {
    %c0_i32 = arith.constant 0 : i32
    %c0_i32_0 = arith.constant 0 : i32
    %c0_i32_1 = arith.constant 0 : i32
    return %c0_i32, %c0_i32_0 : i32, i32
  }
  func.func @transform_3(%arg0: i32) -> (i32, i32) {
    %c0_i32 = arith.constant 0 : i32
    %c0_i32_0 = arith.constant 0 : i32
    %c0_i32_1 = arith.constant 0 : i32
    return %c0_i32, %c0_i32_0 : i32, i32
  }
  func.func @transform_4(%arg0: i32) -> (i32, i32) {
    %c0_i32 = arith.constant 0 : i32
    %c0_i32_0 = arith.constant 0 : i32
    %c0_i32_1 = arith.constant 0 : i32
    return %c0_i32, %c0_i32_0 : i32, i32
  }
}

module attributes {stable_mosaic.version = 11 : i64} {
  func.func @_block0_kernel(%arg0: i32, %arg1: memref<1x64x128xf32, #tpu.memory_space<vmem>>, %arg2: memref<288x32xf32, #tpu.memory_space<vmem>>, %arg3: memref<1x32xf32, #tpu.memory_space<vmem>>, %arg4: memref<1x32xf32, #tpu.memory_space<vmem>>, %arg5: memref<3x288x32xf32, #tpu.memory_space<vmem>>, %arg6: memref<3x1x32xf32, #tpu.memory_space<vmem>>, %arg7: memref<3x1x32xf32, #tpu.memory_space<vmem>>, %arg8: memref<1x64x32xf32, #tpu.memory_space<vmem>>, %arg9: memref<89x128xf32, #tpu.memory_space<vmem>>, %arg10: memref<89x32xf32, #tpu.memory_space<vmem>>) attributes {dimension_semantics = [#tpu.dimension_semantics<parallel>], iteration_bounds = array<i64: 2>, scalar_prefetch = 0 : i64, scratch_operands = 2 : i64, tpu.core_type = #tpu.core_type<tc>, window_params = [{transform_indices = @transform_0, window_bounds = array<i64: 1, 64, 128>}, {pipeline_mode = #tpu.pipeline_mode<synchronous>, transform_indices = @transform_1, window_bounds = array<i64: 288, 32>}, {pipeline_mode = #tpu.pipeline_mode<synchronous>, transform_indices = @transform_2, window_bounds = array<i64: 1, 32>}, {pipeline_mode = #tpu.pipeline_mode<synchronous>, transform_indices = @transform_3, window_bounds = array<i64: 1, 32>}, {pipeline_mode = #tpu.pipeline_mode<synchronous>, transform_indices = @transform_4, window_bounds = array<i64: 3, 288, 32>}, {pipeline_mode = #tpu.pipeline_mode<synchronous>, transform_indices = @transform_5, window_bounds = array<i64: 3, 1, 32>}, {pipeline_mode = #tpu.pipeline_mode<synchronous>, transform_indices = @transform_6, window_bounds = array<i64: 3, 1, 32>}, {transform_indices = @transform_7, window_bounds = array<i64: 1, 64, 32>}]} {
    %cst = arith.constant 0.000000e+00 : f32
    %0 = vector.broadcast %cst : f32 to vector<16x128xf32>
    %c0 = arith.constant 0 : index
    %c0_0 = arith.constant 0 : index
    %1 = vector.load %arg9[%c0, %c0_0] : memref<89x128xf32, #tpu.memory_space<vmem>>, vector<16x128xf32>
    tpu.vector_store %arg9[%c0, %c0_0], %0 {strides = array<i32>} : memref<89x128xf32, #tpu.memory_space<vmem>>, vector<16x128xf32>,
    %cst_1 = arith.constant 0.000000e+00 : f32
    %2 = vector.broadcast %cst_1 : f32 to vector<16x32xf32>
    %c0_2 = arith.constant 0 : index
    %c0_3 = arith.constant 0 : index
    %3 = vector.load %arg10[%c0_2, %c0_3] : memref<89x32xf32, #tpu.memory_space<vmem>>, vector<16x32xf32>
    tpu.vector_store %arg10[%c0_2, %c0_3], %2 {strides = array<i32>} : memref<89x32xf32, #tpu.memory_space<vmem>>, vector<16x32xf32>,
    %cst_4 = arith.constant 0.000000e+00 : f32
    %4 = vector.broadcast %cst_4 : f32 to vector<9x32xf32>
    %c80 = arith.constant 80 : index
    %c0_5 = arith.constant 0 : index
    %5 = vector.load %arg10[%c80, %c0_5] : memref<89x32xf32, #tpu.memory_space<vmem>>, vector<9x32xf32>
    tpu.vector_store %arg10[%c80, %c0_5], %4 {strides = array<i32>} : memref<89x32xf32, #tpu.memory_space<vmem>>, vector<9x32xf32>,
    %6 = tpu.iota {dimensions = array<i32: 0>} : vector<64x1xi32>
    %c8_i32 = arith.constant 8 : i32
    %c0_i32 = arith.constant 0 : i32
    %7 = arith.cmpi eq, %c8_i32, %c0_i32 : i32
    %c1_i32 = arith.constant 1 : i32
    %8 = arith.select %7, %c1_i32, %c8_i32 : i32
    %9 = vector.broadcast %8 : i32 to vector<64x1xi32>
    %10 = arith.remsi %6, %9 : vector<64x1xi32>
    %c0_i32_6 = arith.constant 0 : i32
    %11 = vector.broadcast %c0_i32_6 : i32 to vector<64x1xi32>
    %12 = arith.cmpi ne, %10, %11 : vector<64x1xi32>
    %c0_i32_7 = arith.constant 0 : i32
    %13 = vector.broadcast %c0_i32_7 : i32 to vector<64x1xi32>
    %14 = arith.cmpi slt, %10, %13 : vector<64x1xi32>
    %c0_i32_8 = arith.constant 0 : i32
    %15 = arith.cmpi slt, %8, %c0_i32_8 : i32
    %16 = vector.broadcast %15 : i1 to vector<64x1xi1>
    %17 = vector.broadcast %16 : vector<64x1xi1> to vector<64x1xi1>
    %18 = arith.xori %14, %17 : vector<64x1xi1>
    %19 = arith.andi %18, %12 : vector<64x1xi1>
    %20 = vector.broadcast %8 : i32 to vector<64x1xi32>
    %21 = arith.addi %10, %20 : vector<64x1xi32>
    %22 = arith.select %19, %21, %10 : vector<64x1xi1>, vector<64x1xi32>
    %c0_i32_9 = arith.constant 0 : i32
    %23 = vector.broadcast %c0_i32_9 : i32 to vector<64x1xi32>
    %24 = arith.cmpi ne, %22, %23 : vector<64x1xi32>
    %c7_i32 = arith.constant 7 : i32
    %25 = vector.broadcast %c7_i32 : i32 to vector<64x1xi32>
    %26 = arith.cmpi ne, %22, %25 : vector<64x1xi32>
    %c0_10 = arith.constant 0 : index
    %c0_11 = arith.constant 0 : index
    %c0_12 = arith.constant 0 : index
    %27 = vector.load %arg1[%c0_10, %c0_11, %c0_12] : memref<1x64x128xf32, #tpu.memory_space<vmem>>, vector<1x64x128xf32>
    %28 = vector.shape_cast %27 : vector<1x64x128xf32> to vector<64x128xf32>
    %c16 = arith.constant 16 : index
    %c0_13 = arith.constant 0 : index
    %29 = vector.load %arg9[%c16, %c0_13] : memref<89x128xf32, #tpu.memory_space<vmem>>, vector<64x128xf32>
    tpu.vector_store %arg9[%c16, %c0_13], %28 {strides = array<i32>} : memref<89x128xf32, #tpu.memory_space<vmem>>, vector<64x128xf32>,
    %c0_14 = arith.constant 0 : index
    %c0_15 = arith.constant 0 : index
    %30 = vector.load %arg2[%c0_14, %c0_15] : memref<288x32xf32, #tpu.memory_space<vmem>>, vector<288x32xf32>
    %c0_16 = arith.constant 0 : index
    %c0_17 = arith.constant 0 : index
    %31 = vector.load %arg3[%c0_16, %c0_17] : memref<1x32xf32, #tpu.memory_space<vmem>>, vector<1x32xf32>
    %c0_18 = arith.constant 0 : index
    %c0_19 = arith.constant 0 : index
    %32 = vector.load %arg4[%c0_18, %c0_19] : memref<1x32xf32, #tpu.memory_space<vmem>>, vector<1x32xf32>
    %c16_20 = arith.constant 16 : index
    %c0_21 = arith.constant 0 : index
    %33 = vector.load %arg9[%c16_20, %c0_21] : memref<89x128xf32, #tpu.memory_space<vmem>>, vector<64x128xf32>
    %c15 = arith.constant 15 : index
    %c0_22 = arith.constant 0 : index
    %34 = vector.load %arg9[%c15, %c0_22] : memref<89x128xf32, #tpu.memory_space<vmem>>, vector<64x128xf32>
    %cst_23 = arith.constant 0.000000e+00 : f32
    %35 = vector.shape_cast %24 : vector<64x1xi1> to vector<64x1xi1>
    %36 = vector.broadcast %35 : vector<64x1xi1> to vector<64x128xi1>
    %37 = vector.broadcast %cst_23 : f32 to vector<64x128xf32>
    %38 = arith.select %36, %34, %37 : vector<64x128xi1>, vector<64x128xf32>
    %c8 = arith.constant 8 : index
    %c0_24 = arith.constant 0 : index
    %39 = vector.load %arg9[%c8, %c0_24] : memref<89x128xf32, #tpu.memory_space<vmem>>, vector<64x128xf32>
    %c7 = arith.constant 7 : index
    %c0_25 = arith.constant 0 : index
    %40 = vector.load %arg9[%c7, %c0_25] : memref<89x128xf32, #tpu.memory_space<vmem>>, vector<64x128xf32>
    %cst_26 = arith.constant 0.000000e+00 : f32
    %41 = vector.shape_cast %24 : vector<64x1xi1> to vector<64x1xi1>
    %42 = vector.broadcast %41 : vector<64x1xi1> to vector<64x128xi1>
    %43 = vector.broadcast %cst_26 : f32 to vector<64x128xf32>
    %44 = arith.select %42, %40, %43 : vector<64x128xi1>, vector<64x128xf32>
    %45 = vector.extract_strided_slice %44 {offsets = [0, 96], sizes = [64, 32], strides = [1, 1]} : vector<64x128xf32> to vector<64x32xf32>
    %46 = vector.extract_strided_slice %39 {offsets = [0, 64], sizes = [64, 32], strides = [1, 1]} : vector<64x128xf32> to vector<64x32xf32>
    %47 = vector.extract_strided_slice %39 {offsets = [0, 96], sizes = [64, 32], strides = [1, 1]} : vector<64x128xf32> to vector<64x32xf32>
    %48 = vector.extract_strided_slice %38 {offsets = [0, 32], sizes = [64, 32], strides = [1, 1]} : vector<64x128xf32> to vector<64x32xf32>
    %49 = vector.extract_strided_slice %33 {offsets = [0, 0], sizes = [64, 32], strides = [1, 1]} : vector<64x128xf32> to vector<64x32xf32>
    %50 = vector.extract_strided_slice %33 {offsets = [0, 32], sizes = [64, 32], strides = [1, 1]} : vector<64x128xf32> to vector<64x32xf32>
    %51 = vector.extract_strided_slice %38 {offsets = [0, 96], sizes = [64, 32], strides = [1, 1]} : vector<64x128xf32> to vector<64x32xf32>
    %52 = vector.extract_strided_slice %33 {offsets = [0, 64], sizes = [64, 32], strides = [1, 1]} : vector<64x128xf32> to vector<64x32xf32>
    %53 = vector.extract_strided_slice %33 {offsets = [0, 96], sizes = [64, 32], strides = [1, 1]} : vector<64x128xf32> to vector<64x32xf32>
    %54 = tpu.concatenate %45, %46, %47, %48, %49, %50, %51, %52, %53 in 1 : vector<64x32xf32>, vector<64x32xf32>, vector<64x32xf32>, vector<64x32xf32>, vector<64x32xf32>, vector<64x32xf32>, vector<64x32xf32>, vector<64x32xf32>, vector<64x32xf32> -> vector<64x288xf32>
    %cst_27 = arith.constant dense<0.000000e+00> : vector<64x32xf32>
    %55 = tpu.matmul %54, %30, %cst_27 {dimension_numbers = #tpu.dot_dimension_numbers<[1], [0], [0], [1], [0, 0, 1, 1], [], []>} : vector<64x288xf32>, vector<288x32xf32>, vector<64x32xf32> -> vector<64x32xf32>
    %56 = vector.broadcast %31 : vector<1x32xf32> to vector<64x32xf32>
    %57 = arith.mulf %55, %56 : vector<64x32xf32>
    %58 = vector.broadcast %32 : vector<1x32xf32> to vector<64x32xf32>
    %59 = arith.addf %57, %58 : vector<64x32xf32>
    %cst_28 = arith.constant 0.000000e+00 : f32
    %60 = vector.broadcast %cst_28 : f32 to vector<64x32xf32>
    %61 = arith.maximumf %59, %60 : vector<64x32xf32>
    %c16_29 = arith.constant 16 : index
    %c0_30 = arith.constant 0 : index
    %62 = vector.load %arg10[%c16_29, %c0_30] : memref<89x32xf32, #tpu.memory_space<vmem>>, vector<64x32xf32>
    tpu.vector_store %arg10[%c16_29, %c0_30], %61 {strides = array<i32>} : memref<89x32xf32, #tpu.memory_space<vmem>>, vector<64x32xf32>,
    %c0_31 = arith.constant 0 : index
    %c0_32 = arith.constant 0 : index
    %c0_33 = arith.constant 0 : index
    %63 = vector.load %arg5[%c0_31, %c0_32, %c0_33] : memref<3x288x32xf32, #tpu.memory_space<vmem>>, vector<1x288x32xf32>
    %64 = vector.shape_cast %63 : vector<1x288x32xf32> to vector<288x32xf32>
    %c0_34 = arith.constant 0 : index
    %c0_35 = arith.constant 0 : index
    %c0_36 = arith.constant 0 : index
    %65 = vector.load %arg6[%c0_34, %c0_35, %c0_36] : memref<3x1x32xf32, #tpu.memory_space<vmem>>, vector<1x1x32xf32>
    %66 = vector.shape_cast %65 : vector<1x1x32xf32> to vector<1x32xf32>
    %c0_37 = arith.constant 0 : index
    %c0_38 = arith.constant 0 : index
    %c0_39 = arith.constant 0 : index
    %67 = vector.load %arg7[%c0_37, %c0_38, %c0_39] : memref<3x1x32xf32, #tpu.memory_space<vmem>>, vector<1x1x32xf32>
    %68 = vector.shape_cast %67 : vector<1x1x32xf32> to vector<1x32xf32>
    %c7_40 = arith.constant 7 : index
    %c0_41 = arith.constant 0 : index
    %69 = vector.load %arg10[%c7_40, %c0_41] : memref<89x32xf32, #tpu.memory_space<vmem>>, vector<64x32xf32>
    %cst_42 = arith.constant 0.000000e+00 : f32
    %70 = vector.shape_cast %24 : vector<64x1xi1> to vector<64x1xi1>
    %71 = vector.broadcast %70 : vector<64x1xi1> to vector<64x32xi1>
    %72 = vector.broadcast %cst_42 : f32 to vector<64x32xf32>
    %73 = arith.select %71, %69, %72 : vector<64x32xi1>, vector<64x32xf32>
    %c8_43 = arith.constant 8 : index
    %c0_44 = arith.constant 0 : index
    %74 = vector.load %arg10[%c8_43, %c0_44] : memref<89x32xf32, #tpu.memory_space<vmem>>, vector<64x32xf32>
    %c9 = arith.constant 9 : index
    %c0_45 = arith.constant 0 : index
    %75 = vector.load %arg10[%c9, %c0_45] : memref<89x32xf32, #tpu.memory_space<vmem>>, vector<64x32xf32>
    %cst_46 = arith.constant 0.000000e+00 : f32
    %76 = vector.shape_cast %26 : vector<64x1xi1> to vector<64x1xi1>
    %77 = vector.broadcast %76 : vector<64x1xi1> to vector<64x32xi1>
    %78 = vector.broadcast %cst_46 : f32 to vector<64x32xf32>
    %79 = arith.select %77, %75, %78 : vector<64x32xi1>, vector<64x32xf32>
    %c15_47 = arith.constant 15 : index
    %c0_48 = arith.constant 0 : index
    %80 = vector.load %arg10[%c15_47, %c0_48] : memref<89x32xf32, #tpu.memory_space<vmem>>, vector<64x32xf32>
    %cst_49 = arith.constant 0.000000e+00 : f32
    %81 = vector.shape_cast %24 : vector<64x1xi1> to vector<64x1xi1>
    %82 = vector.broadcast %81 : vector<64x1xi1> to vector<64x32xi1>
    %83 = vector.broadcast %cst_49 : f32 to vector<64x32xf32>
    %84 = arith.select %82, %80, %83 : vector<64x32xi1>, vector<64x32xf32>
    %c16_50 = arith.constant 16 : index
    %c0_51 = arith.constant 0 : index
    %85 = vector.load %arg10[%c16_50, %c0_51] : memref<89x32xf32, #tpu.memory_space<vmem>>, vector<64x32xf32>
    %c17 = arith.constant 17 : index
    %c0_52 = arith.constant 0 : index
    %86 = vector.load %arg10[%c17, %c0_52] : memref<89x32xf32, #tpu.memory_space<vmem>>, vector<64x32xf32>
    %cst_53 = arith.constant 0.000000e+00 : f32
    %87 = vector.shape_cast %26 : vector<64x1xi1> to vector<64x1xi1>
    %88 = vector.broadcast %87 : vector<64x1xi1> to vector<64x32xi1>
    %89 = vector.broadcast %cst_53 : f32 to vector<64x32xf32>
    %90 = arith.select %88, %86, %89 : vector<64x32xi1>, vector<64x32xf32>
    %c23 = arith.constant 23 : index
    %c0_54 = arith.constant 0 : index
    %91 = vector.load %arg10[%c23, %c0_54] : memref<89x32xf32, #tpu.memory_space<vmem>>, vector<64x32xf32>
    %cst_55 = arith.constant 0.000000e+00 : f32
    %92 = vector.shape_cast %24 : vector<64x1xi1> to vector<64x1xi1>
    %93 = vector.broadcast %92 : vector<64x1xi1> to vector<64x32xi1>
    %94 = vector.broadcast %cst_55 : f32 to vector<64x32xf32>
    %95 = arith.select %93, %91, %94 : vector<64x32xi1>, vector<64x32xf32>
    %c24 = arith.constant 24 : index
    %c0_56 = arith.constant 0 : index
    %96 = vector.load %arg10[%c24, %c0_56] : memref<89x32xf32, #tpu.memory_space<vmem>>, vector<64x32xf32>
    %c25 = arith.constant 25 : index
    %c0_57 = arith.constant 0 : index
    %97 = vector.load %arg10[%c25, %c0_57] : memref<89x32xf32, #tpu.memory_space<vmem>>, vector<64x32xf32>
    %cst_58 = arith.constant 0.000000e+00 : f32
    %98 = vector.shape_cast %26 : vector<64x1xi1> to vector<64x1xi1>
    %99 = vector.broadcast %98 : vector<64x1xi1> to vector<64x32xi1>
    %100 = vector.broadcast %cst_58 : f32 to vector<64x32xf32>
    %101 = arith.select %99, %97, %100 : vector<64x32xi1>, vector<64x32xf32>
    %102 = tpu.concatenate %73, %74, %79, %84, %85, %90, %95, %96, %101 in 1 : vector<64x32xf32>, vector<64x32xf32>, vector<64x32xf32>, vector<64x32xf32>, vector<64x32xf32>, vector<64x32xf32>, vector<64x32xf32>, vector<64x32xf32>, vector<64x32xf32> -> vector<64x288xf32>
    %cst_59 = arith.constant dense<0.000000e+00> : vector<64x32xf32>
    %103 = tpu.matmul %102, %64, %cst_59 {dimension_numbers = #tpu.dot_dimension_numbers<[1], [0], [0], [1], [0, 0, 1, 1], [], []>} : vector<64x288xf32>, vector<288x32xf32>, vector<64x32xf32> -> vector<64x32xf32>
    %104 = vector.broadcast %66 : vector<1x32xf32> to vector<64x32xf32>
    %105 = arith.mulf %103, %104 : vector<64x32xf32>
    %106 = vector.broadcast %68 : vector<1x32xf32> to vector<64x32xf32>
    %107 = arith.addf %105, %106 : vector<64x32xf32>
    %cst_60 = arith.constant 0.000000e+00 : f32
    %108 = vector.broadcast %cst_60 : f32 to vector<64x32xf32>
    %109 = arith.maximumf %107, %108 : vector<64x32xf32>
    %c16_61 = arith.constant 16 : index
    %c0_62 = arith.constant 0 : index
    %110 = vector.load %arg10[%c16_61, %c0_62] : memref<89x32xf32, #tpu.memory_space<vmem>>, vector<64x32xf32>
    tpu.vector_store %arg10[%c16_61, %c0_62], %109 {strides = array<i32>} : memref<89x32xf32, #tpu.memory_space<vmem>>, vector<64x32xf32>,
    %c1 = arith.constant 1 : index
    %c0_63 = arith.constant 0 : index
    %c0_64 = arith.constant 0 : index
    %111 = vector.load %arg5[%c1, %c0_63, %c0_64] : memref<3x288x32xf32, #tpu.memory_space<vmem>>, vector<1x288x32xf32>
    %112 = vector.shape_cast %111 : vector<1x288x32xf32> to vector<288x32xf32>
    %c1_65 = arith.constant 1 : index
    %c0_66 = arith.constant 0 : index
    %c0_67 = arith.constant 0 : index
    %113 = vector.load %arg6[%c1_65, %c0_66, %c0_67] : memref<3x1x32xf32, #tpu.memory_space<vmem>>, vector<1x1x32xf32>
    %114 = vector.shape_cast %113 : vector<1x1x32xf32> to vector<1x32xf32>
    %c1_68 = arith.constant 1 : index
    %c0_69 = arith.constant 0 : index
    %c0_70 = arith.constant 0 : index
    %115 = vector.load %arg7[%c1_68, %c0_69, %c0_70] : memref<3x1x32xf32, #tpu.memory_space<vmem>>, vector<1x1x32xf32>
    %116 = vector.shape_cast %115 : vector<1x1x32xf32> to vector<1x32xf32>
    %c7_71 = arith.constant 7 : index
    %c0_72 = arith.constant 0 : index
    %117 = vector.load %arg10[%c7_71, %c0_72] : memref<89x32xf32, #tpu.memory_space<vmem>>, vector<64x32xf32>
    %cst_73 = arith.constant 0.000000e+00 : f32
    %118 = vector.shape_cast %24 : vector<64x1xi1> to vector<64x1xi1>
    %119 = vector.broadcast %118 : vector<64x1xi1> to vector<64x32xi1>
    %120 = vector.broadcast %cst_73 : f32 to vector<64x32xf32>
    %121 = arith.select %119, %117, %120 : vector<64x32xi1>, vector<64x32xf32>
    %c8_74 = arith.constant 8 : index
    %c0_75 = arith.constant 0 : index
    %122 = vector.load %arg10[%c8_74, %c0_75] : memref<89x32xf32, #tpu.memory_space<vmem>>, vector<64x32xf32>
    %c9_76 = arith.constant 9 : index
    %c0_77 = arith.constant 0 : index
    %123 = vector.load %arg10[%c9_76, %c0_77] : memref<89x32xf32, #tpu.memory_space<vmem>>, vector<64x32xf32>
    %cst_78 = arith.constant 0.000000e+00 : f32
    %124 = vector.shape_cast %26 : vector<64x1xi1> to vector<64x1xi1>
    %125 = vector.broadcast %124 : vector<64x1xi1> to vector<64x32xi1>
    %126 = vector.broadcast %cst_78 : f32 to vector<64x32xf32>
    %127 = arith.select %125, %123, %126 : vector<64x32xi1>, vector<64x32xf32>
    %c15_79 = arith.constant 15 : index
    %c0_80 = arith.constant 0 : index
    %128 = vector.load %arg10[%c15_79, %c0_80] : memref<89x32xf32, #tpu.memory_space<vmem>>, vector<64x32xf32>
    %cst_81 = arith.constant 0.000000e+00 : f32
    %129 = vector.shape_cast %24 : vector<64x1xi1> to vector<64x1xi1>
    %130 = vector.broadcast %129 : vector<64x1xi1> to vector<64x32xi1>
    %131 = vector.broadcast %cst_81 : f32 to vector<64x32xf32>
    %132 = arith.select %130, %128, %131 : vector<64x32xi1>, vector<64x32xf32>
    %c16_82 = arith.constant 16 : index
    %c0_83 = arith.constant 0 : index
    %133 = vector.load %arg10[%c16_82, %c0_83] : memref<89x32xf32, #tpu.memory_space<vmem>>, vector<64x32xf32>
    %c17_84 = arith.constant 17 : index
    %c0_85 = arith.constant 0 : index
    %134 = vector.load %arg10[%c17_84, %c0_85] : memref<89x32xf32, #tpu.memory_space<vmem>>, vector<64x32xf32>
    %cst_86 = arith.constant 0.000000e+00 : f32
    %135 = vector.shape_cast %26 : vector<64x1xi1> to vector<64x1xi1>
    %136 = vector.broadcast %135 : vector<64x1xi1> to vector<64x32xi1>
    %137 = vector.broadcast %cst_86 : f32 to vector<64x32xf32>
    %138 = arith.select %136, %134, %137 : vector<64x32xi1>, vector<64x32xf32>
    %c23_87 = arith.constant 23 : index
    %c0_88 = arith.constant 0 : index
    %139 = vector.load %arg10[%c23_87, %c0_88] : memref<89x32xf32, #tpu.memory_space<vmem>>, vector<64x32xf32>
    %cst_89 = arith.constant 0.000000e+00 : f32
    %140 = vector.shape_cast %24 : vector<64x1xi1> to vector<64x1xi1>
    %141 = vector.broadcast %140 : vector<64x1xi1> to vector<64x32xi1>
    %142 = vector.broadcast %cst_89 : f32 to vector<64x32xf32>
    %143 = arith.select %141, %139, %142 : vector<64x32xi1>, vector<64x32xf32>
    %c24_90 = arith.constant 24 : index
    %c0_91 = arith.constant 0 : index
    %144 = vector.load %arg10[%c24_90, %c0_91] : memref<89x32xf32, #tpu.memory_space<vmem>>, vector<64x32xf32>
    %c25_92 = arith.constant 25 : index
    %c0_93 = arith.constant 0 : index
    %145 = vector.load %arg10[%c25_92, %c0_93] : memref<89x32xf32, #tpu.memory_space<vmem>>, vector<64x32xf32>
    %cst_94 = arith.constant 0.000000e+00 : f32
    %146 = vector.shape_cast %26 : vector<64x1xi1> to vector<64x1xi1>
    %147 = vector.broadcast %146 : vector<64x1xi1> to vector<64x32xi1>
    %148 = vector.broadcast %cst_94 : f32 to vector<64x32xf32>
    %149 = arith.select %147, %145, %148 : vector<64x32xi1>, vector<64x32xf32>
    %150 = tpu.concatenate %121, %122, %127, %132, %133, %138, %143, %144, %149 in 1 : vector<64x32xf32>, vector<64x32xf32>, vector<64x32xf32>, vector<64x32xf32>, vector<64x32xf32>, vector<64x32xf32>, vector<64x32xf32>, vector<64x32xf32>, vector<64x32xf32> -> vector<64x288xf32>
    %cst_95 = arith.constant dense<0.000000e+00> : vector<64x32xf32>
    %151 = tpu.matmul %150, %112, %cst_95 {dimension_numbers = #tpu.dot_dimension_numbers<[1], [0], [0], [1], [0, 0, 1, 1], [], []>} : vector<64x288xf32>, vector<288x32xf32>, vector<64x32xf32> -> vector<64x32xf32>
    %152 = vector.broadcast %114 : vector<1x32xf32> to vector<64x32xf32>
    %153 = arith.mulf %151, %152 : vector<64x32xf32>
    %154 = vector.broadcast %116 : vector<1x32xf32> to vector<64x32xf32>
    %155 = arith.addf %153, %154 : vector<64x32xf32>
    %cst_96 = arith.constant 0.000000e+00 : f32
    %156 = vector.broadcast %cst_96 : f32 to vector<64x32xf32>
    %157 = arith.maximumf %155, %156 : vector<64x32xf32>
    %c16_97 = arith.constant 16 : index
    %c0_98 = arith.constant 0 : index
    %158 = vector.load %arg10[%c16_97, %c0_98] : memref<89x32xf32, #tpu.memory_space<vmem>>, vector<64x32xf32>
    tpu.vector_store %arg10[%c16_97, %c0_98], %157 {strides = array<i32>} : memref<89x32xf32, #tpu.memory_space<vmem>>, vector<64x32xf32>,
    %c2 = arith.constant 2 : index
    %c0_99 = arith.constant 0 : index
    %c0_100 = arith.constant 0 : index
    %159 = vector.load %arg5[%c2, %c0_99, %c0_100] : memref<3x288x32xf32, #tpu.memory_space<vmem>>, vector<1x288x32xf32>
    %160 = vector.shape_cast %159 : vector<1x288x32xf32> to vector<288x32xf32>
    %c2_101 = arith.constant 2 : index
    %c0_102 = arith.constant 0 : index
    %c0_103 = arith.constant 0 : index
    %161 = vector.load %arg6[%c2_101, %c0_102, %c0_103] : memref<3x1x32xf32, #tpu.memory_space<vmem>>, vector<1x1x32xf32>
    %162 = vector.shape_cast %161 : vector<1x1x32xf32> to vector<1x32xf32>
    %c2_104 = arith.constant 2 : index
    %c0_105 = arith.constant 0 : index
    %c0_106 = arith.constant 0 : index
    %163 = vector.load %arg7[%c2_104, %c0_105, %c0_106] : memref<3x1x32xf32, #tpu.memory_space<vmem>>, vector<1x1x32xf32>
    %164 = vector.shape_cast %163 : vector<1x1x32xf32> to vector<1x32xf32>
    %c7_107 = arith.constant 7 : index
    %c0_108 = arith.constant 0 : index
    %165 = vector.load %arg10[%c7_107, %c0_108] : memref<89x32xf32, #tpu.memory_space<vmem>>, vector<64x32xf32>
    %cst_109 = arith.constant 0.000000e+00 : f32
    %166 = vector.shape_cast %24 : vector<64x1xi1> to vector<64x1xi1>
    %167 = vector.broadcast %166 : vector<64x1xi1> to vector<64x32xi1>
    %168 = vector.broadcast %cst_109 : f32 to vector<64x32xf32>
    %169 = arith.select %167, %165, %168 : vector<64x32xi1>, vector<64x32xf32>
    %c8_110 = arith.constant 8 : index
    %c0_111 = arith.constant 0 : index
    %170 = vector.load %arg10[%c8_110, %c0_111] : memref<89x32xf32, #tpu.memory_space<vmem>>, vector<64x32xf32>
    %c9_112 = arith.constant 9 : index
    %c0_113 = arith.constant 0 : index
    %171 = vector.load %arg10[%c9_112, %c0_113] : memref<89x32xf32, #tpu.memory_space<vmem>>, vector<64x32xf32>
    %cst_114 = arith.constant 0.000000e+00 : f32
    %172 = vector.shape_cast %26 : vector<64x1xi1> to vector<64x1xi1>
    %173 = vector.broadcast %172 : vector<64x1xi1> to vector<64x32xi1>
    %174 = vector.broadcast %cst_114 : f32 to vector<64x32xf32>
    %175 = arith.select %173, %171, %174 : vector<64x32xi1>, vector<64x32xf32>
    %c15_115 = arith.constant 15 : index
    %c0_116 = arith.constant 0 : index
    %176 = vector.load %arg10[%c15_115, %c0_116] : memref<89x32xf32, #tpu.memory_space<vmem>>, vector<64x32xf32>
    %cst_117 = arith.constant 0.000000e+00 : f32
    %177 = vector.shape_cast %24 : vector<64x1xi1> to vector<64x1xi1>
    %178 = vector.broadcast %177 : vector<64x1xi1> to vector<64x32xi1>
    %179 = vector.broadcast %cst_117 : f32 to vector<64x32xf32>
    %180 = arith.select %178, %176, %179 : vector<64x32xi1>, vector<64x32xf32>
    %c16_118 = arith.constant 16 : index
    %c0_119 = arith.constant 0 : index
    %181 = vector.load %arg10[%c16_118, %c0_119] : memref<89x32xf32, #tpu.memory_space<vmem>>, vector<64x32xf32>
    %c17_120 = arith.constant 17 : index
    %c0_121 = arith.constant 0 : index
    %182 = vector.load %arg10[%c17_120, %c0_121] : memref<89x32xf32, #tpu.memory_space<vmem>>, vector<64x32xf32>
    %cst_122 = arith.constant 0.000000e+00 : f32
    %183 = vector.shape_cast %26 : vector<64x1xi1> to vector<64x1xi1>
    %184 = vector.broadcast %183 : vector<64x1xi1> to vector<64x32xi1>
    %185 = vector.broadcast %cst_122 : f32 to vector<64x32xf32>
    %186 = arith.select %184, %182, %185 : vector<64x32xi1>, vector<64x32xf32>
    %c23_123 = arith.constant 23 : index
    %c0_124 = arith.constant 0 : index
    %187 = vector.load %arg10[%c23_123, %c0_124] : memref<89x32xf32, #tpu.memory_space<vmem>>, vector<64x32xf32>
    %cst_125 = arith.constant 0.000000e+00 : f32
    %188 = vector.shape_cast %24 : vector<64x1xi1> to vector<64x1xi1>
    %189 = vector.broadcast %188 : vector<64x1xi1> to vector<64x32xi1>
    %190 = vector.broadcast %cst_125 : f32 to vector<64x32xf32>
    %191 = arith.select %189, %187, %190 : vector<64x32xi1>, vector<64x32xf32>
    %c24_126 = arith.constant 24 : index
    %c0_127 = arith.constant 0 : index
    %192 = vector.load %arg10[%c24_126, %c0_127] : memref<89x32xf32, #tpu.memory_space<vmem>>, vector<64x32xf32>
    %c25_128 = arith.constant 25 : index
    %c0_129 = arith.constant 0 : index
    %193 = vector.load %arg10[%c25_128, %c0_129] : memref<89x32xf32, #tpu.memory_space<vmem>>, vector<64x32xf32>
    %cst_130 = arith.constant 0.000000e+00 : f32
    %194 = vector.shape_cast %26 : vector<64x1xi1> to vector<64x1xi1>
    %195 = vector.broadcast %194 : vector<64x1xi1> to vector<64x32xi1>
    %196 = vector.broadcast %cst_130 : f32 to vector<64x32xf32>
    %197 = arith.select %195, %193, %196 : vector<64x32xi1>, vector<64x32xf32>
    %198 = tpu.concatenate %169, %170, %175, %180, %181, %186, %191, %192, %197 in 1 : vector<64x32xf32>, vector<64x32xf32>, vector<64x32xf32>, vector<64x32xf32>, vector<64x32xf32>, vector<64x32xf32>, vector<64x32xf32>, vector<64x32xf32>, vector<64x32xf32> -> vector<64x288xf32>
    %cst_131 = arith.constant dense<0.000000e+00> : vector<64x32xf32>
    %199 = tpu.matmul %198, %160, %cst_131 {dimension_numbers = #tpu.dot_dimension_numbers<[1], [0], [0], [1], [0, 0, 1, 1], [], []>} : vector<64x288xf32>, vector<288x32xf32>, vector<64x32xf32> -> vector<64x32xf32>
    %200 = vector.broadcast %162 : vector<1x32xf32> to vector<64x32xf32>
    %201 = arith.mulf %199, %200 : vector<64x32xf32>
    %202 = vector.broadcast %164 : vector<1x32xf32> to vector<64x32xf32>
    %203 = arith.addf %201, %202 : vector<64x32xf32>
    %cst_132 = arith.constant 0.000000e+00 : f32
    %204 = vector.broadcast %cst_132 : f32 to vector<64x32xf32>
    %205 = arith.maximumf %203, %204 : vector<64x32xf32>
    %c0_133 = arith.constant 0 : index
    %c0_134 = arith.constant 0 : index
    %c0_135 = arith.constant 0 : index
    %206 = vector.load %arg8[%c0_133, %c0_134, %c0_135] : memref<1x64x32xf32, #tpu.memory_space<vmem>>, vector<1x64x32xf32>
    %207 = vector.shape_cast %206 : vector<1x64x32xf32> to vector<64x32xf32>
    %208 = vector.shape_cast %205 : vector<64x32xf32> to vector<1x64x32xf32>
    tpu.vector_store %arg8[%c0_133, %c0_134, %c0_135], %208 {strides = array<i32>} : memref<1x64x32xf32, #tpu.memory_space<vmem>>, vector<1x64x32xf32>,
    return
  }
  func.func @transform_0(%arg0: i32) -> (i32, i32, i32) {
    %c0_i32 = arith.constant 0 : i32
    %c0_i32_0 = arith.constant 0 : i32
    %c0_i32_1 = arith.constant 0 : i32
    return %arg0, %c0_i32, %c0_i32_0 : i32, i32, i32
  }
  func.func @transform_1(%arg0: i32) -> (i32, i32) {
    %c0_i32 = arith.constant 0 : i32
    %c0_i32_0 = arith.constant 0 : i32
    %c0_i32_1 = arith.constant 0 : i32
    return %c0_i32, %c0_i32_0 : i32, i32
  }
  func.func @transform_2(%arg0: i32) -> (i32, i32) {
    %c0_i32 = arith.constant 0 : i32
    %c0_i32_0 = arith.constant 0 : i32
    %c0_i32_1 = arith.constant 0 : i32
    return %c0_i32, %c0_i32_0 : i32, i32
  }
  func.func @transform_3(%arg0: i32) -> (i32, i32) {
    %c0_i32 = arith.constant 0 : i32
    %c0_i32_0 = arith.constant 0 : i32
    %c0_i32_1 = arith.constant 0 : i32
    return %c0_i32, %c0_i32_0 : i32, i32
  }
  func.func @transform_4(%arg0: i32) -> (i32, i32, i32) {
    %c0_i32 = arith.constant 0 : i32
    %c0_i32_0 = arith.constant 0 : i32
    %c0_i32_1 = arith.constant 0 : i32
    %c0_i32_2 = arith.constant 0 : i32
    return %c0_i32, %c0_i32_0, %c0_i32_1 : i32, i32, i32
  }
  func.func @transform_5(%arg0: i32) -> (i32, i32, i32) {
    %c0_i32 = arith.constant 0 : i32
    %c0_i32_0 = arith.constant 0 : i32
    %c0_i32_1 = arith.constant 0 : i32
    %c0_i32_2 = arith.constant 0 : i32
    return %c0_i32, %c0_i32_0, %c0_i32_1 : i32, i32, i32
  }
  func.func @transform_6(%arg0: i32) -> (i32, i32, i32) {
    %c0_i32 = arith.constant 0 : i32
    %c0_i32_0 = arith.constant 0 : i32
    %c0_i32_1 = arith.constant 0 : i32
    %c0_i32_2 = arith.constant 0 : i32
    return %c0_i32, %c0_i32_0, %c0_i32_1 : i32, i32, i32
  }
  func.func @transform_7(%arg0: i32) -> (i32, i32, i32) {
    %c0_i32 = arith.constant 0 : i32
    %c0_i32_0 = arith.constant 0 : i32
    %c0_i32_1 = arith.constant 0 : i32
    return %arg0, %c0_i32, %c0_i32_0 : i32, i32, i32
  }
}

module attributes {stable_mosaic.version = 11 : i64} {
  func.func @_block1_head_kernel(%arg0: i32, %arg1: memref<1x16x128xf32, #tpu.memory_space<vmem>>, %arg2: memref<288x64xf32, #tpu.memory_space<vmem>>, %arg3: memref<1x64xf32, #tpu.memory_space<vmem>>, %arg4: memref<1x64xf32, #tpu.memory_space<vmem>>, %arg5: memref<5x576x64xf32, #tpu.memory_space<vmem>>, %arg6: memref<5x1x64xf32, #tpu.memory_space<vmem>>, %arg7: memref<5x1x64xf32, #tpu.memory_space<vmem>>, %arg8: memref<128x64xf32, #tpu.memory_space<vmem>>, %arg9: memref<1x64xf32, #tpu.memory_space<vmem>>, %arg10: memref<1x64xf32, #tpu.memory_space<vmem>>, %arg11: memref<64x64xf32, #tpu.memory_space<vmem>>, %arg12: memref<1x64xf32, #tpu.memory_space<vmem>>, %arg13: memref<1x64xf32, #tpu.memory_space<vmem>>, %arg14: memref<1152x64xf32, #tpu.memory_space<vmem>>, %arg15: memref<1x64xf32, #tpu.memory_space<vmem>>, %arg16: memref<1x64xf32, #tpu.memory_space<vmem>>, %arg17: memref<576x320xf32, #tpu.memory_space<vmem>>, %arg18: memref<1x320xf32, #tpu.memory_space<vmem>>, %arg19: memref<1x320xf32, #tpu.memory_space<vmem>>, %arg20: memref<9x2880xf32, #tpu.memory_space<vmem>>, %arg21: memref<9x1xf32, #tpu.memory_space<vmem>>, %arg22: memref<1x9x16xf32, #tpu.memory_space<vmem>>, %arg23: memref<29x128xf32, #tpu.memory_space<vmem>>, %arg24: memref<29x64xf32, #tpu.memory_space<vmem>>, %arg25: memref<29x128xf32, #tpu.memory_space<vmem>>, %arg26: memref<29x64xf32, #tpu.memory_space<vmem>>, %arg27: memref<29x320xf32, #tpu.memory_space<vmem>>) attributes {dimension_semantics = [#tpu.dimension_semantics<parallel>], iteration_bounds = array<i64: 2>, scalar_prefetch = 0 : i64, scratch_operands = 5 : i64, tpu.core_type = #tpu.core_type<tc>, window_params = [{transform_indices = @transform_0, window_bounds = array<i64: 1, 16, 128>}, {pipeline_mode = #tpu.pipeline_mode<synchronous>, transform_indices = @transform_1, window_bounds = array<i64: 288, 64>}, {pipeline_mode = #tpu.pipeline_mode<synchronous>, transform_indices = @transform_2, window_bounds = array<i64: 1, 64>}, {pipeline_mode = #tpu.pipeline_mode<synchronous>, transform_indices = @transform_3, window_bounds = array<i64: 1, 64>}, {pipeline_mode = #tpu.pipeline_mode<synchronous>, transform_indices = @transform_4, window_bounds = array<i64: 5, 576, 64>}, {pipeline_mode = #tpu.pipeline_mode<synchronous>, transform_indices = @transform_5, window_bounds = array<i64: 5, 1, 64>}, {pipeline_mode = #tpu.pipeline_mode<synchronous>, transform_indices = @transform_6, window_bounds = array<i64: 5, 1, 64>}, {pipeline_mode = #tpu.pipeline_mode<synchronous>, transform_indices = @transform_7, window_bounds = array<i64: 128, 64>}, {pipeline_mode = #tpu.pipeline_mode<synchronous>, transform_indices = @transform_8, window_bounds = array<i64: 1, 64>}, {pipeline_mode = #tpu.pipeline_mode<synchronous>, transform_indices = @transform_9, window_bounds = array<i64: 1, 64>}, {pipeline_mode = #tpu.pipeline_mode<synchronous>, transform_indices = @transform_10, window_bounds = array<i64: 64, 64>}, {pipeline_mode = #tpu.pipeline_mode<synchronous>, transform_indices = @transform_11, window_bounds = array<i64: 1, 64>}, {pipeline_mode = #tpu.pipeline_mode<synchronous>, transform_indices = @transform_12, window_bounds = array<i64: 1, 64>}, {pipeline_mode = #tpu.pipeline_mode<synchronous>, transform_indices = @transform_13, window_bounds = array<i64: 1152, 64>}, {pipeline_mode = #tpu.pipeline_mode<synchronous>, transform_indices = @transform_14, window_bounds = array<i64: 1, 64>}, {pipeline_mode = #tpu.pipeline_mode<synchronous>, transform_indices = @transform_15, window_bounds = array<i64: 1, 64>}, {pipeline_mode = #tpu.pipeline_mode<synchronous>, transform_indices = @transform_16, window_bounds = array<i64: 576, 320>}, {pipeline_mode = #tpu.pipeline_mode<synchronous>, transform_indices = @transform_17, window_bounds = array<i64: 1, 320>}, {pipeline_mode = #tpu.pipeline_mode<synchronous>, transform_indices = @transform_18, window_bounds = array<i64: 1, 320>}, {pipeline_mode = #tpu.pipeline_mode<synchronous>, transform_indices = @transform_19, window_bounds = array<i64: 9, 2880>}, {pipeline_mode = #tpu.pipeline_mode<synchronous>, transform_indices = @transform_20, window_bounds = array<i64: 9, 1>}, {transform_indices = @transform_21, window_bounds = array<i64: 1, 9, 16>}]} {
    %cst = arith.constant 0.000000e+00 : f32
    %0 = vector.broadcast %cst : f32 to vector<8x128xf32>
    %c0 = arith.constant 0 : index
    %c0_0 = arith.constant 0 : index
    %1 = vector.load %arg23[%c0, %c0_0] : memref<29x128xf32, #tpu.memory_space<vmem>>, vector<8x128xf32>
    tpu.vector_store %arg23[%c0, %c0_0], %0 {strides = array<i32>} : memref<29x128xf32, #tpu.memory_space<vmem>>, vector<8x128xf32>,
    %cst_1 = arith.constant 0.000000e+00 : f32
    %2 = vector.broadcast %cst_1 : f32 to vector<8x64xf32>
    %c0_2 = arith.constant 0 : index
    %c0_3 = arith.constant 0 : index
    %3 = vector.load %arg24[%c0_2, %c0_3] : memref<29x64xf32, #tpu.memory_space<vmem>>, vector<8x64xf32>
    tpu.vector_store %arg24[%c0_2, %c0_3], %2 {strides = array<i32>} : memref<29x64xf32, #tpu.memory_space<vmem>>, vector<8x64xf32>,
    %cst_4 = arith.constant 0.000000e+00 : f32
    %4 = vector.broadcast %cst_4 : f32 to vector<5x64xf32>
    %c24 = arith.constant 24 : index
    %c0_5 = arith.constant 0 : index
    %5 = vector.load %arg24[%c24, %c0_5] : memref<29x64xf32, #tpu.memory_space<vmem>>, vector<5x64xf32>
    tpu.vector_store %arg24[%c24, %c0_5], %4 {strides = array<i32>} : memref<29x64xf32, #tpu.memory_space<vmem>>, vector<5x64xf32>,
    %cst_6 = arith.constant 0.000000e+00 : f32
    %6 = vector.broadcast %cst_6 : f32 to vector<8x128xf32>
    %c0_7 = arith.constant 0 : index
    %c0_8 = arith.constant 0 : index
    %7 = vector.load %arg25[%c0_7, %c0_8] : memref<29x128xf32, #tpu.memory_space<vmem>>, vector<8x128xf32>
    tpu.vector_store %arg25[%c0_7, %c0_8], %6 {strides = array<i32>} : memref<29x128xf32, #tpu.memory_space<vmem>>, vector<8x128xf32>,
    %cst_9 = arith.constant 0.000000e+00 : f32
    %8 = vector.broadcast %cst_9 : f32 to vector<5x128xf32>
    %c24_10 = arith.constant 24 : index
    %c0_11 = arith.constant 0 : index
    %9 = vector.load %arg25[%c24_10, %c0_11] : memref<29x128xf32, #tpu.memory_space<vmem>>, vector<5x128xf32>
    tpu.vector_store %arg25[%c24_10, %c0_11], %8 {strides = array<i32>} : memref<29x128xf32, #tpu.memory_space<vmem>>, vector<5x128xf32>,
    %cst_12 = arith.constant 0.000000e+00 : f32
    %10 = vector.broadcast %cst_12 : f32 to vector<8x64xf32>
    %c0_13 = arith.constant 0 : index
    %c0_14 = arith.constant 0 : index
    %11 = vector.load %arg26[%c0_13, %c0_14] : memref<29x64xf32, #tpu.memory_space<vmem>>, vector<8x64xf32>
    tpu.vector_store %arg26[%c0_13, %c0_14], %10 {strides = array<i32>} : memref<29x64xf32, #tpu.memory_space<vmem>>, vector<8x64xf32>,
    %cst_15 = arith.constant 0.000000e+00 : f32
    %12 = vector.broadcast %cst_15 : f32 to vector<5x64xf32>
    %c24_16 = arith.constant 24 : index
    %c0_17 = arith.constant 0 : index
    %13 = vector.load %arg26[%c24_16, %c0_17] : memref<29x64xf32, #tpu.memory_space<vmem>>, vector<5x64xf32>
    tpu.vector_store %arg26[%c24_16, %c0_17], %12 {strides = array<i32>} : memref<29x64xf32, #tpu.memory_space<vmem>>, vector<5x64xf32>,
    %cst_18 = arith.constant 0.000000e+00 : f32
    %14 = vector.broadcast %cst_18 : f32 to vector<8x320xf32>
    %c0_19 = arith.constant 0 : index
    %c0_20 = arith.constant 0 : index
    %15 = vector.load %arg27[%c0_19, %c0_20] : memref<29x320xf32, #tpu.memory_space<vmem>>, vector<8x320xf32>
    tpu.vector_store %arg27[%c0_19, %c0_20], %14 {strides = array<i32>} : memref<29x320xf32, #tpu.memory_space<vmem>>, vector<8x320xf32>,
    %cst_21 = arith.constant 0.000000e+00 : f32
    %16 = vector.broadcast %cst_21 : f32 to vector<5x320xf32>
    %c24_22 = arith.constant 24 : index
    %c0_23 = arith.constant 0 : index
    %17 = vector.load %arg27[%c24_22, %c0_23] : memref<29x320xf32, #tpu.memory_space<vmem>>, vector<5x320xf32>
    tpu.vector_store %arg27[%c24_22, %c0_23], %16 {strides = array<i32>} : memref<29x320xf32, #tpu.memory_space<vmem>>, vector<5x320xf32>,
    %18 = tpu.iota {dimensions = array<i32: 0>} : vector<16x1xi32>
    %c4_i32 = arith.constant 4 : i32
    %c0_i32 = arith.constant 0 : i32
    %19 = arith.cmpi eq, %c4_i32, %c0_i32 : i32
    %c1_i32 = arith.constant 1 : i32
    %20 = arith.select %19, %c1_i32, %c4_i32 : i32
    %21 = vector.broadcast %20 : i32 to vector<16x1xi32>
    %22 = arith.remsi %18, %21 : vector<16x1xi32>
    %c0_i32_24 = arith.constant 0 : i32
    %23 = vector.broadcast %c0_i32_24 : i32 to vector<16x1xi32>
    %24 = arith.cmpi ne, %22, %23 : vector<16x1xi32>
    %c0_i32_25 = arith.constant 0 : i32
    %25 = vector.broadcast %c0_i32_25 : i32 to vector<16x1xi32>
    %26 = arith.cmpi slt, %22, %25 : vector<16x1xi32>
    %c0_i32_26 = arith.constant 0 : i32
    %27 = arith.cmpi slt, %20, %c0_i32_26 : i32
    %28 = vector.broadcast %27 : i1 to vector<16x1xi1>
    %29 = vector.broadcast %28 : vector<16x1xi1> to vector<16x1xi1>
    %30 = arith.xori %26, %29 : vector<16x1xi1>
    %31 = arith.andi %30, %24 : vector<16x1xi1>
    %32 = vector.broadcast %20 : i32 to vector<16x1xi32>
    %33 = arith.addi %22, %32 : vector<16x1xi32>
    %34 = arith.select %31, %33, %22 : vector<16x1xi1>, vector<16x1xi32>
    %c0_i32_27 = arith.constant 0 : i32
    %35 = vector.broadcast %c0_i32_27 : i32 to vector<16x1xi32>
    %36 = arith.cmpi ne, %34, %35 : vector<16x1xi32>
    %c3_i32 = arith.constant 3 : i32
    %37 = vector.broadcast %c3_i32 : i32 to vector<16x1xi32>
    %38 = arith.cmpi ne, %34, %37 : vector<16x1xi32>
    %c0_28 = arith.constant 0 : index
    %c0_29 = arith.constant 0 : index
    %c0_30 = arith.constant 0 : index
    %39 = vector.load %arg1[%c0_28, %c0_29, %c0_30] : memref<1x16x128xf32, #tpu.memory_space<vmem>>, vector<1x16x128xf32>
    %40 = vector.shape_cast %39 : vector<1x16x128xf32> to vector<16x128xf32>
    %c8 = arith.constant 8 : index
    %c0_31 = arith.constant 0 : index
    %41 = vector.load %arg23[%c8, %c0_31] : memref<29x128xf32, #tpu.memory_space<vmem>>, vector<16x128xf32>
    tpu.vector_store %arg23[%c8, %c0_31], %40 {strides = array<i32>} : memref<29x128xf32, #tpu.memory_space<vmem>>, vector<16x128xf32>,
    %c0_32 = arith.constant 0 : index
    %c0_33 = arith.constant 0 : index
    %42 = vector.load %arg2[%c0_32, %c0_33] : memref<288x64xf32, #tpu.memory_space<vmem>>, vector<288x64xf32>
    %c0_34 = arith.constant 0 : index
    %c0_35 = arith.constant 0 : index
    %43 = vector.load %arg3[%c0_34, %c0_35] : memref<1x64xf32, #tpu.memory_space<vmem>>, vector<1x64xf32>
    %c0_36 = arith.constant 0 : index
    %c0_37 = arith.constant 0 : index
    %44 = vector.load %arg4[%c0_36, %c0_37] : memref<1x64xf32, #tpu.memory_space<vmem>>, vector<1x64xf32>
    %c8_38 = arith.constant 8 : index
    %c0_39 = arith.constant 0 : index
    %45 = vector.load %arg23[%c8_38, %c0_39] : memref<29x128xf32, #tpu.memory_space<vmem>>, vector<16x128xf32>
    %c7 = arith.constant 7 : index
    %c0_40 = arith.constant 0 : index
    %46 = vector.load %arg23[%c7, %c0_40] : memref<29x128xf32, #tpu.memory_space<vmem>>, vector<16x128xf32>
    %cst_41 = arith.constant 0.000000e+00 : f32
    %47 = vector.shape_cast %36 : vector<16x1xi1> to vector<16x1xi1>
    %48 = vector.broadcast %47 : vector<16x1xi1> to vector<16x128xi1>
    %49 = vector.broadcast %cst_41 : f32 to vector<16x128xf32>
    %50 = arith.select %48, %46, %49 : vector<16x128xi1>, vector<16x128xf32>
    %c4 = arith.constant 4 : index
    %c0_42 = arith.constant 0 : index
    %51 = vector.load %arg23[%c4, %c0_42] : memref<29x128xf32, #tpu.memory_space<vmem>>, vector<16x128xf32>
    %c3 = arith.constant 3 : index
    %c0_43 = arith.constant 0 : index
    %52 = vector.load %arg23[%c3, %c0_43] : memref<29x128xf32, #tpu.memory_space<vmem>>, vector<16x128xf32>
    %cst_44 = arith.constant 0.000000e+00 : f32
    %53 = vector.shape_cast %36 : vector<16x1xi1> to vector<16x1xi1>
    %54 = vector.broadcast %53 : vector<16x1xi1> to vector<16x128xi1>
    %55 = vector.broadcast %cst_44 : f32 to vector<16x128xf32>
    %56 = arith.select %54, %52, %55 : vector<16x128xi1>, vector<16x128xf32>
    %57 = vector.extract_strided_slice %56 {offsets = [0, 96], sizes = [16, 32], strides = [1, 1]} : vector<16x128xf32> to vector<16x32xf32>
    %58 = vector.extract_strided_slice %51 {offsets = [0, 64], sizes = [16, 32], strides = [1, 1]} : vector<16x128xf32> to vector<16x32xf32>
    %59 = vector.extract_strided_slice %51 {offsets = [0, 96], sizes = [16, 32], strides = [1, 1]} : vector<16x128xf32> to vector<16x32xf32>
    %60 = vector.extract_strided_slice %50 {offsets = [0, 32], sizes = [16, 32], strides = [1, 1]} : vector<16x128xf32> to vector<16x32xf32>
    %61 = vector.extract_strided_slice %45 {offsets = [0, 0], sizes = [16, 32], strides = [1, 1]} : vector<16x128xf32> to vector<16x32xf32>
    %62 = vector.extract_strided_slice %45 {offsets = [0, 32], sizes = [16, 32], strides = [1, 1]} : vector<16x128xf32> to vector<16x32xf32>
    %63 = vector.extract_strided_slice %50 {offsets = [0, 96], sizes = [16, 32], strides = [1, 1]} : vector<16x128xf32> to vector<16x32xf32>
    %64 = vector.extract_strided_slice %45 {offsets = [0, 64], sizes = [16, 32], strides = [1, 1]} : vector<16x128xf32> to vector<16x32xf32>
    %65 = vector.extract_strided_slice %45 {offsets = [0, 96], sizes = [16, 32], strides = [1, 1]} : vector<16x128xf32> to vector<16x32xf32>
    %66 = tpu.concatenate %57, %58, %59, %60, %61, %62, %63, %64, %65 in 1 : vector<16x32xf32>, vector<16x32xf32>, vector<16x32xf32>, vector<16x32xf32>, vector<16x32xf32>, vector<16x32xf32>, vector<16x32xf32>, vector<16x32xf32>, vector<16x32xf32> -> vector<16x288xf32>
    %cst_45 = arith.constant dense<0.000000e+00> : vector<16x64xf32>
    %67 = tpu.matmul %66, %42, %cst_45 {dimension_numbers = #tpu.dot_dimension_numbers<[1], [0], [0], [1], [0, 0, 1, 1], [], []>} : vector<16x288xf32>, vector<288x64xf32>, vector<16x64xf32> -> vector<16x64xf32>
    %68 = vector.broadcast %43 : vector<1x64xf32> to vector<16x64xf32>
    %69 = arith.mulf %67, %68 : vector<16x64xf32>
    %70 = vector.broadcast %44 : vector<1x64xf32> to vector<16x64xf32>
    %71 = arith.addf %69, %70 : vector<16x64xf32>
    %cst_46 = arith.constant 0.000000e+00 : f32
    %72 = vector.broadcast %cst_46 : f32 to vector<16x64xf32>
    %73 = arith.maximumf %71, %72 : vector<16x64xf32>
    %c8_47 = arith.constant 8 : index
    %c0_48 = arith.constant 0 : index
    %74 = vector.load %arg24[%c8_47, %c0_48] : memref<29x64xf32, #tpu.memory_space<vmem>>, vector<16x64xf32>
    tpu.vector_store %arg24[%c8_47, %c0_48], %73 {strides = array<i32>} : memref<29x64xf32, #tpu.memory_space<vmem>>, vector<16x64xf32>,
    %c0_49 = arith.constant 0 : index
    %c0_50 = arith.constant 0 : index
    %c0_51 = arith.constant 0 : index
    %75 = vector.load %arg5[%c0_49, %c0_50, %c0_51] : memref<5x576x64xf32, #tpu.memory_space<vmem>>, vector<1x576x64xf32>
    %76 = vector.shape_cast %75 : vector<1x576x64xf32> to vector<576x64xf32>
    %c0_52 = arith.constant 0 : index
    %c0_53 = arith.constant 0 : index
    %c0_54 = arith.constant 0 : index
    %77 = vector.load %arg6[%c0_52, %c0_53, %c0_54] : memref<5x1x64xf32, #tpu.memory_space<vmem>>, vector<1x1x64xf32>
    %78 = vector.shape_cast %77 : vector<1x1x64xf32> to vector<1x64xf32>
    %c0_55 = arith.constant 0 : index
    %c0_56 = arith.constant 0 : index
    %c0_57 = arith.constant 0 : index
    %79 = vector.load %arg7[%c0_55, %c0_56, %c0_57] : memref<5x1x64xf32, #tpu.memory_space<vmem>>, vector<1x1x64xf32>
    %80 = vector.shape_cast %79 : vector<1x1x64xf32> to vector<1x64xf32>
    %c3_58 = arith.constant 3 : index
    %c0_59 = arith.constant 0 : index
    %81 = vector.load %arg24[%c3_58, %c0_59] : memref<29x64xf32, #tpu.memory_space<vmem>>, vector<16x64xf32>
    %cst_60 = arith.constant 0.000000e+00 : f32
    %82 = vector.shape_cast %36 : vector<16x1xi1> to vector<16x1xi1>
    %83 = vector.broadcast %82 : vector<16x1xi1> to vector<16x64xi1>
    %84 = vector.broadcast %cst_60 : f32 to vector<16x64xf32>
    %85 = arith.select %83, %81, %84 : vector<16x64xi1>, vector<16x64xf32>
    %c4_61 = arith.constant 4 : index
    %c0_62 = arith.constant 0 : index
    %86 = vector.load %arg24[%c4_61, %c0_62] : memref<29x64xf32, #tpu.memory_space<vmem>>, vector<16x64xf32>
    %c5 = arith.constant 5 : index
    %c0_63 = arith.constant 0 : index
    %87 = vector.load %arg24[%c5, %c0_63] : memref<29x64xf32, #tpu.memory_space<vmem>>, vector<16x64xf32>
    %cst_64 = arith.constant 0.000000e+00 : f32
    %88 = vector.shape_cast %38 : vector<16x1xi1> to vector<16x1xi1>
    %89 = vector.broadcast %88 : vector<16x1xi1> to vector<16x64xi1>
    %90 = vector.broadcast %cst_64 : f32 to vector<16x64xf32>
    %91 = arith.select %89, %87, %90 : vector<16x64xi1>, vector<16x64xf32>
    %c7_65 = arith.constant 7 : index
    %c0_66 = arith.constant 0 : index
    %92 = vector.load %arg24[%c7_65, %c0_66] : memref<29x64xf32, #tpu.memory_space<vmem>>, vector<16x64xf32>
    %cst_67 = arith.constant 0.000000e+00 : f32
    %93 = vector.shape_cast %36 : vector<16x1xi1> to vector<16x1xi1>
    %94 = vector.broadcast %93 : vector<16x1xi1> to vector<16x64xi1>
    %95 = vector.broadcast %cst_67 : f32 to vector<16x64xf32>
    %96 = arith.select %94, %92, %95 : vector<16x64xi1>, vector<16x64xf32>
    %c8_68 = arith.constant 8 : index
    %c0_69 = arith.constant 0 : index
    %97 = vector.load %arg24[%c8_68, %c0_69] : memref<29x64xf32, #tpu.memory_space<vmem>>, vector<16x64xf32>
    %c9 = arith.constant 9 : index
    %c0_70 = arith.constant 0 : index
    %98 = vector.load %arg24[%c9, %c0_70] : memref<29x64xf32, #tpu.memory_space<vmem>>, vector<16x64xf32>
    %cst_71 = arith.constant 0.000000e+00 : f32
    %99 = vector.shape_cast %38 : vector<16x1xi1> to vector<16x1xi1>
    %100 = vector.broadcast %99 : vector<16x1xi1> to vector<16x64xi1>
    %101 = vector.broadcast %cst_71 : f32 to vector<16x64xf32>
    %102 = arith.select %100, %98, %101 : vector<16x64xi1>, vector<16x64xf32>
    %c11 = arith.constant 11 : index
    %c0_72 = arith.constant 0 : index
    %103 = vector.load %arg24[%c11, %c0_72] : memref<29x64xf32, #tpu.memory_space<vmem>>, vector<16x64xf32>
    %cst_73 = arith.constant 0.000000e+00 : f32
    %104 = vector.shape_cast %36 : vector<16x1xi1> to vector<16x1xi1>
    %105 = vector.broadcast %104 : vector<16x1xi1> to vector<16x64xi1>
    %106 = vector.broadcast %cst_73 : f32 to vector<16x64xf32>
    %107 = arith.select %105, %103, %106 : vector<16x64xi1>, vector<16x64xf32>
    %c12 = arith.constant 12 : index
    %c0_74 = arith.constant 0 : index
    %108 = vector.load %arg24[%c12, %c0_74] : memref<29x64xf32, #tpu.memory_space<vmem>>, vector<16x64xf32>
    %c13 = arith.constant 13 : index
    %c0_75 = arith.constant 0 : index
    %109 = vector.load %arg24[%c13, %c0_75] : memref<29x64xf32, #tpu.memory_space<vmem>>, vector<16x64xf32>
    %cst_76 = arith.constant 0.000000e+00 : f32
    %110 = vector.shape_cast %38 : vector<16x1xi1> to vector<16x1xi1>
    %111 = vector.broadcast %110 : vector<16x1xi1> to vector<16x64xi1>
    %112 = vector.broadcast %cst_76 : f32 to vector<16x64xf32>
    %113 = arith.select %111, %109, %112 : vector<16x64xi1>, vector<16x64xf32>
    %114 = tpu.concatenate %85, %86, %91, %96, %97, %102, %107, %108, %113 in 1 : vector<16x64xf32>, vector<16x64xf32>, vector<16x64xf32>, vector<16x64xf32>, vector<16x64xf32>, vector<16x64xf32>, vector<16x64xf32>, vector<16x64xf32>, vector<16x64xf32> -> vector<16x576xf32>
    %cst_77 = arith.constant dense<0.000000e+00> : vector<16x64xf32>
    %115 = tpu.matmul %114, %76, %cst_77 {dimension_numbers = #tpu.dot_dimension_numbers<[1], [0], [0], [1], [0, 0, 1, 1], [], []>} : vector<16x576xf32>, vector<576x64xf32>, vector<16x64xf32> -> vector<16x64xf32>
    %116 = vector.broadcast %78 : vector<1x64xf32> to vector<16x64xf32>
    %117 = arith.mulf %115, %116 : vector<16x64xf32>
    %118 = vector.broadcast %80 : vector<1x64xf32> to vector<16x64xf32>
    %119 = arith.addf %117, %118 : vector<16x64xf32>
    %cst_78 = arith.constant 0.000000e+00 : f32
    %120 = vector.broadcast %cst_78 : f32 to vector<16x64xf32>
    %121 = arith.maximumf %119, %120 : vector<16x64xf32>
    %c8_79 = arith.constant 8 : index
    %c0_80 = arith.constant 0 : index
    %122 = vector.load %arg24[%c8_79, %c0_80] : memref<29x64xf32, #tpu.memory_space<vmem>>, vector<16x64xf32>
    tpu.vector_store %arg24[%c8_79, %c0_80], %121 {strides = array<i32>} : memref<29x64xf32, #tpu.memory_space<vmem>>, vector<16x64xf32>,
    %c1 = arith.constant 1 : index
    %c0_81 = arith.constant 0 : index
    %c0_82 = arith.constant 0 : index
    %123 = vector.load %arg5[%c1, %c0_81, %c0_82] : memref<5x576x64xf32, #tpu.memory_space<vmem>>, vector<1x576x64xf32>
    %124 = vector.shape_cast %123 : vector<1x576x64xf32> to vector<576x64xf32>
    %c1_83 = arith.constant 1 : index
    %c0_84 = arith.constant 0 : index
    %c0_85 = arith.constant 0 : index
    %125 = vector.load %arg6[%c1_83, %c0_84, %c0_85] : memref<5x1x64xf32, #tpu.memory_space<vmem>>, vector<1x1x64xf32>
    %126 = vector.shape_cast %125 : vector<1x1x64xf32> to vector<1x64xf32>
    %c1_86 = arith.constant 1 : index
    %c0_87 = arith.constant 0 : index
    %c0_88 = arith.constant 0 : index
    %127 = vector.load %arg7[%c1_86, %c0_87, %c0_88] : memref<5x1x64xf32, #tpu.memory_space<vmem>>, vector<1x1x64xf32>
    %128 = vector.shape_cast %127 : vector<1x1x64xf32> to vector<1x64xf32>
    %c3_89 = arith.constant 3 : index
    %c0_90 = arith.constant 0 : index
    %129 = vector.load %arg24[%c3_89, %c0_90] : memref<29x64xf32, #tpu.memory_space<vmem>>, vector<16x64xf32>
    %cst_91 = arith.constant 0.000000e+00 : f32
    %130 = vector.shape_cast %36 : vector<16x1xi1> to vector<16x1xi1>
    %131 = vector.broadcast %130 : vector<16x1xi1> to vector<16x64xi1>
    %132 = vector.broadcast %cst_91 : f32 to vector<16x64xf32>
    %133 = arith.select %131, %129, %132 : vector<16x64xi1>, vector<16x64xf32>
    %c4_92 = arith.constant 4 : index
    %c0_93 = arith.constant 0 : index
    %134 = vector.load %arg24[%c4_92, %c0_93] : memref<29x64xf32, #tpu.memory_space<vmem>>, vector<16x64xf32>
    %c5_94 = arith.constant 5 : index
    %c0_95 = arith.constant 0 : index
    %135 = vector.load %arg24[%c5_94, %c0_95] : memref<29x64xf32, #tpu.memory_space<vmem>>, vector<16x64xf32>
    %cst_96 = arith.constant 0.000000e+00 : f32
    %136 = vector.shape_cast %38 : vector<16x1xi1> to vector<16x1xi1>
    %137 = vector.broadcast %136 : vector<16x1xi1> to vector<16x64xi1>
    %138 = vector.broadcast %cst_96 : f32 to vector<16x64xf32>
    %139 = arith.select %137, %135, %138 : vector<16x64xi1>, vector<16x64xf32>
    %c7_97 = arith.constant 7 : index
    %c0_98 = arith.constant 0 : index
    %140 = vector.load %arg24[%c7_97, %c0_98] : memref<29x64xf32, #tpu.memory_space<vmem>>, vector<16x64xf32>
    %cst_99 = arith.constant 0.000000e+00 : f32
    %141 = vector.shape_cast %36 : vector<16x1xi1> to vector<16x1xi1>
    %142 = vector.broadcast %141 : vector<16x1xi1> to vector<16x64xi1>
    %143 = vector.broadcast %cst_99 : f32 to vector<16x64xf32>
    %144 = arith.select %142, %140, %143 : vector<16x64xi1>, vector<16x64xf32>
    %c8_100 = arith.constant 8 : index
    %c0_101 = arith.constant 0 : index
    %145 = vector.load %arg24[%c8_100, %c0_101] : memref<29x64xf32, #tpu.memory_space<vmem>>, vector<16x64xf32>
    %c9_102 = arith.constant 9 : index
    %c0_103 = arith.constant 0 : index
    %146 = vector.load %arg24[%c9_102, %c0_103] : memref<29x64xf32, #tpu.memory_space<vmem>>, vector<16x64xf32>
    %cst_104 = arith.constant 0.000000e+00 : f32
    %147 = vector.shape_cast %38 : vector<16x1xi1> to vector<16x1xi1>
    %148 = vector.broadcast %147 : vector<16x1xi1> to vector<16x64xi1>
    %149 = vector.broadcast %cst_104 : f32 to vector<16x64xf32>
    %150 = arith.select %148, %146, %149 : vector<16x64xi1>, vector<16x64xf32>
    %c11_105 = arith.constant 11 : index
    %c0_106 = arith.constant 0 : index
    %151 = vector.load %arg24[%c11_105, %c0_106] : memref<29x64xf32, #tpu.memory_space<vmem>>, vector<16x64xf32>
    %cst_107 = arith.constant 0.000000e+00 : f32
    %152 = vector.shape_cast %36 : vector<16x1xi1> to vector<16x1xi1>
    %153 = vector.broadcast %152 : vector<16x1xi1> to vector<16x64xi1>
    %154 = vector.broadcast %cst_107 : f32 to vector<16x64xf32>
    %155 = arith.select %153, %151, %154 : vector<16x64xi1>, vector<16x64xf32>
    %c12_108 = arith.constant 12 : index
    %c0_109 = arith.constant 0 : index
    %156 = vector.load %arg24[%c12_108, %c0_109] : memref<29x64xf32, #tpu.memory_space<vmem>>, vector<16x64xf32>
    %c13_110 = arith.constant 13 : index
    %c0_111 = arith.constant 0 : index
    %157 = vector.load %arg24[%c13_110, %c0_111] : memref<29x64xf32, #tpu.memory_space<vmem>>, vector<16x64xf32>
    %cst_112 = arith.constant 0.000000e+00 : f32
    %158 = vector.shape_cast %38 : vector<16x1xi1> to vector<16x1xi1>
    %159 = vector.broadcast %158 : vector<16x1xi1> to vector<16x64xi1>
    %160 = vector.broadcast %cst_112 : f32 to vector<16x64xf32>
    %161 = arith.select %159, %157, %160 : vector<16x64xi1>, vector<16x64xf32>
    %162 = tpu.concatenate %133, %134, %139, %144, %145, %150, %155, %156, %161 in 1 : vector<16x64xf32>, vector<16x64xf32>, vector<16x64xf32>, vector<16x64xf32>, vector<16x64xf32>, vector<16x64xf32>, vector<16x64xf32>, vector<16x64xf32>, vector<16x64xf32> -> vector<16x576xf32>
    %cst_113 = arith.constant dense<0.000000e+00> : vector<16x64xf32>
    %163 = tpu.matmul %162, %124, %cst_113 {dimension_numbers = #tpu.dot_dimension_numbers<[1], [0], [0], [1], [0, 0, 1, 1], [], []>} : vector<16x576xf32>, vector<576x64xf32>, vector<16x64xf32> -> vector<16x64xf32>
    %164 = vector.broadcast %126 : vector<1x64xf32> to vector<16x64xf32>
    %165 = arith.mulf %163, %164 : vector<16x64xf32>
    %166 = vector.broadcast %128 : vector<1x64xf32> to vector<16x64xf32>
    %167 = arith.addf %165, %166 : vector<16x64xf32>
    %cst_114 = arith.constant 0.000000e+00 : f32
    %168 = vector.broadcast %cst_114 : f32 to vector<16x64xf32>
    %169 = arith.maximumf %167, %168 : vector<16x64xf32>
    %c8_115 = arith.constant 8 : index
    %c0_116 = arith.constant 0 : index
    %170 = vector.load %arg24[%c8_115, %c0_116] : memref<29x64xf32, #tpu.memory_space<vmem>>, vector<16x64xf32>
    tpu.vector_store %arg24[%c8_115, %c0_116], %169 {strides = array<i32>} : memref<29x64xf32, #tpu.memory_space<vmem>>, vector<16x64xf32>,
    %c2 = arith.constant 2 : index
    %c0_117 = arith.constant 0 : index
    %c0_118 = arith.constant 0 : index
    %171 = vector.load %arg5[%c2, %c0_117, %c0_118] : memref<5x576x64xf32, #tpu.memory_space<vmem>>, vector<1x576x64xf32>
    %172 = vector.shape_cast %171 : vector<1x576x64xf32> to vector<576x64xf32>
    %c2_119 = arith.constant 2 : index
    %c0_120 = arith.constant 0 : index
    %c0_121 = arith.constant 0 : index
    %173 = vector.load %arg6[%c2_119, %c0_120, %c0_121] : memref<5x1x64xf32, #tpu.memory_space<vmem>>, vector<1x1x64xf32>
    %174 = vector.shape_cast %173 : vector<1x1x64xf32> to vector<1x64xf32>
    %c2_122 = arith.constant 2 : index
    %c0_123 = arith.constant 0 : index
    %c0_124 = arith.constant 0 : index
    %175 = vector.load %arg7[%c2_122, %c0_123, %c0_124] : memref<5x1x64xf32, #tpu.memory_space<vmem>>, vector<1x1x64xf32>
    %176 = vector.shape_cast %175 : vector<1x1x64xf32> to vector<1x64xf32>
    %c3_125 = arith.constant 3 : index
    %c0_126 = arith.constant 0 : index
    %177 = vector.load %arg24[%c3_125, %c0_126] : memref<29x64xf32, #tpu.memory_space<vmem>>, vector<16x64xf32>
    %cst_127 = arith.constant 0.000000e+00 : f32
    %178 = vector.shape_cast %36 : vector<16x1xi1> to vector<16x1xi1>
    %179 = vector.broadcast %178 : vector<16x1xi1> to vector<16x64xi1>
    %180 = vector.broadcast %cst_127 : f32 to vector<16x64xf32>
    %181 = arith.select %179, %177, %180 : vector<16x64xi1>, vector<16x64xf32>
    %c4_128 = arith.constant 4 : index
    %c0_129 = arith.constant 0 : index
    %182 = vector.load %arg24[%c4_128, %c0_129] : memref<29x64xf32, #tpu.memory_space<vmem>>, vector<16x64xf32>
    %c5_130 = arith.constant 5 : index
    %c0_131 = arith.constant 0 : index
    %183 = vector.load %arg24[%c5_130, %c0_131] : memref<29x64xf32, #tpu.memory_space<vmem>>, vector<16x64xf32>
    %cst_132 = arith.constant 0.000000e+00 : f32
    %184 = vector.shape_cast %38 : vector<16x1xi1> to vector<16x1xi1>
    %185 = vector.broadcast %184 : vector<16x1xi1> to vector<16x64xi1>
    %186 = vector.broadcast %cst_132 : f32 to vector<16x64xf32>
    %187 = arith.select %185, %183, %186 : vector<16x64xi1>, vector<16x64xf32>
    %c7_133 = arith.constant 7 : index
    %c0_134 = arith.constant 0 : index
    %188 = vector.load %arg24[%c7_133, %c0_134] : memref<29x64xf32, #tpu.memory_space<vmem>>, vector<16x64xf32>
    %cst_135 = arith.constant 0.000000e+00 : f32
    %189 = vector.shape_cast %36 : vector<16x1xi1> to vector<16x1xi1>
    %190 = vector.broadcast %189 : vector<16x1xi1> to vector<16x64xi1>
    %191 = vector.broadcast %cst_135 : f32 to vector<16x64xf32>
    %192 = arith.select %190, %188, %191 : vector<16x64xi1>, vector<16x64xf32>
    %c8_136 = arith.constant 8 : index
    %c0_137 = arith.constant 0 : index
    %193 = vector.load %arg24[%c8_136, %c0_137] : memref<29x64xf32, #tpu.memory_space<vmem>>, vector<16x64xf32>
    %c9_138 = arith.constant 9 : index
    %c0_139 = arith.constant 0 : index
    %194 = vector.load %arg24[%c9_138, %c0_139] : memref<29x64xf32, #tpu.memory_space<vmem>>, vector<16x64xf32>
    %cst_140 = arith.constant 0.000000e+00 : f32
    %195 = vector.shape_cast %38 : vector<16x1xi1> to vector<16x1xi1>
    %196 = vector.broadcast %195 : vector<16x1xi1> to vector<16x64xi1>
    %197 = vector.broadcast %cst_140 : f32 to vector<16x64xf32>
    %198 = arith.select %196, %194, %197 : vector<16x64xi1>, vector<16x64xf32>
    %c11_141 = arith.constant 11 : index
    %c0_142 = arith.constant 0 : index
    %199 = vector.load %arg24[%c11_141, %c0_142] : memref<29x64xf32, #tpu.memory_space<vmem>>, vector<16x64xf32>
    %cst_143 = arith.constant 0.000000e+00 : f32
    %200 = vector.shape_cast %36 : vector<16x1xi1> to vector<16x1xi1>
    %201 = vector.broadcast %200 : vector<16x1xi1> to vector<16x64xi1>
    %202 = vector.broadcast %cst_143 : f32 to vector<16x64xf32>
    %203 = arith.select %201, %199, %202 : vector<16x64xi1>, vector<16x64xf32>
    %c12_144 = arith.constant 12 : index
    %c0_145 = arith.constant 0 : index
    %204 = vector.load %arg24[%c12_144, %c0_145] : memref<29x64xf32, #tpu.memory_space<vmem>>, vector<16x64xf32>
    %c13_146 = arith.constant 13 : index
    %c0_147 = arith.constant 0 : index
    %205 = vector.load %arg24[%c13_146, %c0_147] : memref<29x64xf32, #tpu.memory_space<vmem>>, vector<16x64xf32>
    %cst_148 = arith.constant 0.000000e+00 : f32
    %206 = vector.shape_cast %38 : vector<16x1xi1> to vector<16x1xi1>
    %207 = vector.broadcast %206 : vector<16x1xi1> to vector<16x64xi1>
    %208 = vector.broadcast %cst_148 : f32 to vector<16x64xf32>
    %209 = arith.select %207, %205, %208 : vector<16x64xi1>, vector<16x64xf32>
    %210 = tpu.concatenate %181, %182, %187, %192, %193, %198, %203, %204, %209 in 1 : vector<16x64xf32>, vector<16x64xf32>, vector<16x64xf32>, vector<16x64xf32>, vector<16x64xf32>, vector<16x64xf32>, vector<16x64xf32>, vector<16x64xf32>, vector<16x64xf32> -> vector<16x576xf32>
    %cst_149 = arith.constant dense<0.000000e+00> : vector<16x64xf32>
    %211 = tpu.matmul %210, %172, %cst_149 {dimension_numbers = #tpu.dot_dimension_numbers<[1], [0], [0], [1], [0, 0, 1, 1], [], []>} : vector<16x576xf32>, vector<576x64xf32>, vector<16x64xf32> -> vector<16x64xf32>
    %212 = vector.broadcast %174 : vector<1x64xf32> to vector<16x64xf32>
    %213 = arith.mulf %211, %212 : vector<16x64xf32>
    %214 = vector.broadcast %176 : vector<1x64xf32> to vector<16x64xf32>
    %215 = arith.addf %213, %214 : vector<16x64xf32>
    %cst_150 = arith.constant 0.000000e+00 : f32
    %216 = vector.broadcast %cst_150 : f32 to vector<16x64xf32>
    %217 = arith.maximumf %215, %216 : vector<16x64xf32>
    %c8_151 = arith.constant 8 : index
    %c0_152 = arith.constant 0 : index
    %218 = vector.load %arg24[%c8_151, %c0_152] : memref<29x64xf32, #tpu.memory_space<vmem>>, vector<16x64xf32>
    tpu.vector_store %arg24[%c8_151, %c0_152], %217 {strides = array<i32>} : memref<29x64xf32, #tpu.memory_space<vmem>>, vector<16x64xf32>,
    %c3_153 = arith.constant 3 : index
    %c0_154 = arith.constant 0 : index
    %c0_155 = arith.constant 0 : index
    %219 = vector.load %arg5[%c3_153, %c0_154, %c0_155] : memref<5x576x64xf32, #tpu.memory_space<vmem>>, vector<1x576x64xf32>
    %220 = vector.shape_cast %219 : vector<1x576x64xf32> to vector<576x64xf32>
    %c3_156 = arith.constant 3 : index
    %c0_157 = arith.constant 0 : index
    %c0_158 = arith.constant 0 : index
    %221 = vector.load %arg6[%c3_156, %c0_157, %c0_158] : memref<5x1x64xf32, #tpu.memory_space<vmem>>, vector<1x1x64xf32>
    %222 = vector.shape_cast %221 : vector<1x1x64xf32> to vector<1x64xf32>
    %c3_159 = arith.constant 3 : index
    %c0_160 = arith.constant 0 : index
    %c0_161 = arith.constant 0 : index
    %223 = vector.load %arg7[%c3_159, %c0_160, %c0_161] : memref<5x1x64xf32, #tpu.memory_space<vmem>>, vector<1x1x64xf32>
    %224 = vector.shape_cast %223 : vector<1x1x64xf32> to vector<1x64xf32>
    %c3_162 = arith.constant 3 : index
    %c0_163 = arith.constant 0 : index
    %225 = vector.load %arg24[%c3_162, %c0_163] : memref<29x64xf32, #tpu.memory_space<vmem>>, vector<16x64xf32>
    %cst_164 = arith.constant 0.000000e+00 : f32
    %226 = vector.shape_cast %36 : vector<16x1xi1> to vector<16x1xi1>
    %227 = vector.broadcast %226 : vector<16x1xi1> to vector<16x64xi1>
    %228 = vector.broadcast %cst_164 : f32 to vector<16x64xf32>
    %229 = arith.select %227, %225, %228 : vector<16x64xi1>, vector<16x64xf32>
    %c4_165 = arith.constant 4 : index
    %c0_166 = arith.constant 0 : index
    %230 = vector.load %arg24[%c4_165, %c0_166] : memref<29x64xf32, #tpu.memory_space<vmem>>, vector<16x64xf32>
    %c5_167 = arith.constant 5 : index
    %c0_168 = arith.constant 0 : index
    %231 = vector.load %arg24[%c5_167, %c0_168] : memref<29x64xf32, #tpu.memory_space<vmem>>, vector<16x64xf32>
    %cst_169 = arith.constant 0.000000e+00 : f32
    %232 = vector.shape_cast %38 : vector<16x1xi1> to vector<16x1xi1>
    %233 = vector.broadcast %232 : vector<16x1xi1> to vector<16x64xi1>
    %234 = vector.broadcast %cst_169 : f32 to vector<16x64xf32>
    %235 = arith.select %233, %231, %234 : vector<16x64xi1>, vector<16x64xf32>
    %c7_170 = arith.constant 7 : index
    %c0_171 = arith.constant 0 : index
    %236 = vector.load %arg24[%c7_170, %c0_171] : memref<29x64xf32, #tpu.memory_space<vmem>>, vector<16x64xf32>
    %cst_172 = arith.constant 0.000000e+00 : f32
    %237 = vector.shape_cast %36 : vector<16x1xi1> to vector<16x1xi1>
    %238 = vector.broadcast %237 : vector<16x1xi1> to vector<16x64xi1>
    %239 = vector.broadcast %cst_172 : f32 to vector<16x64xf32>
    %240 = arith.select %238, %236, %239 : vector<16x64xi1>, vector<16x64xf32>
    %c8_173 = arith.constant 8 : index
    %c0_174 = arith.constant 0 : index
    %241 = vector.load %arg24[%c8_173, %c0_174] : memref<29x64xf32, #tpu.memory_space<vmem>>, vector<16x64xf32>
    %c9_175 = arith.constant 9 : index
    %c0_176 = arith.constant 0 : index
    %242 = vector.load %arg24[%c9_175, %c0_176] : memref<29x64xf32, #tpu.memory_space<vmem>>, vector<16x64xf32>
    %cst_177 = arith.constant 0.000000e+00 : f32
    %243 = vector.shape_cast %38 : vector<16x1xi1> to vector<16x1xi1>
    %244 = vector.broadcast %243 : vector<16x1xi1> to vector<16x64xi1>
    %245 = vector.broadcast %cst_177 : f32 to vector<16x64xf32>
    %246 = arith.select %244, %242, %245 : vector<16x64xi1>, vector<16x64xf32>
    %c11_178 = arith.constant 11 : index
    %c0_179 = arith.constant 0 : index
    %247 = vector.load %arg24[%c11_178, %c0_179] : memref<29x64xf32, #tpu.memory_space<vmem>>, vector<16x64xf32>
    %cst_180 = arith.constant 0.000000e+00 : f32
    %248 = vector.shape_cast %36 : vector<16x1xi1> to vector<16x1xi1>
    %249 = vector.broadcast %248 : vector<16x1xi1> to vector<16x64xi1>
    %250 = vector.broadcast %cst_180 : f32 to vector<16x64xf32>
    %251 = arith.select %249, %247, %250 : vector<16x64xi1>, vector<16x64xf32>
    %c12_181 = arith.constant 12 : index
    %c0_182 = arith.constant 0 : index
    %252 = vector.load %arg24[%c12_181, %c0_182] : memref<29x64xf32, #tpu.memory_space<vmem>>, vector<16x64xf32>
    %c13_183 = arith.constant 13 : index
    %c0_184 = arith.constant 0 : index
    %253 = vector.load %arg24[%c13_183, %c0_184] : memref<29x64xf32, #tpu.memory_space<vmem>>, vector<16x64xf32>
    %cst_185 = arith.constant 0.000000e+00 : f32
    %254 = vector.shape_cast %38 : vector<16x1xi1> to vector<16x1xi1>
    %255 = vector.broadcast %254 : vector<16x1xi1> to vector<16x64xi1>
    %256 = vector.broadcast %cst_185 : f32 to vector<16x64xf32>
    %257 = arith.select %255, %253, %256 : vector<16x64xi1>, vector<16x64xf32>
    %258 = tpu.concatenate %229, %230, %235, %240, %241, %246, %251, %252, %257 in 1 : vector<16x64xf32>, vector<16x64xf32>, vector<16x64xf32>, vector<16x64xf32>, vector<16x64xf32>, vector<16x64xf32>, vector<16x64xf32>, vector<16x64xf32>, vector<16x64xf32> -> vector<16x576xf32>
    %cst_186 = arith.constant dense<0.000000e+00> : vector<16x64xf32>
    %259 = tpu.matmul %258, %220, %cst_186 {dimension_numbers = #tpu.dot_dimension_numbers<[1], [0], [0], [1], [0, 0, 1, 1], [], []>} : vector<16x576xf32>, vector<576x64xf32>, vector<16x64xf32> -> vector<16x64xf32>
    %260 = vector.broadcast %222 : vector<1x64xf32> to vector<16x64xf32>
    %261 = arith.mulf %259, %260 : vector<16x64xf32>
    %262 = vector.broadcast %224 : vector<1x64xf32> to vector<16x64xf32>
    %263 = arith.addf %261, %262 : vector<16x64xf32>
    %cst_187 = arith.constant 0.000000e+00 : f32
    %264 = vector.broadcast %cst_187 : f32 to vector<16x64xf32>
    %265 = arith.maximumf %263, %264 : vector<16x64xf32>
    %c8_188 = arith.constant 8 : index
    %c0_189 = arith.constant 0 : index
    %266 = vector.load %arg24[%c8_188, %c0_189] : memref<29x64xf32, #tpu.memory_space<vmem>>, vector<16x64xf32>
    tpu.vector_store %arg24[%c8_188, %c0_189], %265 {strides = array<i32>} : memref<29x64xf32, #tpu.memory_space<vmem>>, vector<16x64xf32>,
    %c4_190 = arith.constant 4 : index
    %c0_191 = arith.constant 0 : index
    %c0_192 = arith.constant 0 : index
    %267 = vector.load %arg5[%c4_190, %c0_191, %c0_192] : memref<5x576x64xf32, #tpu.memory_space<vmem>>, vector<1x576x64xf32>
    %268 = vector.shape_cast %267 : vector<1x576x64xf32> to vector<576x64xf32>
    %c4_193 = arith.constant 4 : index
    %c0_194 = arith.constant 0 : index
    %c0_195 = arith.constant 0 : index
    %269 = vector.load %arg6[%c4_193, %c0_194, %c0_195] : memref<5x1x64xf32, #tpu.memory_space<vmem>>, vector<1x1x64xf32>
    %270 = vector.shape_cast %269 : vector<1x1x64xf32> to vector<1x64xf32>
    %c4_196 = arith.constant 4 : index
    %c0_197 = arith.constant 0 : index
    %c0_198 = arith.constant 0 : index
    %271 = vector.load %arg7[%c4_196, %c0_197, %c0_198] : memref<5x1x64xf32, #tpu.memory_space<vmem>>, vector<1x1x64xf32>
    %272 = vector.shape_cast %271 : vector<1x1x64xf32> to vector<1x64xf32>
    %c3_199 = arith.constant 3 : index
    %c0_200 = arith.constant 0 : index
    %273 = vector.load %arg24[%c3_199, %c0_200] : memref<29x64xf32, #tpu.memory_space<vmem>>, vector<16x64xf32>
    %cst_201 = arith.constant 0.000000e+00 : f32
    %274 = vector.shape_cast %36 : vector<16x1xi1> to vector<16x1xi1>
    %275 = vector.broadcast %274 : vector<16x1xi1> to vector<16x64xi1>
    %276 = vector.broadcast %cst_201 : f32 to vector<16x64xf32>
    %277 = arith.select %275, %273, %276 : vector<16x64xi1>, vector<16x64xf32>
    %c4_202 = arith.constant 4 : index
    %c0_203 = arith.constant 0 : index
    %278 = vector.load %arg24[%c4_202, %c0_203] : memref<29x64xf32, #tpu.memory_space<vmem>>, vector<16x64xf32>
    %c5_204 = arith.constant 5 : index
    %c0_205 = arith.constant 0 : index
    %279 = vector.load %arg24[%c5_204, %c0_205] : memref<29x64xf32, #tpu.memory_space<vmem>>, vector<16x64xf32>
    %cst_206 = arith.constant 0.000000e+00 : f32
    %280 = vector.shape_cast %38 : vector<16x1xi1> to vector<16x1xi1>
    %281 = vector.broadcast %280 : vector<16x1xi1> to vector<16x64xi1>
    %282 = vector.broadcast %cst_206 : f32 to vector<16x64xf32>
    %283 = arith.select %281, %279, %282 : vector<16x64xi1>, vector<16x64xf32>
    %c7_207 = arith.constant 7 : index
    %c0_208 = arith.constant 0 : index
    %284 = vector.load %arg24[%c7_207, %c0_208] : memref<29x64xf32, #tpu.memory_space<vmem>>, vector<16x64xf32>
    %cst_209 = arith.constant 0.000000e+00 : f32
    %285 = vector.shape_cast %36 : vector<16x1xi1> to vector<16x1xi1>
    %286 = vector.broadcast %285 : vector<16x1xi1> to vector<16x64xi1>
    %287 = vector.broadcast %cst_209 : f32 to vector<16x64xf32>
    %288 = arith.select %286, %284, %287 : vector<16x64xi1>, vector<16x64xf32>
    %c8_210 = arith.constant 8 : index
    %c0_211 = arith.constant 0 : index
    %289 = vector.load %arg24[%c8_210, %c0_211] : memref<29x64xf32, #tpu.memory_space<vmem>>, vector<16x64xf32>
    %c9_212 = arith.constant 9 : index
    %c0_213 = arith.constant 0 : index
    %290 = vector.load %arg24[%c9_212, %c0_213] : memref<29x64xf32, #tpu.memory_space<vmem>>, vector<16x64xf32>
    %cst_214 = arith.constant 0.000000e+00 : f32
    %291 = vector.shape_cast %38 : vector<16x1xi1> to vector<16x1xi1>
    %292 = vector.broadcast %291 : vector<16x1xi1> to vector<16x64xi1>
    %293 = vector.broadcast %cst_214 : f32 to vector<16x64xf32>
    %294 = arith.select %292, %290, %293 : vector<16x64xi1>, vector<16x64xf32>
    %c11_215 = arith.constant 11 : index
    %c0_216 = arith.constant 0 : index
    %295 = vector.load %arg24[%c11_215, %c0_216] : memref<29x64xf32, #tpu.memory_space<vmem>>, vector<16x64xf32>
    %cst_217 = arith.constant 0.000000e+00 : f32
    %296 = vector.shape_cast %36 : vector<16x1xi1> to vector<16x1xi1>
    %297 = vector.broadcast %296 : vector<16x1xi1> to vector<16x64xi1>
    %298 = vector.broadcast %cst_217 : f32 to vector<16x64xf32>
    %299 = arith.select %297, %295, %298 : vector<16x64xi1>, vector<16x64xf32>
    %c12_218 = arith.constant 12 : index
    %c0_219 = arith.constant 0 : index
    %300 = vector.load %arg24[%c12_218, %c0_219] : memref<29x64xf32, #tpu.memory_space<vmem>>, vector<16x64xf32>
    %c13_220 = arith.constant 13 : index
    %c0_221 = arith.constant 0 : index
    %301 = vector.load %arg24[%c13_220, %c0_221] : memref<29x64xf32, #tpu.memory_space<vmem>>, vector<16x64xf32>
    %cst_222 = arith.constant 0.000000e+00 : f32
    %302 = vector.shape_cast %38 : vector<16x1xi1> to vector<16x1xi1>
    %303 = vector.broadcast %302 : vector<16x1xi1> to vector<16x64xi1>
    %304 = vector.broadcast %cst_222 : f32 to vector<16x64xf32>
    %305 = arith.select %303, %301, %304 : vector<16x64xi1>, vector<16x64xf32>
    %306 = tpu.concatenate %277, %278, %283, %288, %289, %294, %299, %300, %305 in 1 : vector<16x64xf32>, vector<16x64xf32>, vector<16x64xf32>, vector<16x64xf32>, vector<16x64xf32>, vector<16x64xf32>, vector<16x64xf32>, vector<16x64xf32>, vector<16x64xf32> -> vector<16x576xf32>
    %cst_223 = arith.constant dense<0.000000e+00> : vector<16x64xf32>
    %307 = tpu.matmul %306, %268, %cst_223 {dimension_numbers = #tpu.dot_dimension_numbers<[1], [0], [0], [1], [0, 0, 1, 1], [], []>} : vector<16x576xf32>, vector<576x64xf32>, vector<16x64xf32> -> vector<16x64xf32>
    %308 = vector.broadcast %270 : vector<1x64xf32> to vector<16x64xf32>
    %309 = arith.mulf %307, %308 : vector<16x64xf32>
    %310 = vector.broadcast %272 : vector<1x64xf32> to vector<16x64xf32>
    %311 = arith.addf %309, %310 : vector<16x64xf32>
    %cst_224 = arith.constant 0.000000e+00 : f32
    %312 = vector.broadcast %cst_224 : f32 to vector<16x64xf32>
    %313 = arith.maximumf %311, %312 : vector<16x64xf32>
    %c0_225 = arith.constant 0 : index
    %c0_226 = arith.constant 0 : index
    %314 = vector.load %arg8[%c0_225, %c0_226] : memref<128x64xf32, #tpu.memory_space<vmem>>, vector<128x64xf32>
    %c0_227 = arith.constant 0 : index
    %c0_228 = arith.constant 0 : index
    %315 = vector.load %arg9[%c0_227, %c0_228] : memref<1x64xf32, #tpu.memory_space<vmem>>, vector<1x64xf32>
    %c0_229 = arith.constant 0 : index
    %c0_230 = arith.constant 0 : index
    %316 = vector.load %arg10[%c0_229, %c0_230] : memref<1x64xf32, #tpu.memory_space<vmem>>, vector<1x64xf32>
    %cst_231 = arith.constant dense<0.000000e+00> : vector<16x64xf32>
    %317 = tpu.matmul %40, %314, %cst_231 {dimension_numbers = #tpu.dot_dimension_numbers<[1], [0], [0], [1], [0, 0, 1, 1], [], []>} : vector<16x128xf32>, vector<128x64xf32>, vector<16x64xf32> -> vector<16x64xf32>
    %318 = vector.broadcast %315 : vector<1x64xf32> to vector<16x64xf32>
    %319 = arith.mulf %317, %318 : vector<16x64xf32>
    %320 = vector.broadcast %316 : vector<1x64xf32> to vector<16x64xf32>
    %321 = arith.addf %319, %320 : vector<16x64xf32>
    %cst_232 = arith.constant 0.000000e+00 : f32
    %322 = vector.broadcast %cst_232 : f32 to vector<16x64xf32>
    %323 = arith.maximumf %321, %322 : vector<16x64xf32>
    %c0_233 = arith.constant 0 : index
    %c0_234 = arith.constant 0 : index
    %324 = vector.load %arg11[%c0_233, %c0_234] : memref<64x64xf32, #tpu.memory_space<vmem>>, vector<64x64xf32>
    %c0_235 = arith.constant 0 : index
    %c0_236 = arith.constant 0 : index
    %325 = vector.load %arg12[%c0_235, %c0_236] : memref<1x64xf32, #tpu.memory_space<vmem>>, vector<1x64xf32>
    %c0_237 = arith.constant 0 : index
    %c0_238 = arith.constant 0 : index
    %326 = vector.load %arg13[%c0_237, %c0_238] : memref<1x64xf32, #tpu.memory_space<vmem>>, vector<1x64xf32>
    %cst_239 = arith.constant dense<0.000000e+00> : vector<16x64xf32>
    %327 = tpu.matmul %313, %324, %cst_239 {dimension_numbers = #tpu.dot_dimension_numbers<[1], [0], [0], [1], [0, 0, 1, 1], [], []>} : vector<16x64xf32>, vector<64x64xf32>, vector<16x64xf32> -> vector<16x64xf32>
    %328 = vector.broadcast %325 : vector<1x64xf32> to vector<16x64xf32>
    %329 = arith.mulf %327, %328 : vector<16x64xf32>
    %330 = vector.broadcast %326 : vector<1x64xf32> to vector<16x64xf32>
    %331 = arith.addf %329, %330 : vector<16x64xf32>
    %cst_240 = arith.constant 0.000000e+00 : f32
    %332 = vector.broadcast %cst_240 : f32 to vector<16x64xf32>
    %333 = arith.maximumf %331, %332 : vector<16x64xf32>
    %334 = tpu.concatenate %323, %333 in 1 : vector<16x64xf32>, vector<16x64xf32> -> vector<16x128xf32>
    %c8_241 = arith.constant 8 : index
    %c0_242 = arith.constant 0 : index
    %335 = vector.load %arg25[%c8_241, %c0_242] : memref<29x128xf32, #tpu.memory_space<vmem>>, vector<16x128xf32>
    tpu.vector_store %arg25[%c8_241, %c0_242], %334 {strides = array<i32>} : memref<29x128xf32, #tpu.memory_space<vmem>>, vector<16x128xf32>,
    %c0_243 = arith.constant 0 : index
    %c0_244 = arith.constant 0 : index
    %336 = vector.load %arg14[%c0_243, %c0_244] : memref<1152x64xf32, #tpu.memory_space<vmem>>, vector<1152x64xf32>
    %c0_245 = arith.constant 0 : index
    %c0_246 = arith.constant 0 : index
    %337 = vector.load %arg15[%c0_245, %c0_246] : memref<1x64xf32, #tpu.memory_space<vmem>>, vector<1x64xf32>
    %c0_247 = arith.constant 0 : index
    %c0_248 = arith.constant 0 : index
    %338 = vector.load %arg16[%c0_247, %c0_248] : memref<1x64xf32, #tpu.memory_space<vmem>>, vector<1x64xf32>
    %c3_249 = arith.constant 3 : index
    %c0_250 = arith.constant 0 : index
    %339 = vector.load %arg25[%c3_249, %c0_250] : memref<29x128xf32, #tpu.memory_space<vmem>>, vector<16x128xf32>
    %cst_251 = arith.constant 0.000000e+00 : f32
    %340 = vector.shape_cast %36 : vector<16x1xi1> to vector<16x1xi1>
    %341 = vector.broadcast %340 : vector<16x1xi1> to vector<16x128xi1>
    %342 = vector.broadcast %cst_251 : f32 to vector<16x128xf32>
    %343 = arith.select %341, %339, %342 : vector<16x128xi1>, vector<16x128xf32>
    %c4_252 = arith.constant 4 : index
    %c0_253 = arith.constant 0 : index
    %344 = vector.load %arg25[%c4_252, %c0_253] : memref<29x128xf32, #tpu.memory_space<vmem>>, vector<16x128xf32>
    %c5_254 = arith.constant 5 : index
    %c0_255 = arith.constant 0 : index
    %345 = vector.load %arg25[%c5_254, %c0_255] : memref<29x128xf32, #tpu.memory_space<vmem>>, vector<16x128xf32>
    %cst_256 = arith.constant 0.000000e+00 : f32
    %346 = vector.shape_cast %38 : vector<16x1xi1> to vector<16x1xi1>
    %347 = vector.broadcast %346 : vector<16x1xi1> to vector<16x128xi1>
    %348 = vector.broadcast %cst_256 : f32 to vector<16x128xf32>
    %349 = arith.select %347, %345, %348 : vector<16x128xi1>, vector<16x128xf32>
    %c7_257 = arith.constant 7 : index
    %c0_258 = arith.constant 0 : index
    %350 = vector.load %arg25[%c7_257, %c0_258] : memref<29x128xf32, #tpu.memory_space<vmem>>, vector<16x128xf32>
    %cst_259 = arith.constant 0.000000e+00 : f32
    %351 = vector.shape_cast %36 : vector<16x1xi1> to vector<16x1xi1>
    %352 = vector.broadcast %351 : vector<16x1xi1> to vector<16x128xi1>
    %353 = vector.broadcast %cst_259 : f32 to vector<16x128xf32>
    %354 = arith.select %352, %350, %353 : vector<16x128xi1>, vector<16x128xf32>
    %c8_260 = arith.constant 8 : index
    %c0_261 = arith.constant 0 : index
    %355 = vector.load %arg25[%c8_260, %c0_261] : memref<29x128xf32, #tpu.memory_space<vmem>>, vector<16x128xf32>
    %c9_262 = arith.constant 9 : index
    %c0_263 = arith.constant 0 : index
    %356 = vector.load %arg25[%c9_262, %c0_263] : memref<29x128xf32, #tpu.memory_space<vmem>>, vector<16x128xf32>
    %cst_264 = arith.constant 0.000000e+00 : f32
    %357 = vector.shape_cast %38 : vector<16x1xi1> to vector<16x1xi1>
    %358 = vector.broadcast %357 : vector<16x1xi1> to vector<16x128xi1>
    %359 = vector.broadcast %cst_264 : f32 to vector<16x128xf32>
    %360 = arith.select %358, %356, %359 : vector<16x128xi1>, vector<16x128xf32>
    %c11_265 = arith.constant 11 : index
    %c0_266 = arith.constant 0 : index
    %361 = vector.load %arg25[%c11_265, %c0_266] : memref<29x128xf32, #tpu.memory_space<vmem>>, vector<16x128xf32>
    %cst_267 = arith.constant 0.000000e+00 : f32
    %362 = vector.shape_cast %36 : vector<16x1xi1> to vector<16x1xi1>
    %363 = vector.broadcast %362 : vector<16x1xi1> to vector<16x128xi1>
    %364 = vector.broadcast %cst_267 : f32 to vector<16x128xf32>
    %365 = arith.select %363, %361, %364 : vector<16x128xi1>, vector<16x128xf32>
    %c12_268 = arith.constant 12 : index
    %c0_269 = arith.constant 0 : index
    %366 = vector.load %arg25[%c12_268, %c0_269] : memref<29x128xf32, #tpu.memory_space<vmem>>, vector<16x128xf32>
    %c13_270 = arith.constant 13 : index
    %c0_271 = arith.constant 0 : index
    %367 = vector.load %arg25[%c13_270, %c0_271] : memref<29x128xf32, #tpu.memory_space<vmem>>, vector<16x128xf32>
    %cst_272 = arith.constant 0.000000e+00 : f32
    %368 = vector.shape_cast %38 : vector<16x1xi1> to vector<16x1xi1>
    %369 = vector.broadcast %368 : vector<16x1xi1> to vector<16x128xi1>
    %370 = vector.broadcast %cst_272 : f32 to vector<16x128xf32>
    %371 = arith.select %369, %367, %370 : vector<16x128xi1>, vector<16x128xf32>
    %372 = tpu.concatenate %343, %344, %349, %354, %355, %360, %365, %366, %371 in 1 : vector<16x128xf32>, vector<16x128xf32>, vector<16x128xf32>, vector<16x128xf32>, vector<16x128xf32>, vector<16x128xf32>, vector<16x128xf32>, vector<16x128xf32>, vector<16x128xf32> -> vector<16x1152xf32>
    %cst_273 = arith.constant dense<0.000000e+00> : vector<16x64xf32>
    %373 = tpu.matmul %372, %336, %cst_273 {dimension_numbers = #tpu.dot_dimension_numbers<[1], [0], [0], [1], [0, 0, 1, 1], [], []>} : vector<16x1152xf32>, vector<1152x64xf32>, vector<16x64xf32> -> vector<16x64xf32>
    %374 = vector.broadcast %337 : vector<1x64xf32> to vector<16x64xf32>
    %375 = arith.mulf %373, %374 : vector<16x64xf32>
    %376 = vector.broadcast %338 : vector<1x64xf32> to vector<16x64xf32>
    %377 = arith.addf %375, %376 : vector<16x64xf32>
    %cst_274 = arith.constant 0.000000e+00 : f32
    %378 = vector.broadcast %cst_274 : f32 to vector<16x64xf32>
    %379 = arith.maximumf %377, %378 : vector<16x64xf32>
    %c8_275 = arith.constant 8 : index
    %c0_276 = arith.constant 0 : index
    %380 = vector.load %arg26[%c8_275, %c0_276] : memref<29x64xf32, #tpu.memory_space<vmem>>, vector<16x64xf32>
    tpu.vector_store %arg26[%c8_275, %c0_276], %379 {strides = array<i32>} : memref<29x64xf32, #tpu.memory_space<vmem>>, vector<16x64xf32>,
    %c0_277 = arith.constant 0 : index
    %c0_278 = arith.constant 0 : index
    %381 = vector.load %arg17[%c0_277, %c0_278] : memref<576x320xf32, #tpu.memory_space<vmem>>, vector<576x320xf32>
    %c0_279 = arith.constant 0 : index
    %c0_280 = arith.constant 0 : index
    %382 = vector.load %arg18[%c0_279, %c0_280] : memref<1x320xf32, #tpu.memory_space<vmem>>, vector<1x320xf32>
    %c0_281 = arith.constant 0 : index
    %c0_282 = arith.constant 0 : index
    %383 = vector.load %arg19[%c0_281, %c0_282] : memref<1x320xf32, #tpu.memory_space<vmem>>, vector<1x320xf32>
    %c3_283 = arith.constant 3 : index
    %c0_284 = arith.constant 0 : index
    %384 = vector.load %arg26[%c3_283, %c0_284] : memref<29x64xf32, #tpu.memory_space<vmem>>, vector<16x64xf32>
    %cst_285 = arith.constant 0.000000e+00 : f32
    %385 = vector.shape_cast %36 : vector<16x1xi1> to vector<16x1xi1>
    %386 = vector.broadcast %385 : vector<16x1xi1> to vector<16x64xi1>
    %387 = vector.broadcast %cst_285 : f32 to vector<16x64xf32>
    %388 = arith.select %386, %384, %387 : vector<16x64xi1>, vector<16x64xf32>
    %c4_286 = arith.constant 4 : index
    %c0_287 = arith.constant 0 : index
    %389 = vector.load %arg26[%c4_286, %c0_287] : memref<29x64xf32, #tpu.memory_space<vmem>>, vector<16x64xf32>
    %c5_288 = arith.constant 5 : index
    %c0_289 = arith.constant 0 : index
    %390 = vector.load %arg26[%c5_288, %c0_289] : memref<29x64xf32, #tpu.memory_space<vmem>>, vector<16x64xf32>
    %cst_290 = arith.constant 0.000000e+00 : f32
    %391 = vector.shape_cast %38 : vector<16x1xi1> to vector<16x1xi1>
    %392 = vector.broadcast %391 : vector<16x1xi1> to vector<16x64xi1>
    %393 = vector.broadcast %cst_290 : f32 to vector<16x64xf32>
    %394 = arith.select %392, %390, %393 : vector<16x64xi1>, vector<16x64xf32>
    %c7_291 = arith.constant 7 : index
    %c0_292 = arith.constant 0 : index
    %395 = vector.load %arg26[%c7_291, %c0_292] : memref<29x64xf32, #tpu.memory_space<vmem>>, vector<16x64xf32>
    %cst_293 = arith.constant 0.000000e+00 : f32
    %396 = vector.shape_cast %36 : vector<16x1xi1> to vector<16x1xi1>
    %397 = vector.broadcast %396 : vector<16x1xi1> to vector<16x64xi1>
    %398 = vector.broadcast %cst_293 : f32 to vector<16x64xf32>
    %399 = arith.select %397, %395, %398 : vector<16x64xi1>, vector<16x64xf32>
    %c8_294 = arith.constant 8 : index
    %c0_295 = arith.constant 0 : index
    %400 = vector.load %arg26[%c8_294, %c0_295] : memref<29x64xf32, #tpu.memory_space<vmem>>, vector<16x64xf32>
    %c9_296 = arith.constant 9 : index
    %c0_297 = arith.constant 0 : index
    %401 = vector.load %arg26[%c9_296, %c0_297] : memref<29x64xf32, #tpu.memory_space<vmem>>, vector<16x64xf32>
    %cst_298 = arith.constant 0.000000e+00 : f32
    %402 = vector.shape_cast %38 : vector<16x1xi1> to vector<16x1xi1>
    %403 = vector.broadcast %402 : vector<16x1xi1> to vector<16x64xi1>
    %404 = vector.broadcast %cst_298 : f32 to vector<16x64xf32>
    %405 = arith.select %403, %401, %404 : vector<16x64xi1>, vector<16x64xf32>
    %c11_299 = arith.constant 11 : index
    %c0_300 = arith.constant 0 : index
    %406 = vector.load %arg26[%c11_299, %c0_300] : memref<29x64xf32, #tpu.memory_space<vmem>>, vector<16x64xf32>
    %cst_301 = arith.constant 0.000000e+00 : f32
    %407 = vector.shape_cast %36 : vector<16x1xi1> to vector<16x1xi1>
    %408 = vector.broadcast %407 : vector<16x1xi1> to vector<16x64xi1>
    %409 = vector.broadcast %cst_301 : f32 to vector<16x64xf32>
    %410 = arith.select %408, %406, %409 : vector<16x64xi1>, vector<16x64xf32>
    %c12_302 = arith.constant 12 : index
    %c0_303 = arith.constant 0 : index
    %411 = vector.load %arg26[%c12_302, %c0_303] : memref<29x64xf32, #tpu.memory_space<vmem>>, vector<16x64xf32>
    %c13_304 = arith.constant 13 : index
    %c0_305 = arith.constant 0 : index
    %412 = vector.load %arg26[%c13_304, %c0_305] : memref<29x64xf32, #tpu.memory_space<vmem>>, vector<16x64xf32>
    %cst_306 = arith.constant 0.000000e+00 : f32
    %413 = vector.shape_cast %38 : vector<16x1xi1> to vector<16x1xi1>
    %414 = vector.broadcast %413 : vector<16x1xi1> to vector<16x64xi1>
    %415 = vector.broadcast %cst_306 : f32 to vector<16x64xf32>
    %416 = arith.select %414, %412, %415 : vector<16x64xi1>, vector<16x64xf32>
    %417 = tpu.concatenate %388, %389, %394, %399, %400, %405, %410, %411, %416 in 1 : vector<16x64xf32>, vector<16x64xf32>, vector<16x64xf32>, vector<16x64xf32>, vector<16x64xf32>, vector<16x64xf32>, vector<16x64xf32>, vector<16x64xf32>, vector<16x64xf32> -> vector<16x576xf32>
    %cst_307 = arith.constant dense<0.000000e+00> : vector<16x320xf32>
    %418 = tpu.matmul %417, %381, %cst_307 {dimension_numbers = #tpu.dot_dimension_numbers<[1], [0], [0], [1], [0, 0, 1, 1], [], []>} : vector<16x576xf32>, vector<576x320xf32>, vector<16x320xf32> -> vector<16x320xf32>
    %419 = vector.broadcast %382 : vector<1x320xf32> to vector<16x320xf32>
    %420 = arith.mulf %418, %419 : vector<16x320xf32>
    %421 = vector.broadcast %383 : vector<1x320xf32> to vector<16x320xf32>
    %422 = arith.addf %420, %421 : vector<16x320xf32>
    %cst_308 = arith.constant 0.000000e+00 : f32
    %423 = vector.broadcast %cst_308 : f32 to vector<16x320xf32>
    %424 = arith.maximumf %422, %423 : vector<16x320xf32>
    %c8_309 = arith.constant 8 : index
    %c0_310 = arith.constant 0 : index
    %425 = vector.load %arg27[%c8_309, %c0_310] : memref<29x320xf32, #tpu.memory_space<vmem>>, vector<16x320xf32>
    tpu.vector_store %arg27[%c8_309, %c0_310], %424 {strides = array<i32>} : memref<29x320xf32, #tpu.memory_space<vmem>>, vector<16x320xf32>,
    %c3_311 = arith.constant 3 : index
    %c0_312 = arith.constant 0 : index
    %426 = vector.load %arg27[%c3_311, %c0_312] : memref<29x320xf32, #tpu.memory_space<vmem>>, vector<16x320xf32>
    %cst_313 = arith.constant 0.000000e+00 : f32
    %427 = vector.shape_cast %36 : vector<16x1xi1> to vector<16x1xi1>
    %428 = vector.broadcast %427 : vector<16x1xi1> to vector<16x320xi1>
    %429 = vector.broadcast %cst_313 : f32 to vector<16x320xf32>
    %430 = arith.select %428, %426, %429 : vector<16x320xi1>, vector<16x320xf32>
    %c4_314 = arith.constant 4 : index
    %c0_315 = arith.constant 0 : index
    %431 = vector.load %arg27[%c4_314, %c0_315] : memref<29x320xf32, #tpu.memory_space<vmem>>, vector<16x320xf32>
    %c5_316 = arith.constant 5 : index
    %c0_317 = arith.constant 0 : index
    %432 = vector.load %arg27[%c5_316, %c0_317] : memref<29x320xf32, #tpu.memory_space<vmem>>, vector<16x320xf32>
    %cst_318 = arith.constant 0.000000e+00 : f32
    %433 = vector.shape_cast %38 : vector<16x1xi1> to vector<16x1xi1>
    %434 = vector.broadcast %433 : vector<16x1xi1> to vector<16x320xi1>
    %435 = vector.broadcast %cst_318 : f32 to vector<16x320xf32>
    %436 = arith.select %434, %432, %435 : vector<16x320xi1>, vector<16x320xf32>
    %c7_319 = arith.constant 7 : index
    %c0_320 = arith.constant 0 : index
    %437 = vector.load %arg27[%c7_319, %c0_320] : memref<29x320xf32, #tpu.memory_space<vmem>>, vector<16x320xf32>
    %cst_321 = arith.constant 0.000000e+00 : f32
    %438 = vector.shape_cast %36 : vector<16x1xi1> to vector<16x1xi1>
    %439 = vector.broadcast %438 : vector<16x1xi1> to vector<16x320xi1>
    %440 = vector.broadcast %cst_321 : f32 to vector<16x320xf32>
    %441 = arith.select %439, %437, %440 : vector<16x320xi1>, vector<16x320xf32>
    %c8_322 = arith.constant 8 : index
    %c0_323 = arith.constant 0 : index
    %442 = vector.load %arg27[%c8_322, %c0_323] : memref<29x320xf32, #tpu.memory_space<vmem>>, vector<16x320xf32>
    %c9_324 = arith.constant 9 : index
    %c0_325 = arith.constant 0 : index
    %443 = vector.load %arg27[%c9_324, %c0_325] : memref<29x320xf32, #tpu.memory_space<vmem>>, vector<16x320xf32>
    %cst_326 = arith.constant 0.000000e+00 : f32
    %444 = vector.shape_cast %38 : vector<16x1xi1> to vector<16x1xi1>
    %445 = vector.broadcast %444 : vector<16x1xi1> to vector<16x320xi1>
    %446 = vector.broadcast %cst_326 : f32 to vector<16x320xf32>
    %447 = arith.select %445, %443, %446 : vector<16x320xi1>, vector<16x320xf32>
    %c11_327 = arith.constant 11 : index
    %c0_328 = arith.constant 0 : index
    %448 = vector.load %arg27[%c11_327, %c0_328] : memref<29x320xf32, #tpu.memory_space<vmem>>, vector<16x320xf32>
    %cst_329 = arith.constant 0.000000e+00 : f32
    %449 = vector.shape_cast %36 : vector<16x1xi1> to vector<16x1xi1>
    %450 = vector.broadcast %449 : vector<16x1xi1> to vector<16x320xi1>
    %451 = vector.broadcast %cst_329 : f32 to vector<16x320xf32>
    %452 = arith.select %450, %448, %451 : vector<16x320xi1>, vector<16x320xf32>
    %c12_330 = arith.constant 12 : index
    %c0_331 = arith.constant 0 : index
    %453 = vector.load %arg27[%c12_330, %c0_331] : memref<29x320xf32, #tpu.memory_space<vmem>>, vector<16x320xf32>
    %c13_332 = arith.constant 13 : index
    %c0_333 = arith.constant 0 : index
    %454 = vector.load %arg27[%c13_332, %c0_333] : memref<29x320xf32, #tpu.memory_space<vmem>>, vector<16x320xf32>
    %cst_334 = arith.constant 0.000000e+00 : f32
    %455 = vector.shape_cast %38 : vector<16x1xi1> to vector<16x1xi1>
    %456 = vector.broadcast %455 : vector<16x1xi1> to vector<16x320xi1>
    %457 = vector.broadcast %cst_334 : f32 to vector<16x320xf32>
    %458 = arith.select %456, %454, %457 : vector<16x320xi1>, vector<16x320xf32>
    %459 = tpu.concatenate %430, %431, %436, %441, %442, %447, %452, %453, %458 in 1 : vector<16x320xf32>, vector<16x320xf32>, vector<16x320xf32>, vector<16x320xf32>, vector<16x320xf32>, vector<16x320xf32>, vector<16x320xf32>, vector<16x320xf32>, vector<16x320xf32> -> vector<16x2880xf32>
    %c0_335 = arith.constant 0 : index
    %c0_336 = arith.constant 0 : index
    %460 = vector.load %arg20[%c0_335, %c0_336] : memref<9x2880xf32, #tpu.memory_space<vmem>>, vector<9x2880xf32>
    %cst_337 = arith.constant dense<0.000000e+00> : vector<9x16xf32>
    %461 = tpu.matmul %460, %459, %cst_337 {dimension_numbers = #tpu.dot_dimension_numbers<[1], [1], [0], [0], [0, 0, 1, 0], [], []>} : vector<9x2880xf32>, vector<16x2880xf32>, vector<9x16xf32> -> vector<9x16xf32>
    %c0_338 = arith.constant 0 : index
    %c0_339 = arith.constant 0 : index
    %462 = vector.load %arg21[%c0_338, %c0_339] : memref<9x1xf32, #tpu.memory_space<vmem>>, vector<9x1xf32>
    %463 = vector.broadcast %462 : vector<9x1xf32> to vector<9x16xf32>
    %464 = arith.addf %461, %463 : vector<9x16xf32>
    %c0_340 = arith.constant 0 : index
    %c0_341 = arith.constant 0 : index
    %c0_342 = arith.constant 0 : index
    %465 = vector.load %arg22[%c0_340, %c0_341, %c0_342] : memref<1x9x16xf32, #tpu.memory_space<vmem>>, vector<1x9x16xf32>
    %466 = vector.shape_cast %465 : vector<1x9x16xf32> to vector<9x16xf32>
    %467 = vector.shape_cast %464 : vector<9x16xf32> to vector<1x9x16xf32>
    tpu.vector_store %arg22[%c0_340, %c0_341, %c0_342], %467 {strides = array<i32>} : memref<1x9x16xf32, #tpu.memory_space<vmem>>, vector<1x9x16xf32>,
    return
  }
  func.func @transform_0(%arg0: i32) -> (i32, i32, i32) {
    %c0_i32 = arith.constant 0 : i32
    %c0_i32_0 = arith.constant 0 : i32
    %c0_i32_1 = arith.constant 0 : i32
    return %arg0, %c0_i32, %c0_i32_0 : i32, i32, i32
  }
  func.func @transform_1(%arg0: i32) -> (i32, i32) {
    %c0_i32 = arith.constant 0 : i32
    %c0_i32_0 = arith.constant 0 : i32
    %c0_i32_1 = arith.constant 0 : i32
    return %c0_i32, %c0_i32_0 : i32, i32
  }
  func.func @transform_2(%arg0: i32) -> (i32, i32) {
    %c0_i32 = arith.constant 0 : i32
    %c0_i32_0 = arith.constant 0 : i32
    %c0_i32_1 = arith.constant 0 : i32
    return %c0_i32, %c0_i32_0 : i32, i32
  }
  func.func @transform_3(%arg0: i32) -> (i32, i32) {
    %c0_i32 = arith.constant 0 : i32
    %c0_i32_0 = arith.constant 0 : i32
    %c0_i32_1 = arith.constant 0 : i32
    return %c0_i32, %c0_i32_0 : i32, i32
  }
  func.func @transform_4(%arg0: i32) -> (i32, i32, i32) {
    %c0_i32 = arith.constant 0 : i32
    %c0_i32_0 = arith.constant 0 : i32
    %c0_i32_1 = arith.constant 0 : i32
    %c0_i32_2 = arith.constant 0 : i32
    return %c0_i32, %c0_i32_0, %c0_i32_1 : i32, i32, i32
  }
  func.func @transform_5(%arg0: i32) -> (i32, i32, i32) {
    %c0_i32 = arith.constant 0 : i32
    %c0_i32_0 = arith.constant 0 : i32
    %c0_i32_1 = arith.constant 0 : i32
    %c0_i32_2 = arith.constant 0 : i32
    return %c0_i32, %c0_i32_0, %c0_i32_1 : i32, i32, i32
  }
  func.func @transform_6(%arg0: i32) -> (i32, i32, i32) {
    %c0_i32 = arith.constant 0 : i32
    %c0_i32_0 = arith.constant 0 : i32
    %c0_i32_1 = arith.constant 0 : i32
    %c0_i32_2 = arith.constant 0 : i32
    return %c0_i32, %c0_i32_0, %c0_i32_1 : i32, i32, i32
  }
  func.func @transform_7(%arg0: i32) -> (i32, i32) {
    %c0_i32 = arith.constant 0 : i32
    %c0_i32_0 = arith.constant 0 : i32
    %c0_i32_1 = arith.constant 0 : i32
    return %c0_i32, %c0_i32_0 : i32, i32
  }
  func.func @transform_8(%arg0: i32) -> (i32, i32) {
    %c0_i32 = arith.constant 0 : i32
    %c0_i32_0 = arith.constant 0 : i32
    %c0_i32_1 = arith.constant 0 : i32
    return %c0_i32, %c0_i32_0 : i32, i32
  }
  func.func @transform_9(%arg0: i32) -> (i32, i32) {
    %c0_i32 = arith.constant 0 : i32
    %c0_i32_0 = arith.constant 0 : i32
    %c0_i32_1 = arith.constant 0 : i32
    return %c0_i32, %c0_i32_0 : i32, i32
  }
  func.func @transform_10(%arg0: i32) -> (i32, i32) {
    %c0_i32 = arith.constant 0 : i32
    %c0_i32_0 = arith.constant 0 : i32
    %c0_i32_1 = arith.constant 0 : i32
    return %c0_i32, %c0_i32_0 : i32, i32
  }
  func.func @transform_11(%arg0: i32) -> (i32, i32) {
    %c0_i32 = arith.constant 0 : i32
    %c0_i32_0 = arith.constant 0 : i32
    %c0_i32_1 = arith.constant 0 : i32
    return %c0_i32, %c0_i32_0 : i32, i32
  }
  func.func @transform_12(%arg0: i32) -> (i32, i32) {
    %c0_i32 = arith.constant 0 : i32
    %c0_i32_0 = arith.constant 0 : i32
    %c0_i32_1 = arith.constant 0 : i32
    return %c0_i32, %c0_i32_0 : i32, i32
  }
  func.func @transform_13(%arg0: i32) -> (i32, i32) {
    %c0_i32 = arith.constant 0 : i32
    %c0_i32_0 = arith.constant 0 : i32
    %c0_i32_1 = arith.constant 0 : i32
    return %c0_i32, %c0_i32_0 : i32, i32
  }
  func.func @transform_14(%arg0: i32) -> (i32, i32) {
    %c0_i32 = arith.constant 0 : i32
    %c0_i32_0 = arith.constant 0 : i32
    %c0_i32_1 = arith.constant 0 : i32
    return %c0_i32, %c0_i32_0 : i32, i32
  }
  func.func @transform_15(%arg0: i32) -> (i32, i32) {
    %c0_i32 = arith.constant 0 : i32
    %c0_i32_0 = arith.constant 0 : i32
    %c0_i32_1 = arith.constant 0 : i32
    return %c0_i32, %c0_i32_0 : i32, i32
  }
  func.func @transform_16(%arg0: i32) -> (i32, i32) {
    %c0_i32 = arith.constant 0 : i32
    %c0_i32_0 = arith.constant 0 : i32
    %c0_i32_1 = arith.constant 0 : i32
    return %c0_i32, %c0_i32_0 : i32, i32
  }
  func.func @transform_17(%arg0: i32) -> (i32, i32) {
    %c0_i32 = arith.constant 0 : i32
    %c0_i32_0 = arith.constant 0 : i32
    %c0_i32_1 = arith.constant 0 : i32
    return %c0_i32, %c0_i32_0 : i32, i32
  }
  func.func @transform_18(%arg0: i32) -> (i32, i32) {
    %c0_i32 = arith.constant 0 : i32
    %c0_i32_0 = arith.constant 0 : i32
    %c0_i32_1 = arith.constant 0 : i32
    return %c0_i32, %c0_i32_0 : i32, i32
  }
  func.func @transform_19(%arg0: i32) -> (i32, i32) {
    %c0_i32 = arith.constant 0 : i32
    %c0_i32_0 = arith.constant 0 : i32
    %c0_i32_1 = arith.constant 0 : i32
    return %c0_i32, %c0_i32_0 : i32, i32
  }
  func.func @transform_20(%arg0: i32) -> (i32, i32) {
    %c0_i32 = arith.constant 0 : i32
    %c0_i32_0 = arith.constant 0 : i32
    %c0_i32_1 = arith.constant 0 : i32
    return %c0_i32, %c0_i32_0 : i32, i32
  }
  func.func @transform_21(%arg0: i32) -> (i32, i32, i32) {
    %c0_i32 = arith.constant 0 : i32
    %c0_i32_0 = arith.constant 0 : i32
    %c0_i32_1 = arith.constant 0 : i32
    return %arg0, %c0_i32, %c0_i32_0 : i32, i32, i32
  }
}

</mosaic_0001>

<llo_original>
// kernel: centerpoint_style_net_forward.3
$region0: #{centerpoint_style_net_forward.3}
  #allocation0 [shape = 'u32[]', space=smem, size = 0x4, offset = 0x4, fixed_abs, tag = 'smem constant byte address 0x4 - core index']
  #allocation1 [shape = 'u32[144,128]{1,0:T(1,128)}', space=vmem, size = 0x12000, scoped, tag = 'internal scratch']
  %s0 = inlined_call_operand.hbm [shape: f32[4,512], index: 0, kind: input, shape index: {}]
  %s1 = inlined_call_operand.vmem [shape: f32[32,4], index: 1, kind: input, shape index: {}]
  %s2 = inlined_call_operand.vmem [shape: f32[32,1], index: 2, kind: input, shape index: {}]
  %s3 = inlined_call_operand.vmem [shape: f32[32,1], index: 3, kind: input, shape index: {}]
  %s4 = inlined_call_operand.vmem [shape: f32[32,512], index: 4, kind: output, shape index: {}]
  %s5 = sld [smem:[#allocation0]]
  $region30: #{centerpoint_style_net_forward.3} parent=0
    _
  %s7 = ssub.s32 1, %s5
  %s8 = scalar_select 0, %s7, %s5
  $region1: #{centerpoint_style_net_forward.3} parent=0
    #allocation2 [shape = 'u8[8192]{0}', space=vmem, size = 0x2000, scoped, tag = 'input window, operand 0, single buffered']
    #allocation3 [shape = 's32[1]{0}', space=sflag, size = 0x4, scoped, tag = 'scoped memory for centerpoint_style_net_forward.3']
    %9 = vsyncpa [#allocation3], 0
    // Predicated region
    $region2: #{centerpoint_style_net_forward.3} parent=1 // pred_check
      _
    $region3: #{centerpoint_style_net_forward.3} parent=1 // pred_check_branch
      %11 = sbr.rel (0) target = $region5
    $region4: #{centerpoint_style_net_forward.3} parent=1 // pred_region
      %s13 = ssub.s32 256, 256
      %14 = vsyncadd [#allocation3], %s13
      %s16 = sshll.u32 [#allocation2], 4
      %s17 = int_to_ptr.vmem [resolvable:$true] %s16
      %19 = dma.hbm_to_vmem [thread:$0]  %s0, 256, %s17, [#allocation3]
    $region5: #{centerpoint_style_net_forward.3} parent=1 // pred_fallthru
      _
    // Predicated region
    $region6: #{centerpoint_style_net_forward.3} parent=1 // pred_check
      _
    $region7: #{centerpoint_style_net_forward.3} parent=1 // pred_check_branch
      %21 = sbr.rel (0) target = $region9
    $region8: #{centerpoint_style_net_forward.3} parent=1 // pred_region
      _
    $region9: #{centerpoint_style_net_forward.3} parent=1 // pred_fallthru
      _
    // Predicated region
    $region10: #{centerpoint_style_net_forward.3} parent=1 // pred_check
      _
    $region11: #{centerpoint_style_net_forward.3} parent=1 // pred_check_branch
      %23 = sbr.rel (0) target = $region13
    $region12: #{centerpoint_style_net_forward.3} parent=1 // pred_region
      _
    $region13: #{centerpoint_style_net_forward.3} parent=1 // pred_fallthru
      _
    // Predicated region
    $region14: #{centerpoint_style_net_forward.3} parent=1 // pred_check
      _
    $region15: #{centerpoint_style_net_forward.3} parent=1 // pred_check_branch
      %25 = sbr.rel (0) target = $region17
    $region16: #{centerpoint_style_net_forward.3} parent=1 // pred_region
      _
    $region17: #{centerpoint_style_net_forward.3} parent=1 // pred_fallthru
      _
    // Predicated region
    $region18: #{centerpoint_style_net_forward.3} parent=1 // pred_check
      _
    $region19: #{centerpoint_style_net_forward.3} parent=1 // pred_check_branch
      %27 = sbr.rel (0) target = $region21
    $region20: #{centerpoint_style_net_forward.3} parent=1 // pred_region
      %28 = dma.done [#allocation3], 256
    $region21: #{centerpoint_style_net_forward.3} parent=1 // pred_fallthru
      _
    %v29 = vld [vmem:[%s1] sm:$0xff]
    %v30 = vld [vmem:[%s1 + $0x8] sm:$0xff]
    %v31 = vld [vmem:[%s1 + $0x10] sm:$0xff]
    %v32 = vld [vmem:[%s1 + $0x18] sm:$0xff]
    %v33 = vld [vmem:[#allocation2] sm:$0xff]
    %v34 = vld [vmem:[#allocation2 + $0x8] sm:$0xff]
    %v37 = vcombine.high %v33, %v33
    %v38 = vcombine.high %v34, %v34
    %vm39 = vcmask 31744
    %v41 = vsel %vm39, %v29, 0
    %v44 = vsel %vm39, %v30, 0
    %v47 = vsel %vm39, %v31, 0
    %v50 = vsel %vm39, %v32, 0
    %vm52 = vcmask 1043456
    %v53 = vsel %vm52, %v33, 0
    %v55 = vsel %vm52, %v37, 0
    %v57 = vsel %vm52, %v34, 0
    %v59 = vsel %vm52, %v38, 0
    %61 = vmatprep.subr.mxu0 %v55
    %62 = vmatpush1.msra.mxu0 %v53
    %63 = vmatprep.subr.mxu0 0.0
    %64 = vmatpush1.msra.mxu0 0.0
    %65 = vmatprep.subr.mxu0 0.0
    %66 = vmatpush1.msra.mxu0 0.0
    %67 = vmatprep.subr.mxu0 0.0
    %68 = vmatpush1.msra.mxu0 0.0
    %69 = vmatprep.subr.mxu0 0.0
    %70 = vmatpush1.msra.mxu0 0.0
    %71 = vmatprep.subr.mxu0 0.0
    %72 = vmatpush1.msra.mxu0 0.0
    %73 = vmatprep.subr.mxu0 0.0
    %74 = vmatpush1.msra.mxu0 0.0
    %75 = vmatprep.subr.mxu0 0.0
    %76 = vmatpush1.msra.mxu0 0.0
    %77 = vmatprep.subr.mxu0 0.0
    %78 = vmatpush1.msra.mxu0 0.0
    %79 = vmatprep.subr.mxu0 0.0
    %80 = vmatpush1.msra.mxu0 0.0
    %81 = vmatprep.subr.mxu0 0.0
    %82 = vmatpush1.msra.mxu0 0.0
    %83 = vmatprep.subr.mxu0 0.0
    %84 = vmatpush1.msra.mxu0 0.0
    %85 = vmatprep.subr.mxu0 0.0
    %86 = vmatpush1.msra.mxu0 0.0
    %87 = vmatprep.subr.mxu0 0.0
    %88 = vmatpush1.msra.mxu0 0.0
    %89 = vmatprep.subr.mxu0 0.0
    %90 = vmatpush1.msra.mxu0 0.0
    %91 = vmatprep.subr.mxu0 0.0
    %92 = vmatpush1.msra.mxu0 0.0
    %93 = vmatprep.subr.mxu0 0.0
    %94 = vmatpush1.msra.mxu0 0.0
    %95 = vmatprep.subr.mxu0 0.0
    %96 = vmatpush1.msra.mxu0 0.0
    %97 = vmatprep.subr.mxu0 0.0
    %98 = vmatpush1.msra.mxu0 0.0
    %99 = vmatprep.subr.mxu0 0.0
    %100 = vmatpush1.msra.mxu0 0.0
    %101 = vmatprep.subr.mxu0 0.0
    %102 = vmatpush1.msra.mxu0 0.0
    %103 = vmatprep.subr.mxu0 0.0
    %104 = vmatpush1.msra.mxu0 0.0
    %105 = vmatprep.subr.mxu0 0.0
    %106 = vmatpush1.msra.mxu0 0.0
    %107 = vmatprep.subr.mxu0 0.0
    %108 = vmatpush1.msra.mxu0 0.0
    %109 = vmatprep.subr.mxu0 0.0
    %110 = vmatpush1.msra.mxu0 0.0
    %111 = vmatprep.subr.mxu0 0.0
    %112 = vmatpush1.msra.mxu0 0.0
    %113 = vmatprep.subr.mxu0 0.0
    %114 = vmatpush1.msra.mxu0 0.0
    %115 = vmatprep.subr.mxu0 0.0
    %116 = vmatpush1.msra.mxu0 0.0
    %117 = vmatprep.subr.mxu0 0.0
    %118 = vmatpush1.msra.mxu0 0.0
    %119 = vmatprep.subr.mxu0 0.0
    %120 = vmatpush1.msra.mxu0 0.0
    %121 = vmatprep.subr.mxu0 0.0
    %122 = vmatpush1.msra.mxu0 0.0
    %123 = vmatprep.subr.mxu0 0.0
    %124 = vmatpush1.msra.mxu0 0.0
    %125 = vmatprep.mubr.f32.mxu0 0.0
    %126 = vmatmul.mubr.f32.gmra.mrb[0].mxu0 %v41
    %v127 = vpop.f32.mrb[0].mxu0
    %v128 = vadd.f32 0.0, %v127
    %v129 = vpop.f32.mrb[0].mxu0
    %v130 = vadd.f32 0.0, %v129
    %131 = vmatprep.mubr.f32.mxu0 0.0
    %132 = vmatmul.mubr.f32.gmra.mrb[0].mxu0 %v44
    %v133 = vpop.f32.mrb[0].mxu0
    %v134 = vadd.f32 0.0, %v133
    %v135 = vpop.f32.mrb[0].mxu0
    %v136 = vadd.f32 0.0, %v135
    %137 = vmatprep.mubr.f32.mxu0 0.0
    %138 = vmatmul.mubr.f32.gmra.mrb[0].mxu0 %v47
    %v139 = vpop.f32.mrb[0].mxu0
    %v140 = vadd.f32 0.0, %v139
    %v141 = vpop.f32.mrb[0].mxu0
    %v142 = vadd.f32 0.0, %v141
    %143 = vmatprep.mubr.f32.mxu0 0.0
    %144 = vmatmul.mubr.f32.gmra.mrb[0].mxu0 %v50
    %v145 = vpop.f32.mrb[0].mxu0
    %v146 = vadd.f32 0.0, %v145
    %v147 = vpop.f32.mrb[0].mxu0
    %v148 = vadd.f32 0.0, %v147
    %149 = vdwg.mxu0
    %150 = vmatprep.subr.mxu0 %v59
    %151 = vmatpush1.msra.mxu0 %v57
    %152 = vmatprep.subr.mxu0 0.0
    %153 = vmatpush1.msra.mxu0 0.0
    %154 = vmatprep.subr.mxu0 0.0
    %155 = vmatpush1.msra.mxu0 0.0
    %156 = vmatprep.subr.mxu0 0.0
    %157 = vmatpush1.msra.mxu0 0.0
    %158 = vmatprep.subr.mxu0 0.0
    %159 = vmatpush1.msra.mxu0 0.0
    %160 = vmatprep.subr.mxu0 0.0
    %161 = vmatpush1.msra.mxu0 0.0
    %162 = vmatprep.subr.mxu0 0.0
    %163 = vmatpush1.msra.mxu0 0.0
    %164 = vmatprep.subr.mxu0 0.0
    %165 = vmatpush1.msra.mxu0 0.0
    %166 = vmatprep.subr.mxu0 0.0
    %167 = vmatpush1.msra.mxu0 0.0
    %168 = vmatprep.subr.mxu0 0.0
    %169 = vmatpush1.msra.mxu0 0.0
    %170 = vmatprep.subr.mxu0 0.0
    %171 = vmatpush1.msra.mxu0 0.0
    %172 = vmatprep.subr.mxu0 0.0
    %173 = vmatpush1.msra.mxu0 0.0
    %174 = vmatprep.subr.mxu0 0.0
    %175 = vmatpush1.msra.mxu0 0.0
    %176 = vmatprep.subr.mxu0 0.0
    %177 = vmatpush1.msra.mxu0 0.0
    %178 = vmatprep.subr.mxu0 0.0
    %179 = vmatpush1.msra.mxu0 0.0
    %180 = vmatprep.subr.mxu0 0.0
    %181 = vmatpush1.msra.mxu0 0.0
    %182 = vmatprep.subr.mxu0 0.0
    %183 = vmatpush1.msra.mxu0 0.0
    %184 = vmatprep.subr.mxu0 0.0
    %185 = vmatpush1.msra.mxu0 0.0
    %186 = vmatprep.subr.mxu0 0.0
    %187 = vmatpush1.msra.mxu0 0.0
    %188 = vmatprep.subr.mxu0 0.0
    %189 = vmatpush1.msra.mxu0 0.0
    %190 = vmatprep.subr.mxu0 0.0
    %191 = vmatpush1.msra.mxu0 0.0
    %192 = vmatprep.subr.mxu0 0.0
    %193 = vmatpush1.msra.mxu0 0.0
    %194 = vmatprep.subr.mxu0 0.0
    %195 = vmatpush1.msra.mxu0 0.0
    %196 = vmatprep.subr.mxu0 0.0
    %197 = vmatpush1.msra.mxu0 0.0
    %198 = vmatprep.subr.mxu0 0.0
    %199 = vmatpush1.msra.mxu0 0.0
    %200 = vmatprep.subr.mxu0 0.0
    %201 = vmatpush1.msra.mxu0 0.0
    %202 = vmatprep.subr.mxu0 0.0
    %203 = vmatpush1.msra.mxu0 0.0
    %204 = vmatprep.subr.mxu0 0.0
    %205 = vmatpush1.msra.mxu0 0.0
    %206 = vmatprep.subr.mxu0 0.0
    %207 = vmatpush1.msra.mxu0 0.0
    %208 = vmatprep.subr.mxu0 0.0
    %209 = vmatpush1.msra.mxu0 0.0
    %210 = vmatprep.subr.mxu0 0.0
    %211 = vmatpush1.msra.mxu0 0.0
    %212 = vmatprep.subr.mxu0 0.0
    %213 = vmatpush1.msra.mxu0 0.0
    %214 = vmatprep.mubr.f32.mxu0 0.0
    %215 = vmatmul.mubr.f32.gmra.mrb[0].mxu0 %v41
    %v216 = vpop.f32.mrb[0].mxu0
    %v217 = vadd.f32 0.0, %v216
    %v218 = vpop.f32.mrb[0].mxu0
    %v219 = vadd.f32 0.0, %v218
    %220 = vmatprep.mubr.f32.mxu0 0.0
    %221 = vmatmul.mubr.f32.gmra.mrb[0].mxu0 %v44
    %v222 = vpop.f32.mrb[0].mxu0
    %v223 = vadd.f32 0.0, %v222
    %v224 = vpop.f32.mrb[0].mxu0
    %v225 = vadd.f32 0.0, %v224
    %226 = vmatprep.mubr.f32.mxu0 0.0
    %227 = vmatmul.mubr.f32.gmra.mrb[0].mxu0 %v47
    %v228 = vpop.f32.mrb[0].mxu0
    %v229 = vadd.f32 0.0, %v228
    %v230 = vpop.f32.mrb[0].mxu0
    %v231 = vadd.f32 0.0, %v230
    %232 = vmatprep.mubr.f32.mxu0 0.0
    %233 = vmatmul.mubr.f32.gmra.mrb[0].mxu0 %v50
    %v234 = vpop.f32.mrb[0].mxu0
    %v235 = vadd.f32 0.0, %v234
    %v236 = vpop.f32.mrb[0].mxu0
    %v237 = vadd.f32 0.0, %v236
    %238 = vdwg.mxu0
    %v239 = vld [vmem:[%s2] sm:$0xff]
    %v240 = vld [vmem:[%s2 + $0x8] sm:$0xff]
    %v241 = vld [vmem:[%s2 + $0x10] sm:$0xff]
    %v242 = vld [vmem:[%s2 + $0x18] sm:$0xff]
    %244 = vset.pattern.permute.xlu0 0
    %245 = vperm.xlu0 %244, %v239
    %v246 = vpop.permute.xlu0 %245
    %249 = vset.pattern.permute.xlu0 0
    %250 = vperm.xlu0 %249, %v240
    %v251 = vpop.permute.xlu0 %250
    %254 = vset.pattern.permute.xlu0 0
    %255 = vperm.xlu0 %254, %v241
    %v256 = vpop.permute.xlu0 %255
    %259 = vset.pattern.permute.xlu0 0
    %260 = vperm.xlu0 %259, %v242
    %v261 = vpop.permute.xlu0 %260
    %v263 = vmul.f32 %v128, %v246
    %v264 = vmul.f32 %v130, %v246
    %v265 = vmul.f32 %v217, %v246
    %v266 = vmul.f32 %v219, %v246
    %v267 = vmul.f32 %v134, %v251
    %v268 = vmul.f32 %v136, %v251
    %v269 = vmul.f32 %v223, %v251
    %v270 = vmul.f32 %v225, %v251
    %v271 = vmul.f32 %v140, %v256
    %v272 = vmul.f32 %v142, %v256
    %v273 = vmul.f32 %v229, %v256
    %v274 = vmul.f32 %v231, %v256
    %v275 = vmul.f32 %v146, %v261
    %v276 = vmul.f32 %v148, %v261
    %v277 = vmul.f32 %v235, %v261
    %v278 = vmul.f32 %v237, %v261
    %v279 = vld [vmem:[%s3] sm:$0xff]
    %v280 = vld [vmem:[%s3 + $0x8] sm:$0xff]
    %v281 = vld [vmem:[%s3 + $0x10] sm:$0xff]
    %v282 = vld [vmem:[%s3 + $0x18] sm:$0xff]
    %284 = vset.pattern.permute.xlu0 0
    %285 = vperm.xlu0 %284, %v279
    %v286 = vpop.permute.xlu0 %285
    %289 = vset.pattern.permute.xlu0 0
    %290 = vperm.xlu0 %289, %v280
    %v291 = vpop.permute.xlu0 %290
    %294 = vset.pattern.permute.xlu0 0
    %295 = vperm.xlu0 %294, %v281
    %v296 = vpop.permute.xlu0 %295
    %299 = vset.pattern.permute.xlu0 0
    %300 = vperm.xlu0 %299, %v282
    %v301 = vpop.permute.xlu0 %300
    %v303 = vadd.f32 %v263, %v286
    %v304 = vadd.f32 %v264, %v286
    %v305 = vadd.f32 %v265, %v286
    %v306 = vadd.f32 %v266, %v286
    %v307 = vadd.f32 %v267, %v291
    %v308 = vadd.f32 %v268, %v291
    %v309 = vadd.f32 %v269, %v291
    %v310 = vadd.f32 %v270, %v291
    %v311 = vadd.f32 %v271, %v296
    %v312 = vadd.f32 %v272, %v296
    %v313 = vadd.f32 %v273, %v296
    %v314 = vadd.f32 %v274, %v296
    %v315 = vadd.f32 %v275, %v301
    %v316 = vadd.f32 %v276, %v301
    %v317 = vadd.f32 %v277, %v301
    %v318 = vadd.f32 %v278, %v301
    %v319 = vmax.f32 %v303, 0.0
    %v320 = vmax.f32 %v304, 0.0
    %v321 = vmax.f32 %v305, 0.0
    %v322 = vmax.f32 %v306, 0.0
    %v323 = vmax.f32 %v307, 0.0
    %v324 = vmax.f32 %v308, 0.0
    %v325 = vmax.f32 %v309, 0.0
    %v326 = vmax.f32 %v310, 0.0
    %v327 = vmax.f32 %v311, 0.0
    %v328 = vmax.f32 %v312, 0.0
    %v329 = vmax.f32 %v313, 0.0
    %v330 = vmax.f32 %v314, 0.0
    %v331 = vmax.f32 %v315, 0.0
    %v332 = vmax.f32 %v316, 0.0
    %v333 = vmax.f32 %v317, 0.0
    %v334 = vmax.f32 %v318, 0.0
    %335 = vst [vmem:[%s4] sm:$0xff] %v319
    %336 = vst [vmem:[%s4 + $0x8] sm:$0xff] %v320
    %337 = vst [vmem:[%s4 + $0x10] sm:$0xff] %v321
    %338 = vst [vmem:[%s4 + $0x18] sm:$0xff] %v322
    %339 = vst [vmem:[%s4 + $0x20] sm:$0xff] %v323
    %340 = vst [vmem:[%s4 + $0x28] sm:$0xff] %v324
    %341 = vst [vmem:[%s4 + $0x30] sm:$0xff] %v325
    %342 = vst [vmem:[%s4 + $0x38] sm:$0xff] %v326
    %343 = vst [vmem:[%s4 + $0x40] sm:$0xff] %v327
    %344 = vst [vmem:[%s4 + $0x48] sm:$0xff] %v328
    %345 = vst [vmem:[%s4 + $0x50] sm:$0xff] %v329
    %346 = vst [vmem:[%s4 + $0x58] sm:$0xff] %v330
    %347 = vst [vmem:[%s4 + $0x60] sm:$0xff] %v331
    %348 = vst [vmem:[%s4 + $0x68] sm:$0xff] %v332
    %349 = vst [vmem:[%s4 + $0x70] sm:$0xff] %v333
    %350 = vst [vmem:[%s4 + $0x78] sm:$0xff] %v334
    // Predicated region
    $region22: #{centerpoint_style_net_forward.3} parent=1 // pred_check
      _
    $region23: #{centerpoint_style_net_forward.3} parent=1 // pred_check_branch
      %352 = sbr.rel (0) target = $region25
    $region24: #{centerpoint_style_net_forward.3} parent=1 // pred_region
      _
    $region25: #{centerpoint_style_net_forward.3} parent=1 // pred_fallthru
      _
    // Predicated region
    $region26: #{centerpoint_style_net_forward.3} parent=1 // pred_check
      _
    $region27: #{centerpoint_style_net_forward.3} parent=1 // pred_check_branch
      %354 = sbr.rel (0) target = $region29
    $region28: #{centerpoint_style_net_forward.3} parent=1 // pred_region
      _
    $region29: #{centerpoint_style_net_forward.3} parent=1 // pred_fallthru
      _
    %355 = vsyncpa [#allocation3], 1

// kernel: centerpoint_style_net_forward.4
$region0: #{centerpoint_style_net_forward.4}
  #allocation0 [shape = 'u32[]', space=smem, size = 0x4, offset = 0x4, fixed_abs, tag = 'smem constant byte address 0x4 - core index']
  #allocation1 [shape = 'u32[144,128]{1,0:T(1,128)}', space=vmem, size = 0x12000, scoped, tag = 'internal scratch']
  #allocation2 [shape = 'f32[89,128]{1,0:T(8,128)}', space=vmem, size = 0xc000, scoped, tag = 'scratch operand']
  #allocation3 [shape = 'f32[89,32]{1,0:T(8,128)}', space=vmem, size = 0xc000, scoped, tag = 'scratch operand']
  %s0 = inlined_call_operand.vmem [shape: f32[2,64,128], index: 0, kind: input, shape index: {}]
  %s1 = inlined_call_operand.vmem [shape: f32[288,32], index: 1, kind: input, shape index: {}]
  %s2 = inlined_call_operand.vmem [shape: f32[1,32], index: 2, kind: input, shape index: {}]
  %s3 = inlined_call_operand.vmem [shape: f32[1,32], index: 3, kind: input, shape index: {}]
  %s4 = inlined_call_operand.vmem [shape: f32[3,288,32], index: 4, kind: input, shape index: {}]
  %s5 = inlined_call_operand.vmem [shape: f32[3,1,32], index: 5, kind: input, shape index: {}]
  %s6 = inlined_call_operand.vmem [shape: f32[3,1,32], index: 6, kind: input, shape index: {}]
  %s7 = inlined_call_operand.vmem [shape: f32[2,64,32], index: 7, kind: output, shape index: {}]
  %s8 = sld [smem:[#allocation0]]
  $region61: #{centerpoint_style_net_forward.4} parent=0
    _
  %s10 = ssub.s32 1, %s8
  %s11 = scalar_select 0, %s10, %s8
  loop: start=0, step=1, limit=4
  $region2: #{centerpoint_style_net_forward.4} parent=0 // loop_pre_header
    _
  $region3: #{centerpoint_style_net_forward.4} parent=0 // loop_header
    %s13 = sphi 0, %s17
    %p14 = scmp.ge.s32.totalorder %s13, 4
    %s23 = sphi 0, %s25
    %s26 = sphi 0, %s23
    %s27 = sphi 0, %s26
    %s43 = sphi 0, %s27
    %s47 = sphi 0, %s47
    %s49 = sphi 0, %s47
    %s50 = sphi 0, %s49
    %s64 = sphi 0, %s50
    %s68 = sphi 0, %s68
    %s70 = sphi 0, %s68
    %s71 = sphi 0, %s70
    %s85 = sphi 0, %s71
    %s89 = sphi 0, %s89
    %s91 = sphi 0, %s89
    %s92 = sphi 0, %s91
    %s106 = sphi 0, %s92
    %s110 = sphi 0, %s110
    %s112 = sphi 0, %s110
    %s113 = sphi 0, %s112
    %s127 = sphi 0, %s113
    %s131 = sphi 0, %s131
    %s133 = sphi 0, %s131
    %s134 = sphi 0, %s133
    %s148 = sphi 0, %s134
    %s152 = sphi 0, %s152
    %s154 = sphi 0, %s152
    %s155 = sphi 0, %s154
    %s169 = sphi 0, %s155
    %s175 = sphi 0, %s177
    %s178 = sphi 0, %s175
    %s179 = sphi 0, %s178
    %s195 = sphi 0, %s179
  $region4: #{centerpoint_style_net_forward.4} parent=0 // loop_header_branch
    %16 = sbr.rel (%p14) target = $region8
  $region5: #{centerpoint_style_net_forward.4} parent=0 // loop_body
    %s18 = ssub.s32 %s13, 1
    %s19 = ssub.s32 %s13, 2
    %s20 = sadd.s32 %s13, 1
    %s21 = ssub.s32 %s13, %s20
    %p22 = scmp.eq.s32.totalorder %s21, 0
    %s24 = sadd.s32 %s23, 1
    %s25 = scalar_select %p22, %s23, %s24
    %p28 = pneg %p22
    %p29 = scmp.eq.s32.totalorder %s13, 1
    %p30 = por %p28, %p29
    %p31 = scmp.ne.s32.totalorder %s23, %s26
    %p32 = scmp.eq.s32.totalorder %s13, 0
    %p33 = por %p31, %p32
    %p34 = scmp.ne.s32.totalorder %s23, %s26
    %p35 = scmp.eq.s32.totalorder %s18, 1
    %p36 = por %p34, %p35
    %p37 = scmp.ne.s32.totalorder %s26, %s27
    %p38 = scmp.eq.s32.totalorder %s18, 0
    %p39 = por %p37, %p38
    %p40 = scmp.ne.s32.totalorder %s26, %s27
    %p41 = scmp.eq.s32.totalorder %s19, 1
    %p42 = por %p40, %p41
    %p44 = scmp.ne.s32.totalorder %s27, %s43
    %p45 = scmp.eq.s32.totalorder %s19, 0
    %p46 = por %p44, %p45
    %s48 = sadd.s32 %s47, 1
    %p51 = scmp.eq.s32.totalorder %s13, 1
    %p52 = scmp.ne.s32.totalorder %s47, %s49
    %p53 = scmp.eq.s32.totalorder %s13, 0
    %p54 = por %p52, %p53
    %p55 = scmp.ne.s32.totalorder %s47, %s49
    %p56 = scmp.eq.s32.totalorder %s18, 1
    %p57 = por %p55, %p56
    %p58 = scmp.ne.s32.totalorder %s49, %s50
    %p59 = scmp.eq.s32.totalorder %s18, 0
    %p60 = por %p58, %p59
    %p61 = scmp.ne.s32.totalorder %s49, %s50
    %p62 = scmp.eq.s32.totalorder %s19, 1
    %p63 = por %p61, %p62
    %p65 = scmp.ne.s32.totalorder %s50, %s64
    %p66 = scmp.eq.s32.totalorder %s19, 0
    %p67 = por %p65, %p66
    %s69 = sadd.s32 %s68, 1
    %p72 = scmp.eq.s32.totalorder %s13, 1
    %p73 = scmp.ne.s32.totalorder %s68, %s70
    %p74 = scmp.eq.s32.totalorder %s13, 0
    %p75 = por %p73, %p74
    %p76 = scmp.ne.s32.totalorder %s68, %s70
    %p77 = scmp.eq.s32.totalorder %s18, 1
    %p78 = por %p76, %p77
    %p79 = scmp.ne.s32.totalorder %s70, %s71
    %p80 = scmp.eq.s32.totalorder %s18, 0
    %p81 = por %p79, %p80
    %p82 = scmp.ne.s32.totalorder %s70, %s71
    %p83 = scmp.eq.s32.totalorder %s19, 1
    %p84 = por %p82, %p83
    %p86 = scmp.ne.s32.totalorder %s71, %s85
    %p87 = scmp.eq.s32.totalorder %s19, 0
    %p88 = por %p86, %p87
    %s90 = sadd.s32 %s89, 1
    %p93 = scmp.eq.s32.totalorder %s13, 1
    %p94 = scmp.ne.s32.totalorder %s89, %s91
    %p95 = scmp.eq.s32.totalorder %s13, 0
    %p96 = por %p94, %p95
    %p97 = scmp.ne.s32.totalorder %s89, %s91
    %p98 = scmp.eq.s32.totalorder %s18, 1
    %p99 = por %p97, %p98
    %p100 = scmp.ne.s32.totalorder %s91, %s92
    %p101 = scmp.eq.s32.totalorder %s18, 0
    %p102 = por %p100, %p101
    %p103 = scmp.ne.s32.totalorder %s91, %s92
    %p104 = scmp.eq.s32.totalorder %s19, 1
    %p105 = por %p103, %p104
    %p107 = scmp.ne.s32.totalorder %s92, %s106
    %p108 = scmp.eq.s32.totalorder %s19, 0
    %p109 = por %p107, %p108
    %s111 = sadd.s32 %s110, 1
    %p114 = scmp.eq.s32.totalorder %s13, 1
    %p115 = scmp.ne.s32.totalorder %s110, %s112
    %p116 = scmp.eq.s32.totalorder %s13, 0
    %p117 = por %p115, %p116
    %p118 = scmp.ne.s32.totalorder %s110, %s112
    %p119 = scmp.eq.s32.totalorder %s18, 1
    %p120 = por %p118, %p119
    %p121 = scmp.ne.s32.totalorder %s112, %s113
    %p122 = scmp.eq.s32.totalorder %s18, 0
    %p123 = por %p121, %p122
    %p124 = scmp.ne.s32.totalorder %s112, %s113
    %p125 = scmp.eq.s32.totalorder %s19, 1
    %p126 = por %p124, %p125
    %p128 = scmp.ne.s32.totalorder %s113, %s127
    %p129 = scmp.eq.s32.totalorder %s19, 0
    %p130 = por %p128, %p129
    %s132 = sadd.s32 %s131, 1
    %p135 = scmp.eq.s32.totalorder %s13, 1
    %p136 = scmp.ne.s32.totalorder %s131, %s133
    %p137 = scmp.eq.s32.totalorder %s13, 0
    %p138 = por %p136, %p137
    %p139 = scmp.ne.s32.totalorder %s131, %s133
    %p140 = scmp.eq.s32.totalorder %s18, 1
    %p141 = por %p139, %p140
    %p142 = scmp.ne.s32.totalorder %s133, %s134
    %p143 = scmp.eq.s32.totalorder %s18, 0
    %p144 = por %p142, %p143
    %p145 = scmp.ne.s32.totalorder %s133, %s134
    %p146 = scmp.eq.s32.totalorder %s19, 1
    %p147 = por %p145, %p146
    %p149 = scmp.ne.s32.totalorder %s134, %s148
    %p150 = scmp.eq.s32.totalorder %s19, 0
    %p151 = por %p149, %p150
    %s153 = sadd.s32 %s152, 1
    %p156 = scmp.eq.s32.totalorder %s13, 1
    %p157 = scmp.ne.s32.totalorder %s152, %s154
    %p158 = scmp.eq.s32.totalorder %s13, 0
    %p159 = por %p157, %p158
    %p160 = scmp.ne.s32.totalorder %s152, %s154
    %p161 = scmp.eq.s32.totalorder %s18, 1
    %p162 = por %p160, %p161
    %p163 = scmp.ne.s32.totalorder %s154, %s155
    %p164 = scmp.eq.s32.totalorder %s18, 0
    %p165 = por %p163, %p164
    %p166 = scmp.ne.s32.totalorder %s154, %s155
    %p167 = scmp.eq.s32.totalorder %s19, 1
    %p168 = por %p166, %p167
    %p170 = scmp.ne.s32.totalorder %s155, %s169
    %p171 = scmp.eq.s32.totalorder %s19, 0
    %p172 = por %p170, %p171
    %s173 = ssub.s32 %s13, %s20
    %p174 = scmp.eq.s32.totalorder %s173, 0
    %s176 = sadd.s32 %s175, 1
    %s177 = scalar_select %p174, %s175, %s176
    %p180 = pneg %p174
    %p181 = scmp.eq.s32.totalorder %s13, 1
    %p182 = por %p180, %p181
    %p183 = scmp.ne.s32.totalorder %s175, %s178
    %p184 = scmp.eq.s32.totalorder %s13, 0
    %p185 = por %p183, %p184
    %p186 = scmp.ne.s32.totalorder %s175, %s178
    %p187 = scmp.eq.s32.totalorder %s18, 1
    %p188 = por %p186, %p187
    %p189 = scmp.ne.s32.totalorder %s178, %s179
    %p190 = scmp.eq.s32.totalorder %s18, 0
    %p191 = por %p189, %p190
    %p192 = scmp.ne.s32.totalorder %s178, %s179
    %p193 = scmp.eq.s32.totalorder %s19, 1
    %p194 = por %p192, %p193
    %p196 = scmp.ne.s32.totalorder %s179, %s195
    %p197 = scmp.eq.s32.totalorder %s19, 0
    %p198 = por %p196, %p197
    %p199 = scmp.le.s32.totalorder 1, %s13
    %p200 = scmp.lt.s32.totalorder %s13, 3
    %p201 = pnand %p199, %p200
    %p202 = pneg %p201
    // Predicated region
    $region9: #{centerpoint_style_net_forward.4} parent=5 // pred_check
      _
    $region10: #{centerpoint_style_net_forward.4} parent=5 // pred_check_branch
      %204 = sbr.rel (%p201) target = $region12
    $region11: #{centerpoint_style_net_forward.4} parent=5 // pred_region
      %s205 = ssub.s32 %s13, 1
      // Predicated region
      $region13: #{centerpoint_style_net_forward.4} parent=11 // pred_check
        %p206 = pneg %p60
      $region14: #{centerpoint_style_net_forward.4} parent=11 // pred_check_branch
        %208 = sbr.rel (%p206) target = $region16
      $region15: #{centerpoint_style_net_forward.4} parent=11 // pred_region
        _
      $region16: #{centerpoint_style_net_forward.4} parent=11 // pred_fallthru
        _
      // Predicated region
      $region17: #{centerpoint_style_net_forward.4} parent=11 // pred_check
        %p209 = pneg %p81
      $region18: #{centerpoint_style_net_forward.4} parent=11 // pred_check_branch
        %211 = sbr.rel (%p209) target = $region20
      $region19: #{centerpoint_style_net_forward.4} parent=11 // pred_region
        _
      $region20: #{centerpoint_style_net_forward.4} parent=11 // pred_fallthru
        _
      // Predicated region
      $region21: #{centerpoint_style_net_forward.4} parent=11 // pred_check
        %p212 = pneg %p102
      $region22: #{centerpoint_style_net_forward.4} parent=11 // pred_check_branch
        %214 = sbr.rel (%p212) target = $region24
      $region23: #{centerpoint_style_net_forward.4} parent=11 // pred_region
        _
      $region24: #{centerpoint_style_net_forward.4} parent=11 // pred_fallthru
        _
      // Predicated region
      $region25: #{centerpoint_style_net_forward.4} parent=11 // pred_check
        %p215 = pneg %p123
      $region26: #{centerpoint_style_net_forward.4} parent=11 // pred_check_branch
        %217 = sbr.rel (%p215) target = $region28
      $region27: #{centerpoint_style_net_forward.4} parent=11 // pred_region
        _
      $region28: #{centerpoint_style_net_forward.4} parent=11 // pred_fallthru
        _
      // Predicated region
      $region29: #{centerpoint_style_net_forward.4} parent=11 // pred_check
        %p218 = pneg %p144
      $region30: #{centerpoint_style_net_forward.4} parent=11 // pred_check_branch
        %220 = sbr.rel (%p218) target = $region32
      $region31: #{centerpoint_style_net_forward.4} parent=11 // pred_region
        _
      $region32: #{centerpoint_style_net_forward.4} parent=11 // pred_fallthru
        _
      // Predicated region
      $region33: #{centerpoint_style_net_forward.4} parent=11 // pred_check
        %p221 = pneg %p165
      $region34: #{centerpoint_style_net_forward.4} parent=11 // pred_check_branch
        %223 = sbr.rel (%p221) target = $region36
      $region35: #{centerpoint_style_net_forward.4} parent=11 // pred_region
        _
      $region36: #{centerpoint_style_net_forward.4} parent=11 // pred_fallthru
        _
    $region12: #{centerpoint_style_net_forward.4} parent=5 // pred_fallthru
      _
    %p224 = scmp.lt.s32.totalorder %s13, 2
    // Predicated region
    $region37: #{centerpoint_style_net_forward.4} parent=5 // pred_check
      %p225 = pneg %p224
    $region38: #{centerpoint_style_net_forward.4} parent=5 // pred_check_branch
      %227 = sbr.rel (%p225) target = $region40
    $region39: #{centerpoint_style_net_forward.4} parent=5 // pred_region
      // Predicated region
      $region41: #{centerpoint_style_net_forward.4} parent=39 // pred_check
        %p228 = pneg %p33
      $region42: #{centerpoint_style_net_forward.4} parent=39 // pred_check_branch
        %230 = sbr.rel (%p228) target = $region44
      $region43: #{centerpoint_style_net_forward.4} parent=39 // pred_region
        %p231 = scmp.lt.s32.totalorder %s13, 1
        %s232 = scalar_select %p231, %s13, 1
        %s233 = smul.addr %s232, 8
        %s234 = smul.addr %s233, 8
        %s235 = scalar_lea.vmem %s0, %s234
      $region44: #{centerpoint_style_net_forward.4} parent=39 // pred_fallthru
        _
    $region40: #{centerpoint_style_net_forward.4} parent=5 // pred_fallthru
      _
    %p236 = scmp.le.s32.totalorder 1, %s13
    %p237 = scmp.lt.s32.totalorder %s13, 3
    %p238 = pnand %p236, %p237
    %p239 = pneg %p238
    // Predicated region
    $region45: #{centerpoint_style_net_forward.4} parent=5 // pred_check
      _
    $region46: #{centerpoint_style_net_forward.4} parent=5 // pred_check_branch
      %241 = sbr.rel (%p238) target = $region48
    $region47: #{centerpoint_style_net_forward.4} parent=5 // pred_region
      %s242 = ssub.s32 %s13, 1
      %p243 = scmp.lt.s32.totalorder %s18, 1
      %s244 = scalar_select %p243, %s18, 1
      %s245 = smul.addr %s244, 8
      %s246 = smul.addr %s245, 8
      %s247 = scalar_lea.vmem %s0, %s246
      %p248 = pneg %p39
      %p249 = pneg %p36
      %p250 = pneg %p60
      %p251 = pneg %p57
      %p252 = pneg %p81
      %p253 = pneg %p78
      %p254 = pneg %p102
      %p255 = pneg %p99
      %p256 = pneg %p123
      %p257 = pneg %p120
      %p258 = pneg %p144
      %p259 = pneg %p141
      %p260 = pneg %p165
      %p261 = pneg %p162
      %p262 = pneg %p191
      %p263 = pneg %p188
      %p264 = scmp.lt.s32.totalorder %s18, 1
      %s265 = scalar_select %p264, %s18, 1
      %s266 = smul.addr %s265, 8
      %s267 = smul.addr %s266, 8
      %s268 = scalar_lea.vmem %s7, %s267
      %p269 = scmp.lt.s32.totalorder %s18, 1
      %s270 = scalar_select %p269, %s18, 1
      %s271 = smul.addr %s270, 8
      %s272 = smul.addr %s271, 8
      %s273 = scalar_lea.vmem %s0, %s272
      %p274 = scmp.lt.s32.totalorder %s18, 1
      %s275 = scalar_select %p274, %s18, 1
      %s276 = smul.addr %s275, 8
      %s277 = smul.addr %s276, 8
      %s278 = scalar_lea.vmem %s7, %s277
      %279 = vst [vmem:[#allocation2] sm:$0xff] 0.0
      %280 = vst [vmem:[#allocation2 + $0x8] sm:$0xff] 0.0
      %vm281 = vcmask 261120
      %282 = vst.msk [vmem:[#allocation3] sm:$0xff] %vm281, 0.0
      %283 = vst.msk [vmem:[#allocation3 + $0x8] sm:$0xff] %vm281, 0.0
      %284 = vst.msk [vmem:[#allocation3 + $0x50] sm:$0xff] %vm281, 0.0
      %vm285 = vcmask 253952
      %286 = vst.msk [vmem:[#allocation3 + $0x58] sm:$0x1] %vm285, 0.0
      %v287 = vlaneseq
      %v288 = vshrl.u32 %v287, 7
      %v289 = vadd.s32 %v288, 8
      %v290 = vadd.s32 %v288, 16
      %v291 = vadd.s32 %v288, 24
      %v292 = vadd.s32 %v288, 32
      %v293 = vadd.s32 %v288, 40
      %v294 = vadd.s32 %v288, 48
      %v295 = vadd.s32 %v288, 56
      %vm296 = vcmp.lt.s32.totalorder %v288, 0
      %v297 = vsub.s32 0, %v288
      %v298 = vsel %vm296, %v297, %v288
      %v299 = vshrl.u32 %v298, 3
      %v300 = vand.u32 %v298, 7
      %v301 = vsub.s32 0, %v300
      %v302 = vsel %vm296, %v301, %v300
      %vm303 = vcmp.lt.s32.totalorder %v289, 0
      %v304 = vsub.s32 0, %v289
      %v305 = vsel %vm303, %v304, %v289
      %v306 = vshrl.u32 %v305, 3
      %v307 = vand.u32 %v305, 7
      %v308 = vsub.s32 0, %v307
      %v309 = vsel %vm303, %v308, %v307
      %vm310 = vcmp.lt.s32.totalorder %v290, 0
      %v311 = vsub.s32 0, %v290
      %v312 = vsel %vm310, %v311, %v290
      %v313 = vshrl.u32 %v312, 3
      %v314 = vand.u32 %v312, 7
      %v315 = vsub.s32 0, %v314
      %v316 = vsel %vm310, %v315, %v314
      %vm317 = vcmp.lt.s32.totalorder %v291, 0
      %v318 = vsub.s32 0, %v291
      %v319 = vsel %vm317, %v318, %v291
      %v320 = vshrl.u32 %v319, 3
      %v321 = vand.u32 %v319, 7
      %v322 = vsub.s32 0, %v321
      %v323 = vsel %vm317, %v322, %v321
      %vm324 = vcmp.lt.s32.totalorder %v292, 0
      %v325 = vsub.s32 0, %v292
      %v326 = vsel %vm324, %v325, %v292
      %v327 = vshrl.u32 %v326, 3
      %v328 = vand.u32 %v326, 7
      %v329 = vsub.s32 0, %v328
      %v330 = vsel %vm324, %v329, %v328
      %vm331 = vcmp.lt.s32.totalorder %v293, 0
      %v332 = vsub.s32 0, %v293
      %v333 = vsel %vm331, %v332, %v293
      %v334 = vshrl.u32 %v333, 3
      %v335 = vand.u32 %v333, 7
      %v336 = vsub.s32 0, %v335
      %v337 = vsel %vm331, %v336, %v335
      %vm338 = vcmp.lt.s32.totalorder %v294, 0
      %v339 = vsub.s32 0, %v294
      %v340 = vsel %vm338, %v339, %v294
      %v341 = vshrl.u32 %v340, 3
      %v342 = vand.u32 %v340, 7
      %v343 = vsub.s32 0, %v342
      %v344 = vsel %vm338, %v343, %v342
      %vm345 = vcmp.lt.s32.totalorder %v295, 0
      %v346 = vsub.s32 0, %v295
      %v347 = vsel %vm345, %v346, %v295
      %v348 = vshrl.u32 %v347, 3
      %v349 = vand.u32 %v347, 7
      %v350 = vsub.s32 0, %v349
      %v351 = vsel %vm345, %v350, %v349
      %vm352 = vcmp.ne.s32.totalorder %v302, 0
      %vm353 = vcmp.ne.s32.totalorder %v309, 0
      %vm354 = vcmp.ne.s32.totalorder %v316, 0
      %vm355 = vcmp.ne.s32.totalorder %v323, 0
      %vm356 = vcmp.ne.s32.totalorder %v330, 0
      %vm357 = vcmp.ne.s32.totalorder %v337, 0
      %vm358 = vcmp.ne.s32.totalorder %v344, 0
      %vm359 = vcmp.ne.s32.totalorder %v351, 0
      %vm360 = vcmp.lt.s32.totalorder %v302, 0
      %vm361 = vcmp.lt.s32.totalorder %v309, 0
      %vm362 = vcmp.lt.s32.totalorder %v316, 0
      %vm363 = vcmp.lt.s32.totalorder %v323, 0
      %vm364 = vcmp.lt.s32.totalorder %v330, 0
      %vm365 = vcmp.lt.s32.totalorder %v337, 0
      %vm366 = vcmp.lt.s32.totalorder %v344, 0
      %vm367 = vcmp.lt.s32.totalorder %v351, 0
      %vm368 = vmand %vm360, %vm352
      %vm369 = vmand %vm361, %vm353
      %vm370 = vmand %vm362, %vm354
      %vm371 = vmand %vm363, %vm355
      %vm372 = vmand %vm364, %vm356
      %vm373 = vmand %vm365, %vm357
      %vm374 = vmand %vm366, %vm358
      %vm375 = vmand %vm367, %vm359
      %v376 = vadd.s32 %v302, 8
      %v377 = vadd.s32 %v309, 8
      %v378 = vadd.s32 %v316, 8
      %v379 = vadd.s32 %v323, 8
      %v380 = vadd.s32 %v330, 8
      %v381 = vadd.s32 %v337, 8
      %v382 = vadd.s32 %v344, 8
      %v383 = vadd.s32 %v351, 8
      %v384 = vsel %vm368, %v376, %v302
      %v385 = vsel %vm369, %v377, %v309
      %v386 = vsel %vm370, %v378, %v316
      %v387 = vsel %vm371, %v379, %v323
      %v388 = vsel %vm372, %v380, %v330
      %v389 = vsel %vm373, %v381, %v337
      %v390 = vsel %vm374, %v382, %v344
      %v391 = vsel %vm375, %v383, %v351
      %vm392 = vcmp.ne.s32.totalorder %v384, 0
      %vm393 = vcmp.ne.s32.totalorder %v385, 0
      %vm394 = vcmp.ne.s32.totalorder %v386, 0
      %vm395 = vcmp.ne.s32.totalorder %v387, 0
      %vm396 = vcmp.ne.s32.totalorder %v388, 0
      %vm397 = vcmp.ne.s32.totalorder %v389, 0
      %vm398 = vcmp.ne.s32.totalorder %v390, 0
      %vm399 = vcmp.ne.s32.totalorder %v391, 0
      %vm400 = vcmp.ne.s32.totalorder %v384, 7
      %vm401 = vcmp.ne.s32.totalorder %v385, 7
      %vm402 = vcmp.ne.s32.totalorder %v386, 7
      %vm403 = vcmp.ne.s32.totalorder %v387, 7
      %vm404 = vcmp.ne.s32.totalorder %v388, 7
      %vm405 = vcmp.ne.s32.totalorder %v389, 7
      %vm406 = vcmp.ne.s32.totalorder %v390, 7
      %vm407 = vcmp.ne.s32.totalorder %v391, 7
      %v408 = vld [vmem:[%s273] sm:$0xff]
      %v409 = vld [vmem:[%s273 + $0x8] sm:$0xff]
      %v410 = vld [vmem:[%s273 + $0x10] sm:$0xff]
      %v411 = vld [vmem:[%s273 + $0x18] sm:$0xff]
      %v412 = vld [vmem:[%s273 + $0x20] sm:$0xff]
      %v413 = vld [vmem:[%s273 + $0x28] sm:$0xff]
      %v414 = vld [vmem:[%s273 + $0x30] sm:$0xff]
      %v415 = vld [vmem:[%s273 + $0x38] sm:$0xff]
      %416 = vst [vmem:[#allocation2 + $0x10] sm:$0xff] %v408
      %417 = vst [vmem:[#allocation2 + $0x18] sm:$0xff] %v409
      %418 = vst [vmem:[#allocation2 + $0x20] sm:$0xff] %v410
      %419 = vst [vmem:[#allocation2 + $0x28] sm:$0xff] %v411
      %420 = vst [vmem:[#allocation2 + $0x30] sm:$0xff] %v412
      %421 = vst [vmem:[#allocation2 + $0x38] sm:$0xff] %v413
      %422 = vst [vmem:[#allocation2 + $0x40] sm:$0xff] %v414
      %423 = vst [vmem:[#allocation2 + $0x48] sm:$0xff] %v415
      %v424 = vld [vmem:[%s1] sm:$0xff]
      %v425 = vld [vmem:[%s1 + $0x8] sm:$0xff]
      %v426 = vld [vmem:[%s1 + $0x10] sm:$0xff]
      %v427 = vld [vmem:[%s1 + $0x18] sm:$0xff]
      %v428 = vld [vmem:[%s1 + $0x20] sm:$0xff]
      %v429 = vld [vmem:[%s1 + $0x28] sm:$0xff]
      %v430 = vld [vmem:[%s1 + $0x30] sm:$0xff]
      %v431 = vld [vmem:[%s1 + $0x38] sm:$0xff]
      %v432 = vld [vmem:[%s1 + $0x40] sm:$0xff]
      %v433 = vld [vmem:[%s1 + $0x48] sm:$0xff]
      %v434 = vld [vmem:[%s1 + $0x50] sm:$0xff]
      %v435 = vld [vmem:[%s1 + $0x58] sm:$0xff]
      %v436 = vld [vmem:[%s1 + $0x60] sm:$0xff]
      %v437 = vld [vmem:[%s1 + $0x68] sm:$0xff]
      %v438 = vld [vmem:[%s1 + $0x70] sm:$0xff]
      %v439 = vld [vmem:[%s1 + $0x78] sm:$0xff]
      %v440 = vld [vmem:[%s1 + $0x80] sm:$0xff]
      %v441 = vld [vmem:[%s1 + $0x88] sm:$0xff]
      %v442 = vld [vmem:[%s1 + $0x90] sm:$0xff]
      %v443 = vld [vmem:[%s1 + $0x98] sm:$0xff]
      %v444 = vld [vmem:[%s1 + $0xa0] sm:$0xff]
      %v445 = vld [vmem:[%s1 + $0xa8] sm:$0xff]
      %v446 = vld [vmem:[%s1 + $0xb0] sm:$0xff]
      %v447 = vld [vmem:[%s1 + $0xb8] sm:$0xff]
      %v448 = vld [vmem:[%s1 + $0xc0] sm:$0xff]
      %v449 = vld [vmem:[%s1 + $0xc8] sm:$0xff]
      %v450 = vld [vmem:[%s1 + $0xd0] sm:$0xff]
      %v451 = vld [vmem:[%s1 + $0xd8] sm:$0xff]
      %v452 = vld [vmem:[%s1 + $0xe0] sm:$0xff]
      %v453 = vld [vmem:[%s1 + $0xe8] sm:$0xff]
      %v454 = vld [vmem:[%s1 + $0xf0] sm:$0xff]
      %v455 = vld [vmem:[%s1 + $0xf8] sm:$0xff]
      %v456 = vld [vmem:[%s1 + $0x100] sm:$0xff]
      %v457 = vld [vmem:[%s1 + $0x108] sm:$0xff]
      %v458 = vld [vmem:[%s1 + $0x110] sm:$0xff]
      %v459 = vld [vmem:[%s1 + $0x118] sm:$0xff]
      %v460 = vld [vmem:[%s2] sm:$0x1]
      %v461 = vld [vmem:[%s3] sm:$0x1]
      %v462 = vld [vmem:[#allocation2 + $0x10] sm:$0xff]
      %v463 = vld [vmem:[#allocation2 + $0x18] sm:$0xff]
      %v464 = vld [vmem:[#allocation2 + $0x20] sm:$0xff]
      %v465 = vld [vmem:[#allocation2 + $0x28] sm:$0xff]
      %v466 = vld [vmem:[#allocation2 + $0x30] sm:$0xff]
      %v467 = vld [vmem:[#allocation2 + $0x38] sm:$0xff]
      %v468 = vld [vmem:[#allocation2 + $0x40] sm:$0xff]
      %v469 = vld [vmem:[#allocation2 + $0x48] sm:$0xff]
      %v470 = vld [vmem:[#allocation2 + $0xf] sm:$0xff]
      %v471 = vld [vmem:[#allocation2 + $0x17] sm:$0xff]
      %v472 = vld [vmem:[#allocation2 + $0x1f] sm:$0xff]
      %v473 = vld [vmem:[#allocation2 + $0x27] sm:$0xff]
      %v474 = vld [vmem:[#allocation2 + $0x2f] sm:$0xff]
      %v475 = vld [vmem:[#allocation2 + $0x37] sm:$0xff]
      %v476 = vld [vmem:[#allocation2 + $0x3f] sm:$0xff]
      %v477 = vld [vmem:[#allocation2 + $0x47] sm:$0xff]
      %v478 = vsel %vm392, 1, 0
      %v479 = vsel %vm393, 1, 0
      %v480 = vsel %vm394, 1, 0
      %v481 = vsel %vm395, 1, 0
      %v482 = vsel %vm396, 1, 0
      %v483 = vsel %vm397, 1, 0
      %v484 = vsel %vm398, 1, 0
      %v485 = vsel %vm399, 1, 0
      %vm486 = vcmp.eq.s32.totalorder %v478, 1
      %vm487 = vcmp.eq.s32.totalorder %v479, 1
      %vm488 = vcmp.eq.s32.totalorder %v480, 1
      %vm489 = vcmp.eq.s32.totalorder %v481, 1
      %vm490 = vcmp.eq.s32.totalorder %v482, 1
      %vm491 = vcmp.eq.s32.totalorder %v483, 1
      %vm492 = vcmp.eq.s32.totalorder %v484, 1
      %vm493 = vcmp.eq.s32.totalorder %v485, 1
      %v494 = vsel %vm486, %v470, 0.0
      %v495 = vsel %vm487, %v471, 0.0
      %v496 = vsel %vm488, %v472, 0.0
      %v497 = vsel %vm489, %v473, 0.0
      %v498 = vsel %vm490, %v474, 0.0
      %v499 = vsel %vm491, %v475, 0.0
      %v500 = vsel %vm492, %v476, 0.0
      %v501 = vsel %vm493, %v477, 0.0
      %v502 = vld [vmem:[#allocation2 + $0x8] sm:$0xff]
      %v503 = vld [vmem:[#allocation2 + $0x7] sm:$0xff]
      %v504 = vsel %vm486, %v503, 0.0
      %v505 = vsel %vm487, %v470, 0.0
      %v506 = vsel %vm488, %v471, 0.0
      %v507 = vsel %vm489, %v472, 0.0
      %v508 = vsel %vm490, %v473, 0.0
      %v509 = vsel %vm491, %v474, 0.0
      %v510 = vsel %vm492, %v475, 0.0
      %v511 = vsel %vm493, %v476, 0.0
      %520 = vrot.lane.b32.xlu0 %v504, 32
      %v521 = vpop.permute.xlu0 %520
      %522 = vrot.lane.b32.xlu0 %v505, 32
      %v523 = vpop.permute.xlu0 %522
      %524 = vrot.lane.b32.xlu0 %v506, 32
      %v525 = vpop.permute.xlu0 %524
      %526 = vrot.lane.b32.xlu0 %v507, 32
      %v527 = vpop.permute.xlu0 %526
      %528 = vrot.lane.b32.xlu0 %v508, 32
      %v529 = vpop.permute.xlu0 %528
      %530 = vrot.lane.b32.xlu0 %v509, 32
      %v531 = vpop.permute.xlu0 %530
      %532 = vrot.lane.b32.xlu0 %v510, 32
      %v533 = vpop.permute.xlu0 %532
      %534 = vrot.lane.b32.xlu0 %v511, 32
      %v535 = vpop.permute.xlu0 %534
      %552 = vrot.lane.b32.xlu0 %v502, 96
      %v553 = vpop.permute.xlu0 %552
      %554 = vrot.lane.b32.xlu0 %v462, 96
      %v555 = vpop.permute.xlu0 %554
      %556 = vrot.lane.b32.xlu0 %v463, 96
      %v557 = vpop.permute.xlu0 %556
      %558 = vrot.lane.b32.xlu0 %v464, 96
      %v559 = vpop.permute.xlu0 %558
      %560 = vrot.lane.b32.xlu0 %v465, 96
      %v561 = vpop.permute.xlu0 %560
      %562 = vrot.lane.b32.xlu0 %v466, 96
      %v563 = vpop.permute.xlu0 %562
      %564 = vrot.lane.b32.xlu0 %v467, 96
      %v565 = vpop.permute.xlu0 %564
      %566 = vrot.lane.b32.xlu0 %v468, 96
      %v567 = vpop.permute.xlu0 %566
      %584 = vrot.lane.b32.xlu0 %v494, 64
      %v585 = vpop.permute.xlu0 %584
      %586 = vrot.lane.b32.xlu0 %v495, 64
      %v587 = vpop.permute.xlu0 %586
      %588 = vrot.lane.b32.xlu0 %v496, 64
      %v589 = vpop.permute.xlu0 %588
      %590 = vrot.lane.b32.xlu0 %v497, 64
      %v591 = vpop.permute.xlu0 %590
      %592 = vrot.lane.b32.xlu0 %v498, 64
      %v593 = vpop.permute.xlu0 %592
      %594 = vrot.lane.b32.xlu0 %v499, 64
      %v595 = vpop.permute.xlu0 %594
      %596 = vrot.lane.b32.xlu0 %v500, 64
      %v597 = vpop.permute.xlu0 %596
      %598 = vrot.lane.b32.xlu0 %v501, 64
      %v599 = vpop.permute.xlu0 %598
      %608 = vrot.lane.b32.xlu0 %v494, 96
      %v609 = vpop.permute.xlu0 %608
      %610 = vrot.lane.b32.xlu0 %v495, 96
      %v611 = vpop.permute.xlu0 %610
      %612 = vrot.lane.b32.xlu0 %v496, 96
      %v613 = vpop.permute.xlu0 %612
      %614 = vrot.lane.b32.xlu0 %v497, 96
      %v615 = vpop.permute.xlu0 %614
      %616 = vrot.lane.b32.xlu0 %v498, 96
      %v617 = vpop.permute.xlu0 %616
      %618 = vrot.lane.b32.xlu0 %v499, 96
      %v619 = vpop.permute.xlu0 %618
      %620 = vrot.lane.b32.xlu0 %v500, 96
      %v621 = vpop.permute.xlu0 %620
      %622 = vrot.lane.b32.xlu0 %v501, 96
      %v623 = vpop.permute.xlu0 %622
      %633 = vrot.lane.b32.xlu0 %v462, 32
      %v634 = vpop.permute.xlu0 %633
      %635 = vrot.lane.b32.xlu0 %v463, 32
      %v636 = vpop.permute.xlu0 %635
      %637 = vrot.lane.b32.xlu0 %v464, 32
      %v638 = vpop.permute.xlu0 %637
      %639 = vrot.lane.b32.xlu0 %v465, 32
      %v640 = vpop.permute.xlu0 %639
      %641 = vrot.lane.b32.xlu0 %v466, 32
      %v642 = vpop.permute.xlu0 %641
      %643 = vrot.lane.b32.xlu0 %v467, 32
      %v644 = vpop.permute.xlu0 %643
      %645 = vrot.lane.b32.xlu0 %v468, 32
      %v646 = vpop.permute.xlu0 %645
      %647 = vrot.lane.b32.xlu0 %v469, 32
      %v648 = vpop.permute.xlu0 %647
      %v657 = vsel %vm281, %v521, %v553
      %v658 = vsel %vm281, %v523, %v555
      %v659 = vsel %vm281, %v525, %v557
      %v660 = vsel %vm281, %v527, %v559
      %v661 = vsel %vm281, %v529, %v561
      %v662 = vsel %vm281, %v531, %v563
      %v663 = vsel %vm281, %v533, %v565
      %v664 = vsel %vm281, %v535, %v567
      %vm665 = vcmask 523264
      %v666 = vsel %vm665, %v657, %v553
      %v667 = vsel %vm665, %v658, %v555
      %v668 = vsel %vm665, %v659, %v557
      %v669 = vsel %vm665, %v660, %v559
      %v670 = vsel %vm665, %v661, %v561
      %v671 = vsel %vm665, %v662, %v563
      %v672 = vsel %vm665, %v663, %v565
      %v673 = vsel %vm665, %v664, %v567
      %vm674 = vcmask 785408
      %v675 = vsel %vm674, %v666, %v585
      %v676 = vsel %vm674, %v667, %v587
      %v677 = vsel %vm674, %v668, %v589
      %v678 = vsel %vm674, %v669, %v591
      %v679 = vsel %vm674, %v670, %v593
      %v680 = vsel %vm674, %v671, %v595
      %v681 = vsel %vm674, %v672, %v597
      %v682 = vsel %vm674, %v673, %v599
      %v683 = vsel %vm665, %v462, %v609
      %v684 = vsel %vm665, %v463, %v611
      %v685 = vsel %vm665, %v464, %v613
      %v686 = vsel %vm665, %v465, %v615
      %v687 = vsel %vm665, %v466, %v617
      %v688 = vsel %vm665, %v467, %v619
      %v689 = vsel %vm665, %v468, %v621
      %v690 = vsel %vm665, %v469, %v623
      %v691 = vsel %vm674, %v683, %v634
      %v692 = vsel %vm674, %v684, %v636
      %v693 = vsel %vm674, %v685, %v638
      %v694 = vsel %vm674, %v686, %v640
      %v695 = vsel %vm674, %v687, %v642
      %v696 = vsel %vm674, %v688, %v644
      %v697 = vsel %vm674, %v689, %v646
      %v698 = vsel %vm674, %v690, %v648
      %v699 = vsel %vm281, %v634, 0
      %v701 = vsel %vm281, %v636, 0
      %v703 = vsel %vm281, %v638, 0
      %v705 = vsel %vm281, %v640, 0
      %v707 = vsel %vm281, %v642, 0
      %v709 = vsel %vm281, %v644, 0
      %v711 = vsel %vm281, %v646, 0
      %v713 = vsel %vm281, %v648, 0
      %715 = vmatprep.subr.mxu0 0.0
      %716 = vmatpush1.msra.mxu0 %v424
      %717 = vmatprep.subr.mxu0 0.0
      %718 = vmatpush1.msra.mxu0 %v425
      %719 = vmatprep.subr.mxu0 0.0
      %720 = vmatpush1.msra.mxu0 %v426
      %721 = vmatprep.subr.mxu0 0.0
      %722 = vmatpush1.msra.mxu0 %v427
      %723 = vmatprep.subr.mxu0 0.0
      %724 = vmatpush1.msra.mxu0 %v428
      %725 = vmatprep.subr.mxu0 0.0
      %726 = vmatpush1.msra.mxu0 %v429
      %727 = vmatprep.subr.mxu0 0.0
      %728 = vmatpush1.msra.mxu0 %v430
      %729 = vmatprep.subr.mxu0 0.0
      %730 = vmatpush1.msra.mxu0 %v431
      %731 = vmatprep.subr.mxu0 0.0
      %732 = vmatpush1.msra.mxu0 %v432
      %733 = vmatprep.subr.mxu0 0.0
      %734 = vmatpush1.msra.mxu0 %v433
      %735 = vmatprep.subr.mxu0 0.0
      %736 = vmatpush1.msra.mxu0 %v434
      %737 = vmatprep.subr.mxu0 0.0
      %738 = vmatpush1.msra.mxu0 %v435
      %739 = vmatprep.subr.mxu0 0.0
      %740 = vmatpush1.msra.mxu0 %v436
      %741 = vmatprep.subr.mxu0 0.0
      %742 = vmatpush1.msra.mxu0 %v437
      %743 = vmatprep.subr.mxu0 0.0
      %744 = vmatpush1.msra.mxu0 %v438
      %745 = vmatprep.subr.mxu0 0.0
      %746 = vmatpush1.msra.mxu0 %v439
      %747 = vmatprep.subr.mxu0 0.0
      %748 = vmatpush1.msra.mxu0 %v440
      %749 = vmatprep.subr.mxu0 0.0
      %750 = vmatpush1.msra.mxu0 %v441
      %751 = vmatprep.subr.mxu0 0.0
      %752 = vmatpush1.msra.mxu0 %v442
      %753 = vmatprep.subr.mxu0 0.0
      %754 = vmatpush1.msra.mxu0 %v443
      %755 = vmatprep.subr.mxu0 0.0
      %756 = vmatpush1.msra.mxu0 %v444
      %757 = vmatprep.subr.mxu0 0.0
      %758 = vmatpush1.msra.mxu0 %v445
      %759 = vmatprep.subr.mxu0 0.0
      %760 = vmatpush1.msra.mxu0 %v446
      %761 = vmatprep.subr.mxu0 0.0
      %762 = vmatpush1.msra.mxu0 %v447
      %763 = vmatprep.subr.mxu0 0.0
      %764 = vmatpush1.msra.mxu0 %v448
      %765 = vmatprep.subr.mxu0 0.0
      %766 = vmatpush1.msra.mxu0 %v449
      %767 = vmatprep.subr.mxu0 0.0
      %768 = vmatpush1.msra.mxu0 %v450
      %769 = vmatprep.subr.mxu0 0.0
      %770 = vmatpush1.msra.mxu0 %v451
      %771 = vmatprep.subr.mxu0 0.0
      %772 = vmatpush1.msra.mxu0 %v452
      %773 = vmatprep.subr.mxu0 0.0
      %774 = vmatpush1.msra.mxu0 %v453
      %775 = vmatprep.subr.mxu0 0.0
      %776 = vmatpush1.msra.mxu0 %v454
      %777 = vmatprep.subr.mxu0 0.0
      %778 = vmatpush1.msra.mxu0 %v455
      %779 = vmatprep.mubr.f32.mxu0 %v691
      %780 = vmatmul.mubr.f32.gmra.mrb[0].mxu0 %v675
      %v781 = vpop.f32.mrb[0].mxu0
      %v782 = vadd.f32 0.0, %v781
      %v783 = vpop.f32.mrb[0].mxu0
      %784 = vmatprep.mubr.f32.mxu0 %v692
      %785 = vmatmul.mubr.f32.gmra.mrb[0].mxu0 %v676
      %v786 = vpop.f32.mrb[0].mxu0
      %v787 = vadd.f32 0.0, %v786
      %v788 = vpop.f32.mrb[0].mxu0
      %789 = vmatprep.mubr.f32.mxu0 %v693
      %790 = vmatmul.mubr.f32.gmra.mrb[0].mxu0 %v677
      %v791 = vpop.f32.mrb[0].mxu0
      %v792 = vadd.f32 0.0, %v791
      %v793 = vpop.f32.mrb[0].mxu0
      %794 = vmatprep.mubr.f32.mxu0 %v694
      %795 = vmatmul.mubr.f32.gmra.mrb[0].mxu0 %v678
      %v796 = vpop.f32.mrb[0].mxu0
      %v797 = vadd.f32 0.0, %v796
      %v798 = vpop.f32.mrb[0].mxu0
      %799 = vmatprep.mubr.f32.mxu0 %v695
      %800 = vmatmul.mubr.f32.gmra.mrb[0].mxu0 %v679
      %v801 = vpop.f32.mrb[0].mxu0
      %v802 = vadd.f32 0.0, %v801
      %v803 = vpop.f32.mrb[0].mxu0
      %804 = vmatprep.mubr.f32.mxu0 %v696
      %805 = vmatmul.mubr.f32.gmra.mrb[0].mxu0 %v680
      %v806 = vpop.f32.mrb[0].mxu0
      %v807 = vadd.f32 0.0, %v806
      %v808 = vpop.f32.mrb[0].mxu0
      %809 = vmatprep.mubr.f32.mxu0 %v697
      %810 = vmatmul.mubr.f32.gmra.mrb[0].mxu0 %v681
      %v811 = vpop.f32.mrb[0].mxu0
      %v812 = vadd.f32 0.0, %v811
      %v813 = vpop.f32.mrb[0].mxu0
      %814 = vmatprep.mubr.f32.mxu0 %v698
      %815 = vmatmul.mubr.f32.gmra.mrb[0].mxu0 %v682
      %v816 = vpop.f32.mrb[0].mxu0
      %v817 = vadd.f32 0.0, %v816
      %v818 = vpop.f32.mrb[0].mxu0
      %819 = vdwg.mxu0
      %820 = vmatprep.subr.mxu0 0.0
      %821 = vmatpush1.msra.mxu0 %v456
      %822 = vmatprep.subr.mxu0 0.0
      %823 = vmatpush1.msra.mxu0 %v457
      %824 = vmatprep.subr.mxu0 0.0
      %825 = vmatpush1.msra.mxu0 %v458
      %826 = vmatprep.subr.mxu0 0.0
      %827 = vmatpush1.msra.mxu0 %v459
      %828 = vmatprep.subr.mxu0 0.0
      %829 = vmatpush1.msra.mxu0 0.0
      %830 = vmatprep.subr.mxu0 0.0
      %831 = vmatpush1.msra.mxu0 0.0
      %832 = vmatprep.subr.mxu0 0.0
      %833 = vmatpush1.msra.mxu0 0.0
      %834 = vmatprep.subr.mxu0 0.0
      %835 = vmatpush1.msra.mxu0 0.0
      %836 = vmatprep.subr.mxu0 0.0
      %837 = vmatpush1.msra.mxu0 0.0
      %838 = vmatprep.subr.mxu0 0.0
      %839 = vmatpush1.msra.mxu0 0.0
      %840 = vmatprep.subr.mxu0 0.0
      %841 = vmatpush1.msra.mxu0 0.0
      %842 = vmatprep.subr.mxu0 0.0
      %843 = vmatpush1.msra.mxu0 0.0
      %844 = vmatprep.subr.mxu0 0.0
      %845 = vmatpush1.msra.mxu0 0.0
      %846 = vmatprep.subr.mxu0 0.0
      %847 = vmatpush1.msra.mxu0 0.0
      %848 = vmatprep.subr.mxu0 0.0
      %849 = vmatpush1.msra.mxu0 0.0
      %850 = vmatprep.subr.mxu0 0.0
      %851 = vmatpush1.msra.mxu0 0.0
      %852 = vmatprep.subr.mxu0 0.0
      %853 = vmatpush1.msra.mxu0 0.0
      %854 = vmatprep.subr.mxu0 0.0
      %855 = vmatpush1.msra.mxu0 0.0
      %856 = vmatprep.subr.mxu0 0.0
      %857 = vmatpush1.msra.mxu0 0.0
      %858 = vmatprep.subr.mxu0 0.0
      %859 = vmatpush1.msra.mxu0 0.0
      %860 = vmatprep.subr.mxu0 0.0
      %861 = vmatpush1.msra.mxu0 0.0
      %862 = vmatprep.subr.mxu0 0.0
      %863 = vmatpush1.msra.mxu0 0.0
      %864 = vmatprep.subr.mxu0 0.0
      %865 = vmatpush1.msra.mxu0 0.0
      %866 = vmatprep.subr.mxu0 0.0
      %867 = vmatpush1.msra.mxu0 0.0
      %868 = vmatprep.subr.mxu0 0.0
      %869 = vmatpush1.msra.mxu0 0.0
      %870 = vmatprep.subr.mxu0 0.0
      %871 = vmatpush1.msra.mxu0 0.0
      %872 = vmatprep.subr.mxu0 0.0
      %873 = vmatpush1.msra.mxu0 0.0
      %874 = vmatprep.subr.mxu0 0.0
      %875 = vmatpush1.msra.mxu0 0.0
      %876 = vmatprep.subr.mxu0 0.0
      %877 = vmatpush1.msra.mxu0 0.0
      %878 = vmatprep.subr.mxu0 0.0
      %879 = vmatpush1.msra.mxu0 0.0
      %880 = vmatprep.subr.mxu0 0.0
      %881 = vmatpush1.msra.mxu0 0.0
      %882 = vmatprep.subr.mxu0 0.0
      %883 = vmatpush1.msra.mxu0 0.0
      %884 = vmatprep.mubr.f32.mxu0 0.0
      %885 = vmatmul.mubr.f32.gmra.mrb[0].mxu0 %v699
      %v886 = vpop.f32.mrb[0].mxu0
      %v887 = vadd.f32 %v782, %v886
      %v888 = vpop.f32.mrb[0].mxu0
      %889 = vmatprep.mubr.f32.mxu0 0.0
      %890 = vmatmul.mubr.f32.gmra.mrb[0].mxu0 %v701
      %v891 = vpop.f32.mrb[0].mxu0
      %v892 = vadd.f32 %v787, %v891
      %v893 = vpop.f32.mrb[0].mxu0
      %894 = vmatprep.mubr.f32.mxu0 0.0
      %895 = vmatmul.mubr.f32.gmra.mrb[0].mxu0 %v703
      %v896 = vpop.f32.mrb[0].mxu0
      %v897 = vadd.f32 %v792, %v896
      %v898 = vpop.f32.mrb[0].mxu0
      %899 = vmatprep.mubr.f32.mxu0 0.0
      %900 = vmatmul.mubr.f32.gmra.mrb[0].mxu0 %v705
      %v901 = vpop.f32.mrb[0].mxu0
      %v902 = vadd.f32 %v797, %v901
      %v903 = vpop.f32.mrb[0].mxu0
      %904 = vmatprep.mubr.f32.mxu0 0.0
      %905 = vmatmul.mubr.f32.gmra.mrb[0].mxu0 %v707
      %v906 = vpop.f32.mrb[0].mxu0
      %v907 = vadd.f32 %v802, %v906
      %v908 = vpop.f32.mrb[0].mxu0
      %909 = vmatprep.mubr.f32.mxu0 0.0
      %910 = vmatmul.mubr.f32.gmra.mrb[0].mxu0 %v709
      %v911 = vpop.f32.mrb[0].mxu0
      %v912 = vadd.f32 %v807, %v911
      %v913 = vpop.f32.mrb[0].mxu0
      %914 = vmatprep.mubr.f32.mxu0 0.0
      %915 = vmatmul.mubr.f32.gmra.mrb[0].mxu0 %v711
      %v916 = vpop.f32.mrb[0].mxu0
      %v917 = vadd.f32 %v812, %v916
      %v918 = vpop.f32.mrb[0].mxu0
      %919 = vmatprep.mubr.f32.mxu0 0.0
      %920 = vmatmul.mubr.f32.gmra.mrb[0].mxu0 %v713
      %v921 = vpop.f32.mrb[0].mxu0
      %v922 = vadd.f32 %v817, %v921
      %v923 = vpop.f32.mrb[0].mxu0
      %924 = vdwg.mxu0
      %v926 = vlaneseq
      %v927 = vshrl.u32 %v926, 7
      %v928 = vsub.s32 0, %v927
      %v929 = vrot.slane %v460, %v928
      %v931 = vmul.f32 %v887, %v929
      %v932 = vmul.f32 %v892, %v929
      %v933 = vmul.f32 %v897, %v929
      %v934 = vmul.f32 %v902, %v929
      %v935 = vmul.f32 %v907, %v929
      %v936 = vmul.f32 %v912, %v929
      %v937 = vmul.f32 %v917, %v929
      %v938 = vmul.f32 %v922, %v929
      %v940 = vlaneseq
      %v941 = vshrl.u32 %v940, 7
      %v942 = vsub.s32 0, %v941
      %v943 = vrot.slane %v461, %v942
      %v945 = vadd.f32 %v931, %v943
      %v946 = vadd.f32 %v932, %v943
      %v947 = vadd.f32 %v933, %v943
      %v948 = vadd.f32 %v934, %v943
      %v949 = vadd.f32 %v935, %v943
      %v950 = vadd.f32 %v936, %v943
      %v951 = vadd.f32 %v937, %v943
      %v952 = vadd.f32 %v938, %v943
      %v953 = vmax.f32 %v945, 0.0
      %v954 = vmax.f32 %v946, 0.0
      %v955 = vmax.f32 %v947, 0.0
      %v956 = vmax.f32 %v948, 0.0
      %v957 = vmax.f32 %v949, 0.0
      %v958 = vmax.f32 %v950, 0.0
      %v959 = vmax.f32 %v951, 0.0
      %v960 = vmax.f32 %v952, 0.0
      %961 = vst.msk [vmem:[#allocation3 + $0x10] sm:$0xff] %vm281, %v953
      %962 = vst.msk [vmem:[#allocation3 + $0x18] sm:$0xff] %vm281, %v954
      %963 = vst.msk [vmem:[#allocation3 + $0x20] sm:$0xff] %vm281, %v955
      %964 = vst.msk [vmem:[#allocation3 + $0x28] sm:$0xff] %vm281, %v956
      %965 = vst.msk [vmem:[#allocation3 + $0x30] sm:$0xff] %vm281, %v957
      %966 = vst.msk [vmem:[#allocation3 + $0x38] sm:$0xff] %vm281, %v958
      %967 = vst.msk [vmem:[#allocation3 + $0x40] sm:$0xff] %vm281, %v959
      %968 = vst.msk [vmem:[#allocation3 + $0x48] sm:$0xff] %vm281, %v960
      %v969 = vld [vmem:[%s4] sm:$0xff]
      %v970 = vld [vmem:[%s4 + $0x8] sm:$0xff]
      %v971 = vld [vmem:[%s4 + $0x10] sm:$0xff]
      %v972 = vld [vmem:[%s4 + $0x18] sm:$0xff]
      %v973 = vld [vmem:[%s4 + $0x20] sm:$0xff]
      %v974 = vld [vmem:[%s4 + $0x28] sm:$0xff]
      %v975 = vld [vmem:[%s4 + $0x30] sm:$0xff]
      %v976 = vld [vmem:[%s4 + $0x38] sm:$0xff]
      %v977 = vld [vmem:[%s4 + $0x40] sm:$0xff]
      %v978 = vld [vmem:[%s4 + $0x48] sm:$0xff]
      %v979 = vld [vmem:[%s4 + $0x50] sm:$0xff]
      %v980 = vld [vmem:[%s4 + $0x58] sm:$0xff]
      %v981 = vld [vmem:[%s4 + $0x60] sm:$0xff]
      %v982 = vld [vmem:[%s4 + $0x68] sm:$0xff]
      %v983 = vld [vmem:[%s4 + $0x70] sm:$0xff]
      %v984 = vld [vmem:[%s4 + $0x78] sm:$0xff]
      %v985 = vld [vmem:[%s4 + $0x80] sm:$0xff]
      %v986 = vld [vmem:[%s4 + $0x88] sm:$0xff]
      %v987 = vld [vmem:[%s4 + $0x90] sm:$0xff]
      %v988 = vld [vmem:[%s4 + $0x98] sm:$0xff]
      %v989 = vld [vmem:[%s4 + $0xa0] sm:$0xff]
      %v990 = vld [vmem:[%s4 + $0xa8] sm:$0xff]
      %v991 = vld [vmem:[%s4 + $0xb0] sm:$0xff]
      %v992 = vld [vmem:[%s4 + $0xb8] sm:$0xff]
      %v993 = vld [vmem:[%s4 + $0xc0] sm:$0xff]
      %v994 = vld [vmem:[%s4 + $0xc8] sm:$0xff]
      %v995 = vld [vmem:[%s4 + $0xd0] sm:$0xff]
      %v996 = vld [vmem:[%s4 + $0xd8] sm:$0xff]
      %v997 = vld [vmem:[%s4 + $0xe0] sm:$0xff]
      %v998 = vld [vmem:[%s4 + $0xe8] sm:$0xff]
      %v999 = vld [vmem:[%s4 + $0xf0] sm:$0xff]
      %v1000 = vld [vmem:[%s4 + $0xf8] sm:$0xff]
      %v1001 = vld [vmem:[%s4 + $0x100] sm:$0xff]
      %v1002 = vld [vmem:[%s4 + $0x108] sm:$0xff]
      %v1003 = vld [vmem:[%s4 + $0x110] sm:$0xff]
      %v1004 = vld [vmem:[%s4 + $0x118] sm:$0xff]
      %v1005 = vld [vmem:[%s5] sm:$0x1]
      %v1006 = vld [vmem:[%s6] sm:$0x1]
      %v1007 = vld [vmem:[#allocation3 + $0x7] sm:$0xff]
      %v1008 = vld [vmem:[#allocation3 + $0xf] sm:$0xff]
      %v1009 = vld [vmem:[#allocation3 + $0x17] sm:$0xff]
      %v1010 = vld [vmem:[#allocation3 + $0x1f] sm:$0xff]
      %v1011 = vld [vmem:[#allocation3 + $0x27] sm:$0xff]
      %v1012 = vld [vmem:[#allocation3 + $0x2f] sm:$0xff]
      %v1013 = vld [vmem:[#allocation3 + $0x37] sm:$0xff]
      %v1014 = vld [vmem:[#allocation3 + $0x3f] sm:$0xff]
      %v1015 = vsel %vm486, %v1007, 0.0
      %v1016 = vsel %vm487, %v1008, 0.0
      %v1017 = vsel %vm488, %v1009, 0.0
      %v1018 = vsel %vm489, %v1010, 0.0
      %v1019 = vsel %vm490, %v1011, 0.0
      %v1020 = vsel %vm491, %v1012, 0.0
      %v1021 = vsel %vm492, %v1013, 0.0
      %v1022 = vsel %vm493, %v1014, 0.0
      %v1023 = vld [vmem:[#allocation3 + $0x8] sm:$0xff]
      %v1024 = vld [vmem:[#allocation3 + $0x10] sm:$0xff]
      %v1025 = vld [vmem:[#allocation3 + $0x18] sm:$0xff]
      %v1026 = vld [vmem:[#allocation3 + $0x20] sm:$0xff]
      %v1027 = vld [vmem:[#allocation3 + $0x28] sm:$0xff]
      %v1028 = vld [vmem:[#allocation3 + $0x30] sm:$0xff]
      %v1029 = vld [vmem:[#allocation3 + $0x38] sm:$0xff]
      %v1030 = vld [vmem:[#allocation3 + $0x40] sm:$0xff]
      %v1031 = vld [vmem:[#allocation3 + $0x9] sm:$0xff]
      %v1032 = vld [vmem:[#allocation3 + $0x11] sm:$0xff]
      %v1033 = vld [vmem:[#allocation3 + $0x19] sm:$0xff]
      %v1034 = vld [vmem:[#allocation3 + $0x21] sm:$0xff]
      %v1035 = vld [vmem:[#allocation3 + $0x29] sm:$0xff]
      %v1036 = vld [vmem:[#allocation3 + $0x31] sm:$0xff]
      %v1037 = vld [vmem:[#allocation3 + $0x39] sm:$0xff]
      %v1038 = vld [vmem:[#allocation3 + $0x41] sm:$0xff]
      %v1039 = vsel %vm400, 1, 0
      %v1040 = vsel %vm401, 1, 0
      %v1041 = vsel %vm402, 1, 0
      %v1042 = vsel %vm403, 1, 0
      %v1043 = vsel %vm404, 1, 0
      %v1044 = vsel %vm405, 1, 0
      %v1045 = vsel %vm406, 1, 0
      %v1046 = vsel %vm407, 1, 0
      %vm1047 = vcmp.eq.s32.totalorder %v1039, 1
      %vm1048 = vcmp.eq.s32.totalorder %v1040, 1
      %vm1049 = vcmp.eq.s32.totalorder %v1041, 1
      %vm1050 = vcmp.eq.s32.totalorder %v1042, 1
      %vm1051 = vcmp.eq.s32.totalorder %v1043, 1
      %vm1052 = vcmp.eq.s32.totalorder %v1044, 1
      %vm1053 = vcmp.eq.s32.totalorder %v1045, 1
      %vm1054 = vcmp.eq.s32.totalorder %v1046, 1
      %v1055 = vsel %vm1047, %v1031, 0.0
      %v1056 = vsel %vm1048, %v1032, 0.0
      %v1057 = vsel %vm1049, %v1033, 0.0
      %v1058 = vsel %vm1050, %v1034, 0.0
      %v1059 = vsel %vm1051, %v1035, 0.0
      %v1060 = vsel %vm1052, %v1036, 0.0
      %v1061 = vsel %vm1053, %v1037, 0.0
      %v1062 = vsel %vm1054, %v1038, 0.0
      %v1063 = vld [vmem:[#allocation3 + $0x47] sm:$0xff]
      %v1064 = vsel %vm486, %v1008, 0.0
      %v1065 = vsel %vm487, %v1009, 0.0
      %v1066 = vsel %vm488, %v1010, 0.0
      %v1067 = vsel %vm489, %v1011, 0.0
      %v1068 = vsel %vm490, %v1012, 0.0
      %v1069 = vsel %vm491, %v1013, 0.0
      %v1070 = vsel %vm492, %v1014, 0.0
      %v1071 = vsel %vm493, %v1063, 0.0
      %v1072 = vld [vmem:[#allocation3 + $0x48] sm:$0xff]
      %v1073 = vld [vmem:[#allocation3 + $0x49] sm:$0xff]
      %v1074 = vsel %vm1047, %v1032, 0.0
      %v1075 = vsel %vm1048, %v1033, 0.0
      %v1076 = vsel %vm1049, %v1034, 0.0
      %v1077 = vsel %vm1050, %v1035, 0.0
      %v1078 = vsel %vm1051, %v1036, 0.0
      %v1079 = vsel %vm1052, %v1037, 0.0
      %v1080 = vsel %vm1053, %v1038, 0.0
      %v1081 = vsel %vm1054, %v1073, 0.0
      %v1082 = vld [vmem:[#allocation3 + $0x4f] sm:$0xff]
      %v1083 = vsel %vm486, %v1009, 0.0
      %v1084 = vsel %vm487, %v1010, 0.0
      %v1085 = vsel %vm488, %v1011, 0.0
      %v1086 = vsel %vm489, %v1012, 0.0
      %v1087 = vsel %vm490, %v1013, 0.0
      %v1088 = vsel %vm491, %v1014, 0.0
      %v1089 = vsel %vm492, %v1063, 0.0
      %v1090 = vsel %vm493, %v1082, 0.0
      %v1091 = vld [vmem:[#allocation3 + $0x50] sm:$0xff]
      %v1092 = vld [vmem:[#allocation3 + $0x51] sm:$0xff]
      %v1093 = vsel %vm1047, %v1033, 0.0
      %v1094 = vsel %vm1048, %v1034, 0.0
      %v1095 = vsel %vm1049, %v1035, 0.0
      %v1096 = vsel %vm1050, %v1036, 0.0
      %v1097 = vsel %vm1051, %v1037, 0.0
      %v1098 = vsel %vm1052, %v1038, 0.0
      %v1099 = vsel %vm1053, %v1073, 0.0
      %v1100 = vsel %vm1054, %v1092, 0.0
      %1109 = vrot.lane.b32.xlu0 %v1023, 32
      %v1110 = vpop.permute.xlu0 %1109
      %1111 = vrot.lane.b32.xlu0 %v1024, 32
      %v1112 = vpop.permute.xlu0 %1111
      %1113 = vrot.lane.b32.xlu0 %v1025, 32
      %v1114 = vpop.permute.xlu0 %1113
      %1115 = vrot.lane.b32.xlu0 %v1026, 32
      %v1116 = vpop.permute.xlu0 %1115
      %1117 = vrot.lane.b32.xlu0 %v1027, 32
      %v1118 = vpop.permute.xlu0 %1117
      %1119 = vrot.lane.b32.xlu0 %v1028, 32
      %v1120 = vpop.permute.xlu0 %1119
      %1121 = vrot.lane.b32.xlu0 %v1029, 32
      %v1122 = vpop.permute.xlu0 %1121
      %1123 = vrot.lane.b32.xlu0 %v1030, 32
      %v1124 = vpop.permute.xlu0 %1123
      %1141 = vrot.lane.b32.xlu0 %v1055, 64
      %v1142 = vpop.permute.xlu0 %1141
      %1143 = vrot.lane.b32.xlu0 %v1056, 64
      %v1144 = vpop.permute.xlu0 %1143
      %1145 = vrot.lane.b32.xlu0 %v1057, 64
      %v1146 = vpop.permute.xlu0 %1145
      %1147 = vrot.lane.b32.xlu0 %v1058, 64
      %v1148 = vpop.permute.xlu0 %1147
      %1149 = vrot.lane.b32.xlu0 %v1059, 64
      %v1150 = vpop.permute.xlu0 %1149
      %1151 = vrot.lane.b32.xlu0 %v1060, 64
      %v1152 = vpop.permute.xlu0 %1151
      %1153 = vrot.lane.b32.xlu0 %v1061, 64
      %v1154 = vpop.permute.xlu0 %1153
      %1155 = vrot.lane.b32.xlu0 %v1062, 64
      %v1156 = vpop.permute.xlu0 %1155
      %1173 = vrot.lane.b32.xlu0 %v1064, 96
      %v1174 = vpop.permute.xlu0 %1173
      %1175 = vrot.lane.b32.xlu0 %v1065, 96
      %v1176 = vpop.permute.xlu0 %1175
      %1177 = vrot.lane.b32.xlu0 %v1066, 96
      %v1178 = vpop.permute.xlu0 %1177
      %1179 = vrot.lane.b32.xlu0 %v1067, 96
      %v1180 = vpop.permute.xlu0 %1179
      %1181 = vrot.lane.b32.xlu0 %v1068, 96
      %v1182 = vpop.permute.xlu0 %1181
      %1183 = vrot.lane.b32.xlu0 %v1069, 96
      %v1184 = vpop.permute.xlu0 %1183
      %1185 = vrot.lane.b32.xlu0 %v1070, 96
      %v1186 = vpop.permute.xlu0 %1185
      %1187 = vrot.lane.b32.xlu0 %v1071, 96
      %v1188 = vpop.permute.xlu0 %1187
      %1205 = vrot.lane.b32.xlu0 %v1074, 32
      %v1206 = vpop.permute.xlu0 %1205
      %1207 = vrot.lane.b32.xlu0 %v1075, 32
      %v1208 = vpop.permute.xlu0 %1207
      %1209 = vrot.lane.b32.xlu0 %v1076, 32
      %v1210 = vpop.permute.xlu0 %1209
      %1211 = vrot.lane.b32.xlu0 %v1077, 32
      %v1212 = vpop.permute.xlu0 %1211
      %1213 = vrot.lane.b32.xlu0 %v1078, 32
      %v1214 = vpop.permute.xlu0 %1213
      %1215 = vrot.lane.b32.xlu0 %v1079, 32
      %v1216 = vpop.permute.xlu0 %1215
      %1217 = vrot.lane.b32.xlu0 %v1080, 32
      %v1218 = vpop.permute.xlu0 %1217
      %1219 = vrot.lane.b32.xlu0 %v1081, 32
      %v1220 = vpop.permute.xlu0 %1219
      %1237 = vrot.lane.b32.xlu0 %v1083, 64
      %v1238 = vpop.permute.xlu0 %1237
      %1239 = vrot.lane.b32.xlu0 %v1084, 64
      %v1240 = vpop.permute.xlu0 %1239
      %1241 = vrot.lane.b32.xlu0 %v1085, 64
      %v1242 = vpop.permute.xlu0 %1241
      %1243 = vrot.lane.b32.xlu0 %v1086, 64
      %v1244 = vpop.permute.xlu0 %1243
      %1245 = vrot.lane.b32.xlu0 %v1087, 64
      %v1246 = vpop.permute.xlu0 %1245
      %1247 = vrot.lane.b32.xlu0 %v1088, 64
      %v1248 = vpop.permute.xlu0 %1247
      %1249 = vrot.lane.b32.xlu0 %v1089, 64
      %v1250 = vpop.permute.xlu0 %1249
      %1251 = vrot.lane.b32.xlu0 %v1090, 64
      %v1252 = vpop.permute.xlu0 %1251
      %1263 = vrot.lane.b32.xlu0 %v1025, 96
      %v1264 = vpop.permute.xlu0 %1263
      %1265 = vrot.lane.b32.xlu0 %v1026, 96
      %v1266 = vpop.permute.xlu0 %1265
      %1267 = vrot.lane.b32.xlu0 %v1027, 96
      %v1268 = vpop.permute.xlu0 %1267
      %1269 = vrot.lane.b32.xlu0 %v1028, 96
      %v1270 = vpop.permute.xlu0 %1269
      %1271 = vrot.lane.b32.xlu0 %v1029, 96
      %v1272 = vpop.permute.xlu0 %1271
      %1273 = vrot.lane.b32.xlu0 %v1030, 96
      %v1274 = vpop.permute.xlu0 %1273
      %1275 = vrot.lane.b32.xlu0 %v1072, 96
      %v1276 = vpop.permute.xlu0 %1275
      %1277 = vrot.lane.b32.xlu0 %v1091, 96
      %v1278 = vpop.permute.xlu0 %1277
      %v1287 = vsel %vm281, %v1015, %v1110
      %v1288 = vsel %vm281, %v1016, %v1112
      %v1289 = vsel %vm281, %v1017, %v1114
      %v1290 = vsel %vm281, %v1018, %v1116
      %v1291 = vsel %vm281, %v1019, %v1118
      %v1292 = vsel %vm281, %v1020, %v1120
      %v1293 = vsel %vm281, %v1021, %v1122
      %v1294 = vsel %vm281, %v1022, %v1124
      %v1295 = vsel %vm665, %v1287, %v1142
      %v1296 = vsel %vm665, %v1288, %v1144
      %v1297 = vsel %vm665, %v1289, %v1146
      %v1298 = vsel %vm665, %v1290, %v1148
      %v1299 = vsel %vm665, %v1291, %v1150
      %v1300 = vsel %vm665, %v1292, %v1152
      %v1301 = vsel %vm665, %v1293, %v1154
      %v1302 = vsel %vm665, %v1294, %v1156
      %v1303 = vsel %vm674, %v1295, %v1174
      %v1304 = vsel %vm674, %v1296, %v1176
      %v1305 = vsel %vm674, %v1297, %v1178
      %v1306 = vsel %vm674, %v1298, %v1180
      %v1307 = vsel %vm674, %v1299, %v1182
      %v1308 = vsel %vm674, %v1300, %v1184
      %v1309 = vsel %vm674, %v1301, %v1186
      %v1310 = vsel %vm674, %v1302, %v1188
      %v1311 = vsel %vm281, %v1024, %v1206
      %v1312 = vsel %vm281, %v1025, %v1208
      %v1313 = vsel %vm281, %v1026, %v1210
      %v1314 = vsel %vm281, %v1027, %v1212
      %v1315 = vsel %vm281, %v1028, %v1214
      %v1316 = vsel %vm281, %v1029, %v1216
      %v1317 = vsel %vm281, %v1030, %v1218
      %v1318 = vsel %vm281, %v1072, %v1220
      %v1319 = vsel %vm665, %v1311, %v1238
      %v1320 = vsel %vm665, %v1312, %v1240
      %v1321 = vsel %vm665, %v1313, %v1242
      %v1322 = vsel %vm665, %v1314, %v1244
      %v1323 = vsel %vm665, %v1315, %v1246
      %v1324 = vsel %vm665, %v1316, %v1248
      %v1325 = vsel %vm665, %v1317, %v1250
      %v1326 = vsel %vm665, %v1318, %v1252
      %v1327 = vsel %vm674, %v1319, %v1264
      %v1328 = vsel %vm674, %v1320, %v1266
      %v1329 = vsel %vm674, %v1321, %v1268
      %v1330 = vsel %vm674, %v1322, %v1270
      %v1331 = vsel %vm674, %v1323, %v1272
      %v1332 = vsel %vm674, %v1324, %v1274
      %v1333 = vsel %vm674, %v1325, %v1276
      %v1334 = vsel %vm674, %v1326, %v1278
      %v1336 = vsel %vm281, %v1093, 0
      %v1339 = vsel %vm281, %v1094, 0
      %v1342 = vsel %vm281, %v1095, 0
      %v1345 = vsel %vm281, %v1096, 0
      %v1348 = vsel %vm281, %v1097, 0
      %v1351 = vsel %vm281, %v1098, 0
      %v1354 = vsel %vm281, %v1099, 0
      %v1357 = vsel %vm281, %v1100, 0
      %1359 = vmatprep.subr.mxu0 0.0
      %1360 = vmatpush1.msra.mxu0 %v969
      %1361 = vmatprep.subr.mxu0 0.0
      %1362 = vmatpush1.msra.mxu0 %v970
      %1363 = vmatprep.subr.mxu0 0.0
      %1364 = vmatpush1.msra.mxu0 %v971
      %1365 = vmatprep.subr.mxu0 0.0
      %1366 = vmatpush1.msra.mxu0 %v972
      %1367 = vmatprep.subr.mxu0 0.0
      %1368 = vmatpush1.msra.mxu0 %v973
      %1369 = vmatprep.subr.mxu0 0.0
      %1370 = vmatpush1.msra.mxu0 %v974
      %1371 = vmatprep.subr.mxu0 0.0
      %1372 = vmatpush1.msra.mxu0 %v975
      %1373 = vmatprep.subr.mxu0 0.0
      %1374 = vmatpush1.msra.mxu0 %v976
      %1375 = vmatprep.subr.mxu0 0.0
      %1376 = vmatpush1.msra.mxu0 %v977
      %1377 = vmatprep.subr.mxu0 0.0
      %1378 = vmatpush1.msra.mxu0 %v978
      %1379 = vmatprep.subr.mxu0 0.0
      %1380 = vmatpush1.msra.mxu0 %v979
      %1381 = vmatprep.subr.mxu0 0.0
      %1382 = vmatpush1.msra.mxu0 %v980
      %1383 = vmatprep.subr.mxu0 0.0
      %1384 = vmatpush1.msra.mxu0 %v981
      %1385 = vmatprep.subr.mxu0 0.0
      %1386 = vmatpush1.msra.mxu0 %v982
      %1387 = vmatprep.subr.mxu0 0.0
      %1388 = vmatpush1.msra.mxu0 %v983
      %1389 = vmatprep.subr.mxu0 0.0
      %1390 = vmatpush1.msra.mxu0 %v984
      %1391 = vmatprep.subr.mxu0 0.0
      %1392 = vmatpush1.msra.mxu0 %v985
      %1393 = vmatprep.subr.mxu0 0.0
      %1394 = vmatpush1.msra.mxu0 %v986
      %1395 = vmatprep.subr.mxu0 0.0
      %1396 = vmatpush1.msra.mxu0 %v987
      %1397 = vmatprep.subr.mxu0 0.0
      %1398 = vmatpush1.msra.mxu0 %v988
      %1399 = vmatprep.subr.mxu0 0.0
      %1400 = vmatpush1.msra.mxu0 %v989
      %1401 = vmatprep.subr.mxu0 0.0
      %1402 = vmatpush1.msra.mxu0 %v990
      %1403 = vmatprep.subr.mxu0 0.0
      %1404 = vmatpush1.msra.mxu0 %v991
      %1405 = vmatprep.subr.mxu0 0.0
      %1406 = vmatpush1.msra.mxu0 %v992
      %1407 = vmatprep.subr.mxu0 0.0
      %1408 = vmatpush1.msra.mxu0 %v993
      %1409 = vmatprep.subr.mxu0 0.0
      %1410 = vmatpush1.msra.mxu0 %v994
      %1411 = vmatprep.subr.mxu0 0.0
      %1412 = vmatpush1.msra.mxu0 %v995
      %1413 = vmatprep.subr.mxu0 0.0
      %1414 = vmatpush1.msra.mxu0 %v996
      %1415 = vmatprep.subr.mxu0 0.0
      %1416 = vmatpush1.msra.mxu0 %v997
      %1417 = vmatprep.subr.mxu0 0.0
      %1418 = vmatpush1.msra.mxu0 %v998
      %1419 = vmatprep.subr.mxu0 0.0
      %1420 = vmatpush1.msra.mxu0 %v999
      %1421 = vmatprep.subr.mxu0 0.0
      %1422 = vmatpush1.msra.mxu0 %v1000
      %1423 = vmatprep.mubr.f32.mxu0 %v1327
      %1424 = vmatmul.mubr.f32.gmra.mrb[0].mxu0 %v1303
      %v1425 = vpop.f32.mrb[0].mxu0
      %v1426 = vadd.f32 0.0, %v1425
      %v1427 = vpop.f32.mrb[0].mxu0
      %1428 = vmatprep.mubr.f32.mxu0 %v1328
      %1429 = vmatmul.mubr.f32.gmra.mrb[0].mxu0 %v1304
      %v1430 = vpop.f32.mrb[0].mxu0
      %v1431 = vadd.f32 0.0, %v1430
      %v1432 = vpop.f32.mrb[0].mxu0
      %1433 = vmatprep.mubr.f32.mxu0 %v1329
      %1434 = vmatmul.mubr.f32.gmra.mrb[0].mxu0 %v1305
      %v1435 = vpop.f32.mrb[0].mxu0
      %v1436 = vadd.f32 0.0, %v1435
      %v1437 = vpop.f32.mrb[0].mxu0
      %1438 = vmatprep.mubr.f32.mxu0 %v1330
      %1439 = vmatmul.mubr.f32.gmra.mrb[0].mxu0 %v1306
      %v1440 = vpop.f32.mrb[0].mxu0
      %v1441 = vadd.f32 0.0, %v1440
      %v1442 = vpop.f32.mrb[0].mxu0
      %1443 = vmatprep.mubr.f32.mxu0 %v1331
      %1444 = vmatmul.mubr.f32.gmra.mrb[0].mxu0 %v1307
      %v1445 = vpop.f32.mrb[0].mxu0
      %v1446 = vadd.f32 0.0, %v1445
      %v1447 = vpop.f32.mrb[0].mxu0
      %1448 = vmatprep.mubr.f32.mxu0 %v1332
      %1449 = vmatmul.mubr.f32.gmra.mrb[0].mxu0 %v1308
      %v1450 = vpop.f32.mrb[0].mxu0
      %v1451 = vadd.f32 0.0, %v1450
      %v1452 = vpop.f32.mrb[0].mxu0
      %1453 = vmatprep.mubr.f32.mxu0 %v1333
      %1454 = vmatmul.mubr.f32.gmra.mrb[0].mxu0 %v1309
      %v1455 = vpop.f32.mrb[0].mxu0
      %v1456 = vadd.f32 0.0, %v1455
      %v1457 = vpop.f32.mrb[0].mxu0
      %1458 = vmatprep.mubr.f32.mxu0 %v1334
      %1459 = vmatmul.mubr.f32.gmra.mrb[0].mxu0 %v1310
      %v1460 = vpop.f32.mrb[0].mxu0
      %v1461 = vadd.f32 0.0, %v1460
      %v1462 = vpop.f32.mrb[0].mxu0
      %1463 = vdwg.mxu0
      %1464 = vmatprep.subr.mxu0 0.0
      %1465 = vmatpush1.msra.mxu0 %v1001
      %1466 = vmatprep.subr.mxu0 0.0
      %1467 = vmatpush1.msra.mxu0 %v1002
      %1468 = vmatprep.subr.mxu0 0.0
      %1469 = vmatpush1.msra.mxu0 %v1003
      %1470 = vmatprep.subr.mxu0 0.0
      %1471 = vmatpush1.msra.mxu0 %v1004
      %1472 = vmatprep.subr.mxu0 0.0
      %1473 = vmatpush1.msra.mxu0 0.0
      %1474 = vmatprep.subr.mxu0 0.0
      %1475 = vmatpush1.msra.mxu0 0.0
      %1476 = vmatprep.subr.mxu0 0.0
      %1477 = vmatpush1.msra.mxu0 0.0
      %1478 = vmatprep.subr.mxu0 0.0
      %1479 = vmatpush1.msra.mxu0 0.0
      %1480 = vmatprep.subr.mxu0 0.0
      %1481 = vmatpush1.msra.mxu0 0.0
      %1482 = vmatprep.subr.mxu0 0.0
      %1483 = vmatpush1.msra.mxu0 0.0
      %1484 = vmatprep.subr.mxu0 0.0
      %1485 = vmatpush1.msra.mxu0 0.0
      %1486 = vmatprep.subr.mxu0 0.0
      %1487 = vmatpush1.msra.mxu0 0.0
      %1488 = vmatprep.subr.mxu0 0.0
      %1489 = vmatpush1.msra.mxu0 0.0
      %1490 = vmatprep.subr.mxu0 0.0
      %1491 = vmatpush1.msra.mxu0 0.0
      %1492 = vmatprep.subr.mxu0 0.0
      %1493 = vmatpush1.msra.mxu0 0.0
      %1494 = vmatprep.subr.mxu0 0.0
      %1495 = vmatpush1.msra.mxu0 0.0
      %1496 = vmatprep.subr.mxu0 0.0
      %1497 = vmatpush1.msra.mxu0 0.0
      %1498 = vmatprep.subr.mxu0 0.0
      %1499 = vmatpush1.msra.mxu0 0.0
      %1500 = vmatprep.subr.mxu0 0.0
      %1501 = vmatpush1.msra.mxu0 0.0
      %1502 = vmatprep.subr.mxu0 0.0
      %1503 = vmatpush1.msra.mxu0 0.0
      %1504 = vmatprep.subr.mxu0 0.0
      %1505 = vmatpush1.msra.mxu0 0.0
      %1506 = vmatprep.subr.mxu0 0.0
      %1507 = vmatpush1.msra.mxu0 0.0
      %1508 = vmatprep.subr.mxu0 0.0
      %1509 = vmatpush1.msra.mxu0 0.0
      %1510 = vmatprep.subr.mxu0 0.0
      %1511 = vmatpush1.msra.mxu0 0.0
      %1512 = vmatprep.subr.mxu0 0.0
      %1513 = vmatpush1.msra.mxu0 0.0
      %1514 = vmatprep.subr.mxu0 0.0
      %1515 = vmatpush1.msra.mxu0 0.0
      %1516 = vmatprep.subr.mxu0 0.0
      %1517 = vmatpush1.msra.mxu0 0.0
      %1518 = vmatprep.subr.mxu0 0.0
      %1519 = vmatpush1.msra.mxu0 0.0
      %1520 = vmatprep.subr.mxu0 0.0
      %1521 = vmatpush1.msra.mxu0 0.0
      %1522 = vmatprep.subr.mxu0 0.0
      %1523 = vmatpush1.msra.mxu0 0.0
      %1524 = vmatprep.subr.mxu0 0.0
      %1525 = vmatpush1.msra.mxu0 0.0
      %1526 = vmatprep.subr.mxu0 0.0
      %1527 = vmatpush1.msra.mxu0 0.0
      %1528 = vmatprep.mubr.f32.mxu0 0.0
      %1529 = vmatmul.mubr.f32.gmra.mrb[0].mxu0 %v1336
      %v1530 = vpop.f32.mrb[0].mxu0
      %v1531 = vadd.f32 %v1426, %v1530
      %v1532 = vpop.f32.mrb[0].mxu0
      %1533 = vmatprep.mubr.f32.mxu0 0.0
      %1534 = vmatmul.mubr.f32.gmra.mrb[0].mxu0 %v1339
      %v1535 = vpop.f32.mrb[0].mxu0
      %v1536 = vadd.f32 %v1431, %v1535
      %v1537 = vpop.f32.mrb[0].mxu0
      %1538 = vmatprep.mubr.f32.mxu0 0.0
      %1539 = vmatmul.mubr.f32.gmra.mrb[0].mxu0 %v1342
      %v1540 = vpop.f32.mrb[0].mxu0
      %v1541 = vadd.f32 %v1436, %v1540
      %v1542 = vpop.f32.mrb[0].mxu0
      %1543 = vmatprep.mubr.f32.mxu0 0.0
      %1544 = vmatmul.mubr.f32.gmra.mrb[0].mxu0 %v1345
      %v1545 = vpop.f32.mrb[0].mxu0
      %v1546 = vadd.f32 %v1441, %v1545
      %v1547 = vpop.f32.mrb[0].mxu0
      %1548 = vmatprep.mubr.f32.mxu0 0.0
      %1549 = vmatmul.mubr.f32.gmra.mrb[0].mxu0 %v1348
      %v1550 = vpop.f32.mrb[0].mxu0
      %v1551 = vadd.f32 %v1446, %v1550
      %v1552 = vpop.f32.mrb[0].mxu0
      %1553 = vmatprep.mubr.f32.mxu0 0.0
      %1554 = vmatmul.mubr.f32.gmra.mrb[0].mxu0 %v1351
      %v1555 = vpop.f32.mrb[0].mxu0
      %v1556 = vadd.f32 %v1451, %v1555
      %v1557 = vpop.f32.mrb[0].mxu0
      %1558 = vmatprep.mubr.f32.mxu0 0.0
      %1559 = vmatmul.mubr.f32.gmra.mrb[0].mxu0 %v1354
      %v1560 = vpop.f32.mrb[0].mxu0
      %v1561 = vadd.f32 %v1456, %v1560
      %v1562 = vpop.f32.mrb[0].mxu0
      %1563 = vmatprep.mubr.f32.mxu0 0.0
      %1564 = vmatmul.mubr.f32.gmra.mrb[0].mxu0 %v1357
      %v1565 = vpop.f32.mrb[0].mxu0
      %v1566 = vadd.f32 %v1461, %v1565
      %v1567 = vpop.f32.mrb[0].mxu0
      %1568 = vdwg.mxu0
      %v1570 = vlaneseq
      %v1571 = vshrl.u32 %v1570, 7
      %v1572 = vsub.s32 0, %v1571
      %v1573 = vrot.slane %v1005, %v1572
      %v1575 = vmul.f32 %v1531, %v1573
      %v1576 = vmul.f32 %v1536, %v1573
      %v1577 = vmul.f32 %v1541, %v1573
      %v1578 = vmul.f32 %v1546, %v1573
      %v1579 = vmul.f32 %v1551, %v1573
      %v1580 = vmul.f32 %v1556, %v1573
      %v1581 = vmul.f32 %v1561, %v1573
      %v1582 = vmul.f32 %v1566, %v1573
      %v1584 = vlaneseq
      %v1585 = vshrl.u32 %v1584, 7
      %v1586 = vsub.s32 0, %v1585
      %v1587 = vrot.slane %v1006, %v1586
      %v1589 = vadd.f32 %v1575, %v1587
      %v1590 = vadd.f32 %v1576, %v1587
      %v1591 = vadd.f32 %v1577, %v1587
      %v1592 = vadd.f32 %v1578, %v1587
      %v1593 = vadd.f32 %v1579, %v1587
      %v1594 = vadd.f32 %v1580, %v1587
      %v1595 = vadd.f32 %v1581, %v1587
      %v1596 = vadd.f32 %v1582, %v1587
      %v1597 = vmax.f32 %v1589, 0.0
      %v1598 = vmax.f32 %v1590, 0.0
      %v1599 = vmax.f32 %v1591, 0.0
      %v1600 = vmax.f32 %v1592, 0.0
      %v1601 = vmax.f32 %v1593, 0.0
      %v1602 = vmax.f32 %v1594, 0.0
      %v1603 = vmax.f32 %v1595, 0.0
      %v1604 = vmax.f32 %v1596, 0.0
      %1605 = vst.msk [vmem:[#allocation3 + $0x10] sm:$0xff] %vm281, %v1597
      %1606 = vst.msk [vmem:[#allocation3 + $0x18] sm:$0xff] %vm281, %v1598
      %1607 = vst.msk [vmem:[#allocation3 + $0x20] sm:$0xff] %vm281, %v1599
      %1608 = vst.msk [vmem:[#allocation3 + $0x28] sm:$0xff] %vm281, %v1600
      %1609 = vst.msk [vmem:[#allocation3 + $0x30] sm:$0xff] %vm281, %v1601
      %1610 = vst.msk [vmem:[#allocation3 + $0x38] sm:$0xff] %vm281, %v1602
      %1611 = vst.msk [vmem:[#allocation3 + $0x40] sm:$0xff] %vm281, %v1603
      %1612 = vst.msk [vmem:[#allocation3 + $0x48] sm:$0xff] %vm281, %v1604
      %s1613 = scalar_lea.vmem %s4, 288
      %v1614 = vld [vmem:[%s1613] sm:$0xff]
      %v1615 = vld [vmem:[%s1613 + $0x8] sm:$0xff]
      %v1616 = vld [vmem:[%s1613 + $0x10] sm:$0xff]
      %v1617 = vld [vmem:[%s1613 + $0x18] sm:$0xff]
      %v1618 = vld [vmem:[%s1613 + $0x20] sm:$0xff]
      %v1619 = vld [vmem:[%s1613 + $0x28] sm:$0xff]
      %v1620 = vld [vmem:[%s1613 + $0x30] sm:$0xff]
      %v1621 = vld [vmem:[%s1613 + $0x38] sm:$0xff]
      %v1622 = vld [vmem:[%s1613 + $0x40] sm:$0xff]
      %v1623 = vld [vmem:[%s1613 + $0x48] sm:$0xff]
      %v1624 = vld [vmem:[%s1613 + $0x50] sm:$0xff]
      %v1625 = vld [vmem:[%s1613 + $0x58] sm:$0xff]
      %v1626 = vld [vmem:[%s1613 + $0x60] sm:$0xff]
      %v1627 = vld [vmem:[%s1613 + $0x68] sm:$0xff]
      %v1628 = vld [vmem:[%s1613 + $0x70] sm:$0xff]
      %v1629 = vld [vmem:[%s1613 + $0x78] sm:$0xff]
      %v1630 = vld [vmem:[%s1613 + $0x80] sm:$0xff]
      %v1631 = vld [vmem:[%s1613 + $0x88] sm:$0xff]
      %v1632 = vld [vmem:[%s1613 + $0x90] sm:$0xff]
      %v1633 = vld [vmem:[%s1613 + $0x98] sm:$0xff]
      %v1634 = vld [vmem:[%s1613 + $0xa0] sm:$0xff]
      %v1635 = vld [vmem:[%s1613 + $0xa8] sm:$0xff]
      %v1636 = vld [vmem:[%s1613 + $0xb0] sm:$0xff]
      %v1637 = vld [vmem:[%s1613 + $0xb8] sm:$0xff]
      %v1638 = vld [vmem:[%s1613 + $0xc0] sm:$0xff]
      %v1639 = vld [vmem:[%s1613 + $0xc8] sm:$0xff]
      %v1640 = vld [vmem:[%s1613 + $0xd0] sm:$0xff]
      %v1641 = vld [vmem:[%s1613 + $0xd8] sm:$0xff]
      %v1642 = vld [vmem:[%s1613 + $0xe0] sm:$0xff]
      %v1643 = vld [vmem:[%s1613 + $0xe8] sm:$0xff]
      %v1644 = vld [vmem:[%s1613 + $0xf0] sm:$0xff]
      %v1645 = vld [vmem:[%s1613 + $0xf8] sm:$0xff]
      %v1646 = vld [vmem:[%s1613 + $0x100] sm:$0xff]
      %v1647 = vld [vmem:[%s1613 + $0x108] sm:$0xff]
      %v1648 = vld [vmem:[%s1613 + $0x110] sm:$0xff]
      %v1649 = vld [vmem:[%s1613 + $0x118] sm:$0xff]
      %s1650 = scalar_lea.vmem %s5, 1
      %v1651 = vld [vmem:[%s1650] sm:$0x1]
      %s1652 = scalar_lea.vmem %s6, 1
      %v1653 = vld [vmem:[%s1652] sm:$0x1]
      %v1654 = vld [vmem:[#allocation3 + $0x7] sm:$0xff]
      %v1655 = vld [vmem:[#allocation3 + $0xf] sm:$0xff]
      %v1656 = vld [vmem:[#allocation3 + $0x17] sm:$0xff]
      %v1657 = vld [vmem:[#allocation3 + $0x1f] sm:$0xff]
      %v1658 = vld [vmem:[#allocation3 + $0x27] sm:$0xff]
      %v1659 = vld [vmem:[#allocation3 + $0x2f] sm:$0xff]
      %v1660 = vld [vmem:[#allocation3 + $0x37] sm:$0xff]
      %v1661 = vld [vmem:[#allocation3 + $0x3f] sm:$0xff]
      %v1662 = vsel %vm486, %v1654, 0.0
      %v1663 = vsel %vm487, %v1655, 0.0
      %v1664 = vsel %vm488, %v1656, 0.0
      %v1665 = vsel %vm489, %v1657, 0.0
      %v1666 = vsel %vm490, %v1658, 0.0
      %v1667 = vsel %vm491, %v1659, 0.0
      %v1668 = vsel %vm492, %v1660, 0.0
      %v1669 = vsel %vm493, %v1661, 0.0
      %v1670 = vld [vmem:[#allocation3 + $0x8] sm:$0xff]
      %v1671 = vld [vmem:[#allocation3 + $0x10] sm:$0xff]
      %v1672 = vld [vmem:[#allocation3 + $0x18] sm:$0xff]
      %v1673 = vld [vmem:[#allocation3 + $0x20] sm:$0xff]
      %v1674 = vld [vmem:[#allocation3 + $0x28] sm:$0xff]
      %v1675 = vld [vmem:[#allocation3 + $0x30] sm:$0xff]
      %v1676 = vld [vmem:[#allocation3 + $0x38] sm:$0xff]
      %v1677 = vld [vmem:[#allocation3 + $0x40] sm:$0xff]
      %v1678 = vld [vmem:[#allocation3 + $0x9] sm:$0xff]
      %v1679 = vld [vmem:[#allocation3 + $0x11] sm:$0xff]
      %v1680 = vld [vmem:[#allocation3 + $0x19] sm:$0xff]
      %v1681 = vld [vmem:[#allocation3 + $0x21] sm:$0xff]
      %v1682 = vld [vmem:[#allocation3 + $0x29] sm:$0xff]
      %v1683 = vld [vmem:[#allocation3 + $0x31] sm:$0xff]
      %v1684 = vld [vmem:[#allocation3 + $0x39] sm:$0xff]
      %v1685 = vld [vmem:[#allocation3 + $0x41] sm:$0xff]
      %v1686 = vsel %vm1047, %v1678, 0.0
      %v1687 = vsel %vm1048, %v1679, 0.0
      %v1688 = vsel %vm1049, %v1680, 0.0
      %v1689 = vsel %vm1050, %v1681, 0.0
      %v1690 = vsel %vm1051, %v1682, 0.0
      %v1691 = vsel %vm1052, %v1683, 0.0
      %v1692 = vsel %vm1053, %v1684, 0.0
      %v1693 = vsel %vm1054, %v1685, 0.0
      %v1694 = vld [vmem:[#allocation3 + $0x47] sm:$0xff]
      %v1695 = vsel %vm486, %v1655, 0.0
      %v1696 = vsel %vm487, %v1656, 0.0
      %v1697 = vsel %vm488, %v1657, 0.0
      %v1698 = vsel %vm489, %v1658, 0.0
      %v1699 = vsel %vm490, %v1659, 0.0
      %v1700 = vsel %vm491, %v1660, 0.0
      %v1701 = vsel %vm492, %v1661, 0.0
      %v1702 = vsel %vm493, %v1694, 0.0
      %v1703 = vld [vmem:[#allocation3 + $0x48] sm:$0xff]
      %v1704 = vld [vmem:[#allocation3 + $0x49] sm:$0xff]
      %v1705 = vsel %vm1047, %v1679, 0.0
      %v1706 = vsel %vm1048, %v1680, 0.0
      %v1707 = vsel %vm1049, %v1681, 0.0
      %v1708 = vsel %vm1050, %v1682, 0.0
      %v1709 = vsel %vm1051, %v1683, 0.0
      %v1710 = vsel %vm1052, %v1684, 0.0
      %v1711 = vsel %vm1053, %v1685, 0.0
      %v1712 = vsel %vm1054, %v1704, 0.0
      %v1713 = vld [vmem:[#allocation3 + $0x4f] sm:$0xff]
      %v1714 = vsel %vm486, %v1656, 0.0
      %v1715 = vsel %vm487, %v1657, 0.0
      %v1716 = vsel %vm488, %v1658, 0.0
      %v1717 = vsel %vm489, %v1659, 0.0
      %v1718 = vsel %vm490, %v1660, 0.0
      %v1719 = vsel %vm491, %v1661, 0.0
      %v1720 = vsel %vm492, %v1694, 0.0
      %v1721 = vsel %vm493, %v1713, 0.0
      %v1722 = vld [vmem:[#allocation3 + $0x50] sm:$0xff]
      %v1723 = vld [vmem:[#allocation3 + $0x51] sm:$0xff]
      %v1724 = vsel %vm1047, %v1680, 0.0
      %v1725 = vsel %vm1048, %v1681, 0.0
      %v1726 = vsel %vm1049, %v1682, 0.0
      %v1727 = vsel %vm1050, %v1683, 0.0
      %v1728 = vsel %vm1051, %v1684, 0.0
      %v1729 = vsel %vm1052, %v1685, 0.0
      %v1730 = vsel %vm1053, %v1704, 0.0
      %v1731 = vsel %vm1054, %v1723, 0.0
      %1740 = vrot.lane.b32.xlu0 %v1670, 32
      %v1741 = vpop.permute.xlu0 %1740
      %1742 = vrot.lane.b32.xlu0 %v1671, 32
      %v1743 = vpop.permute.xlu0 %1742
      %1744 = vrot.lane.b32.xlu0 %v1672, 32
      %v1745 = vpop.permute.xlu0 %1744
      %1746 = vrot.lane.b32.xlu0 %v1673, 32
      %v1747 = vpop.permute.xlu0 %1746
      %1748 = vrot.lane.b32.xlu0 %v1674, 32
      %v1749 = vpop.permute.xlu0 %1748
      %1750 = vrot.lane.b32.xlu0 %v1675, 32
      %v1751 = vpop.permute.xlu0 %1750
      %1752 = vrot.lane.b32.xlu0 %v1676, 32
      %v1753 = vpop.permute.xlu0 %1752
      %1754 = vrot.lane.b32.xlu0 %v1677, 32
      %v1755 = vpop.permute.xlu0 %1754
      %1772 = vrot.lane.b32.xlu0 %v1686, 64
      %v1773 = vpop.permute.xlu0 %1772
      %1774 = vrot.lane.b32.xlu0 %v1687, 64
      %v1775 = vpop.permute.xlu0 %1774
      %1776 = vrot.lane.b32.xlu0 %v1688, 64
      %v1777 = vpop.permute.xlu0 %1776
      %1778 = vrot.lane.b32.xlu0 %v1689, 64
      %v1779 = vpop.permute.xlu0 %1778
      %1780 = vrot.lane.b32.xlu0 %v1690, 64
      %v1781 = vpop.permute.xlu0 %1780
      %1782 = vrot.lane.b32.xlu0 %v1691, 64
      %v1783 = vpop.permute.xlu0 %1782
      %1784 = vrot.lane.b32.xlu0 %v1692, 64
      %v1785 = vpop.permute.xlu0 %1784
      %1786 = vrot.lane.b32.xlu0 %v1693, 64
      %v1787 = vpop.permute.xlu0 %1786
      %1804 = vrot.lane.b32.xlu0 %v1695, 96
      %v1805 = vpop.permute.xlu0 %1804
      %1806 = vrot.lane.b32.xlu0 %v1696, 96
      %v1807 = vpop.permute.xlu0 %1806
      %1808 = vrot.lane.b32.xlu0 %v1697, 96
      %v1809 = vpop.permute.xlu0 %1808
      %1810 = vrot.lane.b32.xlu0 %v1698, 96
      %v1811 = vpop.permute.xlu0 %1810
      %1812 = vrot.lane.b32.xlu0 %v1699, 96
      %v1813 = vpop.permute.xlu0 %1812
      %1814 = vrot.lane.b32.xlu0 %v1700, 96
      %v1815 = vpop.permute.xlu0 %1814
      %1816 = vrot.lane.b32.xlu0 %v1701, 96
      %v1817 = vpop.permute.xlu0 %1816
      %1818 = vrot.lane.b32.xlu0 %v1702, 96
      %v1819 = vpop.permute.xlu0 %1818
      %1836 = vrot.lane.b32.xlu0 %v1705, 32
      %v1837 = vpop.permute.xlu0 %1836
      %1838 = vrot.lane.b32.xlu0 %v1706, 32
      %v1839 = vpop.permute.xlu0 %1838
      %1840 = vrot.lane.b32.xlu0 %v1707, 32
      %v1841 = vpop.permute.xlu0 %1840
      %1842 = vrot.lane.b32.xlu0 %v1708, 32
      %v1843 = vpop.permute.xlu0 %1842
      %1844 = vrot.lane.b32.xlu0 %v1709, 32
      %v1845 = vpop.permute.xlu0 %1844
      %1846 = vrot.lane.b32.xlu0 %v1710, 32
      %v1847 = vpop.permute.xlu0 %1846
      %1848 = vrot.lane.b32.xlu0 %v1711, 32
      %v1849 = vpop.permute.xlu0 %1848
      %1850 = vrot.lane.b32.xlu0 %v1712, 32
      %v1851 = vpop.permute.xlu0 %1850
      %1868 = vrot.lane.b32.xlu0 %v1714, 64
      %v1869 = vpop.permute.xlu0 %1868
      %1870 = vrot.lane.b32.xlu0 %v1715, 64
      %v1871 = vpop.permute.xlu0 %1870
      %1872 = vrot.lane.b32.xlu0 %v1716, 64
      %v1873 = vpop.permute.xlu0 %1872
      %1874 = vrot.lane.b32.xlu0 %v1717, 64
      %v1875 = vpop.permute.xlu0 %1874
      %1876 = vrot.lane.b32.xlu0 %v1718, 64
      %v1877 = vpop.permute.xlu0 %1876
      %1878 = vrot.lane.b32.xlu0 %v1719, 64
      %v1879 = vpop.permute.xlu0 %1878
      %1880 = vrot.lane.b32.xlu0 %v1720, 64
      %v1881 = vpop.permute.xlu0 %1880
      %1882 = vrot.lane.b32.xlu0 %v1721, 64
      %v1883 = vpop.permute.xlu0 %1882
      %1894 = vrot.lane.b32.xlu0 %v1672, 96
      %v1895 = vpop.permute.xlu0 %1894
      %1896 = vrot.lane.b32.xlu0 %v1673, 96
      %v1897 = vpop.permute.xlu0 %1896
      %1898 = vrot.lane.b32.xlu0 %v1674, 96
      %v1899 = vpop.permute.xlu0 %1898
      %1900 = vrot.lane.b32.xlu0 %v1675, 96
      %v1901 = vpop.permute.xlu0 %1900
      %1902 = vrot.lane.b32.xlu0 %v1676, 96
      %v1903 = vpop.permute.xlu0 %1902
      %1904 = vrot.lane.b32.xlu0 %v1677, 96
      %v1905 = vpop.permute.xlu0 %1904
      %1906 = vrot.lane.b32.xlu0 %v1703, 96
      %v1907 = vpop.permute.xlu0 %1906
      %1908 = vrot.lane.b32.xlu0 %v1722, 96
      %v1909 = vpop.permute.xlu0 %1908
      %v1918 = vsel %vm281, %v1662, %v1741
      %v1919 = vsel %vm281, %v1663, %v1743
      %v1920 = vsel %vm281, %v1664, %v1745
      %v1921 = vsel %vm281, %v1665, %v1747
      %v1922 = vsel %vm281, %v1666, %v1749
      %v1923 = vsel %vm281, %v1667, %v1751
      %v1924 = vsel %vm281, %v1668, %v1753
      %v1925 = vsel %vm281, %v1669, %v1755
      %v1926 = vsel %vm665, %v1918, %v1773
      %v1927 = vsel %vm665, %v1919, %v1775
      %v1928 = vsel %vm665, %v1920, %v1777
      %v1929 = vsel %vm665, %v1921, %v1779
      %v1930 = vsel %vm665, %v1922, %v1781
      %v1931 = vsel %vm665, %v1923, %v1783
      %v1932 = vsel %vm665, %v1924, %v1785
      %v1933 = vsel %vm665, %v1925, %v1787
      %v1934 = vsel %vm674, %v1926, %v1805
      %v1935 = vsel %vm674, %v1927, %v1807
      %v1936 = vsel %vm674, %v1928, %v1809
      %v1937 = vsel %vm674, %v1929, %v1811
      %v1938 = vsel %vm674, %v1930, %v1813
      %v1939 = vsel %vm674, %v1931, %v1815
      %v1940 = vsel %vm674, %v1932, %v1817
      %v1941 = vsel %vm674, %v1933, %v1819
      %v1942 = vsel %vm281, %v1671, %v1837
      %v1943 = vsel %vm281, %v1672, %v1839
      %v1944 = vsel %vm281, %v1673, %v1841
      %v1945 = vsel %vm281, %v1674, %v1843
      %v1946 = vsel %vm281, %v1675, %v1845
      %v1947 = vsel %vm281, %v1676, %v1847
      %v1948 = vsel %vm281, %v1677, %v1849
      %v1949 = vsel %vm281, %v1703, %v1851
      %v1950 = vsel %vm665, %v1942, %v1869
      %v1951 = vsel %vm665, %v1943, %v1871
      %v1952 = vsel %vm665, %v1944, %v1873
      %v1953 = vsel %vm665, %v1945, %v1875
      %v1954 = vsel %vm665, %v1946, %v1877
      %v1955 = vsel %vm665, %v1947, %v1879
      %v1956 = vsel %vm665, %v1948, %v1881
      %v1957 = vsel %vm665, %v1949, %v1883
      %v1958 = vsel %vm674, %v1950, %v1895
      %v1959 = vsel %vm674, %v1951, %v1897
      %v1960 = vsel %vm674, %v1952, %v1899
      %v1961 = vsel %vm674, %v1953, %v1901
      %v1962 = vsel %vm674, %v1954, %v1903
      %v1963 = vsel %vm674, %v1955, %v1905
      %v1964 = vsel %vm674, %v1956, %v1907
      %v1965 = vsel %vm674, %v1957, %v1909
      %v1967 = vsel %vm281, %v1724, 0
      %v1970 = vsel %vm281, %v1725, 0
      %v1973 = vsel %vm281, %v1726, 0
      %v1976 = vsel %vm281, %v1727, 0
      %v1979 = vsel %vm281, %v1728, 0
      %v1982 = vsel %vm281, %v1729, 0
      %v1985 = vsel %vm281, %v1730, 0
      %v1988 = vsel %vm281, %v1731, 0
      %1990 = vmatprep.subr.mxu0 0.0
      %1991 = vmatpush1.msra.mxu0 %v1614
      %1992 = vmatprep.subr.mxu0 0.0
      %1993 = vmatpush1.msra.mxu0 %v1615
      %1994 = vmatprep.subr.mxu0 0.0
      %1995 = vmatpush1.msra.mxu0 %v1616
      %1996 = vmatprep.subr.mxu0 0.0
      %1997 = vmatpush1.msra.mxu0 %v1617
      %1998 = vmatprep.subr.mxu0 0.0
      %1999 = vmatpush1.msra.mxu0 %v1618
      %2000 = vmatprep.subr.mxu0 0.0
      %2001 = vmatpush1.msra.mxu0 %v1619
      %2002 = vmatprep.subr.mxu0 0.0
      %2003 = vmatpush1.msra.mxu0 %v1620
      %2004 = vmatprep.subr.mxu0 0.0
      %2005 = vmatpush1.msra.mxu0 %v1621
      %2006 = vmatprep.subr.mxu0 0.0
      %2007 = vmatpush1.msra.mxu0 %v1622
      %2008 = vmatprep.subr.mxu0 0.0
      %2009 = vmatpush1.msra.mxu0 %v1623
      %2010 = vmatprep.subr.mxu0 0.0
      %2011 = vmatpush1.msra.mxu0 %v1624
      %2012 = vmatprep.subr.mxu0 0.0
      %2013 = vmatpush1.msra.mxu0 %v1625
      %2014 = vmatprep.subr.mxu0 0.0
      %2015 = vmatpush1.msra.mxu0 %v1626
      %2016 = vmatprep.subr.mxu0 0.0
      %2017 = vmatpush1.msra.mxu0 %v1627
      %2018 = vmatprep.subr.mxu0 0.0
      %2019 = vmatpush1.msra.mxu0 %v1628
      %2020 = vmatprep.subr.mxu0 0.0
      %2021 = vmatpush1.msra.mxu0 %v1629
      %2022 = vmatprep.subr.mxu0 0.0
      %2023 = vmatpush1.msra.mxu0 %v1630
      %2024 = vmatprep.subr.mxu0 0.0
      %2025 = vmatpush1.msra.mxu0 %v1631
      %2026 = vmatprep.subr.mxu0 0.0
      %2027 = vmatpush1.msra.mxu0 %v1632
      %2028 = vmatprep.subr.mxu0 0.0
      %2029 = vmatpush1.msra.mxu0 %v1633
      %2030 = vmatprep.subr.mxu0 0.0
      %2031 = vmatpush1.msra.mxu0 %v1634
      %2032 = vmatprep.subr.mxu0 0.0
      %2033 = vmatpush1.msra.mxu0 %v1635
      %2034 = vmatprep.subr.mxu0 0.0
      %2035 = vmatpush1.msra.mxu0 %v1636
      %2036 = vmatprep.subr.mxu0 0.0
      %2037 = vmatpush1.msra.mxu0 %v1637
      %2038 = vmatprep.subr.mxu0 0.0
      %2039 = vmatpush1.msra.mxu0 %v1638
      %2040 = vmatprep.subr.mxu0 0.0
      %2041 = vmatpush1.msra.mxu0 %v1639
      %2042 = vmatprep.subr.mxu0 0.0
      %2043 = vmatpush1.msra.mxu0 %v1640
      %2044 = vmatprep.subr.mxu0 0.0
      %2045 = vmatpush1.msra.mxu0 %v1641
      %2046 = vmatprep.subr.mxu0 0.0
      %2047 = vmatpush1.msra.mxu0 %v1642
      %2048 = vmatprep.subr.mxu0 0.0
      %2049 = vmatpush1.msra.mxu0 %v1643
      %2050 = vmatprep.subr.mxu0 0.0
      %2051 = vmatpush1.msra.mxu0 %v1644
      %2052 = vmatprep.subr.mxu0 0.0
      %2053 = vmatpush1.msra.mxu0 %v1645
      %2054 = vmatprep.mubr.f32.mxu0 %v1958
      %2055 = vmatmul.mubr.f32.gmra.mrb[0].mxu0 %v1934
      %v2056 = vpop.f32.mrb[0].mxu0
      %v2057 = vadd.f32 0.0, %v2056
      %v2058 = vpop.f32.mrb[0].mxu0
      %2059 = vmatprep.mubr.f32.mxu0 %v1959
      %2060 = vmatmul.mubr.f32.gmra.mrb[0].mxu0 %v1935
      %v2061 = vpop.f32.mrb[0].mxu0
      %v2062 = vadd.f32 0.0, %v2061
      %v2063 = vpop.f32.mrb[0].mxu0
      %2064 = vmatprep.mubr.f32.mxu0 %v1960
      %2065 = vmatmul.mubr.f32.gmra.mrb[0].mxu0 %v1936
      %v2066 = vpop.f32.mrb[0].mxu0
      %v2067 = vadd.f32 0.0, %v2066
      %v2068 = vpop.f32.mrb[0].mxu0
      %2069 = vmatprep.mubr.f32.mxu0 %v1961
      %2070 = vmatmul.mubr.f32.gmra.mrb[0].mxu0 %v1937
      %v2071 = vpop.f32.mrb[0].mxu0
      %v2072 = vadd.f32 0.0, %v2071
      %v2073 = vpop.f32.mrb[0].mxu0
      %2074 = vmatprep.mubr.f32.mxu0 %v1962
      %2075 = vmatmul.mubr.f32.gmra.mrb[0].mxu0 %v1938
      %v2076 = vpop.f32.mrb[0].mxu0
      %v2077 = vadd.f32 0.0, %v2076
      %v2078 = vpop.f32.mrb[0].mxu0
      %2079 = vmatprep.mubr.f32.mxu0 %v1963
      %2080 = vmatmul.mubr.f32.gmra.mrb[0].mxu0 %v1939
      %v2081 = vpop.f32.mrb[0].mxu0
      %v2082 = vadd.f32 0.0, %v2081
      %v2083 = vpop.f32.mrb[0].mxu0
      %2084 = vmatprep.mubr.f32.mxu0 %v1964
      %2085 = vmatmul.mubr.f32.gmra.mrb[0].mxu0 %v1940
      %v2086 = vpop.f32.mrb[0].mxu0
      %v2087 = vadd.f32 0.0, %v2086
      %v2088 = vpop.f32.mrb[0].mxu0
      %2089 = vmatprep.mubr.f32.mxu0 %v1965
      %2090 = vmatmul.mubr.f32.gmra.mrb[0].mxu0 %v1941
      %v2091 = vpop.f32.mrb[0].mxu0
      %v2092 = vadd.f32 0.0, %v2091
      %v2093 = vpop.f32.mrb[0].mxu0
      %2094 = vdwg.mxu0
      %2095 = vmatprep.subr.mxu0 0.0
      %2096 = vmatpush1.msra.mxu0 %v1646
      %2097 = vmatprep.subr.mxu0 0.0
      %2098 = vmatpush1.msra.mxu0 %v1647
      %2099 = vmatprep.subr.mxu0 0.0
      %2100 = vmatpush1.msra.mxu0 %v1648
      %2101 = vmatprep.subr.mxu0 0.0
      %2102 = vmatpush1.msra.mxu0 %v1649
      %2103 = vmatprep.subr.mxu0 0.0
      %2104 = vmatpush1.msra.mxu0 0.0
      %2105 = vmatprep.subr.mxu0 0.0
      %2106 = vmatpush1.msra.mxu0 0.0
      %2107 = vmatprep.subr.mxu0 0.0
      %2108 = vmatpush1.msra.mxu0 0.0
      %2109 = vmatprep.subr.mxu0 0.0
      %2110 = vmatpush1.msra.mxu0 0.0
      %2111 = vmatprep.subr.mxu0 0.0
      %2112 = vmatpush1.msra.mxu0 0.0
      %2113 = vmatprep.subr.mxu0 0.0
      %2114 = vmatpush1.msra.mxu0 0.0
      %2115 = vmatprep.subr.mxu0 0.0
      %2116 = vmatpush1.msra.mxu0 0.0
      %2117 = vmatprep.subr.mxu0 0.0
      %2118 = vmatpush1.msra.mxu0 0.0
      %2119 = vmatprep.subr.mxu0 0.0
      %2120 = vmatpush1.msra.mxu0 0.0
      %2121 = vmatprep.subr.mxu0 0.0
      %2122 = vmatpush1.msra.mxu0 0.0
      %2123 = vmatprep.subr.mxu0 0.0
      %2124 = vmatpush1.msra.mxu0 0.0
      %2125 = vmatprep.subr.mxu0 0.0
      %2126 = vmatpush1.msra.mxu0 0.0
      %2127 = vmatprep.subr.mxu0 0.0
      %2128 = vmatpush1.msra.mxu0 0.0
      %2129 = vmatprep.subr.mxu0 0.0
      %2130 = vmatpush1.msra.mxu0 0.0
      %2131 = vmatprep.subr.mxu0 0.0
      %2132 = vmatpush1.msra.mxu0 0.0
      %2133 = vmatprep.subr.mxu0 0.0
      %2134 = vmatpush1.msra.mxu0 0.0
      %2135 = vmatprep.subr.mxu0 0.0
      %2136 = vmatpush1.msra.mxu0 0.0
      %2137 = vmatprep.subr.mxu0 0.0
      %2138 = vmatpush1.msra.mxu0 0.0
      %2139 = vmatprep.subr.mxu0 0.0
      %2140 = vmatpush1.msra.mxu0 0.0
      %2141 = vmatprep.subr.mxu0 0.0
      %2142 = vmatpush1.msra.mxu0 0.0
      %2143 = vmatprep.subr.mxu0 0.0
      %2144 = vmatpush1.msra.mxu0 0.0
      %2145 = vmatprep.subr.mxu0 0.0
      %2146 = vmatpush1.msra.mxu0 0.0
      %2147 = vmatprep.subr.mxu0 0.0
      %2148 = vmatpush1.msra.mxu0 0.0
      %2149 = vmatprep.subr.mxu0 0.0
      %2150 = vmatpush1.msra.mxu0 0.0
      %2151 = vmatprep.subr.mxu0 0.0
      %2152 = vmatpush1.msra.mxu0 0.0
      %2153 = vmatprep.subr.mxu0 0.0
      %2154 = vmatpush1.msra.mxu0 0.0
      %2155 = vmatprep.subr.mxu0 0.0
      %2156 = vmatpush1.msra.mxu0 0.0
      %2157 = vmatprep.subr.mxu0 0.0
      %2158 = vmatpush1.msra.mxu0 0.0
      %2159 = vmatprep.mubr.f32.mxu0 0.0
      %2160 = vmatmul.mubr.f32.gmra.mrb[0].mxu0 %v1967
      %v2161 = vpop.f32.mrb[0].mxu0
      %v2162 = vadd.f32 %v2057, %v2161
      %v2163 = vpop.f32.mrb[0].mxu0
      %2164 = vmatprep.mubr.f32.mxu0 0.0
      %2165 = vmatmul.mubr.f32.gmra.mrb[0].mxu0 %v1970
      %v2166 = vpop.f32.mrb[0].mxu0
      %v2167 = vadd.f32 %v2062, %v2166
      %v2168 = vpop.f32.mrb[0].mxu0
      %2169 = vmatprep.mubr.f32.mxu0 0.0
      %2170 = vmatmul.mubr.f32.gmra.mrb[0].mxu0 %v1973
      %v2171 = vpop.f32.mrb[0].mxu0
      %v2172 = vadd.f32 %v2067, %v2171
      %v2173 = vpop.f32.mrb[0].mxu0
      %2174 = vmatprep.mubr.f32.mxu0 0.0
      %2175 = vmatmul.mubr.f32.gmra.mrb[0].mxu0 %v1976
      %v2176 = vpop.f32.mrb[0].mxu0
      %v2177 = vadd.f32 %v2072, %v2176
      %v2178 = vpop.f32.mrb[0].mxu0
      %2179 = vmatprep.mubr.f32.mxu0 0.0
      %2180 = vmatmul.mubr.f32.gmra.mrb[0].mxu0 %v1979
      %v2181 = vpop.f32.mrb[0].mxu0
      %v2182 = vadd.f32 %v2077, %v2181
      %v2183 = vpop.f32.mrb[0].mxu0
      %2184 = vmatprep.mubr.f32.mxu0 0.0
      %2185 = vmatmul.mubr.f32.gmra.mrb[0].mxu0 %v1982
      %v2186 = vpop.f32.mrb[0].mxu0
      %v2187 = vadd.f32 %v2082, %v2186
      %v2188 = vpop.f32.mrb[0].mxu0
      %2189 = vmatprep.mubr.f32.mxu0 0.0
      %2190 = vmatmul.mubr.f32.gmra.mrb[0].mxu0 %v1985
      %v2191 = vpop.f32.mrb[0].mxu0
      %v2192 = vadd.f32 %v2087, %v2191
      %v2193 = vpop.f32.mrb[0].mxu0
      %2194 = vmatprep.mubr.f32.mxu0 0.0
      %2195 = vmatmul.mubr.f32.gmra.mrb[0].mxu0 %v1988
      %v2196 = vpop.f32.mrb[0].mxu0
      %v2197 = vadd.f32 %v2092, %v2196
      %v2198 = vpop.f32.mrb[0].mxu0
      %2199 = vdwg.mxu0
      %v2201 = vlaneseq
      %v2202 = vshrl.u32 %v2201, 7
      %v2203 = vsub.s32 0, %v2202
      %v2204 = vrot.slane %v1651, %v2203
      %v2206 = vmul.f32 %v2162, %v2204
      %v2207 = vmul.f32 %v2167, %v2204
      %v2208 = vmul.f32 %v2172, %v2204
      %v2209 = vmul.f32 %v2177, %v2204
      %v2210 = vmul.f32 %v2182, %v2204
      %v2211 = vmul.f32 %v2187, %v2204
      %v2212 = vmul.f32 %v2192, %v2204
      %v2213 = vmul.f32 %v2197, %v2204
      %v2215 = vlaneseq
      %v2216 = vshrl.u32 %v2215, 7
      %v2217 = vsub.s32 0, %v2216
      %v2218 = vrot.slane %v1653, %v2217
      %v2220 = vadd.f32 %v2206, %v2218
      %v2221 = vadd.f32 %v2207, %v2218
      %v2222 = vadd.f32 %v2208, %v2218
      %v2223 = vadd.f32 %v2209, %v2218
      %v2224 = vadd.f32 %v2210, %v2218
      %v2225 = vadd.f32 %v2211, %v2218
      %v2226 = vadd.f32 %v2212, %v2218
      %v2227 = vadd.f32 %v2213, %v2218
      %v2228 = vmax.f32 %v2220, 0.0
      %v2229 = vmax.f32 %v2221, 0.0
      %v2230 = vmax.f32 %v2222, 0.0
      %v2231 = vmax.f32 %v2223, 0.0
      %v2232 = vmax.f32 %v2224, 0.0
      %v2233 = vmax.f32 %v2225, 0.0
      %v2234 = vmax.f32 %v2226, 0.0
      %v2235 = vmax.f32 %v2227, 0.0
      %2236 = vst.msk [vmem:[#allocation3 + $0x10] sm:$0xff] %vm281, %v2228
      %2237 = vst.msk [vmem:[#allocation3 + $0x18] sm:$0xff] %vm281, %v2229
      %2238 = vst.msk [vmem:[#allocation3 + $0x20] sm:$0xff] %vm281, %v2230
      %2239 = vst.msk [vmem:[#allocation3 + $0x28] sm:$0xff] %vm281, %v2231
      %2240 = vst.msk [vmem:[#allocation3 + $0x30] sm:$0xff] %vm281, %v2232
      %2241 = vst.msk [vmem:[#allocation3 + $0x38] sm:$0xff] %vm281, %v2233
      %2242 = vst.msk [vmem:[#allocation3 + $0x40] sm:$0xff] %vm281, %v2234
      %2243 = vst.msk [vmem:[#allocation3 + $0x48] sm:$0xff] %vm281, %v2235
      %s2244 = scalar_lea.vmem %s4, 576
      %v2245 = vld [vmem:[%s2244] sm:$0xff]
      %v2246 = vld [vmem:[%s2244 + $0x8] sm:$0xff]
      %v2247 = vld [vmem:[%s2244 + $0x10] sm:$0xff]
      %v2248 = vld [vmem:[%s2244 + $0x18] sm:$0xff]
      %v2249 = vld [vmem:[%s2244 + $0x20] sm:$0xff]
      %v2250 = vld [vmem:[%s2244 + $0x28] sm:$0xff]
      %v2251 = vld [vmem:[%s2244 + $0x30] sm:$0xff]
      %v2252 = vld [vmem:[%s2244 + $0x38] sm:$0xff]
      %v2253 = vld [vmem:[%s2244 + $0x40] sm:$0xff]
      %v2254 = vld [vmem:[%s2244 + $0x48] sm:$0xff]
      %v2255 = vld [vmem:[%s2244 + $0x50] sm:$0xff]
      %v2256 = vld [vmem:[%s2244 + $0x58] sm:$0xff]
      %v2257 = vld [vmem:[%s2244 + $0x60] sm:$0xff]
      %v2258 = vld [vmem:[%s2244 + $0x68] sm:$0xff]
      %v2259 = vld [vmem:[%s2244 + $0x70] sm:$0xff]
      %v2260 = vld [vmem:[%s2244 + $0x78] sm:$0xff]
      %v2261 = vld [vmem:[%s2244 + $0x80] sm:$0xff]
      %v2262 = vld [vmem:[%s2244 + $0x88] sm:$0xff]
      %v2263 = vld [vmem:[%s2244 + $0x90] sm:$0xff]
      %v2264 = vld [vmem:[%s2244 + $0x98] sm:$0xff]
      %v2265 = vld [vmem:[%s2244 + $0xa0] sm:$0xff]
      %v2266 = vld [vmem:[%s2244 + $0xa8] sm:$0xff]
      %v2267 = vld [vmem:[%s2244 + $0xb0] sm:$0xff]
      %v2268 = vld [vmem:[%s2244 + $0xb8] sm:$0xff]
      %v2269 = vld [vmem:[%s2244 + $0xc0] sm:$0xff]
      %v2270 = vld [vmem:[%s2244 + $0xc8] sm:$0xff]
      %v2271 = vld [vmem:[%s2244 + $0xd0] sm:$0xff]
      %v2272 = vld [vmem:[%s2244 + $0xd8] sm:$0xff]
      %v2273 = vld [vmem:[%s2244 + $0xe0] sm:$0xff]
      %v2274 = vld [vmem:[%s2244 + $0xe8] sm:$0xff]
      %v2275 = vld [vmem:[%s2244 + $0xf0] sm:$0xff]
      %v2276 = vld [vmem:[%s2244 + $0xf8] sm:$0xff]
      %v2277 = vld [vmem:[%s2244 + $0x100] sm:$0xff]
      %v2278 = vld [vmem:[%s2244 + $0x108] sm:$0xff]
      %v2279 = vld [vmem:[%s2244 + $0x110] sm:$0xff]
      %v2280 = vld [vmem:[%s2244 + $0x118] sm:$0xff]
      %s2281 = scalar_lea.vmem %s5, 2
      %v2282 = vld [vmem:[%s2281] sm:$0x1]
      %s2283 = scalar_lea.vmem %s6, 2
      %v2284 = vld [vmem:[%s2283] sm:$0x1]
      %v2285 = vld [vmem:[#allocation3 + $0x7] sm:$0xff]
      %v2286 = vld [vmem:[#allocation3 + $0xf] sm:$0xff]
      %v2287 = vld [vmem:[#allocation3 + $0x17] sm:$0xff]
      %v2288 = vld [vmem:[#allocation3 + $0x1f] sm:$0xff]
      %v2289 = vld [vmem:[#allocation3 + $0x27] sm:$0xff]
      %v2290 = vld [vmem:[#allocation3 + $0x2f] sm:$0xff]
      %v2291 = vld [vmem:[#allocation3 + $0x37] sm:$0xff]
      %v2292 = vld [vmem:[#allocation3 + $0x3f] sm:$0xff]
      %v2293 = vsel %vm486, %v2285, 0.0
      %v2294 = vsel %vm487, %v2286, 0.0
      %v2295 = vsel %vm488, %v2287, 0.0
      %v2296 = vsel %vm489, %v2288, 0.0
      %v2297 = vsel %vm490, %v2289, 0.0
      %v2298 = vsel %vm491, %v2290, 0.0
      %v2299 = vsel %vm492, %v2291, 0.0
      %v2300 = vsel %vm493, %v2292, 0.0
      %v2301 = vld [vmem:[#allocation3 + $0x8] sm:$0xff]
      %v2302 = vld [vmem:[#allocation3 + $0x10] sm:$0xff]
      %v2303 = vld [vmem:[#allocation3 + $0x18] sm:$0xff]
      %v2304 = vld [vmem:[#allocation3 + $0x20] sm:$0xff]
      %v2305 = vld [vmem:[#allocation3 + $0x28] sm:$0xff]
      %v2306 = vld [vmem:[#allocation3 + $0x30] sm:$0xff]
      %v2307 = vld [vmem:[#allocation3 + $0x38] sm:$0xff]
      %v2308 = vld [vmem:[#allocation3 + $0x40] sm:$0xff]
      %v2309 = vld [vmem:[#allocation3 + $0x9] sm:$0xff]
      %v2310 = vld [vmem:[#allocation3 + $0x11] sm:$0xff]
      %v2311 = vld [vmem:[#allocation3 + $0x19] sm:$0xff]
      %v2312 = vld [vmem:[#allocation3 + $0x21] sm:$0xff]
      %v2313 = vld [vmem:[#allocation3 + $0x29] sm:$0xff]
      %v2314 = vld [vmem:[#allocation3 + $0x31] sm:$0xff]
      %v2315 = vld [vmem:[#allocation3 + $0x39] sm:$0xff]
      %v2316 = vld [vmem:[#allocation3 + $0x41] sm:$0xff]
      %v2317 = vsel %vm1047, %v2309, 0.0
      %v2318 = vsel %vm1048, %v2310, 0.0
      %v2319 = vsel %vm1049, %v2311, 0.0
      %v2320 = vsel %vm1050, %v2312, 0.0
      %v2321 = vsel %vm1051, %v2313, 0.0
      %v2322 = vsel %vm1052, %v2314, 0.0
      %v2323 = vsel %vm1053, %v2315, 0.0
      %v2324 = vsel %vm1054, %v2316, 0.0
      %v2325 = vld [vmem:[#allocation3 + $0x47] sm:$0xff]
      %v2326 = vsel %vm486, %v2286, 0.0
      %v2327 = vsel %vm487, %v2287, 0.0
      %v2328 = vsel %vm488, %v2288, 0.0
      %v2329 = vsel %vm489, %v2289, 0.0
      %v2330 = vsel %vm490, %v2290, 0.0
      %v2331 = vsel %vm491, %v2291, 0.0
      %v2332 = vsel %vm492, %v2292, 0.0
      %v2333 = vsel %vm493, %v2325, 0.0
      %v2334 = vld [vmem:[#allocation3 + $0x48] sm:$0xff]
      %v2335 = vld [vmem:[#allocation3 + $0x49] sm:$0xff]
      %v2336 = vsel %vm1047, %v2310, 0.0
      %v2337 = vsel %vm1048, %v2311, 0.0
      %v2338 = vsel %vm1049, %v2312, 0.0
      %v2339 = vsel %vm1050, %v2313, 0.0
      %v2340 = vsel %vm1051, %v2314, 0.0
      %v2341 = vsel %vm1052, %v2315, 0.0
      %v2342 = vsel %vm1053, %v2316, 0.0
      %v2343 = vsel %vm1054, %v2335, 0.0
      %v2344 = vld [vmem:[#allocation3 + $0x4f] sm:$0xff]
      %v2345 = vsel %vm486, %v2287, 0.0
      %v2346 = vsel %vm487, %v2288, 0.0
      %v2347 = vsel %vm488, %v2289, 0.0
      %v2348 = vsel %vm489, %v2290, 0.0
      %v2349 = vsel %vm490, %v2291, 0.0
      %v2350 = vsel %vm491, %v2292, 0.0
      %v2351 = vsel %vm492, %v2325, 0.0
      %v2352 = vsel %vm493, %v2344, 0.0
      %v2353 = vld [vmem:[#allocation3 + $0x50] sm:$0xff]
      %v2354 = vld [vmem:[#allocation3 + $0x51] sm:$0xff]
      %v2355 = vsel %vm1047, %v2311, 0.0
      %v2356 = vsel %vm1048, %v2312, 0.0
      %v2357 = vsel %vm1049, %v2313, 0.0
      %v2358 = vsel %vm1050, %v2314, 0.0
      %v2359 = vsel %vm1051, %v2315, 0.0
      %v2360 = vsel %vm1052, %v2316, 0.0
      %v2361 = vsel %vm1053, %v2335, 0.0
      %v2362 = vsel %vm1054, %v2354, 0.0
      %2371 = vrot.lane.b32.xlu0 %v2301, 32
      %v2372 = vpop.permute.xlu0 %2371
      %2373 = vrot.lane.b32.xlu0 %v2302, 32
      %v2374 = vpop.permute.xlu0 %2373
      %2375 = vrot.lane.b32.xlu0 %v2303, 32
      %v2376 = vpop.permute.xlu0 %2375
      %2377 = vrot.lane.b32.xlu0 %v2304, 32
      %v2378 = vpop.permute.xlu0 %2377
      %2379 = vrot.lane.b32.xlu0 %v2305, 32
      %v2380 = vpop.permute.xlu0 %2379
      %2381 = vrot.lane.b32.xlu0 %v2306, 32
      %v2382 = vpop.permute.xlu0 %2381
      %2383 = vrot.lane.b32.xlu0 %v2307, 32
      %v2384 = vpop.permute.xlu0 %2383
      %2385 = vrot.lane.b32.xlu0 %v2308, 32
      %v2386 = vpop.permute.xlu0 %2385
      %2403 = vrot.lane.b32.xlu0 %v2317, 64
      %v2404 = vpop.permute.xlu0 %2403
      %2405 = vrot.lane.b32.xlu0 %v2318, 64
      %v2406 = vpop.permute.xlu0 %2405
      %2407 = vrot.lane.b32.xlu0 %v2319, 64
      %v2408 = vpop.permute.xlu0 %2407
      %2409 = vrot.lane.b32.xlu0 %v2320, 64
      %v2410 = vpop.permute.xlu0 %2409
      %2411 = vrot.lane.b32.xlu0 %v2321, 64
      %v2412 = vpop.permute.xlu0 %2411
      %2413 = vrot.lane.b32.xlu0 %v2322, 64
      %v2414 = vpop.permute.xlu0 %2413
      %2415 = vrot.lane.b32.xlu0 %v2323, 64
      %v2416 = vpop.permute.xlu0 %2415
      %2417 = vrot.lane.b32.xlu0 %v2324, 64
      %v2418 = vpop.permute.xlu0 %2417
      %2435 = vrot.lane.b32.xlu0 %v2326, 96
      %v2436 = vpop.permute.xlu0 %2435
      %2437 = vrot.lane.b32.xlu0 %v2327, 96
      %v2438 = vpop.permute.xlu0 %2437
      %2439 = vrot.lane.b32.xlu0 %v2328, 96
      %v2440 = vpop.permute.xlu0 %2439
      %2441 = vrot.lane.b32.xlu0 %v2329, 96
      %v2442 = vpop.permute.xlu0 %2441
      %2443 = vrot.lane.b32.xlu0 %v2330, 96
      %v2444 = vpop.permute.xlu0 %2443
      %2445 = vrot.lane.b32.xlu0 %v2331, 96
      %v2446 = vpop.permute.xlu0 %2445
      %2447 = vrot.lane.b32.xlu0 %v2332, 96
      %v2448 = vpop.permute.xlu0 %2447
      %2449 = vrot.lane.b32.xlu0 %v2333, 96
      %v2450 = vpop.permute.xlu0 %2449
      %2467 = vrot.lane.b32.xlu0 %v2336, 32
      %v2468 = vpop.permute.xlu0 %2467
      %2469 = vrot.lane.b32.xlu0 %v2337, 32
      %v2470 = vpop.permute.xlu0 %2469
      %2471 = vrot.lane.b32.xlu0 %v2338, 32
      %v2472 = vpop.permute.xlu0 %2471
      %2473 = vrot.lane.b32.xlu0 %v2339, 32
      %v2474 = vpop.permute.xlu0 %2473
      %2475 = vrot.lane.b32.xlu0 %v2340, 32
      %v2476 = vpop.permute.xlu0 %2475
      %2477 = vrot.lane.b32.xlu0 %v2341, 32
      %v2478 = vpop.permute.xlu0 %2477
      %2479 = vrot.lane.b32.xlu0 %v2342, 32
      %v2480 = vpop.permute.xlu0 %2479
      %2481 = vrot.lane.b32.xlu0 %v2343, 32
      %v2482 = vpop.permute.xlu0 %2481
      %2499 = vrot.lane.b32.xlu0 %v2345, 64
      %v2500 = vpop.permute.xlu0 %2499
      %2501 = vrot.lane.b32.xlu0 %v2346, 64
      %v2502 = vpop.permute.xlu0 %2501
      %2503 = vrot.lane.b32.xlu0 %v2347, 64
      %v2504 = vpop.permute.xlu0 %2503
      %2505 = vrot.lane.b32.xlu0 %v2348, 64
      %v2506 = vpop.permute.xlu0 %2505
      %2507 = vrot.lane.b32.xlu0 %v2349, 64
      %v2508 = vpop.permute.xlu0 %2507
      %2509 = vrot.lane.b32.xlu0 %v2350, 64
      %v2510 = vpop.permute.xlu0 %2509
      %2511 = vrot.lane.b32.xlu0 %v2351, 64
      %v2512 = vpop.permute.xlu0 %2511
      %2513 = vrot.lane.b32.xlu0 %v2352, 64
      %v2514 = vpop.permute.xlu0 %2513
      %2525 = vrot.lane.b32.xlu0 %v2303, 96
      %v2526 = vpop.permute.xlu0 %2525
      %2527 = vrot.lane.b32.xlu0 %v2304, 96
      %v2528 = vpop.permute.xlu0 %2527
      %2529 = vrot.lane.b32.xlu0 %v2305, 96
      %v2530 = vpop.permute.xlu0 %2529
      %2531 = vrot.lane.b32.xlu0 %v2306, 96
      %v2532 = vpop.permute.xlu0 %2531
      %2533 = vrot.lane.b32.xlu0 %v2307, 96
      %v2534 = vpop.permute.xlu0 %2533
      %2535 = vrot.lane.b32.xlu0 %v2308, 96
      %v2536 = vpop.permute.xlu0 %2535
      %2537 = vrot.lane.b32.xlu0 %v2334, 96
      %v2538 = vpop.permute.xlu0 %2537
      %2539 = vrot.lane.b32.xlu0 %v2353, 96
      %v2540 = vpop.permute.xlu0 %2539
      %v2549 = vsel %vm281, %v2293, %v2372
      %v2550 = vsel %vm281, %v2294, %v2374
      %v2551 = vsel %vm281, %v2295, %v2376
      %v2552 = vsel %vm281, %v2296, %v2378
      %v2553 = vsel %vm281, %v2297, %v2380
      %v2554 = vsel %vm281, %v2298, %v2382
      %v2555 = vsel %vm281, %v2299, %v2384
      %v2556 = vsel %vm281, %v2300, %v2386
      %v2557 = vsel %vm665, %v2549, %v2404
      %v2558 = vsel %vm665, %v2550, %v2406
      %v2559 = vsel %vm665, %v2551, %v2408
      %v2560 = vsel %vm665, %v2552, %v2410
      %v2561 = vsel %vm665, %v2553, %v2412
      %v2562 = vsel %vm665, %v2554, %v2414
      %v2563 = vsel %vm665, %v2555, %v2416
      %v2564 = vsel %vm665, %v2556, %v2418
      %v2565 = vsel %vm674, %v2557, %v2436
      %v2566 = vsel %vm674, %v2558, %v2438
      %v2567 = vsel %vm674, %v2559, %v2440
      %v2568 = vsel %vm674, %v2560, %v2442
      %v2569 = vsel %vm674, %v2561, %v2444
      %v2570 = vsel %vm674, %v2562, %v2446
      %v2571 = vsel %vm674, %v2563, %v2448
      %v2572 = vsel %vm674, %v2564, %v2450
      %v2573 = vsel %vm281, %v2302, %v2468
      %v2574 = vsel %vm281, %v2303, %v2470
      %v2575 = vsel %vm281, %v2304, %v2472
      %v2576 = vsel %vm281, %v2305, %v2474
      %v2577 = vsel %vm281, %v2306, %v2476
      %v2578 = vsel %vm281, %v2307, %v2478
      %v2579 = vsel %vm281, %v2308, %v2480
      %v2580 = vsel %vm281, %v2334, %v2482
      %v2581 = vsel %vm665, %v2573, %v2500
      %v2582 = vsel %vm665, %v2574, %v2502
      %v2583 = vsel %vm665, %v2575, %v2504
      %v2584 = vsel %vm665, %v2576, %v2506
      %v2585 = vsel %vm665, %v2577, %v2508
      %v2586 = vsel %vm665, %v2578, %v2510
      %v2587 = vsel %vm665, %v2579, %v2512
      %v2588 = vsel %vm665, %v2580, %v2514
      %v2589 = vsel %vm674, %v2581, %v2526
      %v2590 = vsel %vm674, %v2582, %v2528
      %v2591 = vsel %vm674, %v2583, %v2530
      %v2592 = vsel %vm674, %v2584, %v2532
      %v2593 = vsel %vm674, %v2585, %v2534
      %v2594 = vsel %vm674, %v2586, %v2536
      %v2595 = vsel %vm674, %v2587, %v2538
      %v2596 = vsel %vm674, %v2588, %v2540
      %v2598 = vsel %vm281, %v2355, 0
      %v2601 = vsel %vm281, %v2356, 0
      %v2604 = vsel %vm281, %v2357, 0
      %v2607 = vsel %vm281, %v2358, 0
      %v2610 = vsel %vm281, %v2359, 0
      %v2613 = vsel %vm281, %v2360, 0
      %v2616 = vsel %vm281, %v2361, 0
      %v2619 = vsel %vm281, %v2362, 0
      %2621 = vmatprep.subr.mxu0 0.0
      %2622 = vmatpush1.msra.mxu0 %v2245
      %2623 = vmatprep.subr.mxu0 0.0
      %2624 = vmatpush1.msra.mxu0 %v2246
      %2625 = vmatprep.subr.mxu0 0.0
      %2626 = vmatpush1.msra.mxu0 %v2247
      %2627 = vmatprep.subr.mxu0 0.0
      %2628 = vmatpush1.msra.mxu0 %v2248
      %2629 = vmatprep.subr.mxu0 0.0
      %2630 = vmatpush1.msra.mxu0 %v2249
      %2631 = vmatprep.subr.mxu0 0.0
      %2632 = vmatpush1.msra.mxu0 %v2250
      %2633 = vmatprep.subr.mxu0 0.0
      %2634 = vmatpush1.msra.mxu0 %v2251
      %2635 = vmatprep.subr.mxu0 0.0
      %2636 = vmatpush1.msra.mxu0 %v2252
      %2637 = vmatprep.subr.mxu0 0.0
      %2638 = vmatpush1.msra.mxu0 %v2253
      %2639 = vmatprep.subr.mxu0 0.0
      %2640 = vmatpush1.msra.mxu0 %v2254
      %2641 = vmatprep.subr.mxu0 0.0
      %2642 = vmatpush1.msra.mxu0 %v2255
      %2643 = vmatprep.subr.mxu0 0.0
      %2644 = vmatpush1.msra.mxu0 %v2256
      %2645 = vmatprep.subr.mxu0 0.0
      %2646 = vmatpush1.msra.mxu0 %v2257
      %2647 = vmatprep.subr.mxu0 0.0
      %2648 = vmatpush1.msra.mxu0 %v2258
      %2649 = vmatprep.subr.mxu0 0.0
      %2650 = vmatpush1.msra.mxu0 %v2259
      %2651 = vmatprep.subr.mxu0 0.0
      %2652 = vmatpush1.msra.mxu0 %v2260
      %2653 = vmatprep.subr.mxu0 0.0
      %2654 = vmatpush1.msra.mxu0 %v2261
      %2655 = vmatprep.subr.mxu0 0.0
      %2656 = vmatpush1.msra.mxu0 %v2262
      %2657 = vmatprep.subr.mxu0 0.0
      %2658 = vmatpush1.msra.mxu0 %v2263
      %2659 = vmatprep.subr.mxu0 0.0
      %2660 = vmatpush1.msra.mxu0 %v2264
      %2661 = vmatprep.subr.mxu0 0.0
      %2662 = vmatpush1.msra.mxu0 %v2265
      %2663 = vmatprep.subr.mxu0 0.0
      %2664 = vmatpush1.msra.mxu0 %v2266
      %2665 = vmatprep.subr.mxu0 0.0
      %2666 = vmatpush1.msra.mxu0 %v2267
      %2667 = vmatprep.subr.mxu0 0.0
      %2668 = vmatpush1.msra.mxu0 %v2268
      %2669 = vmatprep.subr.mxu0 0.0
      %2670 = vmatpush1.msra.mxu0 %v2269
      %2671 = vmatprep.subr.mxu0 0.0
      %2672 = vmatpush1.msra.mxu0 %v2270
      %2673 = vmatprep.subr.mxu0 0.0
      %2674 = vmatpush1.msra.mxu0 %v2271
      %2675 = vmatprep.subr.mxu0 0.0
      %2676 = vmatpush1.msra.mxu0 %v2272
      %2677 = vmatprep.subr.mxu0 0.0
      %2678 = vmatpush1.msra.mxu0 %v2273
      %2679 = vmatprep.subr.mxu0 0.0
      %2680 = vmatpush1.msra.mxu0 %v2274
      %2681 = vmatprep.subr.mxu0 0.0
      %2682 = vmatpush1.msra.mxu0 %v2275
      %2683 = vmatprep.subr.mxu0 0.0
      %2684 = vmatpush1.msra.mxu0 %v2276
      %2685 = vmatprep.mubr.f32.mxu0 %v2589
      %2686 = vmatmul.mubr.f32.gmra.mrb[0].mxu0 %v2565
      %v2687 = vpop.f32.mrb[0].mxu0
      %v2688 = vadd.f32 0.0, %v2687
      %v2689 = vpop.f32.mrb[0].mxu0
      %2690 = vmatprep.mubr.f32.mxu0 %v2590
      %2691 = vmatmul.mubr.f32.gmra.mrb[0].mxu0 %v2566
      %v2692 = vpop.f32.mrb[0].mxu0
      %v2693 = vadd.f32 0.0, %v2692
      %v2694 = vpop.f32.mrb[0].mxu0
      %2695 = vmatprep.mubr.f32.mxu0 %v2591
      %2696 = vmatmul.mubr.f32.gmra.mrb[0].mxu0 %v2567
      %v2697 = vpop.f32.mrb[0].mxu0
      %v2698 = vadd.f32 0.0, %v2697
      %v2699 = vpop.f32.mrb[0].mxu0
      %2700 = vmatprep.mubr.f32.mxu0 %v2592
      %2701 = vmatmul.mubr.f32.gmra.mrb[0].mxu0 %v2568
      %v2702 = vpop.f32.mrb[0].mxu0
      %v2703 = vadd.f32 0.0, %v2702
      %v2704 = vpop.f32.mrb[0].mxu0
      %2705 = vmatprep.mubr.f32.mxu0 %v2593
      %2706 = vmatmul.mubr.f32.gmra.mrb[0].mxu0 %v2569
      %v2707 = vpop.f32.mrb[0].mxu0
      %v2708 = vadd.f32 0.0, %v2707
      %v2709 = vpop.f32.mrb[0].mxu0
      %2710 = vmatprep.mubr.f32.mxu0 %v2594
      %2711 = vmatmul.mubr.f32.gmra.mrb[0].mxu0 %v2570
      %v2712 = vpop.f32.mrb[0].mxu0
      %v2713 = vadd.f32 0.0, %v2712
      %v2714 = vpop.f32.mrb[0].mxu0
      %2715 = vmatprep.mubr.f32.mxu0 %v2595
      %2716 = vmatmul.mubr.f32.gmra.mrb[0].mxu0 %v2571
      %v2717 = vpop.f32.mrb[0].mxu0
      %v2718 = vadd.f32 0.0, %v2717
      %v2719 = vpop.f32.mrb[0].mxu0
      %2720 = vmatprep.mubr.f32.mxu0 %v2596
      %2721 = vmatmul.mubr.f32.gmra.mrb[0].mxu0 %v2572
      %v2722 = vpop.f32.mrb[0].mxu0
      %v2723 = vadd.f32 0.0, %v2722
      %v2724 = vpop.f32.mrb[0].mxu0
      %2725 = vdwg.mxu0
      %2726 = vmatprep.subr.mxu0 0.0
      %2727 = vmatpush1.msra.mxu0 %v2277
      %2728 = vmatprep.subr.mxu0 0.0
      %2729 = vmatpush1.msra.mxu0 %v2278
      %2730 = vmatprep.subr.mxu0 0.0
      %2731 = vmatpush1.msra.mxu0 %v2279
      %2732 = vmatprep.subr.mxu0 0.0
      %2733 = vmatpush1.msra.mxu0 %v2280
      %2734 = vmatprep.subr.mxu0 0.0
      %2735 = vmatpush1.msra.mxu0 0.0
      %2736 = vmatprep.subr.mxu0 0.0
      %2737 = vmatpush1.msra.mxu0 0.0
      %2738 = vmatprep.subr.mxu0 0.0
      %2739 = vmatpush1.msra.mxu0 0.0
      %2740 = vmatprep.subr.mxu0 0.0
      %2741 = vmatpush1.msra.mxu0 0.0
      %2742 = vmatprep.subr.mxu0 0.0
      %2743 = vmatpush1.msra.mxu0 0.0
      %2744 = vmatprep.subr.mxu0 0.0
      %2745 = vmatpush1.msra.mxu0 0.0
      %2746 = vmatprep.subr.mxu0 0.0
      %2747 = vmatpush1.msra.mxu0 0.0
      %2748 = vmatprep.subr.mxu0 0.0
      %2749 = vmatpush1.msra.mxu0 0.0
      %2750 = vmatprep.subr.mxu0 0.0
      %2751 = vmatpush1.msra.mxu0 0.0
      %2752 = vmatprep.subr.mxu0 0.0
      %2753 = vmatpush1.msra.mxu0 0.0
      %2754 = vmatprep.subr.mxu0 0.0
      %2755 = vmatpush1.msra.mxu0 0.0
      %2756 = vmatprep.subr.mxu0 0.0
      %2757 = vmatpush1.msra.mxu0 0.0
      %2758 = vmatprep.subr.mxu0 0.0
      %2759 = vmatpush1.msra.mxu0 0.0
      %2760 = vmatprep.subr.mxu0 0.0
      %2761 = vmatpush1.msra.mxu0 0.0
      %2762 = vmatprep.subr.mxu0 0.0
      %2763 = vmatpush1.msra.mxu0 0.0
      %2764 = vmatprep.subr.mxu0 0.0
      %2765 = vmatpush1.msra.mxu0 0.0
      %2766 = vmatprep.subr.mxu0 0.0
      %2767 = vmatpush1.msra.mxu0 0.0
      %2768 = vmatprep.subr.mxu0 0.0
      %2769 = vmatpush1.msra.mxu0 0.0
      %2770 = vmatprep.subr.mxu0 0.0
      %2771 = vmatpush1.msra.mxu0 0.0
      %2772 = vmatprep.subr.mxu0 0.0
      %2773 = vmatpush1.msra.mxu0 0.0
      %2774 = vmatprep.subr.mxu0 0.0
      %2775 = vmatpush1.msra.mxu0 0.0
      %2776 = vmatprep.subr.mxu0 0.0
      %2777 = vmatpush1.msra.mxu0 0.0
      %2778 = vmatprep.subr.mxu0 0.0
      %2779 = vmatpush1.msra.mxu0 0.0
      %2780 = vmatprep.subr.mxu0 0.0
      %2781 = vmatpush1.msra.mxu0 0.0
      %2782 = vmatprep.subr.mxu0 0.0
      %2783 = vmatpush1.msra.mxu0 0.0
      %2784 = vmatprep.subr.mxu0 0.0
      %2785 = vmatpush1.msra.mxu0 0.0
      %2786 = vmatprep.subr.mxu0 0.0
      %2787 = vmatpush1.msra.mxu0 0.0
      %2788 = vmatprep.subr.mxu0 0.0
      %2789 = vmatpush1.msra.mxu0 0.0
      %2790 = vmatprep.mubr.f32.mxu0 0.0
      %2791 = vmatmul.mubr.f32.gmra.mrb[0].mxu0 %v2598
      %v2792 = vpop.f32.mrb[0].mxu0
      %v2793 = vadd.f32 %v2688, %v2792
      %v2794 = vpop.f32.mrb[0].mxu0
      %2795 = vmatprep.mubr.f32.mxu0 0.0
      %2796 = vmatmul.mubr.f32.gmra.mrb[0].mxu0 %v2601
      %v2797 = vpop.f32.mrb[0].mxu0
      %v2798 = vadd.f32 %v2693, %v2797
      %v2799 = vpop.f32.mrb[0].mxu0
      %2800 = vmatprep.mubr.f32.mxu0 0.0
      %2801 = vmatmul.mubr.f32.gmra.mrb[0].mxu0 %v2604
      %v2802 = vpop.f32.mrb[0].mxu0
      %v2803 = vadd.f32 %v2698, %v2802
      %v2804 = vpop.f32.mrb[0].mxu0
      %2805 = vmatprep.mubr.f32.mxu0 0.0
      %2806 = vmatmul.mubr.f32.gmra.mrb[0].mxu0 %v2607
      %v2807 = vpop.f32.mrb[0].mxu0
      %v2808 = vadd.f32 %v2703, %v2807
      %v2809 = vpop.f32.mrb[0].mxu0
      %2810 = vmatprep.mubr.f32.mxu0 0.0
      %2811 = vmatmul.mubr.f32.gmra.mrb[0].mxu0 %v2610
      %v2812 = vpop.f32.mrb[0].mxu0
      %v2813 = vadd.f32 %v2708, %v2812
      %v2814 = vpop.f32.mrb[0].mxu0
      %2815 = vmatprep.mubr.f32.mxu0 0.0
      %2816 = vmatmul.mubr.f32.gmra.mrb[0].mxu0 %v2613
      %v2817 = vpop.f32.mrb[0].mxu0
      %v2818 = vadd.f32 %v2713, %v2817
      %v2819 = vpop.f32.mrb[0].mxu0
      %2820 = vmatprep.mubr.f32.mxu0 0.0
      %2821 = vmatmul.mubr.f32.gmra.mrb[0].mxu0 %v2616
      %v2822 = vpop.f32.mrb[0].mxu0
      %v2823 = vadd.f32 %v2718, %v2822
      %v2824 = vpop.f32.mrb[0].mxu0
      %2825 = vmatprep.mubr.f32.mxu0 0.0
      %2826 = vmatmul.mubr.f32.gmra.mrb[0].mxu0 %v2619
      %v2827 = vpop.f32.mrb[0].mxu0
      %v2828 = vadd.f32 %v2723, %v2827
      %v2829 = vpop.f32.mrb[0].mxu0
      %2830 = vdwg.mxu0
      %v2832 = vlaneseq
      %v2833 = vshrl.u32 %v2832, 7
      %v2834 = vsub.s32 0, %v2833
      %v2835 = vrot.slane %v2282, %v2834
      %v2837 = vmul.f32 %v2793, %v2835
      %v2838 = vmul.f32 %v2798, %v2835
      %v2839 = vmul.f32 %v2803, %v2835
      %v2840 = vmul.f32 %v2808, %v2835
      %v2841 = vmul.f32 %v2813, %v2835
      %v2842 = vmul.f32 %v2818, %v2835
      %v2843 = vmul.f32 %v2823, %v2835
      %v2844 = vmul.f32 %v2828, %v2835
      %v2846 = vlaneseq
      %v2847 = vshrl.u32 %v2846, 7
      %v2848 = vsub.s32 0, %v2847
      %v2849 = vrot.slane %v2284, %v2848
      %v2851 = vadd.f32 %v2837, %v2849
      %v2852 = vadd.f32 %v2838, %v2849
      %v2853 = vadd.f32 %v2839, %v2849
      %v2854 = vadd.f32 %v2840, %v2849
      %v2855 = vadd.f32 %v2841, %v2849
      %v2856 = vadd.f32 %v2842, %v2849
      %v2857 = vadd.f32 %v2843, %v2849
      %v2858 = vadd.f32 %v2844, %v2849
      %v2859 = vmax.f32 %v2851, 0.0
      %v2860 = vmax.f32 %v2852, 0.0
      %v2861 = vmax.f32 %v2853, 0.0
      %v2862 = vmax.f32 %v2854, 0.0
      %v2863 = vmax.f32 %v2855, 0.0
      %v2864 = vmax.f32 %v2856, 0.0
      %v2865 = vmax.f32 %v2857, 0.0
      %v2866 = vmax.f32 %v2858, 0.0
      %2867 = vst.msk [vmem:[%s278] sm:$0xff] %vm281, %v2859
      %2868 = vst.msk [vmem:[%s278 + $0x8] sm:$0xff] %vm281, %v2860
      %2869 = vst.msk [vmem:[%s278 + $0x10] sm:$0xff] %vm281, %v2861
      %2870 = vst.msk [vmem:[%s278 + $0x18] sm:$0xff] %vm281, %v2862
      %2871 = vst.msk [vmem:[%s278 + $0x20] sm:$0xff] %vm281, %v2863
      %2872 = vst.msk [vmem:[%s278 + $0x28] sm:$0xff] %vm281, %v2864
      %2873 = vst.msk [vmem:[%s278 + $0x30] sm:$0xff] %vm281, %v2865
      %2874 = vst.msk [vmem:[%s278 + $0x38] sm:$0xff] %vm281, %v2866
      %p2875 = scmp.lt.s32.totalorder %s18, 1
      %s2876 = scalar_select %p2875, %s18, 1
      %s2877 = smul.addr %s2876, 8
      %s2878 = smul.addr %s2877, 8
      %s2879 = scalar_lea.vmem %s7, %s2878
      // Predicated region
      $region49: #{centerpoint_style_net_forward.4} parent=47 // pred_check
        %p2880 = pneg %p188
      $region50: #{centerpoint_style_net_forward.4} parent=47 // pred_check_branch
        %2882 = sbr.rel (%p2880) target = $region52
      $region51: #{centerpoint_style_net_forward.4} parent=47 // pred_region
        _
      $region52: #{centerpoint_style_net_forward.4} parent=47 // pred_fallthru
        _
    $region48: #{centerpoint_style_net_forward.4} parent=5 // pred_fallthru
      _
    %p2883 = scmp.le.s32.totalorder 2, %s13
    // Predicated region
    $region53: #{centerpoint_style_net_forward.4} parent=5 // pred_check
      %p2884 = pneg %p2883
    $region54: #{centerpoint_style_net_forward.4} parent=5 // pred_check_branch
      %2886 = sbr.rel (%p2884) target = $region56
    $region55: #{centerpoint_style_net_forward.4} parent=5 // pred_region
      %s2887 = ssub.s32 %s13, 2
      // Predicated region
      $region57: #{centerpoint_style_net_forward.4} parent=55 // pred_check
        %p2888 = pneg %p194
      $region58: #{centerpoint_style_net_forward.4} parent=55 // pred_check_branch
        %2890 = sbr.rel (%p2888) target = $region60
      $region59: #{centerpoint_style_net_forward.4} parent=55 // pred_region
        %p2891 = scmp.lt.s32.totalorder %s19, 1
        %s2892 = scalar_select %p2891, %s19, 1
        %s2893 = smul.addr %s2892, 8
        %s2894 = smul.addr %s2893, 8
        %s2895 = scalar_lea.vmem %s7, %s2894
      $region60: #{centerpoint_style_net_forward.4} parent=55 // pred_fallthru
        _
    $region56: #{centerpoint_style_net_forward.4} parent=5 // pred_fallthru
      _
  $region6: #{centerpoint_style_net_forward.4} parent=0 // loop_footer
    %s17 = sadd.s32 1, %s13
  $region7: #{centerpoint_style_net_forward.4} parent=0 // loop_footer_branch
    %12 = sbr.rel target = $region3
  $region8: #{centerpoint_style_net_forward.4} parent=0 // loop_exit
    _

// kernel: centerpoint_style_net_forward.5
$region0: #{centerpoint_style_net_forward.5}
  #allocation0 [shape = 'u32[]', space=smem, size = 0x4, offset = 0x4, fixed_abs, tag = 'smem constant byte address 0x4 - core index']
  #allocation1 [shape = 'u32[144,128]{1,0:T(1,128)}', space=vmem, size = 0x12000, scoped, tag = 'internal scratch']
  #allocation2 [shape = 'f32[29,128]{1,0:T(8,128)}', space=vmem, size = 0x4000, scoped, tag = 'scratch operand']
  #allocation3 [shape = 'f32[29,64]{1,0:T(8,128)}', space=vmem, size = 0x4000, scoped, tag = 'scratch operand']
  #allocation4 [shape = 'f32[29,128]{1,0:T(8,128)}', space=vmem, size = 0x4000, scoped, tag = 'scratch operand']
  #allocation5 [shape = 'f32[29,64]{1,0:T(8,128)}', space=vmem, size = 0x4000, scoped, tag = 'scratch operand']
  #allocation6 [shape = 'f32[29,320]{1,0:T(8,128)}', space=vmem, size = 0xc000, scoped, tag = 'scratch operand']
  %s0 = inlined_call_operand.vmem [shape: f32[2,16,128], index: 0, kind: input, shape index: {}]
  %s1 = inlined_call_operand.vmem [shape: f32[288,64], index: 1, kind: input, shape index: {}]
  %s2 = inlined_call_operand.vmem [shape: f32[1,64], index: 2, kind: input, shape index: {}]
  %s3 = inlined_call_operand.vmem [shape: f32[1,64], index: 3, kind: input, shape index: {}]
  %s4 = inlined_call_operand.vmem [shape: f32[5,576,64], index: 4, kind: input, shape index: {}]
  %s5 = inlined_call_operand.vmem [shape: f32[5,1,64], index: 5, kind: input, shape index: {}]
  %s6 = inlined_call_operand.vmem [shape: f32[5,1,64], index: 6, kind: input, shape index: {}]
  %s7 = inlined_call_operand.vmem [shape: f32[128,64], index: 7, kind: input, shape index: {}]
  %s8 = inlined_call_operand.vmem [shape: f32[1,64], index: 8, kind: input, shape index: {}]
  %s9 = inlined_call_operand.vmem [shape: f32[1,64], index: 9, kind: input, shape index: {}]
  %s10 = inlined_call_operand.vmem [shape: f32[64,64], index: 10, kind: input, shape index: {}]
  %s11 = inlined_call_operand.vmem [shape: f32[1,64], index: 11, kind: input, shape index: {}]
  %s12 = inlined_call_operand.vmem [shape: f32[1,64], index: 12, kind: input, shape index: {}]
  %s13 = inlined_call_operand.vmem [shape: f32[1152,64], index: 13, kind: input, shape index: {}]
  %s14 = inlined_call_operand.vmem [shape: f32[1,64], index: 14, kind: input, shape index: {}]
  %s15 = inlined_call_operand.vmem [shape: f32[1,64], index: 15, kind: input, shape index: {}]
  %s16 = inlined_call_operand.vmem [shape: f32[576,320], index: 16, kind: input, shape index: {}]
  %s17 = inlined_call_operand.vmem [shape: f32[1,320], index: 17, kind: input, shape index: {}]
  %s18 = inlined_call_operand.vmem [shape: f32[1,320], index: 18, kind: input, shape index: {}]
  %s19 = inlined_call_operand.vmem [shape: f32[9,2880], index: 19, kind: input, shape index: {}]
  %s20 = inlined_call_operand.vmem [shape: f32[9,1], index: 20, kind: input, shape index: {}]
  %s21 = inlined_call_operand.vmem [shape: f32[2,9,16], index: 21, kind: output, shape index: {}]
  %s22 = sld [smem:[#allocation0]]
  $region117: #{centerpoint_style_net_forward.5} parent=0
    _
  %s24 = ssub.s32 1, %s22
  %s25 = scalar_select 0, %s24, %s22
  loop: start=0, step=1, limit=4
  $region2: #{centerpoint_style_net_forward.5} parent=0 // loop_pre_header
    _
  $region3: #{centerpoint_style_net_forward.5} parent=0 // loop_header
    %s27 = sphi 0, %s31
    %p28 = scmp.ge.s32.totalorder %s27, 4
    %s37 = sphi 0, %s39
    %s40 = sphi 0, %s37
    %s41 = sphi 0, %s40
    %s57 = sphi 0, %s41
    %s61 = sphi 0, %s61
    %s63 = sphi 0, %s61
    %s64 = sphi 0, %s63
    %s78 = sphi 0, %s64
    %s82 = sphi 0, %s82
    %s84 = sphi 0, %s82
    %s85 = sphi 0, %s84
    %s99 = sphi 0, %s85
    %s103 = sphi 0, %s103
    %s105 = sphi 0, %s103
    %s106 = sphi 0, %s105
    %s120 = sphi 0, %s106
    %s124 = sphi 0, %s124
    %s126 = sphi 0, %s124
    %s127 = sphi 0, %s126
    %s141 = sphi 0, %s127
    %s145 = sphi 0, %s145
    %s147 = sphi 0, %s145
    %s148 = sphi 0, %s147
    %s162 = sphi 0, %s148
    %s166 = sphi 0, %s166
    %s168 = sphi 0, %s166
    %s169 = sphi 0, %s168
    %s183 = sphi 0, %s169
    %s187 = sphi 0, %s187
    %s189 = sphi 0, %s187
    %s190 = sphi 0, %s189
    %s204 = sphi 0, %s190
    %s208 = sphi 0, %s208
    %s210 = sphi 0, %s208
    %s211 = sphi 0, %s210
    %s225 = sphi 0, %s211
    %s229 = sphi 0, %s229
    %s231 = sphi 0, %s229
    %s232 = sphi 0, %s231
    %s246 = sphi 0, %s232
    %s250 = sphi 0, %s250
    %s252 = sphi 0, %s250
    %s253 = sphi 0, %s252
    %s267 = sphi 0, %s253
    %s271 = sphi 0, %s271
    %s273 = sphi 0, %s271
    %s274 = sphi 0, %s273
    %s288 = sphi 0, %s274
    %s292 = sphi 0, %s292
    %s294 = sphi 0, %s292
    %s295 = sphi 0, %s294
    %s309 = sphi 0, %s295
    %s313 = sphi 0, %s313
    %s315 = sphi 0, %s313
    %s316 = sphi 0, %s315
    %s330 = sphi 0, %s316
    %s334 = sphi 0, %s334
    %s336 = sphi 0, %s334
    %s337 = sphi 0, %s336
    %s351 = sphi 0, %s337
    %s355 = sphi 0, %s355
    %s357 = sphi 0, %s355
    %s358 = sphi 0, %s357
    %s372 = sphi 0, %s358
    %s376 = sphi 0, %s376
    %s378 = sphi 0, %s376
    %s379 = sphi 0, %s378
    %s393 = sphi 0, %s379
    %s397 = sphi 0, %s397
    %s399 = sphi 0, %s397
    %s400 = sphi 0, %s399
    %s414 = sphi 0, %s400
    %s418 = sphi 0, %s418
    %s420 = sphi 0, %s418
    %s421 = sphi 0, %s420
    %s435 = sphi 0, %s421
    %s439 = sphi 0, %s439
    %s441 = sphi 0, %s439
    %s442 = sphi 0, %s441
    %s456 = sphi 0, %s442
    %s460 = sphi 0, %s460
    %s462 = sphi 0, %s460
    %s463 = sphi 0, %s462
    %s477 = sphi 0, %s463
    %s483 = sphi 0, %s485
    %s486 = sphi 0, %s483
    %s487 = sphi 0, %s486
    %s503 = sphi 0, %s487
  $region4: #{centerpoint_style_net_forward.5} parent=0 // loop_header_branch
    %30 = sbr.rel (%p28) target = $region8
  $region5: #{centerpoint_style_net_forward.5} parent=0 // loop_body
    %s32 = ssub.s32 %s27, 1
    %s33 = ssub.s32 %s27, 2
    %s34 = sadd.s32 %s27, 1
    %s35 = ssub.s32 %s27, %s34
    %p36 = scmp.eq.s32.totalorder %s35, 0
    %s38 = sadd.s32 %s37, 1
    %s39 = scalar_select %p36, %s37, %s38
    %p42 = pneg %p36
    %p43 = scmp.eq.s32.totalorder %s27, 1
    %p44 = por %p42, %p43
    %p45 = scmp.ne.s32.totalorder %s37, %s40
    %p46 = scmp.eq.s32.totalorder %s27, 0
    %p47 = por %p45, %p46
    %p48 = scmp.ne.s32.totalorder %s37, %s40
    %p49 = scmp.eq.s32.totalorder %s32, 1
    %p50 = por %p48, %p49
    %p51 = scmp.ne.s32.totalorder %s40, %s41
    %p52 = scmp.eq.s32.totalorder %s32, 0
    %p53 = por %p51, %p52
    %p54 = scmp.ne.s32.totalorder %s40, %s41
    %p55 = scmp.eq.s32.totalorder %s33, 1
    %p56 = por %p54, %p55
    %p58 = scmp.ne.s32.totalorder %s41, %s57
    %p59 = scmp.eq.s32.totalorder %s33, 0
    %p60 = por %p58, %p59
    %s62 = sadd.s32 %s61, 1
    %p65 = scmp.eq.s32.totalorder %s27, 1
    %p66 = scmp.ne.s32.totalorder %s61, %s63
    %p67 = scmp.eq.s32.totalorder %s27, 0
    %p68 = por %p66, %p67
    %p69 = scmp.ne.s32.totalorder %s61, %s63
    %p70 = scmp.eq.s32.totalorder %s32, 1
    %p71 = por %p69, %p70
    %p72 = scmp.ne.s32.totalorder %s63, %s64
    %p73 = scmp.eq.s32.totalorder %s32, 0
    %p74 = por %p72, %p73
    %p75 = scmp.ne.s32.totalorder %s63, %s64
    %p76 = scmp.eq.s32.totalorder %s33, 1
    %p77 = por %p75, %p76
    %p79 = scmp.ne.s32.totalorder %s64, %s78
    %p80 = scmp.eq.s32.totalorder %s33, 0
    %p81 = por %p79, %p80
    %s83 = sadd.s32 %s82, 1
    %p86 = scmp.eq.s32.totalorder %s27, 1
    %p87 = scmp.ne.s32.totalorder %s82, %s84
    %p88 = scmp.eq.s32.totalorder %s27, 0
    %p89 = por %p87, %p88
    %p90 = scmp.ne.s32.totalorder %s82, %s84
    %p91 = scmp.eq.s32.totalorder %s32, 1
    %p92 = por %p90, %p91
    %p93 = scmp.ne.s32.totalorder %s84, %s85
    %p94 = scmp.eq.s32.totalorder %s32, 0
    %p95 = por %p93, %p94
    %p96 = scmp.ne.s32.totalorder %s84, %s85
    %p97 = scmp.eq.s32.totalorder %s33, 1
    %p98 = por %p96, %p97
    %p100 = scmp.ne.s32.totalorder %s85, %s99
    %p101 = scmp.eq.s32.totalorder %s33, 0
    %p102 = por %p100, %p101
    %s104 = sadd.s32 %s103, 1
    %p107 = scmp.eq.s32.totalorder %s27, 1
    %p108 = scmp.ne.s32.totalorder %s103, %s105
    %p109 = scmp.eq.s32.totalorder %s27, 0
    %p110 = por %p108, %p109
    %p111 = scmp.ne.s32.totalorder %s103, %s105
    %p112 = scmp.eq.s32.totalorder %s32, 1
    %p113 = por %p111, %p112
    %p114 = scmp.ne.s32.totalorder %s105, %s106
    %p115 = scmp.eq.s32.totalorder %s32, 0
    %p116 = por %p114, %p115
    %p117 = scmp.ne.s32.totalorder %s105, %s106
    %p118 = scmp.eq.s32.totalorder %s33, 1
    %p119 = por %p117, %p118
    %p121 = scmp.ne.s32.totalorder %s106, %s120
    %p122 = scmp.eq.s32.totalorder %s33, 0
    %p123 = por %p121, %p122
    %s125 = sadd.s32 %s124, 1
    %p128 = scmp.eq.s32.totalorder %s27, 1
    %p129 = scmp.ne.s32.totalorder %s124, %s126
    %p130 = scmp.eq.s32.totalorder %s27, 0
    %p131 = por %p129, %p130
    %p132 = scmp.ne.s32.totalorder %s124, %s126
    %p133 = scmp.eq.s32.totalorder %s32, 1
    %p134 = por %p132, %p133
    %p135 = scmp.ne.s32.totalorder %s126, %s127
    %p136 = scmp.eq.s32.totalorder %s32, 0
    %p137 = por %p135, %p136
    %p138 = scmp.ne.s32.totalorder %s126, %s127
    %p139 = scmp.eq.s32.totalorder %s33, 1
    %p140 = por %p138, %p139
    %p142 = scmp.ne.s32.totalorder %s127, %s141
    %p143 = scmp.eq.s32.totalorder %s33, 0
    %p144 = por %p142, %p143
    %s146 = sadd.s32 %s145, 1
    %p149 = scmp.eq.s32.totalorder %s27, 1
    %p150 = scmp.ne.s32.totalorder %s145, %s147
    %p151 = scmp.eq.s32.totalorder %s27, 0
    %p152 = por %p150, %p151
    %p153 = scmp.ne.s32.totalorder %s145, %s147
    %p154 = scmp.eq.s32.totalorder %s32, 1
    %p155 = por %p153, %p154
    %p156 = scmp.ne.s32.totalorder %s147, %s148
    %p157 = scmp.eq.s32.totalorder %s32, 0
    %p158 = por %p156, %p157
    %p159 = scmp.ne.s32.totalorder %s147, %s148
    %p160 = scmp.eq.s32.totalorder %s33, 1
    %p161 = por %p159, %p160
    %p163 = scmp.ne.s32.totalorder %s148, %s162
    %p164 = scmp.eq.s32.totalorder %s33, 0
    %p165 = por %p163, %p164
    %s167 = sadd.s32 %s166, 1
    %p170 = scmp.eq.s32.totalorder %s27, 1
    %p171 = scmp.ne.s32.totalorder %s166, %s168
    %p172 = scmp.eq.s32.totalorder %s27, 0
    %p173 = por %p171, %p172
    %p174 = scmp.ne.s32.totalorder %s166, %s168
    %p175 = scmp.eq.s32.totalorder %s32, 1
    %p176 = por %p174, %p175
    %p177 = scmp.ne.s32.totalorder %s168, %s169
    %p178 = scmp.eq.s32.totalorder %s32, 0
    %p179 = por %p177, %p178
    %p180 = scmp.ne.s32.totalorder %s168, %s169
    %p181 = scmp.eq.s32.totalorder %s33, 1
    %p182 = por %p180, %p181
    %p184 = scmp.ne.s32.totalorder %s169, %s183
    %p185 = scmp.eq.s32.totalorder %s33, 0
    %p186 = por %p184, %p185
    %s188 = sadd.s32 %s187, 1
    %p191 = scmp.eq.s32.totalorder %s27, 1
    %p192 = scmp.ne.s32.totalorder %s187, %s189
    %p193 = scmp.eq.s32.totalorder %s27, 0
    %p194 = por %p192, %p193
    %p195 = scmp.ne.s32.totalorder %s187, %s189
    %p196 = scmp.eq.s32.totalorder %s32, 1
    %p197 = por %p195, %p196
    %p198 = scmp.ne.s32.totalorder %s189, %s190
    %p199 = scmp.eq.s32.totalorder %s32, 0
    %p200 = por %p198, %p199
    %p201 = scmp.ne.s32.totalorder %s189, %s190
    %p202 = scmp.eq.s32.totalorder %s33, 1
    %p203 = por %p201, %p202
    %p205 = scmp.ne.s32.totalorder %s190, %s204
    %p206 = scmp.eq.s32.totalorder %s33, 0
    %p207 = por %p205, %p206
    %s209 = sadd.s32 %s208, 1
    %p212 = scmp.eq.s32.totalorder %s27, 1
    %p213 = scmp.ne.s32.totalorder %s208, %s210
    %p214 = scmp.eq.s32.totalorder %s27, 0
    %p215 = por %p213, %p214
    %p216 = scmp.ne.s32.totalorder %s208, %s210
    %p217 = scmp.eq.s32.totalorder %s32, 1
    %p218 = por %p216, %p217
    %p219 = scmp.ne.s32.totalorder %s210, %s211
    %p220 = scmp.eq.s32.totalorder %s32, 0
    %p221 = por %p219, %p220
    %p222 = scmp.ne.s32.totalorder %s210, %s211
    %p223 = scmp.eq.s32.totalorder %s33, 1
    %p224 = por %p222, %p223
    %p226 = scmp.ne.s32.totalorder %s211, %s225
    %p227 = scmp.eq.s32.totalorder %s33, 0
    %p228 = por %p226, %p227
    %s230 = sadd.s32 %s229, 1
    %p233 = scmp.eq.s32.totalorder %s27, 1
    %p234 = scmp.ne.s32.totalorder %s229, %s231
    %p235 = scmp.eq.s32.totalorder %s27, 0
    %p236 = por %p234, %p235
    %p237 = scmp.ne.s32.totalorder %s229, %s231
    %p238 = scmp.eq.s32.totalorder %s32, 1
    %p239 = por %p237, %p238
    %p240 = scmp.ne.s32.totalorder %s231, %s232
    %p241 = scmp.eq.s32.totalorder %s32, 0
    %p242 = por %p240, %p241
    %p243 = scmp.ne.s32.totalorder %s231, %s232
    %p244 = scmp.eq.s32.totalorder %s33, 1
    %p245 = por %p243, %p244
    %p247 = scmp.ne.s32.totalorder %s232, %s246
    %p248 = scmp.eq.s32.totalorder %s33, 0
    %p249 = por %p247, %p248
    %s251 = sadd.s32 %s250, 1
    %p254 = scmp.eq.s32.totalorder %s27, 1
    %p255 = scmp.ne.s32.totalorder %s250, %s252
    %p256 = scmp.eq.s32.totalorder %s27, 0
    %p257 = por %p255, %p256
    %p258 = scmp.ne.s32.totalorder %s250, %s252
    %p259 = scmp.eq.s32.totalorder %s32, 1
    %p260 = por %p258, %p259
    %p261 = scmp.ne.s32.totalorder %s252, %s253
    %p262 = scmp.eq.s32.totalorder %s32, 0
    %p263 = por %p261, %p262
    %p264 = scmp.ne.s32.totalorder %s252, %s253
    %p265 = scmp.eq.s32.totalorder %s33, 1
    %p266 = por %p264, %p265
    %p268 = scmp.ne.s32.totalorder %s253, %s267
    %p269 = scmp.eq.s32.totalorder %s33, 0
    %p270 = por %p268, %p269
    %s272 = sadd.s32 %s271, 1
    %p275 = scmp.eq.s32.totalorder %s27, 1
    %p276 = scmp.ne.s32.totalorder %s271, %s273
    %p277 = scmp.eq.s32.totalorder %s27, 0
    %p278 = por %p276, %p277
    %p279 = scmp.ne.s32.totalorder %s271, %s273
    %p280 = scmp.eq.s32.totalorder %s32, 1
    %p281 = por %p279, %p280
    %p282 = scmp.ne.s32.totalorder %s273, %s274
    %p283 = scmp.eq.s32.totalorder %s32, 0
    %p284 = por %p282, %p283
    %p285 = scmp.ne.s32.totalorder %s273, %s274
    %p286 = scmp.eq.s32.totalorder %s33, 1
    %p287 = por %p285, %p286
    %p289 = scmp.ne.s32.totalorder %s274, %s288
    %p290 = scmp.eq.s32.totalorder %s33, 0
    %p291 = por %p289, %p290
    %s293 = sadd.s32 %s292, 1
    %p296 = scmp.eq.s32.totalorder %s27, 1
    %p297 = scmp.ne.s32.totalorder %s292, %s294
    %p298 = scmp.eq.s32.totalorder %s27, 0
    %p299 = por %p297, %p298
    %p300 = scmp.ne.s32.totalorder %s292, %s294
    %p301 = scmp.eq.s32.totalorder %s32, 1
    %p302 = por %p300, %p301
    %p303 = scmp.ne.s32.totalorder %s294, %s295
    %p304 = scmp.eq.s32.totalorder %s32, 0
    %p305 = por %p303, %p304
    %p306 = scmp.ne.s32.totalorder %s294, %s295
    %p307 = scmp.eq.s32.totalorder %s33, 1
    %p308 = por %p306, %p307
    %p310 = scmp.ne.s32.totalorder %s295, %s309
    %p311 = scmp.eq.s32.totalorder %s33, 0
    %p312 = por %p310, %p311
    %s314 = sadd.s32 %s313, 1
    %p317 = scmp.eq.s32.totalorder %s27, 1
    %p318 = scmp.ne.s32.totalorder %s313, %s315
    %p319 = scmp.eq.s32.totalorder %s27, 0
    %p320 = por %p318, %p319
    %p321 = scmp.ne.s32.totalorder %s313, %s315
    %p322 = scmp.eq.s32.totalorder %s32, 1
    %p323 = por %p321, %p322
    %p324 = scmp.ne.s32.totalorder %s315, %s316
    %p325 = scmp.eq.s32.totalorder %s32, 0
    %p326 = por %p324, %p325
    %p327 = scmp.ne.s32.totalorder %s315, %s316
    %p328 = scmp.eq.s32.totalorder %s33, 1
    %p329 = por %p327, %p328
    %p331 = scmp.ne.s32.totalorder %s316, %s330
    %p332 = scmp.eq.s32.totalorder %s33, 0
    %p333 = por %p331, %p332
    %s335 = sadd.s32 %s334, 1
    %p338 = scmp.eq.s32.totalorder %s27, 1
    %p339 = scmp.ne.s32.totalorder %s334, %s336
    %p340 = scmp.eq.s32.totalorder %s27, 0
    %p341 = por %p339, %p340
    %p342 = scmp.ne.s32.totalorder %s334, %s336
    %p343 = scmp.eq.s32.totalorder %s32, 1
    %p344 = por %p342, %p343
    %p345 = scmp.ne.s32.totalorder %s336, %s337
    %p346 = scmp.eq.s32.totalorder %s32, 0
    %p347 = por %p345, %p346
    %p348 = scmp.ne.s32.totalorder %s336, %s337
    %p349 = scmp.eq.s32.totalorder %s33, 1
    %p350 = por %p348, %p349
    %p352 = scmp.ne.s32.totalorder %s337, %s351
    %p353 = scmp.eq.s32.totalorder %s33, 0
    %p354 = por %p352, %p353
    %s356 = sadd.s32 %s355, 1
    %p359 = scmp.eq.s32.totalorder %s27, 1
    %p360 = scmp.ne.s32.totalorder %s355, %s357
    %p361 = scmp.eq.s32.totalorder %s27, 0
    %p362 = por %p360, %p361
    %p363 = scmp.ne.s32.totalorder %s355, %s357
    %p364 = scmp.eq.s32.totalorder %s32, 1
    %p365 = por %p363, %p364
    %p366 = scmp.ne.s32.totalorder %s357, %s358
    %p367 = scmp.eq.s32.totalorder %s32, 0
    %p368 = por %p366, %p367
    %p369 = scmp.ne.s32.totalorder %s357, %s358
    %p370 = scmp.eq.s32.totalorder %s33, 1
    %p371 = por %p369, %p370
    %p373 = scmp.ne.s32.totalorder %s358, %s372
    %p374 = scmp.eq.s32.totalorder %s33, 0
    %p375 = por %p373, %p374
    %s377 = sadd.s32 %s376, 1
    %p380 = scmp.eq.s32.totalorder %s27, 1
    %p381 = scmp.ne.s32.totalorder %s376, %s378
    %p382 = scmp.eq.s32.totalorder %s27, 0
    %p383 = por %p381, %p382
    %p384 = scmp.ne.s32.totalorder %s376, %s378
    %p385 = scmp.eq.s32.totalorder %s32, 1
    %p386 = por %p384, %p385
    %p387 = scmp.ne.s32.totalorder %s378, %s379
    %p388 = scmp.eq.s32.totalorder %s32, 0
    %p389 = por %p387, %p388
    %p390 = scmp.ne.s32.totalorder %s378, %s379
    %p391 = scmp.eq.s32.totalorder %s33, 1
    %p392 = por %p390, %p391
    %p394 = scmp.ne.s32.totalorder %s379, %s393
    %p395 = scmp.eq.s32.totalorder %s33, 0
    %p396 = por %p394, %p395
    %s398 = sadd.s32 %s397, 1
    %p401 = scmp.eq.s32.totalorder %s27, 1
    %p402 = scmp.ne.s32.totalorder %s397, %s399
    %p403 = scmp.eq.s32.totalorder %s27, 0
    %p404 = por %p402, %p403
    %p405 = scmp.ne.s32.totalorder %s397, %s399
    %p406 = scmp.eq.s32.totalorder %s32, 1
    %p407 = por %p405, %p406
    %p408 = scmp.ne.s32.totalorder %s399, %s400
    %p409 = scmp.eq.s32.totalorder %s32, 0
    %p410 = por %p408, %p409
    %p411 = scmp.ne.s32.totalorder %s399, %s400
    %p412 = scmp.eq.s32.totalorder %s33, 1
    %p413 = por %p411, %p412
    %p415 = scmp.ne.s32.totalorder %s400, %s414
    %p416 = scmp.eq.s32.totalorder %s33, 0
    %p417 = por %p415, %p416
    %s419 = sadd.s32 %s418, 1
    %p422 = scmp.eq.s32.totalorder %s27, 1
    %p423 = scmp.ne.s32.totalorder %s418, %s420
    %p424 = scmp.eq.s32.totalorder %s27, 0
    %p425 = por %p423, %p424
    %p426 = scmp.ne.s32.totalorder %s418, %s420
    %p427 = scmp.eq.s32.totalorder %s32, 1
    %p428 = por %p426, %p427
    %p429 = scmp.ne.s32.totalorder %s420, %s421
    %p430 = scmp.eq.s32.totalorder %s32, 0
    %p431 = por %p429, %p430
    %p432 = scmp.ne.s32.totalorder %s420, %s421
    %p433 = scmp.eq.s32.totalorder %s33, 1
    %p434 = por %p432, %p433
    %p436 = scmp.ne.s32.totalorder %s421, %s435
    %p437 = scmp.eq.s32.totalorder %s33, 0
    %p438 = por %p436, %p437
    %s440 = sadd.s32 %s439, 1
    %p443 = scmp.eq.s32.totalorder %s27, 1
    %p444 = scmp.ne.s32.totalorder %s439, %s441
    %p445 = scmp.eq.s32.totalorder %s27, 0
    %p446 = por %p444, %p445
    %p447 = scmp.ne.s32.totalorder %s439, %s441
    %p448 = scmp.eq.s32.totalorder %s32, 1
    %p449 = por %p447, %p448
    %p450 = scmp.ne.s32.totalorder %s441, %s442
    %p451 = scmp.eq.s32.totalorder %s32, 0
    %p452 = por %p450, %p451
    %p453 = scmp.ne.s32.totalorder %s441, %s442
    %p454 = scmp.eq.s32.totalorder %s33, 1
    %p455 = por %p453, %p454
    %p457 = scmp.ne.s32.totalorder %s442, %s456
    %p458 = scmp.eq.s32.totalorder %s33, 0
    %p459 = por %p457, %p458
    %s461 = sadd.s32 %s460, 1
    %p464 = scmp.eq.s32.totalorder %s27, 1
    %p465 = scmp.ne.s32.totalorder %s460, %s462
    %p466 = scmp.eq.s32.totalorder %s27, 0
    %p467 = por %p465, %p466
    %p468 = scmp.ne.s32.totalorder %s460, %s462
    %p469 = scmp.eq.s32.totalorder %s32, 1
    %p470 = por %p468, %p469
    %p471 = scmp.ne.s32.totalorder %s462, %s463
    %p472 = scmp.eq.s32.totalorder %s32, 0
    %p473 = por %p471, %p472
    %p474 = scmp.ne.s32.totalorder %s462, %s463
    %p475 = scmp.eq.s32.totalorder %s33, 1
    %p476 = por %p474, %p475
    %p478 = scmp.ne.s32.totalorder %s463, %s477
    %p479 = scmp.eq.s32.totalorder %s33, 0
    %p480 = por %p478, %p479
    %s481 = ssub.s32 %s27, %s34
    %p482 = scmp.eq.s32.totalorder %s481, 0
    %s484 = sadd.s32 %s483, 1
    %s485 = scalar_select %p482, %s483, %s484
    %p488 = pneg %p482
    %p489 = scmp.eq.s32.totalorder %s27, 1
    %p490 = por %p488, %p489
    %p491 = scmp.ne.s32.totalorder %s483, %s486
    %p492 = scmp.eq.s32.totalorder %s27, 0
    %p493 = por %p491, %p492
    %p494 = scmp.ne.s32.totalorder %s483, %s486
    %p495 = scmp.eq.s32.totalorder %s32, 1
    %p496 = por %p494, %p495
    %p497 = scmp.ne.s32.totalorder %s486, %s487
    %p498 = scmp.eq.s32.totalorder %s32, 0
    %p499 = por %p497, %p498
    %p500 = scmp.ne.s32.totalorder %s486, %s487
    %p501 = scmp.eq.s32.totalorder %s33, 1
    %p502 = por %p500, %p501
    %p504 = scmp.ne.s32.totalorder %s487, %s503
    %p505 = scmp.eq.s32.totalorder %s33, 0
    %p506 = por %p504, %p505
    %p507 = scmp.le.s32.totalorder 1, %s27
    %p508 = scmp.lt.s32.totalorder %s27, 3
    %p509 = pnand %p507, %p508
    %p510 = pneg %p509
    // Predicated region
    $region9: #{centerpoint_style_net_forward.5} parent=5 // pred_check
      _
    $region10: #{centerpoint_style_net_forward.5} parent=5 // pred_check_branch
      %512 = sbr.rel (%p509) target = $region12
    $region11: #{centerpoint_style_net_forward.5} parent=5 // pred_region
      %s513 = ssub.s32 %s27, 1
      // Predicated region
      $region13: #{centerpoint_style_net_forward.5} parent=11 // pred_check
        %p514 = pneg %p74
      $region14: #{centerpoint_style_net_forward.5} parent=11 // pred_check_branch
        %516 = sbr.rel (%p514) target = $region16
      $region15: #{centerpoint_style_net_forward.5} parent=11 // pred_region
        _
      $region16: #{centerpoint_style_net_forward.5} parent=11 // pred_fallthru
        _
      // Predicated region
      $region17: #{centerpoint_style_net_forward.5} parent=11 // pred_check
        %p517 = pneg %p95
      $region18: #{centerpoint_style_net_forward.5} parent=11 // pred_check_branch
        %519 = sbr.rel (%p517) target = $region20
      $region19: #{centerpoint_style_net_forward.5} parent=11 // pred_region
        _
      $region20: #{centerpoint_style_net_forward.5} parent=11 // pred_fallthru
        _
      // Predicated region
      $region21: #{centerpoint_style_net_forward.5} parent=11 // pred_check
        %p520 = pneg %p116
      $region22: #{centerpoint_style_net_forward.5} parent=11 // pred_check_branch
        %522 = sbr.rel (%p520) target = $region24
      $region23: #{centerpoint_style_net_forward.5} parent=11 // pred_region
        _
      $region24: #{centerpoint_style_net_forward.5} parent=11 // pred_fallthru
        _
      // Predicated region
      $region25: #{centerpoint_style_net_forward.5} parent=11 // pred_check
        %p523 = pneg %p137
      $region26: #{centerpoint_style_net_forward.5} parent=11 // pred_check_branch
        %525 = sbr.rel (%p523) target = $region28
      $region27: #{centerpoint_style_net_forward.5} parent=11 // pred_region
        _
      $region28: #{centerpoint_style_net_forward.5} parent=11 // pred_fallthru
        _
      // Predicated region
      $region29: #{centerpoint_style_net_forward.5} parent=11 // pred_check
        %p526 = pneg %p158
      $region30: #{centerpoint_style_net_forward.5} parent=11 // pred_check_branch
        %528 = sbr.rel (%p526) target = $region32
      $region31: #{centerpoint_style_net_forward.5} parent=11 // pred_region
        _
      $region32: #{centerpoint_style_net_forward.5} parent=11 // pred_fallthru
        _
      // Predicated region
      $region33: #{centerpoint_style_net_forward.5} parent=11 // pred_check
        %p529 = pneg %p179
      $region34: #{centerpoint_style_net_forward.5} parent=11 // pred_check_branch
        %531 = sbr.rel (%p529) target = $region36
      $region35: #{centerpoint_style_net_forward.5} parent=11 // pred_region
        _
      $region36: #{centerpoint_style_net_forward.5} parent=11 // pred_fallthru
        _
      // Predicated region
      $region37: #{centerpoint_style_net_forward.5} parent=11 // pred_check
        %p532 = pneg %p200
      $region38: #{centerpoint_style_net_forward.5} parent=11 // pred_check_branch
        %534 = sbr.rel (%p532) target = $region40
      $region39: #{centerpoint_style_net_forward.5} parent=11 // pred_region
        _
      $region40: #{centerpoint_style_net_forward.5} parent=11 // pred_fallthru
        _
      // Predicated region
      $region41: #{centerpoint_style_net_forward.5} parent=11 // pred_check
        %p535 = pneg %p221
      $region42: #{centerpoint_style_net_forward.5} parent=11 // pred_check_branch
        %537 = sbr.rel (%p535) target = $region44
      $region43: #{centerpoint_style_net_forward.5} parent=11 // pred_region
        _
      $region44: #{centerpoint_style_net_forward.5} parent=11 // pred_fallthru
        _
      // Predicated region
      $region45: #{centerpoint_style_net_forward.5} parent=11 // pred_check
        %p538 = pneg %p242
      $region46: #{centerpoint_style_net_forward.5} parent=11 // pred_check_branch
        %540 = sbr.rel (%p538) target = $region48
      $region47: #{centerpoint_style_net_forward.5} parent=11 // pred_region
        _
      $region48: #{centerpoint_style_net_forward.5} parent=11 // pred_fallthru
        _
      // Predicated region
      $region49: #{centerpoint_style_net_forward.5} parent=11 // pred_check
        %p541 = pneg %p263
      $region50: #{centerpoint_style_net_forward.5} parent=11 // pred_check_branch
        %543 = sbr.rel (%p541) target = $region52
      $region51: #{centerpoint_style_net_forward.5} parent=11 // pred_region
        _
      $region52: #{centerpoint_style_net_forward.5} parent=11 // pred_fallthru
        _
      // Predicated region
      $region53: #{centerpoint_style_net_forward.5} parent=11 // pred_check
        %p544 = pneg %p284
      $region54: #{centerpoint_style_net_forward.5} parent=11 // pred_check_branch
        %546 = sbr.rel (%p544) target = $region56
      $region55: #{centerpoint_style_net_forward.5} parent=11 // pred_region
        _
      $region56: #{centerpoint_style_net_forward.5} parent=11 // pred_fallthru
        _
      // Predicated region
      $region57: #{centerpoint_style_net_forward.5} parent=11 // pred_check
        %p547 = pneg %p305
      $region58: #{centerpoint_style_net_forward.5} parent=11 // pred_check_branch
        %549 = sbr.rel (%p547) target = $region60
      $region59: #{centerpoint_style_net_forward.5} parent=11 // pred_region
        _
      $region60: #{centerpoint_style_net_forward.5} parent=11 // pred_fallthru
        _
      // Predicated region
      $region61: #{centerpoint_style_net_forward.5} parent=11 // pred_check
        %p550 = pneg %p326
      $region62: #{centerpoint_style_net_forward.5} parent=11 // pred_check_branch
        %552 = sbr.rel (%p550) target = $region64
      $region63: #{centerpoint_style_net_forward.5} parent=11 // pred_region
        _
      $region64: #{centerpoint_style_net_forward.5} parent=11 // pred_fallthru
        _
      // Predicated region
      $region65: #{centerpoint_style_net_forward.5} parent=11 // pred_check
        %p553 = pneg %p347
      $region66: #{centerpoint_style_net_forward.5} parent=11 // pred_check_branch
        %555 = sbr.rel (%p553) target = $region68
      $region67: #{centerpoint_style_net_forward.5} parent=11 // pred_region
        _
      $region68: #{centerpoint_style_net_forward.5} parent=11 // pred_fallthru
        _
      // Predicated region
      $region69: #{centerpoint_style_net_forward.5} parent=11 // pred_check
        %p556 = pneg %p368
      $region70: #{centerpoint_style_net_forward.5} parent=11 // pred_check_branch
        %558 = sbr.rel (%p556) target = $region72
      $region71: #{centerpoint_style_net_forward.5} parent=11 // pred_region
        _
      $region72: #{centerpoint_style_net_forward.5} parent=11 // pred_fallthru
        _
      // Predicated region
      $region73: #{centerpoint_style_net_forward.5} parent=11 // pred_check
        %p559 = pneg %p389
      $region74: #{centerpoint_style_net_forward.5} parent=11 // pred_check_branch
        %561 = sbr.rel (%p559) target = $region76
      $region75: #{centerpoint_style_net_forward.5} parent=11 // pred_region
        _
      $region76: #{centerpoint_style_net_forward.5} parent=11 // pred_fallthru
        _
      // Predicated region
      $region77: #{centerpoint_style_net_forward.5} parent=11 // pred_check
        %p562 = pneg %p410
      $region78: #{centerpoint_style_net_forward.5} parent=11 // pred_check_branch
        %564 = sbr.rel (%p562) target = $region80
      $region79: #{centerpoint_style_net_forward.5} parent=11 // pred_region
        _
      $region80: #{centerpoint_style_net_forward.5} parent=11 // pred_fallthru
        _
      // Predicated region
      $region81: #{centerpoint_style_net_forward.5} parent=11 // pred_check
        %p565 = pneg %p431
      $region82: #{centerpoint_style_net_forward.5} parent=11 // pred_check_branch
        %567 = sbr.rel (%p565) target = $region84
      $region83: #{centerpoint_style_net_forward.5} parent=11 // pred_region
        _
      $region84: #{centerpoint_style_net_forward.5} parent=11 // pred_fallthru
        _
      // Predicated region
      $region85: #{centerpoint_style_net_forward.5} parent=11 // pred_check
        %p568 = pneg %p452
      $region86: #{centerpoint_style_net_forward.5} parent=11 // pred_check_branch
        %570 = sbr.rel (%p568) target = $region88
      $region87: #{centerpoint_style_net_forward.5} parent=11 // pred_region
        _
      $region88: #{centerpoint_style_net_forward.5} parent=11 // pred_fallthru
        _
      // Predicated region
      $region89: #{centerpoint_style_net_forward.5} parent=11 // pred_check
        %p571 = pneg %p473
      $region90: #{centerpoint_style_net_forward.5} parent=11 // pred_check_branch
        %573 = sbr.rel (%p571) target = $region92
      $region91: #{centerpoint_style_net_forward.5} parent=11 // pred_region
        _
      $region92: #{centerpoint_style_net_forward.5} parent=11 // pred_fallthru
        _
    $region12: #{centerpoint_style_net_forward.5} parent=5 // pred_fallthru
      _
    %p574 = scmp.lt.s32.totalorder %s27, 2
    // Predicated region
    $region93: #{centerpoint_style_net_forward.5} parent=5 // pred_check
      %p575 = pneg %p574
    $region94: #{centerpoint_style_net_forward.5} parent=5 // pred_check_branch
      %577 = sbr.rel (%p575) target = $region96
    $region95: #{centerpoint_style_net_forward.5} parent=5 // pred_region
      // Predicated region
      $region97: #{centerpoint_style_net_forward.5} parent=95 // pred_check
        %p578 = pneg %p47
      $region98: #{centerpoint_style_net_forward.5} parent=95 // pred_check_branch
        %580 = sbr.rel (%p578) target = $region100
      $region99: #{centerpoint_style_net_forward.5} parent=95 // pred_region
        %p581 = scmp.lt.s32.totalorder %s27, 1
        %s582 = scalar_select %p581, %s27, 1
        %s583 = smul.addr %s582, 2
        %s584 = smul.addr %s583, 8
        %s585 = scalar_lea.vmem %s0, %s584
      $region100: #{centerpoint_style_net_forward.5} parent=95 // pred_fallthru
        _
    $region96: #{centerpoint_style_net_forward.5} parent=5 // pred_fallthru
      _
    %p586 = scmp.le.s32.totalorder 1, %s27
    %p587 = scmp.lt.s32.totalorder %s27, 3
    %p588 = pnand %p586, %p587
    %p589 = pneg %p588
    // Predicated region
    $region101: #{centerpoint_style_net_forward.5} parent=5 // pred_check
      _
    $region102: #{centerpoint_style_net_forward.5} parent=5 // pred_check_branch
      %591 = sbr.rel (%p588) target = $region104
    $region103: #{centerpoint_style_net_forward.5} parent=5 // pred_region
      %s592 = ssub.s32 %s27, 1
      %p593 = scmp.lt.s32.totalorder %s32, 1
      %s594 = scalar_select %p593, %s32, 1
      %s595 = smul.addr %s594, 2
      %s596 = smul.addr %s595, 8
      %s597 = scalar_lea.vmem %s0, %s596
      %p598 = pneg %p53
      %p599 = pneg %p50
      %p600 = pneg %p74
      %p601 = pneg %p71
      %p602 = pneg %p95
      %p603 = pneg %p92
      %p604 = pneg %p116
      %p605 = pneg %p113
      %p606 = pneg %p137
      %p607 = pneg %p134
      %p608 = pneg %p158
      %p609 = pneg %p155
      %p610 = pneg %p179
      %p611 = pneg %p176
      %p612 = pneg %p200
      %p613 = pneg %p197
      %p614 = pneg %p221
      %p615 = pneg %p218
      %p616 = pneg %p242
      %p617 = pneg %p239
      %p618 = pneg %p263
      %p619 = pneg %p260
      %p620 = pneg %p284
      %p621 = pneg %p281
      %p622 = pneg %p305
      %p623 = pneg %p302
      %p624 = pneg %p326
      %p625 = pneg %p323
      %p626 = pneg %p347
      %p627 = pneg %p344
      %p628 = pneg %p368
      %p629 = pneg %p365
      %p630 = pneg %p389
      %p631 = pneg %p386
      %p632 = pneg %p410
      %p633 = pneg %p407
      %p634 = pneg %p431
      %p635 = pneg %p428
      %p636 = pneg %p452
      %p637 = pneg %p449
      %p638 = pneg %p473
      %p639 = pneg %p470
      %p640 = pneg %p499
      %p641 = pneg %p496
      %p642 = scmp.lt.s32.totalorder %s32, 1
      %s643 = scalar_select %p642, %s32, 1
      %s644 = smul.addr %s643, 2
      %s645 = smul.addr %s644, 8
      %s646 = scalar_lea.vmem %s21, %s645
      %p647 = scmp.lt.s32.totalorder %s32, 1
      %s648 = scalar_select %p647, %s32, 1
      %s649 = smul.addr %s648, 2
      %s650 = smul.addr %s649, 8
      %s651 = scalar_lea.vmem %s0, %s650
      %p652 = scmp.lt.s32.totalorder %s32, 1
      %s653 = scalar_select %p652, %s32, 1
      %s654 = smul.addr %s653, 2
      %s655 = smul.addr %s654, 8
      %s656 = scalar_lea.vmem %s21, %s655
      %657 = vst [vmem:[#allocation2] sm:$0xff] 0.0
      %vm658 = vcmask 523264
      %659 = vst.msk [vmem:[#allocation3] sm:$0xff] %vm658, 0.0
      %vm660 = vcmask 520192
      %661 = vst.msk [vmem:[#allocation3 + $0x18] sm:$0x1f] %vm660, 0.0
      %662 = vst [vmem:[#allocation4] sm:$0xff] 0.0
      %663 = vst [vmem:[#allocation4 + $0x18] sm:$0x1f] 0.0
      %664 = vst.msk [vmem:[#allocation5] sm:$0xff] %vm658, 0.0
      %665 = vst.msk [vmem:[#allocation5 + $0x18] sm:$0x1f] %vm660, 0.0
      %666 = vst [vmem:[#allocation6] sm:$0xff] 0.0
      %667 = vst [vmem:[#allocation6 + $0x8] sm:$0xff] 0.0
      %668 = vst.msk [vmem:[#allocation6 + $0x10] sm:$0xff] %vm658, 0.0
      %669 = vst [vmem:[#allocation6 + $0x48] sm:$0x1f] 0.0
      %670 = vst [vmem:[#allocation6 + $0x50] sm:$0x1f] 0.0
      %671 = vst.msk [vmem:[#allocation6 + $0x58] sm:$0x1f] %vm660, 0.0
      %v672 = vlaneseq
      %v673 = vshrl.u32 %v672, 7
      %v674 = vadd.s32 %v673, 8
      %vm675 = vcmp.lt.s32.totalorder %v673, 0
      %v676 = vsub.s32 0, %v673
      %v677 = vsel %vm675, %v676, %v673
      %v678 = vshrl.u32 %v677, 2
      %v679 = vand.u32 %v677, 3
      %v680 = vsub.s32 0, %v679
      %v681 = vsel %vm675, %v680, %v679
      %vm682 = vcmp.lt.s32.totalorder %v674, 0
      %v683 = vsub.s32 0, %v674
      %v684 = vsel %vm682, %v683, %v674
      %v685 = vshrl.u32 %v684, 2
      %v686 = vand.u32 %v684, 3
      %v687 = vsub.s32 0, %v686
      %v688 = vsel %vm682, %v687, %v686
      %vm689 = vcmp.ne.s32.totalorder %v681, 0
      %vm690 = vcmp.ne.s32.totalorder %v688, 0
      %vm691 = vcmp.lt.s32.totalorder %v681, 0
      %vm692 = vcmp.lt.s32.totalorder %v688, 0
      %vm693 = vmand %vm691, %vm689
      %vm694 = vmand %vm692, %vm690
      %v695 = vadd.s32 %v681, 4
      %v696 = vadd.s32 %v688, 4
      %v697 = vsel %vm693, %v695, %v681
      %v698 = vsel %vm694, %v696, %v688
      %vm699 = vcmp.ne.s32.totalorder %v697, 0
      %vm700 = vcmp.ne.s32.totalorder %v698, 0
      %vm701 = vcmp.ne.s32.totalorder %v697, 3
      %vm702 = vcmp.ne.s32.totalorder %v698, 3
      %v703 = vld [vmem:[%s651] sm:$0xff]
      %v704 = vld [vmem:[%s651 + $0x8] sm:$0xff]
      %705 = vst [vmem:[#allocation2 + $0x8] sm:$0xff] %v703
      %706 = vst [vmem:[#allocation2 + $0x10] sm:$0xff] %v704
      %v707 = vld [vmem:[%s1] sm:$0xff]
      %v708 = vld [vmem:[%s1 + $0x8] sm:$0xff]
      %v709 = vld [vmem:[%s1 + $0x10] sm:$0xff]
      %v710 = vld [vmem:[%s1 + $0x18] sm:$0xff]
      %v711 = vld [vmem:[%s1 + $0x20] sm:$0xff]
      %v712 = vld [vmem:[%s1 + $0x28] sm:$0xff]
      %v713 = vld [vmem:[%s1 + $0x30] sm:$0xff]
      %v714 = vld [vmem:[%s1 + $0x38] sm:$0xff]
      %v715 = vld [vmem:[%s1 + $0x40] sm:$0xff]
      %v716 = vld [vmem:[%s1 + $0x48] sm:$0xff]
      %v717 = vld [vmem:[%s1 + $0x50] sm:$0xff]
      %v718 = vld [vmem:[%s1 + $0x58] sm:$0xff]
      %v719 = vld [vmem:[%s1 + $0x60] sm:$0xff]
      %v720 = vld [vmem:[%s1 + $0x68] sm:$0xff]
      %v721 = vld [vmem:[%s1 + $0x70] sm:$0xff]
      %v722 = vld [vmem:[%s1 + $0x78] sm:$0xff]
      %v723 = vld [vmem:[%s1 + $0x80] sm:$0xff]
      %v724 = vld [vmem:[%s1 + $0x88] sm:$0xff]
      %v725 = vld [vmem:[%s1 + $0x90] sm:$0xff]
      %v726 = vld [vmem:[%s1 + $0x98] sm:$0xff]
      %v727 = vld [vmem:[%s1 + $0xa0] sm:$0xff]
      %v728 = vld [vmem:[%s1 + $0xa8] sm:$0xff]
      %v729 = vld [vmem:[%s1 + $0xb0] sm:$0xff]
      %v730 = vld [vmem:[%s1 + $0xb8] sm:$0xff]
      %v731 = vld [vmem:[%s1 + $0xc0] sm:$0xff]
      %v732 = vld [vmem:[%s1 + $0xc8] sm:$0xff]
      %v733 = vld [vmem:[%s1 + $0xd0] sm:$0xff]
      %v734 = vld [vmem:[%s1 + $0xd8] sm:$0xff]
      %v735 = vld [vmem:[%s1 + $0xe0] sm:$0xff]
      %v736 = vld [vmem:[%s1 + $0xe8] sm:$0xff]
      %v737 = vld [vmem:[%s1 + $0xf0] sm:$0xff]
      %v738 = vld [vmem:[%s1 + $0xf8] sm:$0xff]
      %v739 = vld [vmem:[%s1 + $0x100] sm:$0xff]
      %v740 = vld [vmem:[%s1 + $0x108] sm:$0xff]
      %v741 = vld [vmem:[%s1 + $0x110] sm:$0xff]
      %v742 = vld [vmem:[%s1 + $0x118] sm:$0xff]
      %v743 = vld [vmem:[%s2] sm:$0x1]
      %v744 = vld [vmem:[%s3] sm:$0x1]
      %v745 = vld [vmem:[#allocation2 + $0x8] sm:$0xff]
      %v746 = vld [vmem:[#allocation2 + $0x10] sm:$0xff]
      %v747 = vld [vmem:[#allocation2 + $0x7] sm:$0xff]
      %v748 = vld [vmem:[#allocation2 + $0xf] sm:$0xff]
      %v749 = vsel %vm699, 1, 0
      %v750 = vsel %vm700, 1, 0
      %vm751 = vcmp.eq.s32.totalorder %v749, 1
      %vm752 = vcmp.eq.s32.totalorder %v750, 1
      %v753 = vsel %vm751, %v747, 0.0
      %v754 = vsel %vm752, %v748, 0.0
      %v755 = vld [vmem:[#allocation2 + $0x4] sm:$0xff]
      %v756 = vld [vmem:[#allocation2 + $0xc] sm:$0xff]
      %v757 = vld [vmem:[#allocation2 + $0x3] sm:$0xff]
      %v758 = vld [vmem:[#allocation2 + $0xb] sm:$0xff]
      %v759 = vsel %vm751, %v757, 0.0
      %v760 = vsel %vm752, %v758, 0.0
      %763 = vrot.lane.b32.xlu0 %v759, 32
      %v764 = vpop.permute.xlu0 %763
      %765 = vrot.lane.b32.xlu0 %v760, 32
      %v766 = vpop.permute.xlu0 %765
      %771 = vrot.lane.b32.xlu0 %v755, 96
      %v772 = vpop.permute.xlu0 %771
      %773 = vrot.lane.b32.xlu0 %v756, 96
      %v774 = vpop.permute.xlu0 %773
      %779 = vrot.lane.b32.xlu0 %v753, 64
      %v780 = vpop.permute.xlu0 %779
      %781 = vrot.lane.b32.xlu0 %v754, 64
      %v782 = vpop.permute.xlu0 %781
      %785 = vrot.lane.b32.xlu0 %v753, 96
      %v786 = vpop.permute.xlu0 %785
      %787 = vrot.lane.b32.xlu0 %v754, 96
      %v788 = vpop.permute.xlu0 %787
      %793 = vrot.lane.b32.xlu0 %v745, 32
      %v794 = vpop.permute.xlu0 %793
      %795 = vrot.lane.b32.xlu0 %v746, 32
      %v796 = vpop.permute.xlu0 %795
      %vm799 = vcmask 261120
      %v800 = vsel %vm799, %v764, %v772
      %v801 = vsel %vm799, %v766, %v774
      %v802 = vsel %vm658, %v800, %v772
      %v803 = vsel %vm658, %v801, %v774
      %vm804 = vcmask 785408
      %v805 = vsel %vm804, %v802, %v780
      %v806 = vsel %vm804, %v803, %v782
      %v807 = vsel %vm658, %v745, %v786
      %v808 = vsel %vm658, %v746, %v788
      %v809 = vsel %vm804, %v807, %v794
      %v810 = vsel %vm804, %v808, %v796
      %v811 = vsel %vm799, %v794, 0
      %v813 = vsel %vm799, %v796, 0
      %815 = vmatprep.subr.mxu0 0.0
      %816 = vmatpush1.msra.mxu0 %v707
      %817 = vmatprep.subr.mxu0 0.0
      %818 = vmatpush1.msra.mxu0 %v708
      %819 = vmatprep.subr.mxu0 0.0
      %820 = vmatpush1.msra.mxu0 %v709
      %821 = vmatprep.subr.mxu0 0.0
      %822 = vmatpush1.msra.mxu0 %v710
      %823 = vmatprep.subr.mxu0 0.0
      %824 = vmatpush1.msra.mxu0 %v711
      %825 = vmatprep.subr.mxu0 0.0
      %826 = vmatpush1.msra.mxu0 %v712
      %827 = vmatprep.subr.mxu0 0.0
      %828 = vmatpush1.msra.mxu0 %v713
      %829 = vmatprep.subr.mxu0 0.0
      %830 = vmatpush1.msra.mxu0 %v714
      %831 = vmatprep.subr.mxu0 0.0
      %832 = vmatpush1.msra.mxu0 %v715
      %833 = vmatprep.subr.mxu0 0.0
      %834 = vmatpush1.msra.mxu0 %v716
      %835 = vmatprep.subr.mxu0 0.0
      %836 = vmatpush1.msra.mxu0 %v717
      %837 = vmatprep.subr.mxu0 0.0
      %838 = vmatpush1.msra.mxu0 %v718
      %839 = vmatprep.subr.mxu0 0.0
      %840 = vmatpush1.msra.mxu0 %v719
      %841 = vmatprep.subr.mxu0 0.0
      %842 = vmatpush1.msra.mxu0 %v720
      %843 = vmatprep.subr.mxu0 0.0
      %844 = vmatpush1.msra.mxu0 %v721
      %845 = vmatprep.subr.mxu0 0.0
      %846 = vmatpush1.msra.mxu0 %v722
      %847 = vmatprep.subr.mxu0 0.0
      %848 = vmatpush1.msra.mxu0 %v723
      %849 = vmatprep.subr.mxu0 0.0
      %850 = vmatpush1.msra.mxu0 %v724
      %851 = vmatprep.subr.mxu0 0.0
      %852 = vmatpush1.msra.mxu0 %v725
      %853 = vmatprep.subr.mxu0 0.0
      %854 = vmatpush1.msra.mxu0 %v726
      %855 = vmatprep.subr.mxu0 0.0
      %856 = vmatpush1.msra.mxu0 %v727
      %857 = vmatprep.subr.mxu0 0.0
      %858 = vmatpush1.msra.mxu0 %v728
      %859 = vmatprep.subr.mxu0 0.0
      %860 = vmatpush1.msra.mxu0 %v729
      %861 = vmatprep.subr.mxu0 0.0
      %862 = vmatpush1.msra.mxu0 %v730
      %863 = vmatprep.subr.mxu0 0.0
      %864 = vmatpush1.msra.mxu0 %v731
      %865 = vmatprep.subr.mxu0 0.0
      %866 = vmatpush1.msra.mxu0 %v732
      %867 = vmatprep.subr.mxu0 0.0
      %868 = vmatpush1.msra.mxu0 %v733
      %869 = vmatprep.subr.mxu0 0.0
      %870 = vmatpush1.msra.mxu0 %v734
      %871 = vmatprep.subr.mxu0 0.0
      %872 = vmatpush1.msra.mxu0 %v735
      %873 = vmatprep.subr.mxu0 0.0
      %874 = vmatpush1.msra.mxu0 %v736
      %875 = vmatprep.subr.mxu0 0.0
      %876 = vmatpush1.msra.mxu0 %v737
      %877 = vmatprep.subr.mxu0 0.0
      %878 = vmatpush1.msra.mxu0 %v738
      %879 = vmatprep.mubr.f32.mxu0 %v809
      %880 = vmatmul.mubr.f32.gmra.mrb[0].mxu0 %v805
      %v881 = vpop.f32.mrb[0].mxu0
      %v882 = vadd.f32 0.0, %v881
      %v883 = vpop.f32.mrb[0].mxu0
      %884 = vmatprep.mubr.f32.mxu0 %v810
      %885 = vmatmul.mubr.f32.gmra.mrb[0].mxu0 %v806
      %v886 = vpop.f32.mrb[0].mxu0
      %v887 = vadd.f32 0.0, %v886
      %v888 = vpop.f32.mrb[0].mxu0
      %889 = vdwg.mxu0
      %890 = vmatprep.subr.mxu0 0.0
      %891 = vmatpush1.msra.mxu0 %v739
      %892 = vmatprep.subr.mxu0 0.0
      %893 = vmatpush1.msra.mxu0 %v740
      %894 = vmatprep.subr.mxu0 0.0
      %895 = vmatpush1.msra.mxu0 %v741
      %896 = vmatprep.subr.mxu0 0.0
      %897 = vmatpush1.msra.mxu0 %v742
      %898 = vmatprep.subr.mxu0 0.0
      %899 = vmatpush1.msra.mxu0 0.0
      %900 = vmatprep.subr.mxu0 0.0
      %901 = vmatpush1.msra.mxu0 0.0
      %902 = vmatprep.subr.mxu0 0.0
      %903 = vmatpush1.msra.mxu0 0.0
      %904 = vmatprep.subr.mxu0 0.0
      %905 = vmatpush1.msra.mxu0 0.0
      %906 = vmatprep.subr.mxu0 0.0
      %907 = vmatpush1.msra.mxu0 0.0
      %908 = vmatprep.subr.mxu0 0.0
      %909 = vmatpush1.msra.mxu0 0.0
      %910 = vmatprep.subr.mxu0 0.0
      %911 = vmatpush1.msra.mxu0 0.0
      %912 = vmatprep.subr.mxu0 0.0
      %913 = vmatpush1.msra.mxu0 0.0
      %914 = vmatprep.subr.mxu0 0.0
      %915 = vmatpush1.msra.mxu0 0.0
      %916 = vmatprep.subr.mxu0 0.0
      %917 = vmatpush1.msra.mxu0 0.0
      %918 = vmatprep.subr.mxu0 0.0
      %919 = vmatpush1.msra.mxu0 0.0
      %920 = vmatprep.subr.mxu0 0.0
      %921 = vmatpush1.msra.mxu0 0.0
      %922 = vmatprep.subr.mxu0 0.0
      %923 = vmatpush1.msra.mxu0 0.0
      %924 = vmatprep.subr.mxu0 0.0
      %925 = vmatpush1.msra.mxu0 0.0
      %926 = vmatprep.subr.mxu0 0.0
      %927 = vmatpush1.msra.mxu0 0.0
      %928 = vmatprep.subr.mxu0 0.0
      %929 = vmatpush1.msra.mxu0 0.0
      %930 = vmatprep.subr.mxu0 0.0
      %931 = vmatpush1.msra.mxu0 0.0
      %932 = vmatprep.subr.mxu0 0.0
      %933 = vmatpush1.msra.mxu0 0.0
      %934 = vmatprep.subr.mxu0 0.0
      %935 = vmatpush1.msra.mxu0 0.0
      %936 = vmatprep.subr.mxu0 0.0
      %937 = vmatpush1.msra.mxu0 0.0
      %938 = vmatprep.subr.mxu0 0.0
      %939 = vmatpush1.msra.mxu0 0.0
      %940 = vmatprep.subr.mxu0 0.0
      %941 = vmatpush1.msra.mxu0 0.0
      %942 = vmatprep.subr.mxu0 0.0
      %943 = vmatpush1.msra.mxu0 0.0
      %944 = vmatprep.subr.mxu0 0.0
      %945 = vmatpush1.msra.mxu0 0.0
      %946 = vmatprep.subr.mxu0 0.0
      %947 = vmatpush1.msra.mxu0 0.0
      %948 = vmatprep.subr.mxu0 0.0
      %949 = vmatpush1.msra.mxu0 0.0
      %950 = vmatprep.subr.mxu0 0.0
      %951 = vmatpush1.msra.mxu0 0.0
      %952 = vmatprep.subr.mxu0 0.0
      %953 = vmatpush1.msra.mxu0 0.0
      %954 = vmatprep.mubr.f32.mxu0 0.0
      %955 = vmatmul.mubr.f32.gmra.mrb[0].mxu0 %v811
      %v956 = vpop.f32.mrb[0].mxu0
      %v957 = vadd.f32 %v882, %v956
      %v958 = vpop.f32.mrb[0].mxu0
      %959 = vmatprep.mubr.f32.mxu0 0.0
      %960 = vmatmul.mubr.f32.gmra.mrb[0].mxu0 %v813
      %v961 = vpop.f32.mrb[0].mxu0
      %v962 = vadd.f32 %v887, %v961
      %v963 = vpop.f32.mrb[0].mxu0
      %964 = vdwg.mxu0
      %v966 = vlaneseq
      %v967 = vshrl.u32 %v966, 7
      %v968 = vsub.s32 0, %v967
      %v969 = vrot.slane %v743, %v968
      %v971 = vmul.f32 %v957, %v969
      %v972 = vmul.f32 %v962, %v969
      %v974 = vlaneseq
      %v975 = vshrl.u32 %v974, 7
      %v976 = vsub.s32 0, %v975
      %v977 = vrot.slane %v744, %v976
      %v979 = vadd.f32 %v971, %v977
      %v980 = vadd.f32 %v972, %v977
      %v981 = vmax.f32 %v979, 0.0
      %v982 = vmax.f32 %v980, 0.0
      %983 = vst.msk [vmem:[#allocation3 + $0x8] sm:$0xff] %vm658, %v981
      %984 = vst.msk [vmem:[#allocation3 + $0x10] sm:$0xff] %vm658, %v982
      %v985 = vld [vmem:[%s4] sm:$0xff]
      %v986 = vld [vmem:[%s4 + $0x8] sm:$0xff]
      %v987 = vld [vmem:[%s4 + $0x10] sm:$0xff]
      %v988 = vld [vmem:[%s4 + $0x18] sm:$0xff]
      %v989 = vld [vmem:[%s4 + $0x20] sm:$0xff]
      %v990 = vld [vmem:[%s4 + $0x28] sm:$0xff]
      %v991 = vld [vmem:[%s4 + $0x30] sm:$0xff]
      %v992 = vld [vmem:[%s4 + $0x38] sm:$0xff]
      %v993 = vld [vmem:[%s4 + $0x40] sm:$0xff]
      %v994 = vld [vmem:[%s4 + $0x48] sm:$0xff]
      %v995 = vld [vmem:[%s4 + $0x50] sm:$0xff]
      %v996 = vld [vmem:[%s4 + $0x58] sm:$0xff]
      %v997 = vld [vmem:[%s4 + $0x60] sm:$0xff]
      %v998 = vld [vmem:[%s4 + $0x68] sm:$0xff]
      %v999 = vld [vmem:[%s4 + $0x70] sm:$0xff]
      %v1000 = vld [vmem:[%s4 + $0x78] sm:$0xff]
      %v1001 = vld [vmem:[%s4 + $0x80] sm:$0xff]
      %v1002 = vld [vmem:[%s4 + $0x88] sm:$0xff]
      %v1003 = vld [vmem:[%s4 + $0x90] sm:$0xff]
      %v1004 = vld [vmem:[%s4 + $0x98] sm:$0xff]
      %v1005 = vld [vmem:[%s4 + $0xa0] sm:$0xff]
      %v1006 = vld [vmem:[%s4 + $0xa8] sm:$0xff]
      %v1007 = vld [vmem:[%s4 + $0xb0] sm:$0xff]
      %v1008 = vld [vmem:[%s4 + $0xb8] sm:$0xff]
      %v1009 = vld [vmem:[%s4 + $0xc0] sm:$0xff]
      %v1010 = vld [vmem:[%s4 + $0xc8] sm:$0xff]
      %v1011 = vld [vmem:[%s4 + $0xd0] sm:$0xff]
      %v1012 = vld [vmem:[%s4 + $0xd8] sm:$0xff]
      %v1013 = vld [vmem:[%s4 + $0xe0] sm:$0xff]
      %v1014 = vld [vmem:[%s4 + $0xe8] sm:$0xff]
      %v1015 = vld [vmem:[%s4 + $0xf0] sm:$0xff]
      %v1016 = vld [vmem:[%s4 + $0xf8] sm:$0xff]
      %v1017 = vld [vmem:[%s4 + $0x100] sm:$0xff]
      %v1018 = vld [vmem:[%s4 + $0x108] sm:$0xff]
      %v1019 = vld [vmem:[%s4 + $0x110] sm:$0xff]
      %v1020 = vld [vmem:[%s4 + $0x118] sm:$0xff]
      %v1021 = vld [vmem:[%s4 + $0x120] sm:$0xff]
      %v1022 = vld [vmem:[%s4 + $0x128] sm:$0xff]
      %v1023 = vld [vmem:[%s4 + $0x130] sm:$0xff]
      %v1024 = vld [vmem:[%s4 + $0x138] sm:$0xff]
      %v1025 = vld [vmem:[%s4 + $0x140] sm:$0xff]
      %v1026 = vld [vmem:[%s4 + $0x148] sm:$0xff]
      %v1027 = vld [vmem:[%s4 + $0x150] sm:$0xff]
      %v1028 = vld [vmem:[%s4 + $0x158] sm:$0xff]
      %v1029 = vld [vmem:[%s4 + $0x160] sm:$0xff]
      %v1030 = vld [vmem:[%s4 + $0x168] sm:$0xff]
      %v1031 = vld [vmem:[%s4 + $0x170] sm:$0xff]
      %v1032 = vld [vmem:[%s4 + $0x178] sm:$0xff]
      %v1033 = vld [vmem:[%s4 + $0x180] sm:$0xff]
      %v1034 = vld [vmem:[%s4 + $0x188] sm:$0xff]
      %v1035 = vld [vmem:[%s4 + $0x190] sm:$0xff]
      %v1036 = vld [vmem:[%s4 + $0x198] sm:$0xff]
      %v1037 = vld [vmem:[%s4 + $0x1a0] sm:$0xff]
      %v1038 = vld [vmem:[%s4 + $0x1a8] sm:$0xff]
      %v1039 = vld [vmem:[%s4 + $0x1b0] sm:$0xff]
      %v1040 = vld [vmem:[%s4 + $0x1b8] sm:$0xff]
      %v1041 = vld [vmem:[%s4 + $0x1c0] sm:$0xff]
      %v1042 = vld [vmem:[%s4 + $0x1c8] sm:$0xff]
      %v1043 = vld [vmem:[%s4 + $0x1d0] sm:$0xff]
      %v1044 = vld [vmem:[%s4 + $0x1d8] sm:$0xff]
      %v1045 = vld [vmem:[%s4 + $0x1e0] sm:$0xff]
      %v1046 = vld [vmem:[%s4 + $0x1e8] sm:$0xff]
      %v1047 = vld [vmem:[%s4 + $0x1f0] sm:$0xff]
      %v1048 = vld [vmem:[%s4 + $0x1f8] sm:$0xff]
      %v1049 = vld [vmem:[%s4 + $0x200] sm:$0xff]
      %v1050 = vld [vmem:[%s4 + $0x208] sm:$0xff]
      %v1051 = vld [vmem:[%s4 + $0x210] sm:$0xff]
      %v1052 = vld [vmem:[%s4 + $0x218] sm:$0xff]
      %v1053 = vld [vmem:[%s4 + $0x220] sm:$0xff]
      %v1054 = vld [vmem:[%s4 + $0x228] sm:$0xff]
      %v1055 = vld [vmem:[%s4 + $0x230] sm:$0xff]
      %v1056 = vld [vmem:[%s4 + $0x238] sm:$0xff]
      %v1057 = vld [vmem:[%s5] sm:$0x1]
      %v1058 = vld [vmem:[%s6] sm:$0x1]
      %v1059 = vld [vmem:[#allocation3 + $0x3] sm:$0xff]
      %v1060 = vld [vmem:[#allocation3 + $0xb] sm:$0xff]
      %v1061 = vsel %vm751, %v1059, 0.0
      %v1062 = vsel %vm752, %v1060, 0.0
      %v1063 = vld [vmem:[#allocation3 + $0x4] sm:$0xff]
      %v1064 = vld [vmem:[#allocation3 + $0xc] sm:$0xff]
      %v1065 = vld [vmem:[#allocation3 + $0x5] sm:$0xff]
      %v1066 = vld [vmem:[#allocation3 + $0xd] sm:$0xff]
      %v1067 = vsel %vm701, 1, 0
      %v1068 = vsel %vm702, 1, 0
      %vm1069 = vcmp.eq.s32.totalorder %v1067, 1
      %vm1070 = vcmp.eq.s32.totalorder %v1068, 1
      %v1071 = vsel %vm1069, %v1065, 0.0
      %v1072 = vsel %vm1070, %v1066, 0.0
      %v1073 = vld [vmem:[#allocation3 + $0x7] sm:$0xff]
      %v1074 = vld [vmem:[#allocation3 + $0xf] sm:$0xff]
      %v1075 = vsel %vm751, %v1073, 0.0
      %v1076 = vsel %vm752, %v1074, 0.0
      %v1077 = vld [vmem:[#allocation3 + $0x8] sm:$0xff]
      %v1078 = vld [vmem:[#allocation3 + $0x10] sm:$0xff]
      %v1079 = vld [vmem:[#allocation3 + $0x9] sm:$0xff]
      %v1080 = vld [vmem:[#allocation3 + $0x11] sm:$0xff]
      %v1081 = vsel %vm1069, %v1079, 0.0
      %v1082 = vsel %vm1070, %v1080, 0.0
      %v1083 = vld [vmem:[#allocation3 + $0x13] sm:$0xff]
      %v1084 = vsel %vm751, %v1060, 0.0
      %v1085 = vsel %vm752, %v1083, 0.0
      %v1086 = vld [vmem:[#allocation3 + $0x14] sm:$0xff]
      %v1087 = vld [vmem:[#allocation3 + $0x15] sm:$0xff]
      %v1088 = vsel %vm1069, %v1066, 0.0
      %v1089 = vsel %vm1070, %v1087, 0.0
      %1092 = vrot.lane.b32.xlu0 %v1063, 64
      %v1093 = vpop.permute.xlu0 %1092
      %1094 = vrot.lane.b32.xlu0 %v1064, 64
      %v1095 = vpop.permute.xlu0 %1094
      %1100 = vrot.lane.b32.xlu0 %v1075, 64
      %v1101 = vpop.permute.xlu0 %1100
      %1102 = vrot.lane.b32.xlu0 %v1076, 64
      %v1103 = vpop.permute.xlu0 %1102
      %1108 = vrot.lane.b32.xlu0 %v1081, 64
      %v1109 = vpop.permute.xlu0 %1108
      %1110 = vrot.lane.b32.xlu0 %v1082, 64
      %v1111 = vpop.permute.xlu0 %1110
      %1115 = vrot.lane.b32.xlu0 %v1086, 64
      %v1116 = vpop.permute.xlu0 %1115
      %v1118 = vsel %vm658, %v1061, %v1093
      %v1119 = vsel %vm658, %v1062, %v1095
      %v1120 = vsel %vm658, %v1071, %v1101
      %v1121 = vsel %vm658, %v1072, %v1103
      %v1122 = vsel %vm658, %v1077, %v1109
      %v1123 = vsel %vm658, %v1078, %v1111
      %v1124 = vsel %vm658, %v1084, %v1095
      %v1125 = vsel %vm658, %v1085, %v1116
      %v1127 = vsel %vm658, %v1088, 0
      %v1130 = vsel %vm658, %v1089, 0
      %1132 = vmatprep.subr.mxu0 0.0
      %1133 = vmatpush1.msra.mxu0 %v985
      %1134 = vmatprep.subr.mxu0 0.0
      %1135 = vmatpush1.msra.mxu0 %v986
      %1136 = vmatprep.subr.mxu0 0.0
      %1137 = vmatpush1.msra.mxu0 %v987
      %1138 = vmatprep.subr.mxu0 0.0
      %1139 = vmatpush1.msra.mxu0 %v988
      %1140 = vmatprep.subr.mxu0 0.0
      %1141 = vmatpush1.msra.mxu0 %v989
      %1142 = vmatprep.subr.mxu0 0.0
      %1143 = vmatpush1.msra.mxu0 %v990
      %1144 = vmatprep.subr.mxu0 0.0
      %1145 = vmatpush1.msra.mxu0 %v991
      %1146 = vmatprep.subr.mxu0 0.0
      %1147 = vmatpush1.msra.mxu0 %v992
      %1148 = vmatprep.subr.mxu0 0.0
      %1149 = vmatpush1.msra.mxu0 %v993
      %1150 = vmatprep.subr.mxu0 0.0
      %1151 = vmatpush1.msra.mxu0 %v994
      %1152 = vmatprep.subr.mxu0 0.0
      %1153 = vmatpush1.msra.mxu0 %v995
      %1154 = vmatprep.subr.mxu0 0.0
      %1155 = vmatpush1.msra.mxu0 %v996
      %1156 = vmatprep.subr.mxu0 0.0
      %1157 = vmatpush1.msra.mxu0 %v997
      %1158 = vmatprep.subr.mxu0 0.0
      %1159 = vmatpush1.msra.mxu0 %v998
      %1160 = vmatprep.subr.mxu0 0.0
      %1161 = vmatpush1.msra.mxu0 %v999
      %1162 = vmatprep.subr.mxu0 0.0
      %1163 = vmatpush1.msra.mxu0 %v1000
      %1164 = vmatprep.subr.mxu0 0.0
      %1165 = vmatpush1.msra.mxu0 %v1001
      %1166 = vmatprep.subr.mxu0 0.0
      %1167 = vmatpush1.msra.mxu0 %v1002
      %1168 = vmatprep.subr.mxu0 0.0
      %1169 = vmatpush1.msra.mxu0 %v1003
      %1170 = vmatprep.subr.mxu0 0.0
      %1171 = vmatpush1.msra.mxu0 %v1004
      %1172 = vmatprep.subr.mxu0 0.0
      %1173 = vmatpush1.msra.mxu0 %v1005
      %1174 = vmatprep.subr.mxu0 0.0
      %1175 = vmatpush1.msra.mxu0 %v1006
      %1176 = vmatprep.subr.mxu0 0.0
      %1177 = vmatpush1.msra.mxu0 %v1007
      %1178 = vmatprep.subr.mxu0 0.0
      %1179 = vmatpush1.msra.mxu0 %v1008
      %1180 = vmatprep.subr.mxu0 0.0
      %1181 = vmatpush1.msra.mxu0 %v1009
      %1182 = vmatprep.subr.mxu0 0.0
      %1183 = vmatpush1.msra.mxu0 %v1010
      %1184 = vmatprep.subr.mxu0 0.0
      %1185 = vmatpush1.msra.mxu0 %v1011
      %1186 = vmatprep.subr.mxu0 0.0
      %1187 = vmatpush1.msra.mxu0 %v1012
      %1188 = vmatprep.subr.mxu0 0.0
      %1189 = vmatpush1.msra.mxu0 %v1013
      %1190 = vmatprep.subr.mxu0 0.0
      %1191 = vmatpush1.msra.mxu0 %v1014
      %1192 = vmatprep.subr.mxu0 0.0
      %1193 = vmatpush1.msra.mxu0 %v1015
      %1194 = vmatprep.subr.mxu0 0.0
      %1195 = vmatpush1.msra.mxu0 %v1016
      %1196 = vmatprep.mubr.f32.mxu0 %v1120
      %1197 = vmatmul.mubr.f32.gmra.mrb[0].mxu0 %v1118
      %v1198 = vpop.f32.mrb[0].mxu0
      %v1199 = vadd.f32 0.0, %v1198
      %v1200 = vpop.f32.mrb[0].mxu0
      %1201 = vmatprep.mubr.f32.mxu0 %v1121
      %1202 = vmatmul.mubr.f32.gmra.mrb[0].mxu0 %v1119
      %v1203 = vpop.f32.mrb[0].mxu0
      %v1204 = vadd.f32 0.0, %v1203
      %v1205 = vpop.f32.mrb[0].mxu0
      %1206 = vdwg.mxu0
      %1207 = vmatprep.subr.mxu0 0.0
      %1208 = vmatpush1.msra.mxu0 %v1017
      %1209 = vmatprep.subr.mxu0 0.0
      %1210 = vmatpush1.msra.mxu0 %v1018
      %1211 = vmatprep.subr.mxu0 0.0
      %1212 = vmatpush1.msra.mxu0 %v1019
      %1213 = vmatprep.subr.mxu0 0.0
      %1214 = vmatpush1.msra.mxu0 %v1020
      %1215 = vmatprep.subr.mxu0 0.0
      %1216 = vmatpush1.msra.mxu0 %v1021
      %1217 = vmatprep.subr.mxu0 0.0
      %1218 = vmatpush1.msra.mxu0 %v1022
      %1219 = vmatprep.subr.mxu0 0.0
      %1220 = vmatpush1.msra.mxu0 %v1023
      %1221 = vmatprep.subr.mxu0 0.0
      %1222 = vmatpush1.msra.mxu0 %v1024
      %1223 = vmatprep.subr.mxu0 0.0
      %1224 = vmatpush1.msra.mxu0 %v1025
      %1225 = vmatprep.subr.mxu0 0.0
      %1226 = vmatpush1.msra.mxu0 %v1026
      %1227 = vmatprep.subr.mxu0 0.0
      %1228 = vmatpush1.msra.mxu0 %v1027
      %1229 = vmatprep.subr.mxu0 0.0
      %1230 = vmatpush1.msra.mxu0 %v1028
      %1231 = vmatprep.subr.mxu0 0.0
      %1232 = vmatpush1.msra.mxu0 %v1029
      %1233 = vmatprep.subr.mxu0 0.0
      %1234 = vmatpush1.msra.mxu0 %v1030
      %1235 = vmatprep.subr.mxu0 0.0
      %1236 = vmatpush1.msra.mxu0 %v1031
      %1237 = vmatprep.subr.mxu0 0.0
      %1238 = vmatpush1.msra.mxu0 %v1032
      %1239 = vmatprep.subr.mxu0 0.0
      %1240 = vmatpush1.msra.mxu0 %v1033
      %1241 = vmatprep.subr.mxu0 0.0
      %1242 = vmatpush1.msra.mxu0 %v1034
      %1243 = vmatprep.subr.mxu0 0.0
      %1244 = vmatpush1.msra.mxu0 %v1035
      %1245 = vmatprep.subr.mxu0 0.0
      %1246 = vmatpush1.msra.mxu0 %v1036
      %1247 = vmatprep.subr.mxu0 0.0
      %1248 = vmatpush1.msra.mxu0 %v1037
      %1249 = vmatprep.subr.mxu0 0.0
      %1250 = vmatpush1.msra.mxu0 %v1038
      %1251 = vmatprep.subr.mxu0 0.0
      %1252 = vmatpush1.msra.mxu0 %v1039
      %1253 = vmatprep.subr.mxu0 0.0
      %1254 = vmatpush1.msra.mxu0 %v1040
      %1255 = vmatprep.subr.mxu0 0.0
      %1256 = vmatpush1.msra.mxu0 %v1041
      %1257 = vmatprep.subr.mxu0 0.0
      %1258 = vmatpush1.msra.mxu0 %v1042
      %1259 = vmatprep.subr.mxu0 0.0
      %1260 = vmatpush1.msra.mxu0 %v1043
      %1261 = vmatprep.subr.mxu0 0.0
      %1262 = vmatpush1.msra.mxu0 %v1044
      %1263 = vmatprep.subr.mxu0 0.0
      %1264 = vmatpush1.msra.mxu0 %v1045
      %1265 = vmatprep.subr.mxu0 0.0
      %1266 = vmatpush1.msra.mxu0 %v1046
      %1267 = vmatprep.subr.mxu0 0.0
      %1268 = vmatpush1.msra.mxu0 %v1047
      %1269 = vmatprep.subr.mxu0 0.0
      %1270 = vmatpush1.msra.mxu0 %v1048
      %1271 = vmatprep.mubr.f32.mxu0 %v1124
      %1272 = vmatmul.mubr.f32.gmra.mrb[0].mxu0 %v1122
      %v1273 = vpop.f32.mrb[0].mxu0
      %v1274 = vadd.f32 %v1199, %v1273
      %v1275 = vpop.f32.mrb[0].mxu0
      %1276 = vmatprep.mubr.f32.mxu0 %v1125
      %1277 = vmatmul.mubr.f32.gmra.mrb[0].mxu0 %v1123
      %v1278 = vpop.f32.mrb[0].mxu0
      %v1279 = vadd.f32 %v1204, %v1278
      %v1280 = vpop.f32.mrb[0].mxu0
      %1281 = vdwg.mxu0
      %1282 = vmatprep.subr.mxu0 0.0
      %1283 = vmatpush1.msra.mxu0 %v1049
      %1284 = vmatprep.subr.mxu0 0.0
      %1285 = vmatpush1.msra.mxu0 %v1050
      %1286 = vmatprep.subr.mxu0 0.0
      %1287 = vmatpush1.msra.mxu0 %v1051
      %1288 = vmatprep.subr.mxu0 0.0
      %1289 = vmatpush1.msra.mxu0 %v1052
      %1290 = vmatprep.subr.mxu0 0.0
      %1291 = vmatpush1.msra.mxu0 %v1053
      %1292 = vmatprep.subr.mxu0 0.0
      %1293 = vmatpush1.msra.mxu0 %v1054
      %1294 = vmatprep.subr.mxu0 0.0
      %1295 = vmatpush1.msra.mxu0 %v1055
      %1296 = vmatprep.subr.mxu0 0.0
      %1297 = vmatpush1.msra.mxu0 %v1056
      %1298 = vmatprep.subr.mxu0 0.0
      %1299 = vmatpush1.msra.mxu0 0.0
      %1300 = vmatprep.subr.mxu0 0.0
      %1301 = vmatpush1.msra.mxu0 0.0
      %1302 = vmatprep.subr.mxu0 0.0
      %1303 = vmatpush1.msra.mxu0 0.0
      %1304 = vmatprep.subr.mxu0 0.0
      %1305 = vmatpush1.msra.mxu0 0.0
      %1306 = vmatprep.subr.mxu0 0.0
      %1307 = vmatpush1.msra.mxu0 0.0
      %1308 = vmatprep.subr.mxu0 0.0
      %1309 = vmatpush1.msra.mxu0 0.0
      %1310 = vmatprep.subr.mxu0 0.0
      %1311 = vmatpush1.msra.mxu0 0.0
      %1312 = vmatprep.subr.mxu0 0.0
      %1313 = vmatpush1.msra.mxu0 0.0
      %1314 = vmatprep.subr.mxu0 0.0
      %1315 = vmatpush1.msra.mxu0 0.0
      %1316 = vmatprep.subr.mxu0 0.0
      %1317 = vmatpush1.msra.mxu0 0.0
      %1318 = vmatprep.subr.mxu0 0.0
      %1319 = vmatpush1.msra.mxu0 0.0
      %1320 = vmatprep.subr.mxu0 0.0
      %1321 = vmatpush1.msra.mxu0 0.0
      %1322 = vmatprep.subr.mxu0 0.0
      %1323 = vmatpush1.msra.mxu0 0.0
      %1324 = vmatprep.subr.mxu0 0.0
      %1325 = vmatpush1.msra.mxu0 0.0
      %1326 = vmatprep.subr.mxu0 0.0
      %1327 = vmatpush1.msra.mxu0 0.0
      %1328 = vmatprep.subr.mxu0 0.0
      %1329 = vmatpush1.msra.mxu0 0.0
      %1330 = vmatprep.subr.mxu0 0.0
      %1331 = vmatpush1.msra.mxu0 0.0
      %1332 = vmatprep.subr.mxu0 0.0
      %1333 = vmatpush1.msra.mxu0 0.0
      %1334 = vmatprep.subr.mxu0 0.0
      %1335 = vmatpush1.msra.mxu0 0.0
      %1336 = vmatprep.subr.mxu0 0.0
      %1337 = vmatpush1.msra.mxu0 0.0
      %1338 = vmatprep.subr.mxu0 0.0
      %1339 = vmatpush1.msra.mxu0 0.0
      %1340 = vmatprep.subr.mxu0 0.0
      %1341 = vmatpush1.msra.mxu0 0.0
      %1342 = vmatprep.subr.mxu0 0.0
      %1343 = vmatpush1.msra.mxu0 0.0
      %1344 = vmatprep.subr.mxu0 0.0
      %1345 = vmatpush1.msra.mxu0 0.0
      %1346 = vmatprep.mubr.f32.mxu0 0.0
      %1347 = vmatmul.mubr.f32.gmra.mrb[0].mxu0 %v1127
      %v1348 = vpop.f32.mrb[0].mxu0
      %v1349 = vadd.f32 %v1274, %v1348
      %v1350 = vpop.f32.mrb[0].mxu0
      %1351 = vmatprep.mubr.f32.mxu0 0.0
      %1352 = vmatmul.mubr.f32.gmra.mrb[0].mxu0 %v1130
      %v1353 = vpop.f32.mrb[0].mxu0
      %v1354 = vadd.f32 %v1279, %v1353
      %v1355 = vpop.f32.mrb[0].mxu0
      %1356 = vdwg.mxu0
      %v1358 = vlaneseq
      %v1359 = vshrl.u32 %v1358, 7
      %v1360 = vsub.s32 0, %v1359
      %v1361 = vrot.slane %v1057, %v1360
      %v1363 = vmul.f32 %v1349, %v1361
      %v1364 = vmul.f32 %v1354, %v1361
      %v1366 = vlaneseq
      %v1367 = vshrl.u32 %v1366, 7
      %v1368 = vsub.s32 0, %v1367
      %v1369 = vrot.slane %v1058, %v1368
      %v1371 = vadd.f32 %v1363, %v1369
      %v1372 = vadd.f32 %v1364, %v1369
      %v1373 = vmax.f32 %v1371, 0.0
      %v1374 = vmax.f32 %v1372, 0.0
      %1375 = vst.msk [vmem:[#allocation3 + $0x8] sm:$0xff] %vm658, %v1373
      %1376 = vst.msk [vmem:[#allocation3 + $0x10] sm:$0xff] %vm658, %v1374
      %s1377 = scalar_lea.vmem %s4, 576
      %v1378 = vld [vmem:[%s1377] sm:$0xff]
      %v1379 = vld [vmem:[%s1377 + $0x8] sm:$0xff]
      %v1380 = vld [vmem:[%s1377 + $0x10] sm:$0xff]
      %v1381 = vld [vmem:[%s1377 + $0x18] sm:$0xff]
      %v1382 = vld [vmem:[%s1377 + $0x20] sm:$0xff]
      %v1383 = vld [vmem:[%s1377 + $0x28] sm:$0xff]
      %v1384 = vld [vmem:[%s1377 + $0x30] sm:$0xff]
      %v1385 = vld [vmem:[%s1377 + $0x38] sm:$0xff]
      %v1386 = vld [vmem:[%s1377 + $0x40] sm:$0xff]
      %v1387 = vld [vmem:[%s1377 + $0x48] sm:$0xff]
      %v1388 = vld [vmem:[%s1377 + $0x50] sm:$0xff]
      %v1389 = vld [vmem:[%s1377 + $0x58] sm:$0xff]
      %v1390 = vld [vmem:[%s1377 + $0x60] sm:$0xff]
      %v1391 = vld [vmem:[%s1377 + $0x68] sm:$0xff]
      %v1392 = vld [vmem:[%s1377 + $0x70] sm:$0xff]
      %v1393 = vld [vmem:[%s1377 + $0x78] sm:$0xff]
      %v1394 = vld [vmem:[%s1377 + $0x80] sm:$0xff]
      %v1395 = vld [vmem:[%s1377 + $0x88] sm:$0xff]
      %v1396 = vld [vmem:[%s1377 + $0x90] sm:$0xff]
      %v1397 = vld [vmem:[%s1377 + $0x98] sm:$0xff]
      %v1398 = vld [vmem:[%s1377 + $0xa0] sm:$0xff]
      %v1399 = vld [vmem:[%s1377 + $0xa8] sm:$0xff]
      %v1400 = vld [vmem:[%s1377 + $0xb0] sm:$0xff]
      %v1401 = vld [vmem:[%s1377 + $0xb8] sm:$0xff]
      %v1402 = vld [vmem:[%s1377 + $0xc0] sm:$0xff]
      %v1403 = vld [vmem:[%s1377 + $0xc8] sm:$0xff]
      %v1404 = vld [vmem:[%s1377 + $0xd0] sm:$0xff]
      %v1405 = vld [vmem:[%s1377 + $0xd8] sm:$0xff]
      %v1406 = vld [vmem:[%s1377 + $0xe0] sm:$0xff]
      %v1407 = vld [vmem:[%s1377 + $0xe8] sm:$0xff]
      %v1408 = vld [vmem:[%s1377 + $0xf0] sm:$0xff]
      %v1409 = vld [vmem:[%s1377 + $0xf8] sm:$0xff]
      %v1410 = vld [vmem:[%s1377 + $0x100] sm:$0xff]
      %v1411 = vld [vmem:[%s1377 + $0x108] sm:$0xff]
      %v1412 = vld [vmem:[%s1377 + $0x110] sm:$0xff]
      %v1413 = vld [vmem:[%s1377 + $0x118] sm:$0xff]
      %v1414 = vld [vmem:[%s1377 + $0x120] sm:$0xff]
      %v1415 = vld [vmem:[%s1377 + $0x128] sm:$0xff]
      %v1416 = vld [vmem:[%s1377 + $0x130] sm:$0xff]
      %v1417 = vld [vmem:[%s1377 + $0x138] sm:$0xff]
      %v1418 = vld [vmem:[%s1377 + $0x140] sm:$0xff]
      %v1419 = vld [vmem:[%s1377 + $0x148] sm:$0xff]
      %v1420 = vld [vmem:[%s1377 + $0x150] sm:$0xff]
      %v1421 = vld [vmem:[%s1377 + $0x158] sm:$0xff]
      %v1422 = vld [vmem:[%s1377 + $0x160] sm:$0xff]
      %v1423 = vld [vmem:[%s1377 + $0x168] sm:$0xff]
      %v1424 = vld [vmem:[%s1377 + $0x170] sm:$0xff]
      %v1425 = vld [vmem:[%s1377 + $0x178] sm:$0xff]
      %v1426 = vld [vmem:[%s1377 + $0x180] sm:$0xff]
      %v1427 = vld [vmem:[%s1377 + $0x188] sm:$0xff]
      %v1428 = vld [vmem:[%s1377 + $0x190] sm:$0xff]
      %v1429 = vld [vmem:[%s1377 + $0x198] sm:$0xff]
      %v1430 = vld [vmem:[%s1377 + $0x1a0] sm:$0xff]
      %v1431 = vld [vmem:[%s1377 + $0x1a8] sm:$0xff]
      %v1432 = vld [vmem:[%s1377 + $0x1b0] sm:$0xff]
      %v1433 = vld [vmem:[%s1377 + $0x1b8] sm:$0xff]
      %v1434 = vld [vmem:[%s1377 + $0x1c0] sm:$0xff]
      %v1435 = vld [vmem:[%s1377 + $0x1c8] sm:$0xff]
      %v1436 = vld [vmem:[%s1377 + $0x1d0] sm:$0xff]
      %v1437 = vld [vmem:[%s1377 + $0x1d8] sm:$0xff]
      %v1438 = vld [vmem:[%s1377 + $0x1e0] sm:$0xff]
      %v1439 = vld [vmem:[%s1377 + $0x1e8] sm:$0xff]
      %v1440 = vld [vmem:[%s1377 + $0x1f0] sm:$0xff]
      %v1441 = vld [vmem:[%s1377 + $0x1f8] sm:$0xff]
      %v1442 = vld [vmem:[%s1377 + $0x200] sm:$0xff]
      %v1443 = vld [vmem:[%s1377 + $0x208] sm:$0xff]
      %v1444 = vld [vmem:[%s1377 + $0x210] sm:$0xff]
      %v1445 = vld [vmem:[%s1377 + $0x218] sm:$0xff]
      %v1446 = vld [vmem:[%s1377 + $0x220] sm:$0xff]
      %v1447 = vld [vmem:[%s1377 + $0x228] sm:$0xff]
      %v1448 = vld [vmem:[%s1377 + $0x230] sm:$0xff]
      %v1449 = vld [vmem:[%s1377 + $0x238] sm:$0xff]
      %s1450 = scalar_lea.vmem %s5, 1
      %v1451 = vld [vmem:[%s1450] sm:$0x1]
      %s1452 = scalar_lea.vmem %s6, 1
      %v1453 = vld [vmem:[%s1452] sm:$0x1]
      %v1454 = vld [vmem:[#allocation3 + $0x3] sm:$0xff]
      %v1455 = vld [vmem:[#allocation3 + $0xb] sm:$0xff]
      %v1456 = vsel %vm751, %v1454, 0.0
      %v1457 = vsel %vm752, %v1455, 0.0
      %v1458 = vld [vmem:[#allocation3 + $0x4] sm:$0xff]
      %v1459 = vld [vmem:[#allocation3 + $0xc] sm:$0xff]
      %v1460 = vld [vmem:[#allocation3 + $0x5] sm:$0xff]
      %v1461 = vld [vmem:[#allocation3 + $0xd] sm:$0xff]
      %v1462 = vsel %vm1069, %v1460, 0.0
      %v1463 = vsel %vm1070, %v1461, 0.0
      %v1464 = vld [vmem:[#allocation3 + $0x7] sm:$0xff]
      %v1465 = vld [vmem:[#allocation3 + $0xf] sm:$0xff]
      %v1466 = vsel %vm751, %v1464, 0.0
      %v1467 = vsel %vm752, %v1465, 0.0
      %v1468 = vld [vmem:[#allocation3 + $0x8] sm:$0xff]
      %v1469 = vld [vmem:[#allocation3 + $0x10] sm:$0xff]
      %v1470 = vld [vmem:[#allocation3 + $0x9] sm:$0xff]
      %v1471 = vld [vmem:[#allocation3 + $0x11] sm:$0xff]
      %v1472 = vsel %vm1069, %v1470, 0.0
      %v1473 = vsel %vm1070, %v1471, 0.0
      %v1474 = vld [vmem:[#allocation3 + $0x13] sm:$0xff]
      %v1475 = vsel %vm751, %v1455, 0.0
      %v1476 = vsel %vm752, %v1474, 0.0
      %v1477 = vld [vmem:[#allocation3 + $0x14] sm:$0xff]
      %v1478 = vld [vmem:[#allocation3 + $0x15] sm:$0xff]
      %v1479 = vsel %vm1069, %v1461, 0.0
      %v1480 = vsel %vm1070, %v1478, 0.0
      %1483 = vrot.lane.b32.xlu0 %v1458, 64
      %v1484 = vpop.permute.xlu0 %1483
      %1485 = vrot.lane.b32.xlu0 %v1459, 64
      %v1486 = vpop.permute.xlu0 %1485
      %1491 = vrot.lane.b32.xlu0 %v1466, 64
      %v1492 = vpop.permute.xlu0 %1491
      %1493 = vrot.lane.b32.xlu0 %v1467, 64
      %v1494 = vpop.permute.xlu0 %1493
      %1499 = vrot.lane.b32.xlu0 %v1472, 64
      %v1500 = vpop.permute.xlu0 %1499
      %1501 = vrot.lane.b32.xlu0 %v1473, 64
      %v1502 = vpop.permute.xlu0 %1501
      %1506 = vrot.lane.b32.xlu0 %v1477, 64
      %v1507 = vpop.permute.xlu0 %1506
      %v1509 = vsel %vm658, %v1456, %v1484
      %v1510 = vsel %vm658, %v1457, %v1486
      %v1511 = vsel %vm658, %v1462, %v1492
      %v1512 = vsel %vm658, %v1463, %v1494
      %v1513 = vsel %vm658, %v1468, %v1500
      %v1514 = vsel %vm658, %v1469, %v1502
      %v1515 = vsel %vm658, %v1475, %v1486
      %v1516 = vsel %vm658, %v1476, %v1507
      %v1518 = vsel %vm658, %v1479, 0
      %v1521 = vsel %vm658, %v1480, 0
      %1523 = vmatprep.subr.mxu0 0.0
      %1524 = vmatpush1.msra.mxu0 %v1378
      %1525 = vmatprep.subr.mxu0 0.0
      %1526 = vmatpush1.msra.mxu0 %v1379
      %1527 = vmatprep.subr.mxu0 0.0
      %1528 = vmatpush1.msra.mxu0 %v1380
      %1529 = vmatprep.subr.mxu0 0.0
      %1530 = vmatpush1.msra.mxu0 %v1381
      %1531 = vmatprep.subr.mxu0 0.0
      %1532 = vmatpush1.msra.mxu0 %v1382
      %1533 = vmatprep.subr.mxu0 0.0
      %1534 = vmatpush1.msra.mxu0 %v1383
      %1535 = vmatprep.subr.mxu0 0.0
      %1536 = vmatpush1.msra.mxu0 %v1384
      %1537 = vmatprep.subr.mxu0 0.0
      %1538 = vmatpush1.msra.mxu0 %v1385
      %1539 = vmatprep.subr.mxu0 0.0
      %1540 = vmatpush1.msra.mxu0 %v1386
      %1541 = vmatprep.subr.mxu0 0.0
      %1542 = vmatpush1.msra.mxu0 %v1387
      %1543 = vmatprep.subr.mxu0 0.0
      %1544 = vmatpush1.msra.mxu0 %v1388
      %1545 = vmatprep.subr.mxu0 0.0
      %1546 = vmatpush1.msra.mxu0 %v1389
      %1547 = vmatprep.subr.mxu0 0.0
      %1548 = vmatpush1.msra.mxu0 %v1390
      %1549 = vmatprep.subr.mxu0 0.0
      %1550 = vmatpush1.msra.mxu0 %v1391
      %1551 = vmatprep.subr.mxu0 0.0
      %1552 = vmatpush1.msra.mxu0 %v1392
      %1553 = vmatprep.subr.mxu0 0.0
      %1554 = vmatpush1.msra.mxu0 %v1393
      %1555 = vmatprep.subr.mxu0 0.0
      %1556 = vmatpush1.msra.mxu0 %v1394
      %1557 = vmatprep.subr.mxu0 0.0
      %1558 = vmatpush1.msra.mxu0 %v1395
      %1559 = vmatprep.subr.mxu0 0.0
      %1560 = vmatpush1.msra.mxu0 %v1396
      %1561 = vmatprep.subr.mxu0 0.0
      %1562 = vmatpush1.msra.mxu0 %v1397
      %1563 = vmatprep.subr.mxu0 0.0
      %1564 = vmatpush1.msra.mxu0 %v1398
      %1565 = vmatprep.subr.mxu0 0.0
      %1566 = vmatpush1.msra.mxu0 %v1399
      %1567 = vmatprep.subr.mxu0 0.0
      %1568 = vmatpush1.msra.mxu0 %v1400
      %1569 = vmatprep.subr.mxu0 0.0
      %1570 = vmatpush1.msra.mxu0 %v1401
      %1571 = vmatprep.subr.mxu0 0.0
      %1572 = vmatpush1.msra.mxu0 %v1402
      %1573 = vmatprep.subr.mxu0 0.0
      %1574 = vmatpush1.msra.mxu0 %v1403
      %1575 = vmatprep.subr.mxu0 0.0
      %1576 = vmatpush1.msra.mxu0 %v1404
      %1577 = vmatprep.subr.mxu0 0.0
      %1578 = vmatpush1.msra.mxu0 %v1405
      %1579 = vmatprep.subr.mxu0 0.0
      %1580 = vmatpush1.msra.mxu0 %v1406
      %1581 = vmatprep.subr.mxu0 0.0
      %1582 = vmatpush1.msra.mxu0 %v1407
      %1583 = vmatprep.subr.mxu0 0.0
      %1584 = vmatpush1.msra.mxu0 %v1408
      %1585 = vmatprep.subr.mxu0 0.0
      %1586 = vmatpush1.msra.mxu0 %v1409
      %1587 = vmatprep.mubr.f32.mxu0 %v1511
      %1588 = vmatmul.mubr.f32.gmra.mrb[0].mxu0 %v1509
      %v1589 = vpop.f32.mrb[0].mxu0
      %v1590 = vadd.f32 0.0, %v1589
      %v1591 = vpop.f32.mrb[0].mxu0
      %1592 = vmatprep.mubr.f32.mxu0 %v1512
      %1593 = vmatmul.mubr.f32.gmra.mrb[0].mxu0 %v1510
      %v1594 = vpop.f32.mrb[0].mxu0
      %v1595 = vadd.f32 0.0, %v1594
      %v1596 = vpop.f32.mrb[0].mxu0
      %1597 = vdwg.mxu0
      %1598 = vmatprep.subr.mxu0 0.0
      %1599 = vmatpush1.msra.mxu0 %v1410
      %1600 = vmatprep.subr.mxu0 0.0
      %1601 = vmatpush1.msra.mxu0 %v1411
      %1602 = vmatprep.subr.mxu0 0.0
      %1603 = vmatpush1.msra.mxu0 %v1412
      %1604 = vmatprep.subr.mxu0 0.0
      %1605 = vmatpush1.msra.mxu0 %v1413
      %1606 = vmatprep.subr.mxu0 0.0
      %1607 = vmatpush1.msra.mxu0 %v1414
      %1608 = vmatprep.subr.mxu0 0.0
      %1609 = vmatpush1.msra.mxu0 %v1415
      %1610 = vmatprep.subr.mxu0 0.0
      %1611 = vmatpush1.msra.mxu0 %v1416
      %1612 = vmatprep.subr.mxu0 0.0
      %1613 = vmatpush1.msra.mxu0 %v1417
      %1614 = vmatprep.subr.mxu0 0.0
      %1615 = vmatpush1.msra.mxu0 %v1418
      %1616 = vmatprep.subr.mxu0 0.0
      %1617 = vmatpush1.msra.mxu0 %v1419
      %1618 = vmatprep.subr.mxu0 0.0
      %1619 = vmatpush1.msra.mxu0 %v1420
      %1620 = vmatprep.subr.mxu0 0.0
      %1621 = vmatpush1.msra.mxu0 %v1421
      %1622 = vmatprep.subr.mxu0 0.0
      %1623 = vmatpush1.msra.mxu0 %v1422
      %1624 = vmatprep.subr.mxu0 0.0
      %1625 = vmatpush1.msra.mxu0 %v1423
      %1626 = vmatprep.subr.mxu0 0.0
      %1627 = vmatpush1.msra.mxu0 %v1424
      %1628 = vmatprep.subr.mxu0 0.0
      %1629 = vmatpush1.msra.mxu0 %v1425
      %1630 = vmatprep.subr.mxu0 0.0
      %1631 = vmatpush1.msra.mxu0 %v1426
      %1632 = vmatprep.subr.mxu0 0.0
      %1633 = vmatpush1.msra.mxu0 %v1427
      %1634 = vmatprep.subr.mxu0 0.0
      %1635 = vmatpush1.msra.mxu0 %v1428
      %1636 = vmatprep.subr.mxu0 0.0
      %1637 = vmatpush1.msra.mxu0 %v1429
      %1638 = vmatprep.subr.mxu0 0.0
      %1639 = vmatpush1.msra.mxu0 %v1430
      %1640 = vmatprep.subr.mxu0 0.0
      %1641 = vmatpush1.msra.mxu0 %v1431
      %1642 = vmatprep.subr.mxu0 0.0
      %1643 = vmatpush1.msra.mxu0 %v1432
      %1644 = vmatprep.subr.mxu0 0.0
      %1645 = vmatpush1.msra.mxu0 %v1433
      %1646 = vmatprep.subr.mxu0 0.0
      %1647 = vmatpush1.msra.mxu0 %v1434
      %1648 = vmatprep.subr.mxu0 0.0
      %1649 = vmatpush1.msra.mxu0 %v1435
      %1650 = vmatprep.subr.mxu0 0.0
      %1651 = vmatpush1.msra.mxu0 %v1436
      %1652 = vmatprep.subr.mxu0 0.0
      %1653 = vmatpush1.msra.mxu0 %v1437
      %1654 = vmatprep.subr.mxu0 0.0
      %1655 = vmatpush1.msra.mxu0 %v1438
      %1656 = vmatprep.subr.mxu0 0.0
      %1657 = vmatpush1.msra.mxu0 %v1439
      %1658 = vmatprep.subr.mxu0 0.0
      %1659 = vmatpush1.msra.mxu0 %v1440
      %1660 = vmatprep.subr.mxu0 0.0
      %1661 = vmatpush1.msra.mxu0 %v1441
      %1662 = vmatprep.mubr.f32.mxu0 %v1515
      %1663 = vmatmul.mubr.f32.gmra.mrb[0].mxu0 %v1513
      %v1664 = vpop.f32.mrb[0].mxu0
      %v1665 = vadd.f32 %v1590, %v1664
      %v1666 = vpop.f32.mrb[0].mxu0
      %1667 = vmatprep.mubr.f32.mxu0 %v1516
      %1668 = vmatmul.mubr.f32.gmra.mrb[0].mxu0 %v1514
      %v1669 = vpop.f32.mrb[0].mxu0
      %v1670 = vadd.f32 %v1595, %v1669
      %v1671 = vpop.f32.mrb[0].mxu0
      %1672 = vdwg.mxu0
      %1673 = vmatprep.subr.mxu0 0.0
      %1674 = vmatpush1.msra.mxu0 %v1442
      %1675 = vmatprep.subr.mxu0 0.0
      %1676 = vmatpush1.msra.mxu0 %v1443
      %1677 = vmatprep.subr.mxu0 0.0
      %1678 = vmatpush1.msra.mxu0 %v1444
      %1679 = vmatprep.subr.mxu0 0.0
      %1680 = vmatpush1.msra.mxu0 %v1445
      %1681 = vmatprep.subr.mxu0 0.0
      %1682 = vmatpush1.msra.mxu0 %v1446
      %1683 = vmatprep.subr.mxu0 0.0
      %1684 = vmatpush1.msra.mxu0 %v1447
      %1685 = vmatprep.subr.mxu0 0.0
      %1686 = vmatpush1.msra.mxu0 %v1448
      %1687 = vmatprep.subr.mxu0 0.0
      %1688 = vmatpush1.msra.mxu0 %v1449
      %1689 = vmatprep.subr.mxu0 0.0
      %1690 = vmatpush1.msra.mxu0 0.0
      %1691 = vmatprep.subr.mxu0 0.0
      %1692 = vmatpush1.msra.mxu0 0.0
      %1693 = vmatprep.subr.mxu0 0.0
      %1694 = vmatpush1.msra.mxu0 0.0
      %1695 = vmatprep.subr.mxu0 0.0
      %1696 = vmatpush1.msra.mxu0 0.0
      %1697 = vmatprep.subr.mxu0 0.0
      %1698 = vmatpush1.msra.mxu0 0.0
      %1699 = vmatprep.subr.mxu0 0.0
      %1700 = vmatpush1.msra.mxu0 0.0
      %1701 = vmatprep.subr.mxu0 0.0
      %1702 = vmatpush1.msra.mxu0 0.0
      %1703 = vmatprep.subr.mxu0 0.0
      %1704 = vmatpush1.msra.mxu0 0.0
      %1705 = vmatprep.subr.mxu0 0.0
      %1706 = vmatpush1.msra.mxu0 0.0
      %1707 = vmatprep.subr.mxu0 0.0
      %1708 = vmatpush1.msra.mxu0 0.0
      %1709 = vmatprep.subr.mxu0 0.0
      %1710 = vmatpush1.msra.mxu0 0.0
      %1711 = vmatprep.subr.mxu0 0.0
      %1712 = vmatpush1.msra.mxu0 0.0
      %1713 = vmatprep.subr.mxu0 0.0
      %1714 = vmatpush1.msra.mxu0 0.0
      %1715 = vmatprep.subr.mxu0 0.0
      %1716 = vmatpush1.msra.mxu0 0.0
      %1717 = vmatprep.subr.mxu0 0.0
      %1718 = vmatpush1.msra.mxu0 0.0
      %1719 = vmatprep.subr.mxu0 0.0
      %1720 = vmatpush1.msra.mxu0 0.0
      %1721 = vmatprep.subr.mxu0 0.0
      %1722 = vmatpush1.msra.mxu0 0.0
      %1723 = vmatprep.subr.mxu0 0.0
      %1724 = vmatpush1.msra.mxu0 0.0
      %1725 = vmatprep.subr.mxu0 0.0
      %1726 = vmatpush1.msra.mxu0 0.0
      %1727 = vmatprep.subr.mxu0 0.0
      %1728 = vmatpush1.msra.mxu0 0.0
      %1729 = vmatprep.subr.mxu0 0.0
      %1730 = vmatpush1.msra.mxu0 0.0
      %1731 = vmatprep.subr.mxu0 0.0
      %1732 = vmatpush1.msra.mxu0 0.0
      %1733 = vmatprep.subr.mxu0 0.0
      %1734 = vmatpush1.msra.mxu0 0.0
      %1735 = vmatprep.subr.mxu0 0.0
      %1736 = vmatpush1.msra.mxu0 0.0
      %1737 = vmatprep.mubr.f32.mxu0 0.0
      %1738 = vmatmul.mubr.f32.gmra.mrb[0].mxu0 %v1518
      %v1739 = vpop.f32.mrb[0].mxu0
      %v1740 = vadd.f32 %v1665, %v1739
      %v1741 = vpop.f32.mrb[0].mxu0
      %1742 = vmatprep.mubr.f32.mxu0 0.0
      %1743 = vmatmul.mubr.f32.gmra.mrb[0].mxu0 %v1521
      %v1744 = vpop.f32.mrb[0].mxu0
      %v1745 = vadd.f32 %v1670, %v1744
      %v1746 = vpop.f32.mrb[0].mxu0
      %1747 = vdwg.mxu0
      %v1749 = vlaneseq
      %v1750 = vshrl.u32 %v1749, 7
      %v1751 = vsub.s32 0, %v1750
      %v1752 = vrot.slane %v1451, %v1751
      %v1754 = vmul.f32 %v1740, %v1752
      %v1755 = vmul.f32 %v1745, %v1752
      %v1757 = vlaneseq
      %v1758 = vshrl.u32 %v1757, 7
      %v1759 = vsub.s32 0, %v1758
      %v1760 = vrot.slane %v1453, %v1759
      %v1762 = vadd.f32 %v1754, %v1760
      %v1763 = vadd.f32 %v1755, %v1760
      %v1764 = vmax.f32 %v1762, 0.0
      %v1765 = vmax.f32 %v1763, 0.0
      %1766 = vst.msk [vmem:[#allocation3 + $0x8] sm:$0xff] %vm658, %v1764
      %1767 = vst.msk [vmem:[#allocation3 + $0x10] sm:$0xff] %vm658, %v1765
      %s1768 = scalar_lea.vmem %s4, 1152
      %v1769 = vld [vmem:[%s1768] sm:$0xff]
      %v1770 = vld [vmem:[%s1768 + $0x8] sm:$0xff]
      %v1771 = vld [vmem:[%s1768 + $0x10] sm:$0xff]
      %v1772 = vld [vmem:[%s1768 + $0x18] sm:$0xff]
      %v1773 = vld [vmem:[%s1768 + $0x20] sm:$0xff]
      %v1774 = vld [vmem:[%s1768 + $0x28] sm:$0xff]
      %v1775 = vld [vmem:[%s1768 + $0x30] sm:$0xff]
      %v1776 = vld [vmem:[%s1768 + $0x38] sm:$0xff]
      %v1777 = vld [vmem:[%s1768 + $0x40] sm:$0xff]
      %v1778 = vld [vmem:[%s1768 + $0x48] sm:$0xff]
      %v1779 = vld [vmem:[%s1768 + $0x50] sm:$0xff]
      %v1780 = vld [vmem:[%s1768 + $0x58] sm:$0xff]
      %v1781 = vld [vmem:[%s1768 + $0x60] sm:$0xff]
      %v1782 = vld [vmem:[%s1768 + $0x68] sm:$0xff]
      %v1783 = vld [vmem:[%s1768 + $0x70] sm:$0xff]
      %v1784 = vld [vmem:[%s1768 + $0x78] sm:$0xff]
      %v1785 = vld [vmem:[%s1768 + $0x80] sm:$0xff]
      %v1786 = vld [vmem:[%s1768 + $0x88] sm:$0xff]
      %v1787 = vld [vmem:[%s1768 + $0x90] sm:$0xff]
      %v1788 = vld [vmem:[%s1768 + $0x98] sm:$0xff]
      %v1789 = vld [vmem:[%s1768 + $0xa0] sm:$0xff]
      %v1790 = vld [vmem:[%s1768 + $0xa8] sm:$0xff]
      %v1791 = vld [vmem:[%s1768 + $0xb0] sm:$0xff]
      %v1792 = vld [vmem:[%s1768 + $0xb8] sm:$0xff]
      %v1793 = vld [vmem:[%s1768 + $0xc0] sm:$0xff]
      %v1794 = vld [vmem:[%s1768 + $0xc8] sm:$0xff]
      %v1795 = vld [vmem:[%s1768 + $0xd0] sm:$0xff]
      %v1796 = vld [vmem:[%s1768 + $0xd8] sm:$0xff]
      %v1797 = vld [vmem:[%s1768 + $0xe0] sm:$0xff]
      %v1798 = vld [vmem:[%s1768 + $0xe8] sm:$0xff]
      %v1799 = vld [vmem:[%s1768 + $0xf0] sm:$0xff]
      %v1800 = vld [vmem:[%s1768 + $0xf8] sm:$0xff]
      %v1801 = vld [vmem:[%s1768 + $0x100] sm:$0xff]
      %v1802 = vld [vmem:[%s1768 + $0x108] sm:$0xff]
      %v1803 = vld [vmem:[%s1768 + $0x110] sm:$0xff]
      %v1804 = vld [vmem:[%s1768 + $0x118] sm:$0xff]
      %v1805 = vld [vmem:[%s1768 + $0x120] sm:$0xff]
      %v1806 = vld [vmem:[%s1768 + $0x128] sm:$0xff]
      %v1807 = vld [vmem:[%s1768 + $0x130] sm:$0xff]
      %v1808 = vld [vmem:[%s1768 + $0x138] sm:$0xff]
      %v1809 = vld [vmem:[%s1768 + $0x140] sm:$0xff]
      %v1810 = vld [vmem:[%s1768 + $0x148] sm:$0xff]
      %v1811 = vld [vmem:[%s1768 + $0x150] sm:$0xff]
      %v1812 = vld [vmem:[%s1768 + $0x158] sm:$0xff]
      %v1813 = vld [vmem:[%s1768 + $0x160] sm:$0xff]
      %v1814 = vld [vmem:[%s1768 + $0x168] sm:$0xff]
      %v1815 = vld [vmem:[%s1768 + $0x170] sm:$0xff]
      %v1816 = vld [vmem:[%s1768 + $0x178] sm:$0xff]
      %v1817 = vld [vmem:[%s1768 + $0x180] sm:$0xff]
      %v1818 = vld [vmem:[%s1768 + $0x188] sm:$0xff]
      %v1819 = vld [vmem:[%s1768 + $0x190] sm:$0xff]
      %v1820 = vld [vmem:[%s1768 + $0x198] sm:$0xff]
      %v1821 = vld [vmem:[%s1768 + $0x1a0] sm:$0xff]
      %v1822 = vld [vmem:[%s1768 + $0x1a8] sm:$0xff]
      %v1823 = vld [vmem:[%s1768 + $0x1b0] sm:$0xff]
      %v1824 = vld [vmem:[%s1768 + $0x1b8] sm:$0xff]
      %v1825 = vld [vmem:[%s1768 + $0x1c0] sm:$0xff]
      %v1826 = vld [vmem:[%s1768 + $0x1c8] sm:$0xff]
      %v1827 = vld [vmem:[%s1768 + $0x1d0] sm:$0xff]
      %v1828 = vld [vmem:[%s1768 + $0x1d8] sm:$0xff]
      %v1829 = vld [vmem:[%s1768 + $0x1e0] sm:$0xff]
      %v1830 = vld [vmem:[%s1768 + $0x1e8] sm:$0xff]
      %v1831 = vld [vmem:[%s1768 + $0x1f0] sm:$0xff]
      %v1832 = vld [vmem:[%s1768 + $0x1f8] sm:$0xff]
      %v1833 = vld [vmem:[%s1768 + $0x200] sm:$0xff]
      %v1834 = vld [vmem:[%s1768 + $0x208] sm:$0xff]
      %v1835 = vld [vmem:[%s1768 + $0x210] sm:$0xff]
      %v1836 = vld [vmem:[%s1768 + $0x218] sm:$0xff]
      %v1837 = vld [vmem:[%s1768 + $0x220] sm:$0xff]
      %v1838 = vld [vmem:[%s1768 + $0x228] sm:$0xff]
      %v1839 = vld [vmem:[%s1768 + $0x230] sm:$0xff]
      %v1840 = vld [vmem:[%s1768 + $0x238] sm:$0xff]
      %s1841 = scalar_lea.vmem %s5, 2
      %v1842 = vld [vmem:[%s1841] sm:$0x1]
      %s1843 = scalar_lea.vmem %s6, 2
      %v1844 = vld [vmem:[%s1843] sm:$0x1]
      %v1845 = vld [vmem:[#allocation3 + $0x3] sm:$0xff]
      %v1846 = vld [vmem:[#allocation3 + $0xb] sm:$0xff]
      %v1847 = vsel %vm751, %v1845, 0.0
      %v1848 = vsel %vm752, %v1846, 0.0
      %v1849 = vld [vmem:[#allocation3 + $0x4] sm:$0xff]
      %v1850 = vld [vmem:[#allocation3 + $0xc] sm:$0xff]
      %v1851 = vld [vmem:[#allocation3 + $0x5] sm:$0xff]
      %v1852 = vld [vmem:[#allocation3 + $0xd] sm:$0xff]
      %v1853 = vsel %vm1069, %v1851, 0.0
      %v1854 = vsel %vm1070, %v1852, 0.0
      %v1855 = vld [vmem:[#allocation3 + $0x7] sm:$0xff]
      %v1856 = vld [vmem:[#allocation3 + $0xf] sm:$0xff]
      %v1857 = vsel %vm751, %v1855, 0.0
      %v1858 = vsel %vm752, %v1856, 0.0
      %v1859 = vld [vmem:[#allocation3 + $0x8] sm:$0xff]
      %v1860 = vld [vmem:[#allocation3 + $0x10] sm:$0xff]
      %v1861 = vld [vmem:[#allocation3 + $0x9] sm:$0xff]
      %v1862 = vld [vmem:[#allocation3 + $0x11] sm:$0xff]
      %v1863 = vsel %vm1069, %v1861, 0.0
      %v1864 = vsel %vm1070, %v1862, 0.0
      %v1865 = vld [vmem:[#allocation3 + $0x13] sm:$0xff]
      %v1866 = vsel %vm751, %v1846, 0.0
      %v1867 = vsel %vm752, %v1865, 0.0
      %v1868 = vld [vmem:[#allocation3 + $0x14] sm:$0xff]
      %v1869 = vld [vmem:[#allocation3 + $0x15] sm:$0xff]
      %v1870 = vsel %vm1069, %v1852, 0.0
      %v1871 = vsel %vm1070, %v1869, 0.0
      %1874 = vrot.lane.b32.xlu0 %v1849, 64
      %v1875 = vpop.permute.xlu0 %1874
      %1876 = vrot.lane.b32.xlu0 %v1850, 64
      %v1877 = vpop.permute.xlu0 %1876
      %1882 = vrot.lane.b32.xlu0 %v1857, 64
      %v1883 = vpop.permute.xlu0 %1882
      %1884 = vrot.lane.b32.xlu0 %v1858, 64
      %v1885 = vpop.permute.xlu0 %1884
      %1890 = vrot.lane.b32.xlu0 %v1863, 64
      %v1891 = vpop.permute.xlu0 %1890
      %1892 = vrot.lane.b32.xlu0 %v1864, 64
      %v1893 = vpop.permute.xlu0 %1892
      %1897 = vrot.lane.b32.xlu0 %v1868, 64
      %v1898 = vpop.permute.xlu0 %1897
      %v1900 = vsel %vm658, %v1847, %v1875
      %v1901 = vsel %vm658, %v1848, %v1877
      %v1902 = vsel %vm658, %v1853, %v1883
      %v1903 = vsel %vm658, %v1854, %v1885
      %v1904 = vsel %vm658, %v1859, %v1891
      %v1905 = vsel %vm658, %v1860, %v1893
      %v1906 = vsel %vm658, %v1866, %v1877
      %v1907 = vsel %vm658, %v1867, %v1898
      %v1909 = vsel %vm658, %v1870, 0
      %v1912 = vsel %vm658, %v1871, 0
      %1914 = vmatprep.subr.mxu0 0.0
      %1915 = vmatpush1.msra.mxu0 %v1769
      %1916 = vmatprep.subr.mxu0 0.0
      %1917 = vmatpush1.msra.mxu0 %v1770
      %1918 = vmatprep.subr.mxu0 0.0
      %1919 = vmatpush1.msra.mxu0 %v1771
      %1920 = vmatprep.subr.mxu0 0.0
      %1921 = vmatpush1.msra.mxu0 %v1772
      %1922 = vmatprep.subr.mxu0 0.0
      %1923 = vmatpush1.msra.mxu0 %v1773
      %1924 = vmatprep.subr.mxu0 0.0
      %1925 = vmatpush1.msra.mxu0 %v1774
      %1926 = vmatprep.subr.mxu0 0.0
      %1927 = vmatpush1.msra.mxu0 %v1775
      %1928 = vmatprep.subr.mxu0 0.0
      %1929 = vmatpush1.msra.mxu0 %v1776
      %1930 = vmatprep.subr.mxu0 0.0
      %1931 = vmatpush1.msra.mxu0 %v1777
      %1932 = vmatprep.subr.mxu0 0.0
      %1933 = vmatpush1.msra.mxu0 %v1778
      %1934 = vmatprep.subr.mxu0 0.0
      %1935 = vmatpush1.msra.mxu0 %v1779
      %1936 = vmatprep.subr.mxu0 0.0
      %1937 = vmatpush1.msra.mxu0 %v1780
      %1938 = vmatprep.subr.mxu0 0.0
      %1939 = vmatpush1.msra.mxu0 %v1781
      %1940 = vmatprep.subr.mxu0 0.0
      %1941 = vmatpush1.msra.mxu0 %v1782
      %1942 = vmatprep.subr.mxu0 0.0
      %1943 = vmatpush1.msra.mxu0 %v1783
      %1944 = vmatprep.subr.mxu0 0.0
      %1945 = vmatpush1.msra.mxu0 %v1784
      %1946 = vmatprep.subr.mxu0 0.0
      %1947 = vmatpush1.msra.mxu0 %v1785
      %1948 = vmatprep.subr.mxu0 0.0
      %1949 = vmatpush1.msra.mxu0 %v1786
      %1950 = vmatprep.subr.mxu0 0.0
      %1951 = vmatpush1.msra.mxu0 %v1787
      %1952 = vmatprep.subr.mxu0 0.0
      %1953 = vmatpush1.msra.mxu0 %v1788
      %1954 = vmatprep.subr.mxu0 0.0
      %1955 = vmatpush1.msra.mxu0 %v1789
      %1956 = vmatprep.subr.mxu0 0.0
      %1957 = vmatpush1.msra.mxu0 %v1790
      %1958 = vmatprep.subr.mxu0 0.0
      %1959 = vmatpush1.msra.mxu0 %v1791
      %1960 = vmatprep.subr.mxu0 0.0
      %1961 = vmatpush1.msra.mxu0 %v1792
      %1962 = vmatprep.subr.mxu0 0.0
      %1963 = vmatpush1.msra.mxu0 %v1793
      %1964 = vmatprep.subr.mxu0 0.0
      %1965 = vmatpush1.msra.mxu0 %v1794
      %1966 = vmatprep.subr.mxu0 0.0
      %1967 = vmatpush1.msra.mxu0 %v1795
      %1968 = vmatprep.subr.mxu0 0.0
      %1969 = vmatpush1.msra.mxu0 %v1796
      %1970 = vmatprep.subr.mxu0 0.0
      %1971 = vmatpush1.msra.mxu0 %v1797
      %1972 = vmatprep.subr.mxu0 0.0
      %1973 = vmatpush1.msra.mxu0 %v1798
      %1974 = vmatprep.subr.mxu0 0.0
      %1975 = vmatpush1.msra.mxu0 %v1799
      %1976 = vmatprep.subr.mxu0 0.0
      %1977 = vmatpush1.msra.mxu0 %v1800
      %1978 = vmatprep.mubr.f32.mxu0 %v1902
      %1979 = vmatmul.mubr.f32.gmra.mrb[0].mxu0 %v1900
      %v1980 = vpop.f32.mrb[0].mxu0
      %v1981 = vadd.f32 0.0, %v1980
      %v1982 = vpop.f32.mrb[0].mxu0
      %1983 = vmatprep.mubr.f32.mxu0 %v1903
      %1984 = vmatmul.mubr.f32.gmra.mrb[0].mxu0 %v1901
      %v1985 = vpop.f32.mrb[0].mxu0
      %v1986 = vadd.f32 0.0, %v1985
      %v1987 = vpop.f32.mrb[0].mxu0
      %1988 = vdwg.mxu0
      %1989 = vmatprep.subr.mxu0 0.0
      %1990 = vmatpush1.msra.mxu0 %v1801
      %1991 = vmatprep.subr.mxu0 0.0
      %1992 = vmatpush1.msra.mxu0 %v1802
      %1993 = vmatprep.subr.mxu0 0.0
      %1994 = vmatpush1.msra.mxu0 %v1803
      %1995 = vmatprep.subr.mxu0 0.0
      %1996 = vmatpush1.msra.mxu0 %v1804
      %1997 = vmatprep.subr.mxu0 0.0
      %1998 = vmatpush1.msra.mxu0 %v1805
      %1999 = vmatprep.subr.mxu0 0.0
      %2000 = vmatpush1.msra.mxu0 %v1806
      %2001 = vmatprep.subr.mxu0 0.0
      %2002 = vmatpush1.msra.mxu0 %v1807
      %2003 = vmatprep.subr.mxu0 0.0
      %2004 = vmatpush1.msra.mxu0 %v1808
      %2005 = vmatprep.subr.mxu0 0.0
      %2006 = vmatpush1.msra.mxu0 %v1809
      %2007 = vmatprep.subr.mxu0 0.0
      %2008 = vmatpush1.msra.mxu0 %v1810
      %2009 = vmatprep.subr.mxu0 0.0
      %2010 = vmatpush1.msra.mxu0 %v1811
      %2011 = vmatprep.subr.mxu0 0.0
      %2012 = vmatpush1.msra.mxu0 %v1812
      %2013 = vmatprep.subr.mxu0 0.0
      %2014 = vmatpush1.msra.mxu0 %v1813
      %2015 = vmatprep.subr.mxu0 0.0
      %2016 = vmatpush1.msra.mxu0 %v1814
      %2017 = vmatprep.subr.mxu0 0.0
      %2018 = vmatpush1.msra.mxu0 %v1815
      %2019 = vmatprep.subr.mxu0 0.0
      %2020 = vmatpush1.msra.mxu0 %v1816
      %2021 = vmatprep.subr.mxu0 0.0
      %2022 = vmatpush1.msra.mxu0 %v1817
      %2023 = vmatprep.subr.mxu0 0.0
      %2024 = vmatpush1.msra.mxu0 %v1818
      %2025 = vmatprep.subr.mxu0 0.0
      %2026 = vmatpush1.msra.mxu0 %v1819
      %2027 = vmatprep.subr.mxu0 0.0
      %2028 = vmatpush1.msra.mxu0 %v1820
      %2029 = vmatprep.subr.mxu0 0.0
      %2030 = vmatpush1.msra.mxu0 %v1821
      %2031 = vmatprep.subr.mxu0 0.0
      %2032 = vmatpush1.msra.mxu0 %v1822
      %2033 = vmatprep.subr.mxu0 0.0
      %2034 = vmatpush1.msra.mxu0 %v1823
      %2035 = vmatprep.subr.mxu0 0.0
      %2036 = vmatpush1.msra.mxu0 %v1824
      %2037 = vmatprep.subr.mxu0 0.0
      %2038 = vmatpush1.msra.mxu0 %v1825
      %2039 = vmatprep.subr.mxu0 0.0
      %2040 = vmatpush1.msra.mxu0 %v1826
      %2041 = vmatprep.subr.mxu0 0.0
      %2042 = vmatpush1.msra.mxu0 %v1827
      %2043 = vmatprep.subr.mxu0 0.0
      %2044 = vmatpush1.msra.mxu0 %v1828
      %2045 = vmatprep.subr.mxu0 0.0
      %2046 = vmatpush1.msra.mxu0 %v1829
      %2047 = vmatprep.subr.mxu0 0.0
      %2048 = vmatpush1.msra.mxu0 %v1830
      %2049 = vmatprep.subr.mxu0 0.0
      %2050 = vmatpush1.msra.mxu0 %v1831
      %2051 = vmatprep.subr.mxu0 0.0
      %2052 = vmatpush1.msra.mxu0 %v1832
      %2053 = vmatprep.mubr.f32.mxu0 %v1906
      %2054 = vmatmul.mubr.f32.gmra.mrb[0].mxu0 %v1904
      %v2055 = vpop.f32.mrb[0].mxu0
      %v2056 = vadd.f32 %v1981, %v2055
      %v2057 = vpop.f32.mrb[0].mxu0
      %2058 = vmatprep.mubr.f32.mxu0 %v1907
      %2059 = vmatmul.mubr.f32.gmra.mrb[0].mxu0 %v1905
      %v2060 = vpop.f32.mrb[0].mxu0
      %v2061 = vadd.f32 %v1986, %v2060
      %v2062 = vpop.f32.mrb[0].mxu0
      %2063 = vdwg.mxu0
      %2064 = vmatprep.subr.mxu0 0.0
      %2065 = vmatpush1.msra.mxu0 %v1833
      %2066 = vmatprep.subr.mxu0 0.0
      %2067 = vmatpush1.msra.mxu0 %v1834
      %2068 = vmatprep.subr.mxu0 0.0
      %2069 = vmatpush1.msra.mxu0 %v1835
      %2070 = vmatprep.subr.mxu0 0.0
      %2071 = vmatpush1.msra.mxu0 %v1836
      %2072 = vmatprep.subr.mxu0 0.0
      %2073 = vmatpush1.msra.mxu0 %v1837
      %2074 = vmatprep.subr.mxu0 0.0
      %2075 = vmatpush1.msra.mxu0 %v1838
      %2076 = vmatprep.subr.mxu0 0.0
      %2077 = vmatpush1.msra.mxu0 %v1839
      %2078 = vmatprep.subr.mxu0 0.0
      %2079 = vmatpush1.msra.mxu0 %v1840
      %2080 = vmatprep.subr.mxu0 0.0
      %2081 = vmatpush1.msra.mxu0 0.0
      %2082 = vmatprep.subr.mxu0 0.0
      %2083 = vmatpush1.msra.mxu0 0.0
      %2084 = vmatprep.subr.mxu0 0.0
      %2085 = vmatpush1.msra.mxu0 0.0
      %2086 = vmatprep.subr.mxu0 0.0
      %2087 = vmatpush1.msra.mxu0 0.0
      %2088 = vmatprep.subr.mxu0 0.0
      %2089 = vmatpush1.msra.mxu0 0.0
      %2090 = vmatprep.subr.mxu0 0.0
      %2091 = vmatpush1.msra.mxu0 0.0
      %2092 = vmatprep.subr.mxu0 0.0
      %2093 = vmatpush1.msra.mxu0 0.0
      %2094 = vmatprep.subr.mxu0 0.0
      %2095 = vmatpush1.msra.mxu0 0.0
      %2096 = vmatprep.subr.mxu0 0.0
      %2097 = vmatpush1.msra.mxu0 0.0
      %2098 = vmatprep.subr.mxu0 0.0
      %2099 = vmatpush1.msra.mxu0 0.0
      %2100 = vmatprep.subr.mxu0 0.0
      %2101 = vmatpush1.msra.mxu0 0.0
      %2102 = vmatprep.subr.mxu0 0.0
      %2103 = vmatpush1.msra.mxu0 0.0
      %2104 = vmatprep.subr.mxu0 0.0
      %2105 = vmatpush1.msra.mxu0 0.0
      %2106 = vmatprep.subr.mxu0 0.0
      %2107 = vmatpush1.msra.mxu0 0.0
      %2108 = vmatprep.subr.mxu0 0.0
      %2109 = vmatpush1.msra.mxu0 0.0
      %2110 = vmatprep.subr.mxu0 0.0
      %2111 = vmatpush1.msra.mxu0 0.0
      %2112 = vmatprep.subr.mxu0 0.0
      %2113 = vmatpush1.msra.mxu0 0.0
      %2114 = vmatprep.subr.mxu0 0.0
      %2115 = vmatpush1.msra.mxu0 0.0
      %2116 = vmatprep.subr.mxu0 0.0
      %2117 = vmatpush1.msra.mxu0 0.0
      %2118 = vmatprep.subr.mxu0 0.0
      %2119 = vmatpush1.msra.mxu0 0.0
      %2120 = vmatprep.subr.mxu0 0.0
      %2121 = vmatpush1.msra.mxu0 0.0
      %2122 = vmatprep.subr.mxu0 0.0
      %2123 = vmatpush1.msra.mxu0 0.0
      %2124 = vmatprep.subr.mxu0 0.0
      %2125 = vmatpush1.msra.mxu0 0.0
      %2126 = vmatprep.subr.mxu0 0.0
      %2127 = vmatpush1.msra.mxu0 0.0
      %2128 = vmatprep.mubr.f32.mxu0 0.0
      %2129 = vmatmul.mubr.f32.gmra.mrb[0].mxu0 %v1909
      %v2130 = vpop.f32.mrb[0].mxu0
      %v2131 = vadd.f32 %v2056, %v2130
      %v2132 = vpop.f32.mrb[0].mxu0
      %2133 = vmatprep.mubr.f32.mxu0 0.0
      %2134 = vmatmul.mubr.f32.gmra.mrb[0].mxu0 %v1912
      %v2135 = vpop.f32.mrb[0].mxu0
      %v2136 = vadd.f32 %v2061, %v2135
      %v2137 = vpop.f32.mrb[0].mxu0
      %2138 = vdwg.mxu0
      %v2140 = vlaneseq
      %v2141 = vshrl.u32 %v2140, 7
      %v2142 = vsub.s32 0, %v2141
      %v2143 = vrot.slane %v1842, %v2142
      %v2145 = vmul.f32 %v2131, %v2143
      %v2146 = vmul.f32 %v2136, %v2143
      %v2148 = vlaneseq
      %v2149 = vshrl.u32 %v2148, 7
      %v2150 = vsub.s32 0, %v2149
      %v2151 = vrot.slane %v1844, %v2150
      %v2153 = vadd.f32 %v2145, %v2151
      %v2154 = vadd.f32 %v2146, %v2151
      %v2155 = vmax.f32 %v2153, 0.0
      %v2156 = vmax.f32 %v2154, 0.0
      %2157 = vst.msk [vmem:[#allocation3 + $0x8] sm:$0xff] %vm658, %v2155
      %2158 = vst.msk [vmem:[#allocation3 + $0x10] sm:$0xff] %vm658, %v2156
      %s2159 = scalar_lea.vmem %s4, 1728
      %v2160 = vld [vmem:[%s2159] sm:$0xff]
      %v2161 = vld [vmem:[%s2159 + $0x8] sm:$0xff]
      %v2162 = vld [vmem:[%s2159 + $0x10] sm:$0xff]
      %v2163 = vld [vmem:[%s2159 + $0x18] sm:$0xff]
      %v2164 = vld [vmem:[%s2159 + $0x20] sm:$0xff]
      %v2165 = vld [vmem:[%s2159 + $0x28] sm:$0xff]
      %v2166 = vld [vmem:[%s2159 + $0x30] sm:$0xff]
      %v2167 = vld [vmem:[%s2159 + $0x38] sm:$0xff]
      %v2168 = vld [vmem:[%s2159 + $0x40] sm:$0xff]
      %v2169 = vld [vmem:[%s2159 + $0x48] sm:$0xff]
      %v2170 = vld [vmem:[%s2159 + $0x50] sm:$0xff]
      %v2171 = vld [vmem:[%s2159 + $0x58] sm:$0xff]
      %v2172 = vld [vmem:[%s2159 + $0x60] sm:$0xff]
      %v2173 = vld [vmem:[%s2159 + $0x68] sm:$0xff]
      %v2174 = vld [vmem:[%s2159 + $0x70] sm:$0xff]
      %v2175 = vld [vmem:[%s2159 + $0x78] sm:$0xff]
      %v2176 = vld [vmem:[%s2159 + $0x80] sm:$0xff]
      %v2177 = vld [vmem:[%s2159 + $0x88] sm:$0xff]
      %v2178 = vld [vmem:[%s2159 + $0x90] sm:$0xff]
      %v2179 = vld [vmem:[%s2159 + $0x98] sm:$0xff]
      %v2180 = vld [vmem:[%s2159 + $0xa0] sm:$0xff]
      %v2181 = vld [vmem:[%s2159 + $0xa8] sm:$0xff]
      %v2182 = vld [vmem:[%s2159 + $0xb0] sm:$0xff]
      %v2183 = vld [vmem:[%s2159 + $0xb8] sm:$0xff]
      %v2184 = vld [vmem:[%s2159 + $0xc0] sm:$0xff]
      %v2185 = vld [vmem:[%s2159 + $0xc8] sm:$0xff]
      %v2186 = vld [vmem:[%s2159 + $0xd0] sm:$0xff]
      %v2187 = vld [vmem:[%s2159 + $0xd8] sm:$0xff]
      %v2188 = vld [vmem:[%s2159 + $0xe0] sm:$0xff]
      %v2189 = vld [vmem:[%s2159 + $0xe8] sm:$0xff]
      %v2190 = vld [vmem:[%s2159 + $0xf0] sm:$0xff]
      %v2191 = vld [vmem:[%s2159 + $0xf8] sm:$0xff]
      %v2192 = vld [vmem:[%s2159 + $0x100] sm:$0xff]
      %v2193 = vld [vmem:[%s2159 + $0x108] sm:$0xff]
      %v2194 = vld [vmem:[%s2159 + $0x110] sm:$0xff]
      %v2195 = vld [vmem:[%s2159 + $0x118] sm:$0xff]
      %v2196 = vld [vmem:[%s2159 + $0x120] sm:$0xff]
      %v2197 = vld [vmem:[%s2159 + $0x128] sm:$0xff]
      %v2198 = vld [vmem:[%s2159 + $0x130] sm:$0xff]
      %v2199 = vld [vmem:[%s2159 + $0x138] sm:$0xff]
      %v2200 = vld [vmem:[%s2159 + $0x140] sm:$0xff]
      %v2201 = vld [vmem:[%s2159 + $0x148] sm:$0xff]
      %v2202 = vld [vmem:[%s2159 + $0x150] sm:$0xff]
      %v2203 = vld [vmem:[%s2159 + $0x158] sm:$0xff]
      %v2204 = vld [vmem:[%s2159 + $0x160] sm:$0xff]
      %v2205 = vld [vmem:[%s2159 + $0x168] sm:$0xff]
      %v2206 = vld [vmem:[%s2159 + $0x170] sm:$0xff]
      %v2207 = vld [vmem:[%s2159 + $0x178] sm:$0xff]
      %v2208 = vld [vmem:[%s2159 + $0x180] sm:$0xff]
      %v2209 = vld [vmem:[%s2159 + $0x188] sm:$0xff]
      %v2210 = vld [vmem:[%s2159 + $0x190] sm:$0xff]
      %v2211 = vld [vmem:[%s2159 + $0x198] sm:$0xff]
      %v2212 = vld [vmem:[%s2159 + $0x1a0] sm:$0xff]
      %v2213 = vld [vmem:[%s2159 + $0x1a8] sm:$0xff]
      %v2214 = vld [vmem:[%s2159 + $0x1b0] sm:$0xff]
      %v2215 = vld [vmem:[%s2159 + $0x1b8] sm:$0xff]
      %v2216 = vld [vmem:[%s2159 + $0x1c0] sm:$0xff]
      %v2217 = vld [vmem:[%s2159 + $0x1c8] sm:$0xff]
      %v2218 = vld [vmem:[%s2159 + $0x1d0] sm:$0xff]
      %v2219 = vld [vmem:[%s2159 + $0x1d8] sm:$0xff]
      %v2220 = vld [vmem:[%s2159 + $0x1e0] sm:$0xff]
      %v2221 = vld [vmem:[%s2159 + $0x1e8] sm:$0xff]
      %v2222 = vld [vmem:[%s2159 + $0x1f0] sm:$0xff]
      %v2223 = vld [vmem:[%s2159 + $0x1f8] sm:$0xff]
      %v2224 = vld [vmem:[%s2159 + $0x200] sm:$0xff]
      %v2225 = vld [vmem:[%s2159 + $0x208] sm:$0xff]
      %v2226 = vld [vmem:[%s2159 + $0x210] sm:$0xff]
      %v2227 = vld [vmem:[%s2159 + $0x218] sm:$0xff]
      %v2228 = vld [vmem:[%s2159 + $0x220] sm:$0xff]
      %v2229 = vld [vmem:[%s2159 + $0x228] sm:$0xff]
      %v2230 = vld [vmem:[%s2159 + $0x230] sm:$0xff]
      %v2231 = vld [vmem:[%s2159 + $0x238] sm:$0xff]
      %s2232 = scalar_lea.vmem %s5, 3
      %v2233 = vld [vmem:[%s2232] sm:$0x1]
      %s2234 = scalar_lea.vmem %s6, 3
      %v2235 = vld [vmem:[%s2234] sm:$0x1]
      %v2236 = vld [vmem:[#allocation3 + $0x3] sm:$0xff]
      %v2237 = vld [vmem:[#allocation3 + $0xb] sm:$0xff]
      %v2238 = vsel %vm751, %v2236, 0.0
      %v2239 = vsel %vm752, %v2237, 0.0
      %v2240 = vld [vmem:[#allocation3 + $0x4] sm:$0xff]
      %v2241 = vld [vmem:[#allocation3 + $0xc] sm:$0xff]
      %v2242 = vld [vmem:[#allocation3 + $0x5] sm:$0xff]
      %v2243 = vld [vmem:[#allocation3 + $0xd] sm:$0xff]
      %v2244 = vsel %vm1069, %v2242, 0.0
      %v2245 = vsel %vm1070, %v2243, 0.0
      %v2246 = vld [vmem:[#allocation3 + $0x7] sm:$0xff]
      %v2247 = vld [vmem:[#allocation3 + $0xf] sm:$0xff]
      %v2248 = vsel %vm751, %v2246, 0.0
      %v2249 = vsel %vm752, %v2247, 0.0
      %v2250 = vld [vmem:[#allocation3 + $0x8] sm:$0xff]
      %v2251 = vld [vmem:[#allocation3 + $0x10] sm:$0xff]
      %v2252 = vld [vmem:[#allocation3 + $0x9] sm:$0xff]
      %v2253 = vld [vmem:[#allocation3 + $0x11] sm:$0xff]
      %v2254 = vsel %vm1069, %v2252, 0.0
      %v2255 = vsel %vm1070, %v2253, 0.0
      %v2256 = vld [vmem:[#allocation3 + $0x13] sm:$0xff]
      %v2257 = vsel %vm751, %v2237, 0.0
      %v2258 = vsel %vm752, %v2256, 0.0
      %v2259 = vld [vmem:[#allocation3 + $0x14] sm:$0xff]
      %v2260 = vld [vmem:[#allocation3 + $0x15] sm:$0xff]
      %v2261 = vsel %vm1069, %v2243, 0.0
      %v2262 = vsel %vm1070, %v2260, 0.0
      %2265 = vrot.lane.b32.xlu0 %v2240, 64
      %v2266 = vpop.permute.xlu0 %2265
      %2267 = vrot.lane.b32.xlu0 %v2241, 64
      %v2268 = vpop.permute.xlu0 %2267
      %2273 = vrot.lane.b32.xlu0 %v2248, 64
      %v2274 = vpop.permute.xlu0 %2273
      %2275 = vrot.lane.b32.xlu0 %v2249, 64
      %v2276 = vpop.permute.xlu0 %2275
      %2281 = vrot.lane.b32.xlu0 %v2254, 64
      %v2282 = vpop.permute.xlu0 %2281
      %2283 = vrot.lane.b32.xlu0 %v2255, 64
      %v2284 = vpop.permute.xlu0 %2283
      %2288 = vrot.lane.b32.xlu0 %v2259, 64
      %v2289 = vpop.permute.xlu0 %2288
      %v2291 = vsel %vm658, %v2238, %v2266
      %v2292 = vsel %vm658, %v2239, %v2268
      %v2293 = vsel %vm658, %v2244, %v2274
      %v2294 = vsel %vm658, %v2245, %v2276
      %v2295 = vsel %vm658, %v2250, %v2282
      %v2296 = vsel %vm658, %v2251, %v2284
      %v2297 = vsel %vm658, %v2257, %v2268
      %v2298 = vsel %vm658, %v2258, %v2289
      %v2300 = vsel %vm658, %v2261, 0
      %v2303 = vsel %vm658, %v2262, 0
      %2305 = vmatprep.subr.mxu0 0.0
      %2306 = vmatpush1.msra.mxu0 %v2160
      %2307 = vmatprep.subr.mxu0 0.0
      %2308 = vmatpush1.msra.mxu0 %v2161
      %2309 = vmatprep.subr.mxu0 0.0
      %2310 = vmatpush1.msra.mxu0 %v2162
      %2311 = vmatprep.subr.mxu0 0.0
      %2312 = vmatpush1.msra.mxu0 %v2163
      %2313 = vmatprep.subr.mxu0 0.0
      %2314 = vmatpush1.msra.mxu0 %v2164
      %2315 = vmatprep.subr.mxu0 0.0
      %2316 = vmatpush1.msra.mxu0 %v2165
      %2317 = vmatprep.subr.mxu0 0.0
      %2318 = vmatpush1.msra.mxu0 %v2166
      %2319 = vmatprep.subr.mxu0 0.0
      %2320 = vmatpush1.msra.mxu0 %v2167
      %2321 = vmatprep.subr.mxu0 0.0
      %2322 = vmatpush1.msra.mxu0 %v2168
      %2323 = vmatprep.subr.mxu0 0.0
      %2324 = vmatpush1.msra.mxu0 %v2169
      %2325 = vmatprep.subr.mxu0 0.0
      %2326 = vmatpush1.msra.mxu0 %v2170
      %2327 = vmatprep.subr.mxu0 0.0
      %2328 = vmatpush1.msra.mxu0 %v2171
      %2329 = vmatprep.subr.mxu0 0.0
      %2330 = vmatpush1.msra.mxu0 %v2172
      %2331 = vmatprep.subr.mxu0 0.0
      %2332 = vmatpush1.msra.mxu0 %v2173
      %2333 = vmatprep.subr.mxu0 0.0
      %2334 = vmatpush1.msra.mxu0 %v2174
      %2335 = vmatprep.subr.mxu0 0.0
      %2336 = vmatpush1.msra.mxu0 %v2175
      %2337 = vmatprep.subr.mxu0 0.0
      %2338 = vmatpush1.msra.mxu0 %v2176
      %2339 = vmatprep.subr.mxu0 0.0
      %2340 = vmatpush1.msra.mxu0 %v2177
      %2341 = vmatprep.subr.mxu0 0.0
      %2342 = vmatpush1.msra.mxu0 %v2178
      %2343 = vmatprep.subr.mxu0 0.0
      %2344 = vmatpush1.msra.mxu0 %v2179
      %2345 = vmatprep.subr.mxu0 0.0
      %2346 = vmatpush1.msra.mxu0 %v2180
      %2347 = vmatprep.subr.mxu0 0.0
      %2348 = vmatpush1.msra.mxu0 %v2181
      %2349 = vmatprep.subr.mxu0 0.0
      %2350 = vmatpush1.msra.mxu0 %v2182
      %2351 = vmatprep.subr.mxu0 0.0
      %2352 = vmatpush1.msra.mxu0 %v2183
      %2353 = vmatprep.subr.mxu0 0.0
      %2354 = vmatpush1.msra.mxu0 %v2184
      %2355 = vmatprep.subr.mxu0 0.0
      %2356 = vmatpush1.msra.mxu0 %v2185
      %2357 = vmatprep.subr.mxu0 0.0
      %2358 = vmatpush1.msra.mxu0 %v2186
      %2359 = vmatprep.subr.mxu0 0.0
      %2360 = vmatpush1.msra.mxu0 %v2187
      %2361 = vmatprep.subr.mxu0 0.0
      %2362 = vmatpush1.msra.mxu0 %v2188
      %2363 = vmatprep.subr.mxu0 0.0
      %2364 = vmatpush1.msra.mxu0 %v2189
      %2365 = vmatprep.subr.mxu0 0.0
      %2366 = vmatpush1.msra.mxu0 %v2190
      %2367 = vmatprep.subr.mxu0 0.0
      %2368 = vmatpush1.msra.mxu0 %v2191
      %2369 = vmatprep.mubr.f32.mxu0 %v2293
      %2370 = vmatmul.mubr.f32.gmra.mrb[0].mxu0 %v2291
      %v2371 = vpop.f32.mrb[0].mxu0
      %v2372 = vadd.f32 0.0, %v2371
      %v2373 = vpop.f32.mrb[0].mxu0
      %2374 = vmatprep.mubr.f32.mxu0 %v2294
      %2375 = vmatmul.mubr.f32.gmra.mrb[0].mxu0 %v2292
      %v2376 = vpop.f32.mrb[0].mxu0
      %v2377 = vadd.f32 0.0, %v2376
      %v2378 = vpop.f32.mrb[0].mxu0
      %2379 = vdwg.mxu0
      %2380 = vmatprep.subr.mxu0 0.0
      %2381 = vmatpush1.msra.mxu0 %v2192
      %2382 = vmatprep.subr.mxu0 0.0
      %2383 = vmatpush1.msra.mxu0 %v2193
      %2384 = vmatprep.subr.mxu0 0.0
      %2385 = vmatpush1.msra.mxu0 %v2194
      %2386 = vmatprep.subr.mxu0 0.0
      %2387 = vmatpush1.msra.mxu0 %v2195
      %2388 = vmatprep.subr.mxu0 0.0
      %2389 = vmatpush1.msra.mxu0 %v2196
      %2390 = vmatprep.subr.mxu0 0.0
      %2391 = vmatpush1.msra.mxu0 %v2197
      %2392 = vmatprep.subr.mxu0 0.0
      %2393 = vmatpush1.msra.mxu0 %v2198
      %2394 = vmatprep.subr.mxu0 0.0
      %2395 = vmatpush1.msra.mxu0 %v2199
      %2396 = vmatprep.subr.mxu0 0.0
      %2397 = vmatpush1.msra.mxu0 %v2200
      %2398 = vmatprep.subr.mxu0 0.0
      %2399 = vmatpush1.msra.mxu0 %v2201
      %2400 = vmatprep.subr.mxu0 0.0
      %2401 = vmatpush1.msra.mxu0 %v2202
      %2402 = vmatprep.subr.mxu0 0.0
      %2403 = vmatpush1.msra.mxu0 %v2203
      %2404 = vmatprep.subr.mxu0 0.0
      %2405 = vmatpush1.msra.mxu0 %v2204
      %2406 = vmatprep.subr.mxu0 0.0
      %2407 = vmatpush1.msra.mxu0 %v2205
      %2408 = vmatprep.subr.mxu0 0.0
      %2409 = vmatpush1.msra.mxu0 %v2206
      %2410 = vmatprep.subr.mxu0 0.0
      %2411 = vmatpush1.msra.mxu0 %v2207
      %2412 = vmatprep.subr.mxu0 0.0
      %2413 = vmatpush1.msra.mxu0 %v2208
      %2414 = vmatprep.subr.mxu0 0.0
      %2415 = vmatpush1.msra.mxu0 %v2209
      %2416 = vmatprep.subr.mxu0 0.0
      %2417 = vmatpush1.msra.mxu0 %v2210
      %2418 = vmatprep.subr.mxu0 0.0
      %2419 = vmatpush1.msra.mxu0 %v2211
      %2420 = vmatprep.subr.mxu0 0.0
      %2421 = vmatpush1.msra.mxu0 %v2212
      %2422 = vmatprep.subr.mxu0 0.0
      %2423 = vmatpush1.msra.mxu0 %v2213
      %2424 = vmatprep.subr.mxu0 0.0
      %2425 = vmatpush1.msra.mxu0 %v2214
      %2426 = vmatprep.subr.mxu0 0.0
      %2427 = vmatpush1.msra.mxu0 %v2215
      %2428 = vmatprep.subr.mxu0 0.0
      %2429 = vmatpush1.msra.mxu0 %v2216
      %2430 = vmatprep.subr.mxu0 0.0
      %2431 = vmatpush1.msra.mxu0 %v2217
      %2432 = vmatprep.subr.mxu0 0.0
      %2433 = vmatpush1.msra.mxu0 %v2218
      %2434 = vmatprep.subr.mxu0 0.0
      %2435 = vmatpush1.msra.mxu0 %v2219
      %2436 = vmatprep.subr.mxu0 0.0
      %2437 = vmatpush1.msra.mxu0 %v2220
      %2438 = vmatprep.subr.mxu0 0.0
      %2439 = vmatpush1.msra.mxu0 %v2221
      %2440 = vmatprep.subr.mxu0 0.0
      %2441 = vmatpush1.msra.mxu0 %v2222
      %2442 = vmatprep.subr.mxu0 0.0
      %2443 = vmatpush1.msra.mxu0 %v2223
      %2444 = vmatprep.mubr.f32.mxu0 %v2297
      %2445 = vmatmul.mubr.f32.gmra.mrb[0].mxu0 %v2295
      %v2446 = vpop.f32.mrb[0].mxu0
      %v2447 = vadd.f32 %v2372, %v2446
      %v2448 = vpop.f32.mrb[0].mxu0
      %2449 = vmatprep.mubr.f32.mxu0 %v2298
      %2450 = vmatmul.mubr.f32.gmra.mrb[0].mxu0 %v2296
      %v2451 = vpop.f32.mrb[0].mxu0
      %v2452 = vadd.f32 %v2377, %v2451
      %v2453 = vpop.f32.mrb[0].mxu0
      %2454 = vdwg.mxu0
      %2455 = vmatprep.subr.mxu0 0.0
      %2456 = vmatpush1.msra.mxu0 %v2224
      %2457 = vmatprep.subr.mxu0 0.0
      %2458 = vmatpush1.msra.mxu0 %v2225
      %2459 = vmatprep.subr.mxu0 0.0
      %2460 = vmatpush1.msra.mxu0 %v2226
      %2461 = vmatprep.subr.mxu0 0.0
      %2462 = vmatpush1.msra.mxu0 %v2227
      %2463 = vmatprep.subr.mxu0 0.0
      %2464 = vmatpush1.msra.mxu0 %v2228
      %2465 = vmatprep.subr.mxu0 0.0
      %2466 = vmatpush1.msra.mxu0 %v2229
      %2467 = vmatprep.subr.mxu0 0.0
      %2468 = vmatpush1.msra.mxu0 %v2230
      %2469 = vmatprep.subr.mxu0 0.0
      %2470 = vmatpush1.msra.mxu0 %v2231
      %2471 = vmatprep.subr.mxu0 0.0
      %2472 = vmatpush1.msra.mxu0 0.0
      %2473 = vmatprep.subr.mxu0 0.0
      %2474 = vmatpush1.msra.mxu0 0.0
      %2475 = vmatprep.subr.mxu0 0.0
      %2476 = vmatpush1.msra.mxu0 0.0
      %2477 = vmatprep.subr.mxu0 0.0
      %2478 = vmatpush1.msra.mxu0 0.0
      %2479 = vmatprep.subr.mxu0 0.0
      %2480 = vmatpush1.msra.mxu0 0.0
      %2481 = vmatprep.subr.mxu0 0.0
      %2482 = vmatpush1.msra.mxu0 0.0
      %2483 = vmatprep.subr.mxu0 0.0
      %2484 = vmatpush1.msra.mxu0 0.0
      %2485 = vmatprep.subr.mxu0 0.0
      %2486 = vmatpush1.msra.mxu0 0.0
      %2487 = vmatprep.subr.mxu0 0.0
      %2488 = vmatpush1.msra.mxu0 0.0
      %2489 = vmatprep.subr.mxu0 0.0
      %2490 = vmatpush1.msra.mxu0 0.0
      %2491 = vmatprep.subr.mxu0 0.0
      %2492 = vmatpush1.msra.mxu0 0.0
      %2493 = vmatprep.subr.mxu0 0.0
      %2494 = vmatpush1.msra.mxu0 0.0
      %2495 = vmatprep.subr.mxu0 0.0
      %2496 = vmatpush1.msra.mxu0 0.0
      %2497 = vmatprep.subr.mxu0 0.0
      %2498 = vmatpush1.msra.mxu0 0.0
      %2499 = vmatprep.subr.mxu0 0.0
      %2500 = vmatpush1.msra.mxu0 0.0
      %2501 = vmatprep.subr.mxu0 0.0
      %2502 = vmatpush1.msra.mxu0 0.0
      %2503 = vmatprep.subr.mxu0 0.0
      %2504 = vmatpush1.msra.mxu0 0.0
      %2505 = vmatprep.subr.mxu0 0.0
      %2506 = vmatpush1.msra.mxu0 0.0
      %2507 = vmatprep.subr.mxu0 0.0
      %2508 = vmatpush1.msra.mxu0 0.0
      %2509 = vmatprep.subr.mxu0 0.0
      %2510 = vmatpush1.msra.mxu0 0.0
      %2511 = vmatprep.subr.mxu0 0.0
      %2512 = vmatpush1.msra.mxu0 0.0
      %2513 = vmatprep.subr.mxu0 0.0
      %2514 = vmatpush1.msra.mxu0 0.0
      %2515 = vmatprep.subr.mxu0 0.0
      %2516 = vmatpush1.msra.mxu0 0.0
      %2517 = vmatprep.subr.mxu0 0.0
      %2518 = vmatpush1.msra.mxu0 0.0
      %2519 = vmatprep.mubr.f32.mxu0 0.0
      %2520 = vmatmul.mubr.f32.gmra.mrb[0].mxu0 %v2300
      %v2521 = vpop.f32.mrb[0].mxu0
      %v2522 = vadd.f32 %v2447, %v2521
      %v2523 = vpop.f32.mrb[0].mxu0
      %2524 = vmatprep.mubr.f32.mxu0 0.0
      %2525 = vmatmul.mubr.f32.gmra.mrb[0].mxu0 %v2303
      %v2526 = vpop.f32.mrb[0].mxu0
      %v2527 = vadd.f32 %v2452, %v2526
      %v2528 = vpop.f32.mrb[0].mxu0
      %2529 = vdwg.mxu0
      %v2531 = vlaneseq
      %v2532 = vshrl.u32 %v2531, 7
      %v2533 = vsub.s32 0, %v2532
      %v2534 = vrot.slane %v2233, %v2533
      %v2536 = vmul.f32 %v2522, %v2534
      %v2537 = vmul.f32 %v2527, %v2534
      %v2539 = vlaneseq
      %v2540 = vshrl.u32 %v2539, 7
      %v2541 = vsub.s32 0, %v2540
      %v2542 = vrot.slane %v2235, %v2541
      %v2544 = vadd.f32 %v2536, %v2542
      %v2545 = vadd.f32 %v2537, %v2542
      %v2546 = vmax.f32 %v2544, 0.0
      %v2547 = vmax.f32 %v2545, 0.0
      %2548 = vst.msk [vmem:[#allocation3 + $0x8] sm:$0xff] %vm658, %v2546
      %2549 = vst.msk [vmem:[#allocation3 + $0x10] sm:$0xff] %vm658, %v2547
      %s2550 = scalar_lea.vmem %s4, 2304
      %v2551 = vld [vmem:[%s2550] sm:$0xff]
      %v2552 = vld [vmem:[%s2550 + $0x8] sm:$0xff]
      %v2553 = vld [vmem:[%s2550 + $0x10] sm:$0xff]
      %v2554 = vld [vmem:[%s2550 + $0x18] sm:$0xff]
      %v2555 = vld [vmem:[%s2550 + $0x20] sm:$0xff]
      %v2556 = vld [vmem:[%s2550 + $0x28] sm:$0xff]
      %v2557 = vld [vmem:[%s2550 + $0x30] sm:$0xff]
      %v2558 = vld [vmem:[%s2550 + $0x38] sm:$0xff]
      %v2559 = vld [vmem:[%s2550 + $0x40] sm:$0xff]
      %v2560 = vld [vmem:[%s2550 + $0x48] sm:$0xff]
      %v2561 = vld [vmem:[%s2550 + $0x50] sm:$0xff]
      %v2562 = vld [vmem:[%s2550 + $0x58] sm:$0xff]
      %v2563 = vld [vmem:[%s2550 + $0x60] sm:$0xff]
      %v2564 = vld [vmem:[%s2550 + $0x68] sm:$0xff]
      %v2565 = vld [vmem:[%s2550 + $0x70] sm:$0xff]
      %v2566 = vld [vmem:[%s2550 + $0x78] sm:$0xff]
      %v2567 = vld [vmem:[%s2550 + $0x80] sm:$0xff]
      %v2568 = vld [vmem:[%s2550 + $0x88] sm:$0xff]
      %v2569 = vld [vmem:[%s2550 + $0x90] sm:$0xff]
      %v2570 = vld [vmem:[%s2550 + $0x98] sm:$0xff]
      %v2571 = vld [vmem:[%s2550 + $0xa0] sm:$0xff]
      %v2572 = vld [vmem:[%s2550 + $0xa8] sm:$0xff]
      %v2573 = vld [vmem:[%s2550 + $0xb0] sm:$0xff]
      %v2574 = vld [vmem:[%s2550 + $0xb8] sm:$0xff]
      %v2575 = vld [vmem:[%s2550 + $0xc0] sm:$0xff]
      %v2576 = vld [vmem:[%s2550 + $0xc8] sm:$0xff]
      %v2577 = vld [vmem:[%s2550 + $0xd0] sm:$0xff]
      %v2578 = vld [vmem:[%s2550 + $0xd8] sm:$0xff]
      %v2579 = vld [vmem:[%s2550 + $0xe0] sm:$0xff]
      %v2580 = vld [vmem:[%s2550 + $0xe8] sm:$0xff]
      %v2581 = vld [vmem:[%s2550 + $0xf0] sm:$0xff]
      %v2582 = vld [vmem:[%s2550 + $0xf8] sm:$0xff]
      %v2583 = vld [vmem:[%s2550 + $0x100] sm:$0xff]
      %v2584 = vld [vmem:[%s2550 + $0x108] sm:$0xff]
      %v2585 = vld [vmem:[%s2550 + $0x110] sm:$0xff]
      %v2586 = vld [vmem:[%s2550 + $0x118] sm:$0xff]
      %v2587 = vld [vmem:[%s2550 + $0x120] sm:$0xff]
      %v2588 = vld [vmem:[%s2550 + $0x128] sm:$0xff]
      %v2589 = vld [vmem:[%s2550 + $0x130] sm:$0xff]
      %v2590 = vld [vmem:[%s2550 + $0x138] sm:$0xff]
      %v2591 = vld [vmem:[%s2550 + $0x140] sm:$0xff]
      %v2592 = vld [vmem:[%s2550 + $0x148] sm:$0xff]
      %v2593 = vld [vmem:[%s2550 + $0x150] sm:$0xff]
      %v2594 = vld [vmem:[%s2550 + $0x158] sm:$0xff]
      %v2595 = vld [vmem:[%s2550 + $0x160] sm:$0xff]
      %v2596 = vld [vmem:[%s2550 + $0x168] sm:$0xff]
      %v2597 = vld [vmem:[%s2550 + $0x170] sm:$0xff]
      %v2598 = vld [vmem:[%s2550 + $0x178] sm:$0xff]
      %v2599 = vld [vmem:[%s2550 + $0x180] sm:$0xff]
      %v2600 = vld [vmem:[%s2550 + $0x188] sm:$0xff]
      %v2601 = vld [vmem:[%s2550 + $0x190] sm:$0xff]
      %v2602 = vld [vmem:[%s2550 + $0x198] sm:$0xff]
      %v2603 = vld [vmem:[%s2550 + $0x1a0] sm:$0xff]
      %v2604 = vld [vmem:[%s2550 + $0x1a8] sm:$0xff]
      %v2605 = vld [vmem:[%s2550 + $0x1b0] sm:$0xff]
      %v2606 = vld [vmem:[%s2550 + $0x1b8] sm:$0xff]
      %v2607 = vld [vmem:[%s2550 + $0x1c0] sm:$0xff]
      %v2608 = vld [vmem:[%s2550 + $0x1c8] sm:$0xff]
      %v2609 = vld [vmem:[%s2550 + $0x1d0] sm:$0xff]
      %v2610 = vld [vmem:[%s2550 + $0x1d8] sm:$0xff]
      %v2611 = vld [vmem:[%s2550 + $0x1e0] sm:$0xff]
      %v2612 = vld [vmem:[%s2550 + $0x1e8] sm:$0xff]
      %v2613 = vld [vmem:[%s2550 + $0x1f0] sm:$0xff]
      %v2614 = vld [vmem:[%s2550 + $0x1f8] sm:$0xff]
      %v2615 = vld [vmem:[%s2550 + $0x200] sm:$0xff]
      %v2616 = vld [vmem:[%s2550 + $0x208] sm:$0xff]
      %v2617 = vld [vmem:[%s2550 + $0x210] sm:$0xff]
      %v2618 = vld [vmem:[%s2550 + $0x218] sm:$0xff]
      %v2619 = vld [vmem:[%s2550 + $0x220] sm:$0xff]
      %v2620 = vld [vmem:[%s2550 + $0x228] sm:$0xff]
      %v2621 = vld [vmem:[%s2550 + $0x230] sm:$0xff]
      %v2622 = vld [vmem:[%s2550 + $0x238] sm:$0xff]
      %s2623 = scalar_lea.vmem %s5, 4
      %v2624 = vld [vmem:[%s2623] sm:$0x1]
      %s2625 = scalar_lea.vmem %s6, 4
      %v2626 = vld [vmem:[%s2625] sm:$0x1]
      %v2627 = vld [vmem:[#allocation3 + $0x3] sm:$0xff]
      %v2628 = vld [vmem:[#allocation3 + $0xb] sm:$0xff]
      %v2629 = vsel %vm751, %v2627, 0.0
      %v2630 = vsel %vm752, %v2628, 0.0
      %v2631 = vld [vmem:[#allocation3 + $0x4] sm:$0xff]
      %v2632 = vld [vmem:[#allocation3 + $0xc] sm:$0xff]
      %v2633 = vld [vmem:[#allocation3 + $0x5] sm:$0xff]
      %v2634 = vld [vmem:[#allocation3 + $0xd] sm:$0xff]
      %v2635 = vsel %vm1069, %v2633, 0.0
      %v2636 = vsel %vm1070, %v2634, 0.0
      %v2637 = vld [vmem:[#allocation3 + $0x7] sm:$0xff]
      %v2638 = vld [vmem:[#allocation3 + $0xf] sm:$0xff]
      %v2639 = vsel %vm751, %v2637, 0.0
      %v2640 = vsel %vm752, %v2638, 0.0
      %v2641 = vld [vmem:[#allocation3 + $0x8] sm:$0xff]
      %v2642 = vld [vmem:[#allocation3 + $0x10] sm:$0xff]
      %v2643 = vld [vmem:[#allocation3 + $0x9] sm:$0xff]
      %v2644 = vld [vmem:[#allocation3 + $0x11] sm:$0xff]
      %v2645 = vsel %vm1069, %v2643, 0.0
      %v2646 = vsel %vm1070, %v2644, 0.0
      %v2647 = vld [vmem:[#allocation3 + $0x13] sm:$0xff]
      %v2648 = vsel %vm751, %v2628, 0.0
      %v2649 = vsel %vm752, %v2647, 0.0
      %v2650 = vld [vmem:[#allocation3 + $0x14] sm:$0xff]
      %v2651 = vld [vmem:[#allocation3 + $0x15] sm:$0xff]
      %v2652 = vsel %vm1069, %v2634, 0.0
      %v2653 = vsel %vm1070, %v2651, 0.0
      %2656 = vrot.lane.b32.xlu0 %v2631, 64
      %v2657 = vpop.permute.xlu0 %2656
      %2658 = vrot.lane.b32.xlu0 %v2632, 64
      %v2659 = vpop.permute.xlu0 %2658
      %2664 = vrot.lane.b32.xlu0 %v2639, 64
      %v2665 = vpop.permute.xlu0 %2664
      %2666 = vrot.lane.b32.xlu0 %v2640, 64
      %v2667 = vpop.permute.xlu0 %2666
      %2672 = vrot.lane.b32.xlu0 %v2645, 64
      %v2673 = vpop.permute.xlu0 %2672
      %2674 = vrot.lane.b32.xlu0 %v2646, 64
      %v2675 = vpop.permute.xlu0 %2674
      %2679 = vrot.lane.b32.xlu0 %v2650, 64
      %v2680 = vpop.permute.xlu0 %2679
      %v2682 = vsel %vm658, %v2629, %v2657
      %v2683 = vsel %vm658, %v2630, %v2659
      %v2684 = vsel %vm658, %v2635, %v2665
      %v2685 = vsel %vm658, %v2636, %v2667
      %v2686 = vsel %vm658, %v2641, %v2673
      %v2687 = vsel %vm658, %v2642, %v2675
      %v2688 = vsel %vm658, %v2648, %v2659
      %v2689 = vsel %vm658, %v2649, %v2680
      %v2691 = vsel %vm658, %v2652, 0
      %v2694 = vsel %vm658, %v2653, 0
      %2696 = vmatprep.subr.mxu0 0.0
      %2697 = vmatpush1.msra.mxu0 %v2551
      %2698 = vmatprep.subr.mxu0 0.0
      %2699 = vmatpush1.msra.mxu0 %v2552
      %2700 = vmatprep.subr.mxu0 0.0
      %2701 = vmatpush1.msra.mxu0 %v2553
      %2702 = vmatprep.subr.mxu0 0.0
      %2703 = vmatpush1.msra.mxu0 %v2554
      %2704 = vmatprep.subr.mxu0 0.0
      %2705 = vmatpush1.msra.mxu0 %v2555
      %2706 = vmatprep.subr.mxu0 0.0
      %2707 = vmatpush1.msra.mxu0 %v2556
      %2708 = vmatprep.subr.mxu0 0.0
      %2709 = vmatpush1.msra.mxu0 %v2557
      %2710 = vmatprep.subr.mxu0 0.0
      %2711 = vmatpush1.msra.mxu0 %v2558
      %2712 = vmatprep.subr.mxu0 0.0
      %2713 = vmatpush1.msra.mxu0 %v2559
      %2714 = vmatprep.subr.mxu0 0.0
      %2715 = vmatpush1.msra.mxu0 %v2560
      %2716 = vmatprep.subr.mxu0 0.0
      %2717 = vmatpush1.msra.mxu0 %v2561
      %2718 = vmatprep.subr.mxu0 0.0
      %2719 = vmatpush1.msra.mxu0 %v2562
      %2720 = vmatprep.subr.mxu0 0.0
      %2721 = vmatpush1.msra.mxu0 %v2563
      %2722 = vmatprep.subr.mxu0 0.0
      %2723 = vmatpush1.msra.mxu0 %v2564
      %2724 = vmatprep.subr.mxu0 0.0
      %2725 = vmatpush1.msra.mxu0 %v2565
      %2726 = vmatprep.subr.mxu0 0.0
      %2727 = vmatpush1.msra.mxu0 %v2566
      %2728 = vmatprep.subr.mxu0 0.0
      %2729 = vmatpush1.msra.mxu0 %v2567
      %2730 = vmatprep.subr.mxu0 0.0
      %2731 = vmatpush1.msra.mxu0 %v2568
      %2732 = vmatprep.subr.mxu0 0.0
      %2733 = vmatpush1.msra.mxu0 %v2569
      %2734 = vmatprep.subr.mxu0 0.0
      %2735 = vmatpush1.msra.mxu0 %v2570
      %2736 = vmatprep.subr.mxu0 0.0
      %2737 = vmatpush1.msra.mxu0 %v2571
      %2738 = vmatprep.subr.mxu0 0.0
      %2739 = vmatpush1.msra.mxu0 %v2572
      %2740 = vmatprep.subr.mxu0 0.0
      %2741 = vmatpush1.msra.mxu0 %v2573
      %2742 = vmatprep.subr.mxu0 0.0
      %2743 = vmatpush1.msra.mxu0 %v2574
      %2744 = vmatprep.subr.mxu0 0.0
      %2745 = vmatpush1.msra.mxu0 %v2575
      %2746 = vmatprep.subr.mxu0 0.0
      %2747 = vmatpush1.msra.mxu0 %v2576
      %2748 = vmatprep.subr.mxu0 0.0
      %2749 = vmatpush1.msra.mxu0 %v2577
      %2750 = vmatprep.subr.mxu0 0.0
      %2751 = vmatpush1.msra.mxu0 %v2578
      %2752 = vmatprep.subr.mxu0 0.0
      %2753 = vmatpush1.msra.mxu0 %v2579
      %2754 = vmatprep.subr.mxu0 0.0
      %2755 = vmatpush1.msra.mxu0 %v2580
      %2756 = vmatprep.subr.mxu0 0.0
      %2757 = vmatpush1.msra.mxu0 %v2581
      %2758 = vmatprep.subr.mxu0 0.0
      %2759 = vmatpush1.msra.mxu0 %v2582
      %2760 = vmatprep.mubr.f32.mxu0 %v2684
      %2761 = vmatmul.mubr.f32.gmra.mrb[0].mxu0 %v2682
      %v2762 = vpop.f32.mrb[0].mxu0
      %v2763 = vadd.f32 0.0, %v2762
      %v2764 = vpop.f32.mrb[0].mxu0
      %2765 = vmatprep.mubr.f32.mxu0 %v2685
      %2766 = vmatmul.mubr.f32.gmra.mrb[0].mxu0 %v2683
      %v2767 = vpop.f32.mrb[0].mxu0
      %v2768 = vadd.f32 0.0, %v2767
      %v2769 = vpop.f32.mrb[0].mxu0
      %2770 = vdwg.mxu0
      %2771 = vmatprep.subr.mxu0 0.0
      %2772 = vmatpush1.msra.mxu0 %v2583
      %2773 = vmatprep.subr.mxu0 0.0
      %2774 = vmatpush1.msra.mxu0 %v2584
      %2775 = vmatprep.subr.mxu0 0.0
      %2776 = vmatpush1.msra.mxu0 %v2585
      %2777 = vmatprep.subr.mxu0 0.0
      %2778 = vmatpush1.msra.mxu0 %v2586
      %2779 = vmatprep.subr.mxu0 0.0
      %2780 = vmatpush1.msra.mxu0 %v2587
      %2781 = vmatprep.subr.mxu0 0.0
      %2782 = vmatpush1.msra.mxu0 %v2588
      %2783 = vmatprep.subr.mxu0 0.0
      %2784 = vmatpush1.msra.mxu0 %v2589
      %2785 = vmatprep.subr.mxu0 0.0
      %2786 = vmatpush1.msra.mxu0 %v2590
      %2787 = vmatprep.subr.mxu0 0.0
      %2788 = vmatpush1.msra.mxu0 %v2591
      %2789 = vmatprep.subr.mxu0 0.0
      %2790 = vmatpush1.msra.mxu0 %v2592
      %2791 = vmatprep.subr.mxu0 0.0
      %2792 = vmatpush1.msra.mxu0 %v2593
      %2793 = vmatprep.subr.mxu0 0.0
      %2794 = vmatpush1.msra.mxu0 %v2594
      %2795 = vmatprep.subr.mxu0 0.0
      %2796 = vmatpush1.msra.mxu0 %v2595
      %2797 = vmatprep.subr.mxu0 0.0
      %2798 = vmatpush1.msra.mxu0 %v2596
      %2799 = vmatprep.subr.mxu0 0.0
      %2800 = vmatpush1.msra.mxu0 %v2597
      %2801 = vmatprep.subr.mxu0 0.0
      %2802 = vmatpush1.msra.mxu0 %v2598
      %2803 = vmatprep.subr.mxu0 0.0
      %2804 = vmatpush1.msra.mxu0 %v2599
      %2805 = vmatprep.subr.mxu0 0.0
      %2806 = vmatpush1.msra.mxu0 %v2600
      %2807 = vmatprep.subr.mxu0 0.0
      %2808 = vmatpush1.msra.mxu0 %v2601
      %2809 = vmatprep.subr.mxu0 0.0
      %2810 = vmatpush1.msra.mxu0 %v2602
      %2811 = vmatprep.subr.mxu0 0.0
      %2812 = vmatpush1.msra.mxu0 %v2603
      %2813 = vmatprep.subr.mxu0 0.0
      %2814 = vmatpush1.msra.mxu0 %v2604
      %2815 = vmatprep.subr.mxu0 0.0
      %2816 = vmatpush1.msra.mxu0 %v2605
      %2817 = vmatprep.subr.mxu0 0.0
      %2818 = vmatpush1.msra.mxu0 %v2606
      %2819 = vmatprep.subr.mxu0 0.0
      %2820 = vmatpush1.msra.mxu0 %v2607
      %2821 = vmatprep.subr.mxu0 0.0
      %2822 = vmatpush1.msra.mxu0 %v2608
      %2823 = vmatprep.subr.mxu0 0.0
      %2824 = vmatpush1.msra.mxu0 %v2609
      %2825 = vmatprep.subr.mxu0 0.0
      %2826 = vmatpush1.msra.mxu0 %v2610
      %2827 = vmatprep.subr.mxu0 0.0
      %2828 = vmatpush1.msra.mxu0 %v2611
      %2829 = vmatprep.subr.mxu0 0.0
      %2830 = vmatpush1.msra.mxu0 %v2612
      %2831 = vmatprep.subr.mxu0 0.0
      %2832 = vmatpush1.msra.mxu0 %v2613
      %2833 = vmatprep.subr.mxu0 0.0
      %2834 = vmatpush1.msra.mxu0 %v2614
      %2835 = vmatprep.mubr.f32.mxu0 %v2688
      %2836 = vmatmul.mubr.f32.gmra.mrb[0].mxu0 %v2686
      %v2837 = vpop.f32.mrb[0].mxu0
      %v2838 = vadd.f32 %v2763, %v2837
      %v2839 = vpop.f32.mrb[0].mxu0
      %2840 = vmatprep.mubr.f32.mxu0 %v2689
      %2841 = vmatmul.mubr.f32.gmra.mrb[0].mxu0 %v2687
      %v2842 = vpop.f32.mrb[0].mxu0
      %v2843 = vadd.f32 %v2768, %v2842
      %v2844 = vpop.f32.mrb[0].mxu0
      %2845 = vdwg.mxu0
      %2846 = vmatprep.subr.mxu0 0.0
      %2847 = vmatpush1.msra.mxu0 %v2615
      %2848 = vmatprep.subr.mxu0 0.0
      %2849 = vmatpush1.msra.mxu0 %v2616
      %2850 = vmatprep.subr.mxu0 0.0
      %2851 = vmatpush1.msra.mxu0 %v2617
      %2852 = vmatprep.subr.mxu0 0.0
      %2853 = vmatpush1.msra.mxu0 %v2618
      %2854 = vmatprep.subr.mxu0 0.0
      %2855 = vmatpush1.msra.mxu0 %v2619
      %2856 = vmatprep.subr.mxu0 0.0
      %2857 = vmatpush1.msra.mxu0 %v2620
      %2858 = vmatprep.subr.mxu0 0.0
      %2859 = vmatpush1.msra.mxu0 %v2621
      %2860 = vmatprep.subr.mxu0 0.0
      %2861 = vmatpush1.msra.mxu0 %v2622
      %2862 = vmatprep.subr.mxu0 0.0
      %2863 = vmatpush1.msra.mxu0 0.0
      %2864 = vmatprep.subr.mxu0 0.0
      %2865 = vmatpush1.msra.mxu0 0.0
      %2866 = vmatprep.subr.mxu0 0.0
      %2867 = vmatpush1.msra.mxu0 0.0
      %2868 = vmatprep.subr.mxu0 0.0
      %2869 = vmatpush1.msra.mxu0 0.0
      %2870 = vmatprep.subr.mxu0 0.0
      %2871 = vmatpush1.msra.mxu0 0.0
      %2872 = vmatprep.subr.mxu0 0.0
      %2873 = vmatpush1.msra.mxu0 0.0
      %2874 = vmatprep.subr.mxu0 0.0
      %2875 = vmatpush1.msra.mxu0 0.0
      %2876 = vmatprep.subr.mxu0 0.0
      %2877 = vmatpush1.msra.mxu0 0.0
      %2878 = vmatprep.subr.mxu0 0.0
      %2879 = vmatpush1.msra.mxu0 0.0
      %2880 = vmatprep.subr.mxu0 0.0
      %2881 = vmatpush1.msra.mxu0 0.0
      %2882 = vmatprep.subr.mxu0 0.0
      %2883 = vmatpush1.msra.mxu0 0.0
      %2884 = vmatprep.subr.mxu0 0.0
      %2885 = vmatpush1.msra.mxu0 0.0
      %2886 = vmatprep.subr.mxu0 0.0
      %2887 = vmatpush1.msra.mxu0 0.0
      %2888 = vmatprep.subr.mxu0 0.0
      %2889 = vmatpush1.msra.mxu0 0.0
      %2890 = vmatprep.subr.mxu0 0.0
      %2891 = vmatpush1.msra.mxu0 0.0
      %2892 = vmatprep.subr.mxu0 0.0
      %2893 = vmatpush1.msra.mxu0 0.0
      %2894 = vmatprep.subr.mxu0 0.0
      %2895 = vmatpush1.msra.mxu0 0.0
      %2896 = vmatprep.subr.mxu0 0.0
      %2897 = vmatpush1.msra.mxu0 0.0
      %2898 = vmatprep.subr.mxu0 0.0
      %2899 = vmatpush1.msra.mxu0 0.0
      %2900 = vmatprep.subr.mxu0 0.0
      %2901 = vmatpush1.msra.mxu0 0.0
      %2902 = vmatprep.subr.mxu0 0.0
      %2903 = vmatpush1.msra.mxu0 0.0
      %2904 = vmatprep.subr.mxu0 0.0
      %2905 = vmatpush1.msra.mxu0 0.0
      %2906 = vmatprep.subr.mxu0 0.0
      %2907 = vmatpush1.msra.mxu0 0.0
      %2908 = vmatprep.subr.mxu0 0.0
      %2909 = vmatpush1.msra.mxu0 0.0
      %2910 = vmatprep.mubr.f32.mxu0 0.0
      %2911 = vmatmul.mubr.f32.gmra.mrb[0].mxu0 %v2691
      %v2912 = vpop.f32.mrb[0].mxu0
      %v2913 = vadd.f32 %v2838, %v2912
      %v2914 = vpop.f32.mrb[0].mxu0
      %2915 = vmatprep.mubr.f32.mxu0 0.0
      %2916 = vmatmul.mubr.f32.gmra.mrb[0].mxu0 %v2694
      %v2917 = vpop.f32.mrb[0].mxu0
      %v2918 = vadd.f32 %v2843, %v2917
      %v2919 = vpop.f32.mrb[0].mxu0
      %2920 = vdwg.mxu0
      %v2922 = vlaneseq
      %v2923 = vshrl.u32 %v2922, 7
      %v2924 = vsub.s32 0, %v2923
      %v2925 = vrot.slane %v2624, %v2924
      %v2927 = vmul.f32 %v2913, %v2925
      %v2928 = vmul.f32 %v2918, %v2925
      %v2930 = vlaneseq
      %v2931 = vshrl.u32 %v2930, 7
      %v2932 = vsub.s32 0, %v2931
      %v2933 = vrot.slane %v2626, %v2932
      %v2935 = vadd.f32 %v2927, %v2933
      %v2936 = vadd.f32 %v2928, %v2933
      %v2937 = vmax.f32 %v2935, 0.0
      %v2938 = vmax.f32 %v2936, 0.0
      %v2939 = vld [vmem:[%s7] sm:$0xff]
      %v2940 = vld [vmem:[%s7 + $0x8] sm:$0xff]
      %v2941 = vld [vmem:[%s7 + $0x10] sm:$0xff]
      %v2942 = vld [vmem:[%s7 + $0x18] sm:$0xff]
      %v2943 = vld [vmem:[%s7 + $0x20] sm:$0xff]
      %v2944 = vld [vmem:[%s7 + $0x28] sm:$0xff]
      %v2945 = vld [vmem:[%s7 + $0x30] sm:$0xff]
      %v2946 = vld [vmem:[%s7 + $0x38] sm:$0xff]
      %v2947 = vld [vmem:[%s7 + $0x40] sm:$0xff]
      %v2948 = vld [vmem:[%s7 + $0x48] sm:$0xff]
      %v2949 = vld [vmem:[%s7 + $0x50] sm:$0xff]
      %v2950 = vld [vmem:[%s7 + $0x58] sm:$0xff]
      %v2951 = vld [vmem:[%s7 + $0x60] sm:$0xff]
      %v2952 = vld [vmem:[%s7 + $0x68] sm:$0xff]
      %v2953 = vld [vmem:[%s7 + $0x70] sm:$0xff]
      %v2954 = vld [vmem:[%s7 + $0x78] sm:$0xff]
      %v2955 = vld [vmem:[%s8] sm:$0x1]
      %v2956 = vld [vmem:[%s9] sm:$0x1]
      %2957 = vmatprep.subr.mxu0 0.0
      %2958 = vmatpush1.msra.mxu0 %v2939
      %2959 = vmatprep.subr.mxu0 0.0
      %2960 = vmatpush1.msra.mxu0 %v2940
      %2961 = vmatprep.subr.mxu0 0.0
      %2962 = vmatpush1.msra.mxu0 %v2941
      %2963 = vmatprep.subr.mxu0 0.0
      %2964 = vmatpush1.msra.mxu0 %v2942
      %2965 = vmatprep.subr.mxu0 0.0
      %2966 = vmatpush1.msra.mxu0 %v2943
      %2967 = vmatprep.subr.mxu0 0.0
      %2968 = vmatpush1.msra.mxu0 %v2944
      %2969 = vmatprep.subr.mxu0 0.0
      %2970 = vmatpush1.msra.mxu0 %v2945
      %2971 = vmatprep.subr.mxu0 0.0
      %2972 = vmatpush1.msra.mxu0 %v2946
      %2973 = vmatprep.subr.mxu0 0.0
      %2974 = vmatpush1.msra.mxu0 %v2947
      %2975 = vmatprep.subr.mxu0 0.0
      %2976 = vmatpush1.msra.mxu0 %v2948
      %2977 = vmatprep.subr.mxu0 0.0
      %2978 = vmatpush1.msra.mxu0 %v2949
      %2979 = vmatprep.subr.mxu0 0.0
      %2980 = vmatpush1.msra.mxu0 %v2950
      %2981 = vmatprep.subr.mxu0 0.0
      %2982 = vmatpush1.msra.mxu0 %v2951
      %2983 = vmatprep.subr.mxu0 0.0
      %2984 = vmatpush1.msra.mxu0 %v2952
      %2985 = vmatprep.subr.mxu0 0.0
      %2986 = vmatpush1.msra.mxu0 %v2953
      %2987 = vmatprep.subr.mxu0 0.0
      %2988 = vmatpush1.msra.mxu0 %v2954
      %2989 = vmatprep.subr.mxu0 0.0
      %2990 = vmatpush1.msra.mxu0 0.0
      %2991 = vmatprep.subr.mxu0 0.0
      %2992 = vmatpush1.msra.mxu0 0.0
      %2993 = vmatprep.subr.mxu0 0.0
      %2994 = vmatpush1.msra.mxu0 0.0
      %2995 = vmatprep.subr.mxu0 0.0
      %2996 = vmatpush1.msra.mxu0 0.0
      %2997 = vmatprep.subr.mxu0 0.0
      %2998 = vmatpush1.msra.mxu0 0.0
      %2999 = vmatprep.subr.mxu0 0.0
      %3000 = vmatpush1.msra.mxu0 0.0
      %3001 = vmatprep.subr.mxu0 0.0
      %3002 = vmatpush1.msra.mxu0 0.0
      %3003 = vmatprep.subr.mxu0 0.0
      %3004 = vmatpush1.msra.mxu0 0.0
      %3005 = vmatprep.subr.mxu0 0.0
      %3006 = vmatpush1.msra.mxu0 0.0
      %3007 = vmatprep.subr.mxu0 0.0
      %3008 = vmatpush1.msra.mxu0 0.0
      %3009 = vmatprep.subr.mxu0 0.0
      %3010 = vmatpush1.msra.mxu0 0.0
      %3011 = vmatprep.subr.mxu0 0.0
      %3012 = vmatpush1.msra.mxu0 0.0
      %3013 = vmatprep.subr.mxu0 0.0
      %3014 = vmatpush1.msra.mxu0 0.0
      %3015 = vmatprep.subr.mxu0 0.0
      %3016 = vmatpush1.msra.mxu0 0.0
      %3017 = vmatprep.subr.mxu0 0.0
      %3018 = vmatpush1.msra.mxu0 0.0
      %3019 = vmatprep.subr.mxu0 0.0
      %3020 = vmatpush1.msra.mxu0 0.0
      %3021 = vmatprep.mubr.f32.mxu0 0.0
      %3022 = vmatmul.mubr.f32.gmra.mrb[0].mxu0 %v703
      %v3023 = vpop.f32.mrb[0].mxu0
      %v3024 = vadd.f32 0.0, %v3023
      %v3025 = vpop.f32.mrb[0].mxu0
      %3026 = vmatprep.mubr.f32.mxu0 0.0
      %3027 = vmatmul.mubr.f32.gmra.mrb[0].mxu0 %v704
      %v3028 = vpop.f32.mrb[0].mxu0
      %v3029 = vadd.f32 0.0, %v3028
      %v3030 = vpop.f32.mrb[0].mxu0
      %3031 = vdwg.mxu0
      %v3033 = vlaneseq
      %v3034 = vshrl.u32 %v3033, 7
      %v3035 = vsub.s32 0, %v3034
      %v3036 = vrot.slane %v2955, %v3035
      %v3038 = vmul.f32 %v3024, %v3036
      %v3039 = vmul.f32 %v3029, %v3036
      %v3041 = vlaneseq
      %v3042 = vshrl.u32 %v3041, 7
      %v3043 = vsub.s32 0, %v3042
      %v3044 = vrot.slane %v2956, %v3043
      %v3046 = vadd.f32 %v3038, %v3044
      %v3047 = vadd.f32 %v3039, %v3044
      %v3048 = vmax.f32 %v3046, 0.0
      %v3049 = vmax.f32 %v3047, 0.0
      %v3050 = vld [vmem:[%s10] sm:$0xff]
      %v3051 = vld [vmem:[%s10 + $0x8] sm:$0xff]
      %v3052 = vld [vmem:[%s10 + $0x10] sm:$0xff]
      %v3053 = vld [vmem:[%s10 + $0x18] sm:$0xff]
      %v3054 = vld [vmem:[%s10 + $0x20] sm:$0xff]
      %v3055 = vld [vmem:[%s10 + $0x28] sm:$0xff]
      %v3056 = vld [vmem:[%s10 + $0x30] sm:$0xff]
      %v3057 = vld [vmem:[%s10 + $0x38] sm:$0xff]
      %v3058 = vld [vmem:[%s11] sm:$0x1]
      %v3059 = vld [vmem:[%s12] sm:$0x1]
      %v3061 = vsel %vm658, %v2937, 0
      %v3064 = vsel %vm658, %v2938, 0
      %3066 = vmatprep.subr.mxu0 0.0
      %3067 = vmatpush1.msra.mxu0 %v3050
      %3068 = vmatprep.subr.mxu0 0.0
      %3069 = vmatpush1.msra.mxu0 %v3051
      %3070 = vmatprep.subr.mxu0 0.0
      %3071 = vmatpush1.msra.mxu0 %v3052
      %3072 = vmatprep.subr.mxu0 0.0
      %3073 = vmatpush1.msra.mxu0 %v3053
      %3074 = vmatprep.subr.mxu0 0.0
      %3075 = vmatpush1.msra.mxu0 %v3054
      %3076 = vmatprep.subr.mxu0 0.0
      %3077 = vmatpush1.msra.mxu0 %v3055
      %3078 = vmatprep.subr.mxu0 0.0
      %3079 = vmatpush1.msra.mxu0 %v3056
      %3080 = vmatprep.subr.mxu0 0.0
      %3081 = vmatpush1.msra.mxu0 %v3057
      %3082 = vmatprep.subr.mxu0 0.0
      %3083 = vmatpush1.msra.mxu0 0.0
      %3084 = vmatprep.subr.mxu0 0.0
      %3085 = vmatpush1.msra.mxu0 0.0
      %3086 = vmatprep.subr.mxu0 0.0
      %3087 = vmatpush1.msra.mxu0 0.0
      %3088 = vmatprep.subr.mxu0 0.0
      %3089 = vmatpush1.msra.mxu0 0.0
      %3090 = vmatprep.subr.mxu0 0.0
      %3091 = vmatpush1.msra.mxu0 0.0
      %3092 = vmatprep.subr.mxu0 0.0
      %3093 = vmatpush1.msra.mxu0 0.0
      %3094 = vmatprep.subr.mxu0 0.0
      %3095 = vmatpush1.msra.mxu0 0.0
      %3096 = vmatprep.subr.mxu0 0.0
      %3097 = vmatpush1.msra.mxu0 0.0
      %3098 = vmatprep.subr.mxu0 0.0
      %3099 = vmatpush1.msra.mxu0 0.0
      %3100 = vmatprep.subr.mxu0 0.0
      %3101 = vmatpush1.msra.mxu0 0.0
      %3102 = vmatprep.subr.mxu0 0.0
      %3103 = vmatpush1.msra.mxu0 0.0
      %3104 = vmatprep.subr.mxu0 0.0
      %3105 = vmatpush1.msra.mxu0 0.0
      %3106 = vmatprep.subr.mxu0 0.0
      %3107 = vmatpush1.msra.mxu0 0.0
      %3108 = vmatprep.subr.mxu0 0.0
      %3109 = vmatpush1.msra.mxu0 0.0
      %3110 = vmatprep.subr.mxu0 0.0
      %3111 = vmatpush1.msra.mxu0 0.0
      %3112 = vmatprep.subr.mxu0 0.0
      %3113 = vmatpush1.msra.mxu0 0.0
      %3114 = vmatprep.subr.mxu0 0.0
      %3115 = vmatpush1.msra.mxu0 0.0
      %3116 = vmatprep.subr.mxu0 0.0
      %3117 = vmatpush1.msra.mxu0 0.0
      %3118 = vmatprep.subr.mxu0 0.0
      %3119 = vmatpush1.msra.mxu0 0.0
      %3120 = vmatprep.subr.mxu0 0.0
      %3121 = vmatpush1.msra.mxu0 0.0
      %3122 = vmatprep.subr.mxu0 0.0
      %3123 = vmatpush1.msra.mxu0 0.0
      %3124 = vmatprep.subr.mxu0 0.0
      %3125 = vmatpush1.msra.mxu0 0.0
      %3126 = vmatprep.subr.mxu0 0.0
      %3127 = vmatpush1.msra.mxu0 0.0
      %3128 = vmatprep.subr.mxu0 0.0
      %3129 = vmatpush1.msra.mxu0 0.0
      %3130 = vmatprep.mubr.f32.mxu0 0.0
      %3131 = vmatmul.mubr.f32.gmra.mrb[0].mxu0 %v3061
      %v3132 = vpop.f32.mrb[0].mxu0
      %v3133 = vadd.f32 0.0, %v3132
      %v3134 = vpop.f32.mrb[0].mxu0
      %3135 = vmatprep.mubr.f32.mxu0 0.0
      %3136 = vmatmul.mubr.f32.gmra.mrb[0].mxu0 %v3064
      %v3137 = vpop.f32.mrb[0].mxu0
      %v3138 = vadd.f32 0.0, %v3137
      %v3139 = vpop.f32.mrb[0].mxu0
      %3140 = vdwg.mxu0
      %v3142 = vlaneseq
      %v3143 = vshrl.u32 %v3142, 7
      %v3144 = vsub.s32 0, %v3143
      %v3145 = vrot.slane %v3058, %v3144
      %v3147 = vmul.f32 %v3133, %v3145
      %v3148 = vmul.f32 %v3138, %v3145
      %v3150 = vlaneseq
      %v3151 = vshrl.u32 %v3150, 7
      %v3152 = vsub.s32 0, %v3151
      %v3153 = vrot.slane %v3059, %v3152
      %v3155 = vadd.f32 %v3147, %v3153
      %v3156 = vadd.f32 %v3148, %v3153
      %v3157 = vmax.f32 %v3155, 0.0
      %v3158 = vmax.f32 %v3156, 0.0
      %3161 = vrot.lane.b32.xlu0 %v3157, 64
      %v3162 = vpop.permute.xlu0 %3161
      %3163 = vrot.lane.b32.xlu0 %v3158, 64
      %v3164 = vpop.permute.xlu0 %3163
      %v3167 = vsel %vm658, %v3048, %v3162
      %v3168 = vsel %vm658, %v3049, %v3164
      %3169 = vst [vmem:[#allocation4 + $0x8] sm:$0xff] %v3167
      %3170 = vst [vmem:[#allocation4 + $0x10] sm:$0xff] %v3168
      %v3171 = vld [vmem:[%s13] sm:$0xff]
      %v3172 = vld [vmem:[%s13 + $0x8] sm:$0xff]
      %v3173 = vld [vmem:[%s13 + $0x10] sm:$0xff]
      %v3174 = vld [vmem:[%s13 + $0x18] sm:$0xff]
      %v3175 = vld [vmem:[%s13 + $0x20] sm:$0xff]
      %v3176 = vld [vmem:[%s13 + $0x28] sm:$0xff]
      %v3177 = vld [vmem:[%s13 + $0x30] sm:$0xff]
      %v3178 = vld [vmem:[%s13 + $0x38] sm:$0xff]
      %v3179 = vld [vmem:[%s13 + $0x40] sm:$0xff]
      %v3180 = vld [vmem:[%s13 + $0x48] sm:$0xff]
      %v3181 = vld [vmem:[%s13 + $0x50] sm:$0xff]
      %v3182 = vld [vmem:[%s13 + $0x58] sm:$0xff]
      %v3183 = vld [vmem:[%s13 + $0x60] sm:$0xff]
      %v3184 = vld [vmem:[%s13 + $0x68] sm:$0xff]
      %v3185 = vld [vmem:[%s13 + $0x70] sm:$0xff]
      %v3186 = vld [vmem:[%s13 + $0x78] sm:$0xff]
      %v3187 = vld [vmem:[%s13 + $0x80] sm:$0xff]
      %v3188 = vld [vmem:[%s13 + $0x88] sm:$0xff]
      %v3189 = vld [vmem:[%s13 + $0x90] sm:$0xff]
      %v3190 = vld [vmem:[%s13 + $0x98] sm:$0xff]
      %v3191 = vld [vmem:[%s13 + $0xa0] sm:$0xff]
      %v3192 = vld [vmem:[%s13 + $0xa8] sm:$0xff]
      %v3193 = vld [vmem:[%s13 + $0xb0] sm:$0xff]
      %v3194 = vld [vmem:[%s13 + $0xb8] sm:$0xff]
      %v3195 = vld [vmem:[%s13 + $0xc0] sm:$0xff]
      %v3196 = vld [vmem:[%s13 + $0xc8] sm:$0xff]
      %v3197 = vld [vmem:[%s13 + $0xd0] sm:$0xff]
      %v3198 = vld [vmem:[%s13 + $0xd8] sm:$0xff]
      %v3199 = vld [vmem:[%s13 + $0xe0] sm:$0xff]
      %v3200 = vld [vmem:[%s13 + $0xe8] sm:$0xff]
      %v3201 = vld [vmem:[%s13 + $0xf0] sm:$0xff]
      %v3202 = vld [vmem:[%s13 + $0xf8] sm:$0xff]
      %v3203 = vld [vmem:[%s13 + $0x100] sm:$0xff]
      %v3204 = vld [vmem:[%s13 + $0x108] sm:$0xff]
      %v3205 = vld [vmem:[%s13 + $0x110] sm:$0xff]
      %v3206 = vld [vmem:[%s13 + $0x118] sm:$0xff]
      %v3207 = vld [vmem:[%s13 + $0x120] sm:$0xff]
      %v3208 = vld [vmem:[%s13 + $0x128] sm:$0xff]
      %v3209 = vld [vmem:[%s13 + $0x130] sm:$0xff]
      %v3210 = vld [vmem:[%s13 + $0x138] sm:$0xff]
      %v3211 = vld [vmem:[%s13 + $0x140] sm:$0xff]
      %v3212 = vld [vmem:[%s13 + $0x148] sm:$0xff]
      %v3213 = vld [vmem:[%s13 + $0x150] sm:$0xff]
      %v3214 = vld [vmem:[%s13 + $0x158] sm:$0xff]
      %v3215 = vld [vmem:[%s13 + $0x160] sm:$0xff]
      %v3216 = vld [vmem:[%s13 + $0x168] sm:$0xff]
      %v3217 = vld [vmem:[%s13 + $0x170] sm:$0xff]
      %v3218 = vld [vmem:[%s13 + $0x178] sm:$0xff]
      %v3219 = vld [vmem:[%s13 + $0x180] sm:$0xff]
      %v3220 = vld [vmem:[%s13 + $0x188] sm:$0xff]
      %v3221 = vld [vmem:[%s13 + $0x190] sm:$0xff]
      %v3222 = vld [vmem:[%s13 + $0x198] sm:$0xff]
      %v3223 = vld [vmem:[%s13 + $0x1a0] sm:$0xff]
      %v3224 = vld [vmem:[%s13 + $0x1a8] sm:$0xff]
      %v3225 = vld [vmem:[%s13 + $0x1b0] sm:$0xff]
      %v3226 = vld [vmem:[%s13 + $0x1b8] sm:$0xff]
      %v3227 = vld [vmem:[%s13 + $0x1c0] sm:$0xff]
      %v3228 = vld [vmem:[%s13 + $0x1c8] sm:$0xff]
      %v3229 = vld [vmem:[%s13 + $0x1d0] sm:$0xff]
      %v3230 = vld [vmem:[%s13 + $0x1d8] sm:$0xff]
      %v3231 = vld [vmem:[%s13 + $0x1e0] sm:$0xff]
      %v3232 = vld [vmem:[%s13 + $0x1e8] sm:$0xff]
      %v3233 = vld [vmem:[%s13 + $0x1f0] sm:$0xff]
      %v3234 = vld [vmem:[%s13 + $0x1f8] sm:$0xff]
      %v3235 = vld [vmem:[%s13 + $0x200] sm:$0xff]
      %v3236 = vld [vmem:[%s13 + $0x208] sm:$0xff]
      %v3237 = vld [vmem:[%s13 + $0x210] sm:$0xff]
      %v3238 = vld [vmem:[%s13 + $0x218] sm:$0xff]
      %v3239 = vld [vmem:[%s13 + $0x220] sm:$0xff]
      %v3240 = vld [vmem:[%s13 + $0x228] sm:$0xff]
      %v3241 = vld [vmem:[%s13 + $0x230] sm:$0xff]
      %v3242 = vld [vmem:[%s13 + $0x238] sm:$0xff]
      %v3243 = vld [vmem:[%s13 + $0x240] sm:$0xff]
      %v3244 = vld [vmem:[%s13 + $0x248] sm:$0xff]
      %v3245 = vld [vmem:[%s13 + $0x250] sm:$0xff]
      %v3246 = vld [vmem:[%s13 + $0x258] sm:$0xff]
      %v3247 = vld [vmem:[%s13 + $0x260] sm:$0xff]
      %v3248 = vld [vmem:[%s13 + $0x268] sm:$0xff]
      %v3249 = vld [vmem:[%s13 + $0x270] sm:$0xff]
      %v3250 = vld [vmem:[%s13 + $0x278] sm:$0xff]
      %v3251 = vld [vmem:[%s13 + $0x280] sm:$0xff]
      %v3252 = vld [vmem:[%s13 + $0x288] sm:$0xff]
      %v3253 = vld [vmem:[%s13 + $0x290] sm:$0xff]
      %v3254 = vld [vmem:[%s13 + $0x298] sm:$0xff]
      %v3255 = vld [vmem:[%s13 + $0x2a0] sm:$0xff]
      %v3256 = vld [vmem:[%s13 + $0x2a8] sm:$0xff]
      %v3257 = vld [vmem:[%s13 + $0x2b0] sm:$0xff]
      %v3258 = vld [vmem:[%s13 + $0x2b8] sm:$0xff]
      %v3259 = vld [vmem:[%s13 + $0x2c0] sm:$0xff]
      %v3260 = vld [vmem:[%s13 + $0x2c8] sm:$0xff]
      %v3261 = vld [vmem:[%s13 + $0x2d0] sm:$0xff]
      %v3262 = vld [vmem:[%s13 + $0x2d8] sm:$0xff]
      %v3263 = vld [vmem:[%s13 + $0x2e0] sm:$0xff]
      %v3264 = vld [vmem:[%s13 + $0x2e8] sm:$0xff]
      %v3265 = vld [vmem:[%s13 + $0x2f0] sm:$0xff]
      %v3266 = vld [vmem:[%s13 + $0x2f8] sm:$0xff]
      %v3267 = vld [vmem:[%s13 + $0x300] sm:$0xff]
      %v3268 = vld [vmem:[%s13 + $0x308] sm:$0xff]
      %v3269 = vld [vmem:[%s13 + $0x310] sm:$0xff]
      %v3270 = vld [vmem:[%s13 + $0x318] sm:$0xff]
      %v3271 = vld [vmem:[%s13 + $0x320] sm:$0xff]
      %v3272 = vld [vmem:[%s13 + $0x328] sm:$0xff]
      %v3273 = vld [vmem:[%s13 + $0x330] sm:$0xff]
      %v3274 = vld [vmem:[%s13 + $0x338] sm:$0xff]
      %v3275 = vld [vmem:[%s13 + $0x340] sm:$0xff]
      %v3276 = vld [vmem:[%s13 + $0x348] sm:$0xff]
      %v3277 = vld [vmem:[%s13 + $0x350] sm:$0xff]
      %v3278 = vld [vmem:[%s13 + $0x358] sm:$0xff]
      %v3279 = vld [vmem:[%s13 + $0x360] sm:$0xff]
      %v3280 = vld [vmem:[%s13 + $0x368] sm:$0xff]
      %v3281 = vld [vmem:[%s13 + $0x370] sm:$0xff]
      %v3282 = vld [vmem:[%s13 + $0x378] sm:$0xff]
      %v3283 = vld [vmem:[%s13 + $0x380] sm:$0xff]
      %v3284 = vld [vmem:[%s13 + $0x388] sm:$0xff]
      %v3285 = vld [vmem:[%s13 + $0x390] sm:$0xff]
      %v3286 = vld [vmem:[%s13 + $0x398] sm:$0xff]
      %v3287 = vld [vmem:[%s13 + $0x3a0] sm:$0xff]
      %v3288 = vld [vmem:[%s13 + $0x3a8] sm:$0xff]
      %v3289 = vld [vmem:[%s13 + $0x3b0] sm:$0xff]
      %v3290 = vld [vmem:[%s13 + $0x3b8] sm:$0xff]
      %v3291 = vld [vmem:[%s13 + $0x3c0] sm:$0xff]
      %v3292 = vld [vmem:[%s13 + $0x3c8] sm:$0xff]
      %v3293 = vld [vmem:[%s13 + $0x3d0] sm:$0xff]
      %v3294 = vld [vmem:[%s13 + $0x3d8] sm:$0xff]
      %v3295 = vld [vmem:[%s13 + $0x3e0] sm:$0xff]
      %v3296 = vld [vmem:[%s13 + $0x3e8] sm:$0xff]
      %v3297 = vld [vmem:[%s13 + $0x3f0] sm:$0xff]
      %v3298 = vld [vmem:[%s13 + $0x3f8] sm:$0xff]
      %v3299 = vld [vmem:[%s13 + $0x400] sm:$0xff]
      %v3300 = vld [vmem:[%s13 + $0x408] sm:$0xff]
      %v3301 = vld [vmem:[%s13 + $0x410] sm:$0xff]
      %v3302 = vld [vmem:[%s13 + $0x418] sm:$0xff]
      %v3303 = vld [vmem:[%s13 + $0x420] sm:$0xff]
      %v3304 = vld [vmem:[%s13 + $0x428] sm:$0xff]
      %v3305 = vld [vmem:[%s13 + $0x430] sm:$0xff]
      %v3306 = vld [vmem:[%s13 + $0x438] sm:$0xff]
      %v3307 = vld [vmem:[%s13 + $0x440] sm:$0xff]
      %v3308 = vld [vmem:[%s13 + $0x448] sm:$0xff]
      %v3309 = vld [vmem:[%s13 + $0x450] sm:$0xff]
      %v3310 = vld [vmem:[%s13 + $0x458] sm:$0xff]
      %v3311 = vld [vmem:[%s13 + $0x460] sm:$0xff]
      %v3312 = vld [vmem:[%s13 + $0x468] sm:$0xff]
      %v3313 = vld [vmem:[%s13 + $0x470] sm:$0xff]
      %v3314 = vld [vmem:[%s13 + $0x478] sm:$0xff]
      %v3315 = vld [vmem:[%s14] sm:$0x1]
      %v3316 = vld [vmem:[%s15] sm:$0x1]
      %v3317 = vld [vmem:[#allocation4 + $0x3] sm:$0xff]
      %v3318 = vld [vmem:[#allocation4 + $0xb] sm:$0xff]
      %v3319 = vsel %vm751, %v3317, 0.0
      %v3320 = vsel %vm752, %v3318, 0.0
      %v3321 = vld [vmem:[#allocation4 + $0x4] sm:$0xff]
      %v3322 = vld [vmem:[#allocation4 + $0xc] sm:$0xff]
      %v3323 = vld [vmem:[#allocation4 + $0x5] sm:$0xff]
      %v3324 = vld [vmem:[#allocation4 + $0xd] sm:$0xff]
      %v3325 = vsel %vm1069, %v3323, 0.0
      %v3326 = vsel %vm1070, %v3324, 0.0
      %v3327 = vld [vmem:[#allocation4 + $0x7] sm:$0xff]
      %v3328 = vld [vmem:[#allocation4 + $0xf] sm:$0xff]
      %v3329 = vsel %vm751, %v3327, 0.0
      %v3330 = vsel %vm752, %v3328, 0.0
      %v3331 = vld [vmem:[#allocation4 + $0x8] sm:$0xff]
      %v3332 = vld [vmem:[#allocation4 + $0x10] sm:$0xff]
      %v3333 = vld [vmem:[#allocation4 + $0x9] sm:$0xff]
      %v3334 = vld [vmem:[#allocation4 + $0x11] sm:$0xff]
      %v3335 = vsel %vm1069, %v3333, 0.0
      %v3336 = vsel %vm1070, %v3334, 0.0
      %v3337 = vld [vmem:[#allocation4 + $0x13] sm:$0xff]
      %v3338 = vsel %vm751, %v3318, 0.0
      %v3339 = vsel %vm752, %v3337, 0.0
      %v3340 = vld [vmem:[#allocation4 + $0x14] sm:$0xff]
      %v3341 = vld [vmem:[#allocation4 + $0xd] sm:$0xff]
      %v3342 = vld [vmem:[#allocation4 + $0x15] sm:$0xff]
      %v3343 = vsel %vm1069, %v3341, 0.0
      %v3344 = vsel %vm1070, %v3342, 0.0
      %3345 = vmatprep.subr.mxu0 0.0
      %3346 = vmatpush1.msra.mxu0 %v3171
      %3347 = vmatprep.subr.mxu0 0.0
      %3348 = vmatpush1.msra.mxu0 %v3172
      %3349 = vmatprep.subr.mxu0 0.0
      %3350 = vmatpush1.msra.mxu0 %v3173
      %3351 = vmatprep.subr.mxu0 0.0
      %3352 = vmatpush1.msra.mxu0 %v3174
      %3353 = vmatprep.subr.mxu0 0.0
      %3354 = vmatpush1.msra.mxu0 %v3175
      %3355 = vmatprep.subr.mxu0 0.0
      %3356 = vmatpush1.msra.mxu0 %v3176
      %3357 = vmatprep.subr.mxu0 0.0
      %3358 = vmatpush1.msra.mxu0 %v3177
      %3359 = vmatprep.subr.mxu0 0.0
      %3360 = vmatpush1.msra.mxu0 %v3178
      %3361 = vmatprep.subr.mxu0 0.0
      %3362 = vmatpush1.msra.mxu0 %v3179
      %3363 = vmatprep.subr.mxu0 0.0
      %3364 = vmatpush1.msra.mxu0 %v3180
      %3365 = vmatprep.subr.mxu0 0.0
      %3366 = vmatpush1.msra.mxu0 %v3181
      %3367 = vmatprep.subr.mxu0 0.0
      %3368 = vmatpush1.msra.mxu0 %v3182
      %3369 = vmatprep.subr.mxu0 0.0
      %3370 = vmatpush1.msra.mxu0 %v3183
      %3371 = vmatprep.subr.mxu0 0.0
      %3372 = vmatpush1.msra.mxu0 %v3184
      %3373 = vmatprep.subr.mxu0 0.0
      %3374 = vmatpush1.msra.mxu0 %v3185
      %3375 = vmatprep.subr.mxu0 0.0
      %3376 = vmatpush1.msra.mxu0 %v3186
      %3377 = vmatprep.subr.mxu0 0.0
      %3378 = vmatpush1.msra.mxu0 %v3187
      %3379 = vmatprep.subr.mxu0 0.0
      %3380 = vmatpush1.msra.mxu0 %v3188
      %3381 = vmatprep.subr.mxu0 0.0
      %3382 = vmatpush1.msra.mxu0 %v3189
      %3383 = vmatprep.subr.mxu0 0.0
      %3384 = vmatpush1.msra.mxu0 %v3190
      %3385 = vmatprep.subr.mxu0 0.0
      %3386 = vmatpush1.msra.mxu0 %v3191
      %3387 = vmatprep.subr.mxu0 0.0
      %3388 = vmatpush1.msra.mxu0 %v3192
      %3389 = vmatprep.subr.mxu0 0.0
      %3390 = vmatpush1.msra.mxu0 %v3193
      %3391 = vmatprep.subr.mxu0 0.0
      %3392 = vmatpush1.msra.mxu0 %v3194
      %3393 = vmatprep.subr.mxu0 0.0
      %3394 = vmatpush1.msra.mxu0 %v3195
      %3395 = vmatprep.subr.mxu0 0.0
      %3396 = vmatpush1.msra.mxu0 %v3196
      %3397 = vmatprep.subr.mxu0 0.0
      %3398 = vmatpush1.msra.mxu0 %v3197
      %3399 = vmatprep.subr.mxu0 0.0
      %3400 = vmatpush1.msra.mxu0 %v3198
      %3401 = vmatprep.subr.mxu0 0.0
      %3402 = vmatpush1.msra.mxu0 %v3199
      %3403 = vmatprep.subr.mxu0 0.0
      %3404 = vmatpush1.msra.mxu0 %v3200
      %3405 = vmatprep.subr.mxu0 0.0
      %3406 = vmatpush1.msra.mxu0 %v3201
      %3407 = vmatprep.subr.mxu0 0.0
      %3408 = vmatpush1.msra.mxu0 %v3202
      %3409 = vmatprep.mubr.f32.mxu0 %v3321
      %3410 = vmatmul.mubr.f32.gmra.mrb[0].mxu0 %v3319
      %v3411 = vpop.f32.mrb[0].mxu0
      %v3412 = vadd.f32 0.0, %v3411
      %v3413 = vpop.f32.mrb[0].mxu0
      %3414 = vmatprep.mubr.f32.mxu0 %v3322
      %3415 = vmatmul.mubr.f32.gmra.mrb[0].mxu0 %v3320
      %v3416 = vpop.f32.mrb[0].mxu0
      %v3417 = vadd.f32 0.0, %v3416
      %v3418 = vpop.f32.mrb[0].mxu0
      %3419 = vdwg.mxu0
      %3420 = vmatprep.subr.mxu0 0.0
      %3421 = vmatpush1.msra.mxu0 %v3203
      %3422 = vmatprep.subr.mxu0 0.0
      %3423 = vmatpush1.msra.mxu0 %v3204
      %3424 = vmatprep.subr.mxu0 0.0
      %3425 = vmatpush1.msra.mxu0 %v3205
      %3426 = vmatprep.subr.mxu0 0.0
      %3427 = vmatpush1.msra.mxu0 %v3206
      %3428 = vmatprep.subr.mxu0 0.0
      %3429 = vmatpush1.msra.mxu0 %v3207
      %3430 = vmatprep.subr.mxu0 0.0
      %3431 = vmatpush1.msra.mxu0 %v3208
      %3432 = vmatprep.subr.mxu0 0.0
      %3433 = vmatpush1.msra.mxu0 %v3209
      %3434 = vmatprep.subr.mxu0 0.0
      %3435 = vmatpush1.msra.mxu0 %v3210
      %3436 = vmatprep.subr.mxu0 0.0
      %3437 = vmatpush1.msra.mxu0 %v3211
      %3438 = vmatprep.subr.mxu0 0.0
      %3439 = vmatpush1.msra.mxu0 %v3212
      %3440 = vmatprep.subr.mxu0 0.0
      %3441 = vmatpush1.msra.mxu0 %v3213
      %3442 = vmatprep.subr.mxu0 0.0
      %3443 = vmatpush1.msra.mxu0 %v3214
      %3444 = vmatprep.subr.mxu0 0.0
      %3445 = vmatpush1.msra.mxu0 %v3215
      %3446 = vmatprep.subr.mxu0 0.0
      %3447 = vmatpush1.msra.mxu0 %v3216
      %3448 = vmatprep.subr.mxu0 0.0
      %3449 = vmatpush1.msra.mxu0 %v3217
      %3450 = vmatprep.subr.mxu0 0.0
      %3451 = vmatpush1.msra.mxu0 %v3218
      %3452 = vmatprep.subr.mxu0 0.0
      %3453 = vmatpush1.msra.mxu0 %v3219
      %3454 = vmatprep.subr.mxu0 0.0
      %3455 = vmatpush1.msra.mxu0 %v3220
      %3456 = vmatprep.subr.mxu0 0.0
      %3457 = vmatpush1.msra.mxu0 %v3221
      %3458 = vmatprep.subr.mxu0 0.0
      %3459 = vmatpush1.msra.mxu0 %v3222
      %3460 = vmatprep.subr.mxu0 0.0
      %3461 = vmatpush1.msra.mxu0 %v3223
      %3462 = vmatprep.subr.mxu0 0.0
      %3463 = vmatpush1.msra.mxu0 %v3224
      %3464 = vmatprep.subr.mxu0 0.0
      %3465 = vmatpush1.msra.mxu0 %v3225
      %3466 = vmatprep.subr.mxu0 0.0
      %3467 = vmatpush1.msra.mxu0 %v3226
      %3468 = vmatprep.subr.mxu0 0.0
      %3469 = vmatpush1.msra.mxu0 %v3227
      %3470 = vmatprep.subr.mxu0 0.0
      %3471 = vmatpush1.msra.mxu0 %v3228
      %3472 = vmatprep.subr.mxu0 0.0
      %3473 = vmatpush1.msra.mxu0 %v3229
      %3474 = vmatprep.subr.mxu0 0.0
      %3475 = vmatpush1.msra.mxu0 %v3230
      %3476 = vmatprep.subr.mxu0 0.0
      %3477 = vmatpush1.msra.mxu0 %v3231
      %3478 = vmatprep.subr.mxu0 0.0
      %3479 = vmatpush1.msra.mxu0 %v3232
      %3480 = vmatprep.subr.mxu0 0.0
      %3481 = vmatpush1.msra.mxu0 %v3233
      %3482 = vmatprep.subr.mxu0 0.0
      %3483 = vmatpush1.msra.mxu0 %v3234
      %3484 = vmatprep.mubr.f32.mxu0 %v3329
      %3485 = vmatmul.mubr.f32.gmra.mrb[0].mxu0 %v3325
      %v3486 = vpop.f32.mrb[0].mxu0
      %v3487 = vadd.f32 %v3412, %v3486
      %v3488 = vpop.f32.mrb[0].mxu0
      %3489 = vmatprep.mubr.f32.mxu0 %v3330
      %3490 = vmatmul.mubr.f32.gmra.mrb[0].mxu0 %v3326
      %v3491 = vpop.f32.mrb[0].mxu0
      %v3492 = vadd.f32 %v3417, %v3491
      %v3493 = vpop.f32.mrb[0].mxu0
      %3494 = vdwg.mxu0
      %3495 = vmatprep.subr.mxu0 0.0
      %3496 = vmatpush1.msra.mxu0 %v3235
      %3497 = vmatprep.subr.mxu0 0.0
      %3498 = vmatpush1.msra.mxu0 %v3236
      %3499 = vmatprep.subr.mxu0 0.0
      %3500 = vmatpush1.msra.mxu0 %v3237
      %3501 = vmatprep.subr.mxu0 0.0
      %3502 = vmatpush1.msra.mxu0 %v3238
      %3503 = vmatprep.subr.mxu0 0.0
      %3504 = vmatpush1.msra.mxu0 %v3239
      %3505 = vmatprep.subr.mxu0 0.0
      %3506 = vmatpush1.msra.mxu0 %v3240
      %3507 = vmatprep.subr.mxu0 0.0
      %3508 = vmatpush1.msra.mxu0 %v3241
      %3509 = vmatprep.subr.mxu0 0.0
      %3510 = vmatpush1.msra.mxu0 %v3242
      %3511 = vmatprep.subr.mxu0 0.0
      %3512 = vmatpush1.msra.mxu0 %v3243
      %3513 = vmatprep.subr.mxu0 0.0
      %3514 = vmatpush1.msra.mxu0 %v3244
      %3515 = vmatprep.subr.mxu0 0.0
      %3516 = vmatpush1.msra.mxu0 %v3245
      %3517 = vmatprep.subr.mxu0 0.0
      %3518 = vmatpush1.msra.mxu0 %v3246
      %3519 = vmatprep.subr.mxu0 0.0
      %3520 = vmatpush1.msra.mxu0 %v3247
      %3521 = vmatprep.subr.mxu0 0.0
      %3522 = vmatpush1.msra.mxu0 %v3248
      %3523 = vmatprep.subr.mxu0 0.0
      %3524 = vmatpush1.msra.mxu0 %v3249
      %3525 = vmatprep.subr.mxu0 0.0
      %3526 = vmatpush1.msra.mxu0 %v3250
      %3527 = vmatprep.subr.mxu0 0.0
      %3528 = vmatpush1.msra.mxu0 %v3251
      %3529 = vmatprep.subr.mxu0 0.0
      %3530 = vmatpush1.msra.mxu0 %v3252
      %3531 = vmatprep.subr.mxu0 0.0
      %3532 = vmatpush1.msra.mxu0 %v3253
      %3533 = vmatprep.subr.mxu0 0.0
      %3534 = vmatpush1.msra.mxu0 %v3254
      %3535 = vmatprep.subr.mxu0 0.0
      %3536 = vmatpush1.msra.mxu0 %v3255
      %3537 = vmatprep.subr.mxu0 0.0
      %3538 = vmatpush1.msra.mxu0 %v3256
      %3539 = vmatprep.subr.mxu0 0.0
      %3540 = vmatpush1.msra.mxu0 %v3257
      %3541 = vmatprep.subr.mxu0 0.0
      %3542 = vmatpush1.msra.mxu0 %v3258
      %3543 = vmatprep.subr.mxu0 0.0
      %3544 = vmatpush1.msra.mxu0 %v3259
      %3545 = vmatprep.subr.mxu0 0.0
      %3546 = vmatpush1.msra.mxu0 %v3260
      %3547 = vmatprep.subr.mxu0 0.0
      %3548 = vmatpush1.msra.mxu0 %v3261
      %3549 = vmatprep.subr.mxu0 0.0
      %3550 = vmatpush1.msra.mxu0 %v3262
      %3551 = vmatprep.subr.mxu0 0.0
      %3552 = vmatpush1.msra.mxu0 %v3263
      %3553 = vmatprep.subr.mxu0 0.0
      %3554 = vmatpush1.msra.mxu0 %v3264
      %3555 = vmatprep.subr.mxu0 0.0
      %3556 = vmatpush1.msra.mxu0 %v3265
      %3557 = vmatprep.subr.mxu0 0.0
      %3558 = vmatpush1.msra.mxu0 %v3266
      %3559 = vmatprep.mubr.f32.mxu0 %v3335
      %3560 = vmatmul.mubr.f32.gmra.mrb[0].mxu0 %v3331
      %v3561 = vpop.f32.mrb[0].mxu0
      %v3562 = vadd.f32 %v3487, %v3561
      %v3563 = vpop.f32.mrb[0].mxu0
      %3564 = vmatprep.mubr.f32.mxu0 %v3336
      %3565 = vmatmul.mubr.f32.gmra.mrb[0].mxu0 %v3332
      %v3566 = vpop.f32.mrb[0].mxu0
      %v3567 = vadd.f32 %v3492, %v3566
      %v3568 = vpop.f32.mrb[0].mxu0
      %3569 = vdwg.mxu0
      %3570 = vmatprep.subr.mxu0 0.0
      %3571 = vmatpush1.msra.mxu0 %v3267
      %3572 = vmatprep.subr.mxu0 0.0
      %3573 = vmatpush1.msra.mxu0 %v3268
      %3574 = vmatprep.subr.mxu0 0.0
      %3575 = vmatpush1.msra.mxu0 %v3269
      %3576 = vmatprep.subr.mxu0 0.0
      %3577 = vmatpush1.msra.mxu0 %v3270
      %3578 = vmatprep.subr.mxu0 0.0
      %3579 = vmatpush1.msra.mxu0 %v3271
      %3580 = vmatprep.subr.mxu0 0.0
      %3581 = vmatpush1.msra.mxu0 %v3272
      %3582 = vmatprep.subr.mxu0 0.0
      %3583 = vmatpush1.msra.mxu0 %v3273
      %3584 = vmatprep.subr.mxu0 0.0
      %3585 = vmatpush1.msra.mxu0 %v3274
      %3586 = vmatprep.subr.mxu0 0.0
      %3587 = vmatpush1.msra.mxu0 %v3275
      %3588 = vmatprep.subr.mxu0 0.0
      %3589 = vmatpush1.msra.mxu0 %v3276
      %3590 = vmatprep.subr.mxu0 0.0
      %3591 = vmatpush1.msra.mxu0 %v3277
      %3592 = vmatprep.subr.mxu0 0.0
      %3593 = vmatpush1.msra.mxu0 %v3278
      %3594 = vmatprep.subr.mxu0 0.0
      %3595 = vmatpush1.msra.mxu0 %v3279
      %3596 = vmatprep.subr.mxu0 0.0
      %3597 = vmatpush1.msra.mxu0 %v3280
      %3598 = vmatprep.subr.mxu0 0.0
      %3599 = vmatpush1.msra.mxu0 %v3281
      %3600 = vmatprep.subr.mxu0 0.0
      %3601 = vmatpush1.msra.mxu0 %v3282
      %3602 = vmatprep.subr.mxu0 0.0
      %3603 = vmatpush1.msra.mxu0 %v3283
      %3604 = vmatprep.subr.mxu0 0.0
      %3605 = vmatpush1.msra.mxu0 %v3284
      %3606 = vmatprep.subr.mxu0 0.0
      %3607 = vmatpush1.msra.mxu0 %v3285
      %3608 = vmatprep.subr.mxu0 0.0
      %3609 = vmatpush1.msra.mxu0 %v3286
      %3610 = vmatprep.subr.mxu0 0.0
      %3611 = vmatpush1.msra.mxu0 %v3287
      %3612 = vmatprep.subr.mxu0 0.0
      %3613 = vmatpush1.msra.mxu0 %v3288
      %3614 = vmatprep.subr.mxu0 0.0
      %3615 = vmatpush1.msra.mxu0 %v3289
      %3616 = vmatprep.subr.mxu0 0.0
      %3617 = vmatpush1.msra.mxu0 %v3290
      %3618 = vmatprep.subr.mxu0 0.0
      %3619 = vmatpush1.msra.mxu0 %v3291
      %3620 = vmatprep.subr.mxu0 0.0
      %3621 = vmatpush1.msra.mxu0 %v3292
      %3622 = vmatprep.subr.mxu0 0.0
      %3623 = vmatpush1.msra.mxu0 %v3293
      %3624 = vmatprep.subr.mxu0 0.0
      %3625 = vmatpush1.msra.mxu0 %v3294
      %3626 = vmatprep.subr.mxu0 0.0
      %3627 = vmatpush1.msra.mxu0 %v3295
      %3628 = vmatprep.subr.mxu0 0.0
      %3629 = vmatpush1.msra.mxu0 %v3296
      %3630 = vmatprep.subr.mxu0 0.0
      %3631 = vmatpush1.msra.mxu0 %v3297
      %3632 = vmatprep.subr.mxu0 0.0
      %3633 = vmatpush1.msra.mxu0 %v3298
      %3634 = vmatprep.mubr.f32.mxu0 %v3322
      %3635 = vmatmul.mubr.f32.gmra.mrb[0].mxu0 %v3338
      %v3636 = vpop.f32.mrb[0].mxu0
      %v3637 = vadd.f32 %v3562, %v3636
      %v3638 = vpop.f32.mrb[0].mxu0
      %3639 = vmatprep.mubr.f32.mxu0 %v3340
      %3640 = vmatmul.mubr.f32.gmra.mrb[0].mxu0 %v3339
      %v3641 = vpop.f32.mrb[0].mxu0
      %v3642 = vadd.f32 %v3567, %v3641
      %v3643 = vpop.f32.mrb[0].mxu0
      %3644 = vdwg.mxu0
      %3645 = vmatprep.subr.mxu0 0.0
      %3646 = vmatpush1.msra.mxu0 %v3299
      %3647 = vmatprep.subr.mxu0 0.0
      %3648 = vmatpush1.msra.mxu0 %v3300
      %3649 = vmatprep.subr.mxu0 0.0
      %3650 = vmatpush1.msra.mxu0 %v3301
      %3651 = vmatprep.subr.mxu0 0.0
      %3652 = vmatpush1.msra.mxu0 %v3302
      %3653 = vmatprep.subr.mxu0 0.0
      %3654 = vmatpush1.msra.mxu0 %v3303
      %3655 = vmatprep.subr.mxu0 0.0
      %3656 = vmatpush1.msra.mxu0 %v3304
      %3657 = vmatprep.subr.mxu0 0.0
      %3658 = vmatpush1.msra.mxu0 %v3305
      %3659 = vmatprep.subr.mxu0 0.0
      %3660 = vmatpush1.msra.mxu0 %v3306
      %3661 = vmatprep.subr.mxu0 0.0
      %3662 = vmatpush1.msra.mxu0 %v3307
      %3663 = vmatprep.subr.mxu0 0.0
      %3664 = vmatpush1.msra.mxu0 %v3308
      %3665 = vmatprep.subr.mxu0 0.0
      %3666 = vmatpush1.msra.mxu0 %v3309
      %3667 = vmatprep.subr.mxu0 0.0
      %3668 = vmatpush1.msra.mxu0 %v3310
      %3669 = vmatprep.subr.mxu0 0.0
      %3670 = vmatpush1.msra.mxu0 %v3311
      %3671 = vmatprep.subr.mxu0 0.0
      %3672 = vmatpush1.msra.mxu0 %v3312
      %3673 = vmatprep.subr.mxu0 0.0
      %3674 = vmatpush1.msra.mxu0 %v3313
      %3675 = vmatprep.subr.mxu0 0.0
      %3676 = vmatpush1.msra.mxu0 %v3314
      %3677 = vmatprep.subr.mxu0 0.0
      %3678 = vmatpush1.msra.mxu0 0.0
      %3679 = vmatprep.subr.mxu0 0.0
      %3680 = vmatpush1.msra.mxu0 0.0
      %3681 = vmatprep.subr.mxu0 0.0
      %3682 = vmatpush1.msra.mxu0 0.0
      %3683 = vmatprep.subr.mxu0 0.0
      %3684 = vmatpush1.msra.mxu0 0.0
      %3685 = vmatprep.subr.mxu0 0.0
      %3686 = vmatpush1.msra.mxu0 0.0
      %3687 = vmatprep.subr.mxu0 0.0
      %3688 = vmatpush1.msra.mxu0 0.0
      %3689 = vmatprep.subr.mxu0 0.0
      %3690 = vmatpush1.msra.mxu0 0.0
      %3691 = vmatprep.subr.mxu0 0.0
      %3692 = vmatpush1.msra.mxu0 0.0
      %3693 = vmatprep.subr.mxu0 0.0
      %3694 = vmatpush1.msra.mxu0 0.0
      %3695 = vmatprep.subr.mxu0 0.0
      %3696 = vmatpush1.msra.mxu0 0.0
      %3697 = vmatprep.subr.mxu0 0.0
      %3698 = vmatpush1.msra.mxu0 0.0
      %3699 = vmatprep.subr.mxu0 0.0
      %3700 = vmatpush1.msra.mxu0 0.0
      %3701 = vmatprep.subr.mxu0 0.0
      %3702 = vmatpush1.msra.mxu0 0.0
      %3703 = vmatprep.subr.mxu0 0.0
      %3704 = vmatpush1.msra.mxu0 0.0
      %3705 = vmatprep.subr.mxu0 0.0
      %3706 = vmatpush1.msra.mxu0 0.0
      %3707 = vmatprep.subr.mxu0 0.0
      %3708 = vmatpush1.msra.mxu0 0.0
      %3709 = vmatprep.mubr.f32.mxu0 0.0
      %3710 = vmatmul.mubr.f32.gmra.mrb[0].mxu0 %v3343
      %v3711 = vpop.f32.mrb[0].mxu0
      %v3712 = vadd.f32 %v3637, %v3711
      %v3713 = vpop.f32.mrb[0].mxu0
      %3714 = vmatprep.mubr.f32.mxu0 0.0
      %3715 = vmatmul.mubr.f32.gmra.mrb[0].mxu0 %v3344
      %v3716 = vpop.f32.mrb[0].mxu0
      %v3717 = vadd.f32 %v3642, %v3716
      %v3718 = vpop.f32.mrb[0].mxu0
      %3719 = vdwg.mxu0
      %v3721 = vlaneseq
      %v3722 = vshrl.u32 %v3721, 7
      %v3723 = vsub.s32 0, %v3722
      %v3724 = vrot.slane %v3315, %v3723
      %v3726 = vmul.f32 %v3712, %v3724
      %v3727 = vmul.f32 %v3717, %v3724
      %v3729 = vlaneseq
      %v3730 = vshrl.u32 %v3729, 7
      %v3731 = vsub.s32 0, %v3730
      %v3732 = vrot.slane %v3316, %v3731
      %v3734 = vadd.f32 %v3726, %v3732
      %v3735 = vadd.f32 %v3727, %v3732
      %v3736 = vmax.f32 %v3734, 0.0
      %v3737 = vmax.f32 %v3735, 0.0
      %3738 = vst.msk [vmem:[#allocation5 + $0x8] sm:$0xff] %vm658, %v3736
      %3739 = vst.msk [vmem:[#allocation5 + $0x10] sm:$0xff] %vm658, %v3737
      %v3740 = vld [vmem:[%s16] sm:$0xff]
      %v3741 = vld [vmem:[%s16 + $0x8] sm:$0xff]
      %v3742 = vld [vmem:[%s16 + $0x10] sm:$0xff]
      %v3743 = vld [vmem:[%s16 + $0x18] sm:$0xff]
      %v3744 = vld [vmem:[%s16 + $0x20] sm:$0xff]
      %v3745 = vld [vmem:[%s16 + $0x28] sm:$0xff]
      %v3746 = vld [vmem:[%s16 + $0x30] sm:$0xff]
      %v3747 = vld [vmem:[%s16 + $0x38] sm:$0xff]
      %v3748 = vld [vmem:[%s16 + $0x40] sm:$0xff]
      %v3749 = vld [vmem:[%s16 + $0x48] sm:$0xff]
      %v3750 = vld [vmem:[%s16 + $0x50] sm:$0xff]
      %v3751 = vld [vmem:[%s16 + $0x58] sm:$0xff]
      %v3752 = vld [vmem:[%s16 + $0x60] sm:$0xff]
      %v3753 = vld [vmem:[%s16 + $0x68] sm:$0xff]
      %v3754 = vld [vmem:[%s16 + $0x70] sm:$0xff]
      %v3755 = vld [vmem:[%s16 + $0x78] sm:$0xff]
      %v3756 = vld [vmem:[%s16 + $0x80] sm:$0xff]
      %v3757 = vld [vmem:[%s16 + $0x88] sm:$0xff]
      %v3758 = vld [vmem:[%s16 + $0x90] sm:$0xff]
      %v3759 = vld [vmem:[%s16 + $0x98] sm:$0xff]
      %v3760 = vld [vmem:[%s16 + $0xa0] sm:$0xff]
      %v3761 = vld [vmem:[%s16 + $0xa8] sm:$0xff]
      %v3762 = vld [vmem:[%s16 + $0xb0] sm:$0xff]
      %v3763 = vld [vmem:[%s16 + $0xb8] sm:$0xff]
      %v3764 = vld [vmem:[%s16 + $0xc0] sm:$0xff]
      %v3765 = vld [vmem:[%s16 + $0xc8] sm:$0xff]
      %v3766 = vld [vmem:[%s16 + $0xd0] sm:$0xff]
      %v3767 = vld [vmem:[%s16 + $0xd8] sm:$0xff]
      %v3768 = vld [vmem:[%s16 + $0xe0] sm:$0xff]
      %v3769 = vld [vmem:[%s16 + $0xe8] sm:$0xff]
      %v3770 = vld [vmem:[%s16 + $0xf0] sm:$0xff]
      %v3771 = vld [vmem:[%s16 + $0xf8] sm:$0xff]
      %v3772 = vld [vmem:[%s16 + $0x100] sm:$0xff]
      %v3773 = vld [vmem:[%s16 + $0x108] sm:$0xff]
      %v3774 = vld [vmem:[%s16 + $0x110] sm:$0xff]
      %v3775 = vld [vmem:[%s16 + $0x118] sm:$0xff]
      %v3776 = vld [vmem:[%s16 + $0x120] sm:$0xff]
      %v3777 = vld [vmem:[%s16 + $0x128] sm:$0xff]
      %v3778 = vld [vmem:[%s16 + $0x130] sm:$0xff]
      %v3779 = vld [vmem:[%s16 + $0x138] sm:$0xff]
      %v3780 = vld [vmem:[%s16 + $0x140] sm:$0xff]
      %v3781 = vld [vmem:[%s16 + $0x148] sm:$0xff]
      %v3782 = vld [vmem:[%s16 + $0x150] sm:$0xff]
      %v3783 = vld [vmem:[%s16 + $0x158] sm:$0xff]
      %v3784 = vld [vmem:[%s16 + $0x160] sm:$0xff]
      %v3785 = vld [vmem:[%s16 + $0x168] sm:$0xff]
      %v3786 = vld [vmem:[%s16 + $0x170] sm:$0xff]
      %v3787 = vld [vmem:[%s16 + $0x178] sm:$0xff]
      %v3788 = vld [vmem:[%s16 + $0x180] sm:$0xff]
      %v3789 = vld [vmem:[%s16 + $0x188] sm:$0xff]
      %v3790 = vld [vmem:[%s16 + $0x190] sm:$0xff]
      %v3791 = vld [vmem:[%s16 + $0x198] sm:$0xff]
      %v3792 = vld [vmem:[%s16 + $0x1a0] sm:$0xff]
      %v3793 = vld [vmem:[%s16 + $0x1a8] sm:$0xff]
      %v3794 = vld [vmem:[%s16 + $0x1b0] sm:$0xff]
      %v3795 = vld [vmem:[%s16 + $0x1b8] sm:$0xff]
      %v3796 = vld [vmem:[%s16 + $0x1c0] sm:$0xff]
      %v3797 = vld [vmem:[%s16 + $0x1c8] sm:$0xff]
      %v3798 = vld [vmem:[%s16 + $0x1d0] sm:$0xff]
      %v3799 = vld [vmem:[%s16 + $0x1d8] sm:$0xff]
      %v3800 = vld [vmem:[%s16 + $0x1e0] sm:$0xff]
      %v3801 = vld [vmem:[%s16 + $0x1e8] sm:$0xff]
      %v3802 = vld [vmem:[%s16 + $0x1f0] sm:$0xff]
      %v3803 = vld [vmem:[%s16 + $0x1f8] sm:$0xff]
      %v3804 = vld [vmem:[%s16 + $0x200] sm:$0xff]
      %v3805 = vld [vmem:[%s16 + $0x208] sm:$0xff]
      %v3806 = vld [vmem:[%s16 + $0x210] sm:$0xff]
      %v3807 = vld [vmem:[%s16 + $0x218] sm:$0xff]
      %v3808 = vld [vmem:[%s16 + $0x220] sm:$0xff]
      %v3809 = vld [vmem:[%s16 + $0x228] sm:$0xff]
      %v3810 = vld [vmem:[%s16 + $0x230] sm:$0xff]
      %v3811 = vld [vmem:[%s16 + $0x238] sm:$0xff]
      %v3812 = vld [vmem:[%s16 + $0x240] sm:$0xff]
      %v3813 = vld [vmem:[%s16 + $0x248] sm:$0xff]
      %v3814 = vld [vmem:[%s16 + $0x250] sm:$0xff]
      %v3815 = vld [vmem:[%s16 + $0x258] sm:$0xff]
      %v3816 = vld [vmem:[%s16 + $0x260] sm:$0xff]
      %v3817 = vld [vmem:[%s16 + $0x268] sm:$0xff]
      %v3818 = vld [vmem:[%s16 + $0x270] sm:$0xff]
      %v3819 = vld [vmem:[%s16 + $0x278] sm:$0xff]
      %v3820 = vld [vmem:[%s16 + $0x280] sm:$0xff]
      %v3821 = vld [vmem:[%s16 + $0x288] sm:$0xff]
      %v3822 = vld [vmem:[%s16 + $0x290] sm:$0xff]
      %v3823 = vld [vmem:[%s16 + $0x298] sm:$0xff]
      %v3824 = vld [vmem:[%s16 + $0x2a0] sm:$0xff]
      %v3825 = vld [vmem:[%s16 + $0x2a8] sm:$0xff]
      %v3826 = vld [vmem:[%s16 + $0x2b0] sm:$0xff]
      %v3827 = vld [vmem:[%s16 + $0x2b8] sm:$0xff]
      %v3828 = vld [vmem:[%s16 + $0x2c0] sm:$0xff]
      %v3829 = vld [vmem:[%s16 + $0x2c8] sm:$0xff]
      %v3830 = vld [vmem:[%s16 + $0x2d0] sm:$0xff]
      %v3831 = vld [vmem:[%s16 + $0x2d8] sm:$0xff]
      %v3832 = vld [vmem:[%s16 + $0x2e0] sm:$0xff]
      %v3833 = vld [vmem:[%s16 + $0x2e8] sm:$0xff]
      %v3834 = vld [vmem:[%s16 + $0x2f0] sm:$0xff]
      %v3835 = vld [vmem:[%s16 + $0x2f8] sm:$0xff]
      %v3836 = vld [vmem:[%s16 + $0x300] sm:$0xff]
      %v3837 = vld [vmem:[%s16 + $0x308] sm:$0xff]
      %v3838 = vld [vmem:[%s16 + $0x310] sm:$0xff]
      %v3839 = vld [vmem:[%s16 + $0x318] sm:$0xff]
      %v3840 = vld [vmem:[%s16 + $0x320] sm:$0xff]
      %v3841 = vld [vmem:[%s16 + $0x328] sm:$0xff]
      %v3842 = vld [vmem:[%s16 + $0x330] sm:$0xff]
      %v3843 = vld [vmem:[%s16 + $0x338] sm:$0xff]
      %v3844 = vld [vmem:[%s16 + $0x340] sm:$0xff]
      %v3845 = vld [vmem:[%s16 + $0x348] sm:$0xff]
      %v3846 = vld [vmem:[%s16 + $0x350] sm:$0xff]
      %v3847 = vld [vmem:[%s16 + $0x358] sm:$0xff]
      %v3848 = vld [vmem:[%s16 + $0x360] sm:$0xff]
      %v3849 = vld [vmem:[%s16 + $0x368] sm:$0xff]
      %v3850 = vld [vmem:[%s16 + $0x370] sm:$0xff]
      %v3851 = vld [vmem:[%s16 + $0x378] sm:$0xff]
      %v3852 = vld [vmem:[%s16 + $0x380] sm:$0xff]
      %v3853 = vld [vmem:[%s16 + $0x388] sm:$0xff]
      %v3854 = vld [vmem:[%s16 + $0x390] sm:$0xff]
      %v3855 = vld [vmem:[%s16 + $0x398] sm:$0xff]
      %v3856 = vld [vmem:[%s16 + $0x3a0] sm:$0xff]
      %v3857 = vld [vmem:[%s16 + $0x3a8] sm:$0xff]
      %v3858 = vld [vmem:[%s16 + $0x3b0] sm:$0xff]
      %v3859 = vld [vmem:[%s16 + $0x3b8] sm:$0xff]
      %v3860 = vld [vmem:[%s16 + $0x3c0] sm:$0xff]
      %v3861 = vld [vmem:[%s16 + $0x3c8] sm:$0xff]
      %v3862 = vld [vmem:[%s16 + $0x3d0] sm:$0xff]
      %v3863 = vld [vmem:[%s16 + $0x3d8] sm:$0xff]
      %v3864 = vld [vmem:[%s16 + $0x3e0] sm:$0xff]
      %v3865 = vld [vmem:[%s16 + $0x3e8] sm:$0xff]
      %v3866 = vld [vmem:[%s16 + $0x3f0] sm:$0xff]
      %v3867 = vld [vmem:[%s16 + $0x3f8] sm:$0xff]
      %v3868 = vld [vmem:[%s16 + $0x400] sm:$0xff]
      %v3869 = vld [vmem:[%s16 + $0x408] sm:$0xff]
      %v3870 = vld [vmem:[%s16 + $0x410] sm:$0xff]
      %v3871 = vld [vmem:[%s16 + $0x418] sm:$0xff]
      %v3872 = vld [vmem:[%s16 + $0x420] sm:$0xff]
      %v3873 = vld [vmem:[%s16 + $0x428] sm:$0xff]
      %v3874 = vld [vmem:[%s16 + $0x430] sm:$0xff]
      %v3875 = vld [vmem:[%s16 + $0x438] sm:$0xff]
      %v3876 = vld [vmem:[%s16 + $0x440] sm:$0xff]
      %v3877 = vld [vmem:[%s16 + $0x448] sm:$0xff]
      %v3878 = vld [vmem:[%s16 + $0x450] sm:$0xff]
      %v3879 = vld [vmem:[%s16 + $0x458] sm:$0xff]
      %v3880 = vld [vmem:[%s16 + $0x460] sm:$0xff]
      %v3881 = vld [vmem:[%s16 + $0x468] sm:$0xff]
      %v3882 = vld [vmem:[%s16 + $0x470] sm:$0xff]
      %v3883 = vld [vmem:[%s16 + $0x478] sm:$0xff]
      %v3884 = vld [vmem:[%s16 + $0x480] sm:$0xff]
      %v3885 = vld [vmem:[%s16 + $0x488] sm:$0xff]
      %v3886 = vld [vmem:[%s16 + $0x490] sm:$0xff]
      %v3887 = vld [vmem:[%s16 + $0x498] sm:$0xff]
      %v3888 = vld [vmem:[%s16 + $0x4a0] sm:$0xff]
      %v3889 = vld [vmem:[%s16 + $0x4a8] sm:$0xff]
      %v3890 = vld [vmem:[%s16 + $0x4b0] sm:$0xff]
      %v3891 = vld [vmem:[%s16 + $0x4b8] sm:$0xff]
      %v3892 = vld [vmem:[%s16 + $0x4c0] sm:$0xff]
      %v3893 = vld [vmem:[%s16 + $0x4c8] sm:$0xff]
      %v3894 = vld [vmem:[%s16 + $0x4d0] sm:$0xff]
      %v3895 = vld [vmem:[%s16 + $0x4d8] sm:$0xff]
      %v3896 = vld [vmem:[%s16 + $0x4e0] sm:$0xff]
      %v3897 = vld [vmem:[%s16 + $0x4e8] sm:$0xff]
      %v3898 = vld [vmem:[%s16 + $0x4f0] sm:$0xff]
      %v3899 = vld [vmem:[%s16 + $0x4f8] sm:$0xff]
      %v3900 = vld [vmem:[%s16 + $0x500] sm:$0xff]
      %v3901 = vld [vmem:[%s16 + $0x508] sm:$0xff]
      %v3902 = vld [vmem:[%s16 + $0x510] sm:$0xff]
      %v3903 = vld [vmem:[%s16 + $0x518] sm:$0xff]
      %v3904 = vld [vmem:[%s16 + $0x520] sm:$0xff]
      %v3905 = vld [vmem:[%s16 + $0x528] sm:$0xff]
      %v3906 = vld [vmem:[%s16 + $0x530] sm:$0xff]
      %v3907 = vld [vmem:[%s16 + $0x538] sm:$0xff]
      %v3908 = vld [vmem:[%s16 + $0x540] sm:$0xff]
      %v3909 = vld [vmem:[%s16 + $0x548] sm:$0xff]
      %v3910 = vld [vmem:[%s16 + $0x550] sm:$0xff]
      %v3911 = vld [vmem:[%s16 + $0x558] sm:$0xff]
      %v3912 = vld [vmem:[%s16 + $0x560] sm:$0xff]
      %v3913 = vld [vmem:[%s16 + $0x568] sm:$0xff]
      %v3914 = vld [vmem:[%s16 + $0x570] sm:$0xff]
      %v3915 = vld [vmem:[%s16 + $0x578] sm:$0xff]
      %v3916 = vld [vmem:[%s16 + $0x580] sm:$0xff]
      %v3917 = vld [vmem:[%s16 + $0x588] sm:$0xff]
      %v3918 = vld [vmem:[%s16 + $0x590] sm:$0xff]
      %v3919 = vld [vmem:[%s16 + $0x598] sm:$0xff]
      %v3920 = vld [vmem:[%s16 + $0x5a0] sm:$0xff]
      %v3921 = vld [vmem:[%s16 + $0x5a8] sm:$0xff]
      %v3922 = vld [vmem:[%s16 + $0x5b0] sm:$0xff]
      %v3923 = vld [vmem:[%s16 + $0x5b8] sm:$0xff]
      %v3924 = vld [vmem:[%s16 + $0x5c0] sm:$0xff]
      %v3925 = vld [vmem:[%s16 + $0x5c8] sm:$0xff]
      %v3926 = vld [vmem:[%s16 + $0x5d0] sm:$0xff]
      %v3927 = vld [vmem:[%s16 + $0x5d8] sm:$0xff]
      %v3928 = vld [vmem:[%s16 + $0x5e0] sm:$0xff]
      %v3929 = vld [vmem:[%s16 + $0x5e8] sm:$0xff]
      %v3930 = vld [vmem:[%s16 + $0x5f0] sm:$0xff]
      %v3931 = vld [vmem:[%s16 + $0x5f8] sm:$0xff]
      %v3932 = vld [vmem:[%s16 + $0x600] sm:$0xff]
      %v3933 = vld [vmem:[%s16 + $0x608] sm:$0xff]
      %v3934 = vld [vmem:[%s16 + $0x610] sm:$0xff]
      %v3935 = vld [vmem:[%s16 + $0x618] sm:$0xff]
      %v3936 = vld [vmem:[%s16 + $0x620] sm:$0xff]
      %v3937 = vld [vmem:[%s16 + $0x628] sm:$0xff]
      %v3938 = vld [vmem:[%s16 + $0x630] sm:$0xff]
      %v3939 = vld [vmem:[%s16 + $0x638] sm:$0xff]
      %v3940 = vld [vmem:[%s16 + $0x640] sm:$0xff]
      %v3941 = vld [vmem:[%s16 + $0x648] sm:$0xff]
      %v3942 = vld [vmem:[%s16 + $0x650] sm:$0xff]
      %v3943 = vld [vmem:[%s16 + $0x658] sm:$0xff]
      %v3944 = vld [vmem:[%s16 + $0x660] sm:$0xff]
      %v3945 = vld [vmem:[%s16 + $0x668] sm:$0xff]
      %v3946 = vld [vmem:[%s16 + $0x670] sm:$0xff]
      %v3947 = vld [vmem:[%s16 + $0x678] sm:$0xff]
      %v3948 = vld [vmem:[%s16 + $0x680] sm:$0xff]
      %v3949 = vld [vmem:[%s16 + $0x688] sm:$0xff]
      %v3950 = vld [vmem:[%s16 + $0x690] sm:$0xff]
      %v3951 = vld [vmem:[%s16 + $0x698] sm:$0xff]
      %v3952 = vld [vmem:[%s16 + $0x6a0] sm:$0xff]
      %v3953 = vld [vmem:[%s16 + $0x6a8] sm:$0xff]
      %v3954 = vld [vmem:[%s16 + $0x6b0] sm:$0xff]
      %v3955 = vld [vmem:[%s16 + $0x6b8] sm:$0xff]
      %v3956 = vld [vmem:[%s17] sm:$0x7]
      %v3957 = vld [vmem:[%s18] sm:$0x7]
      %v3958 = vld [vmem:[#allocation5 + $0x3] sm:$0xff]
      %v3959 = vld [vmem:[#allocation5 + $0xb] sm:$0xff]
      %v3960 = vsel %vm751, %v3958, 0.0
      %v3961 = vsel %vm752, %v3959, 0.0
      %v3962 = vld [vmem:[#allocation5 + $0x4] sm:$0xff]
      %v3963 = vld [vmem:[#allocation5 + $0xc] sm:$0xff]
      %v3964 = vld [vmem:[#allocation5 + $0x5] sm:$0xff]
      %v3965 = vld [vmem:[#allocation5 + $0xd] sm:$0xff]
      %v3966 = vsel %vm1069, %v3964, 0.0
      %v3967 = vsel %vm1070, %v3965, 0.0
      %v3968 = vld [vmem:[#allocation5 + $0x7] sm:$0xff]
      %v3969 = vld [vmem:[#allocation5 + $0xf] sm:$0xff]
      %v3970 = vsel %vm751, %v3968, 0.0
      %v3971 = vsel %vm752, %v3969, 0.0
      %v3972 = vld [vmem:[#allocation5 + $0x8] sm:$0xff]
      %v3973 = vld [vmem:[#allocation5 + $0x10] sm:$0xff]
      %v3974 = vld [vmem:[#allocation5 + $0x9] sm:$0xff]
      %v3975 = vld [vmem:[#allocation5 + $0x11] sm:$0xff]
      %v3976 = vsel %vm1069, %v3974, 0.0
      %v3977 = vsel %vm1070, %v3975, 0.0
      %v3978 = vld [vmem:[#allocation5 + $0x13] sm:$0xff]
      %v3979 = vsel %vm751, %v3959, 0.0
      %v3980 = vsel %vm752, %v3978, 0.0
      %v3981 = vld [vmem:[#allocation5 + $0x14] sm:$0xff]
      %v3982 = vld [vmem:[#allocation5 + $0x15] sm:$0xff]
      %v3983 = vsel %vm1069, %v3965, 0.0
      %v3984 = vsel %vm1070, %v3982, 0.0
      %3987 = vrot.lane.b32.xlu0 %v3962, 64
      %v3988 = vpop.permute.xlu0 %3987
      %3989 = vrot.lane.b32.xlu0 %v3963, 64
      %v3990 = vpop.permute.xlu0 %3989
      %3995 = vrot.lane.b32.xlu0 %v3970, 64
      %v3996 = vpop.permute.xlu0 %3995
      %3997 = vrot.lane.b32.xlu0 %v3971, 64
      %v3998 = vpop.permute.xlu0 %3997
      %4003 = vrot.lane.b32.xlu0 %v3976, 64
      %v4004 = vpop.permute.xlu0 %4003
      %4005 = vrot.lane.b32.xlu0 %v3977, 64
      %v4006 = vpop.permute.xlu0 %4005
      %4010 = vrot.lane.b32.xlu0 %v3981, 64
      %v4011 = vpop.permute.xlu0 %4010
      %v4013 = vsel %vm658, %v3960, %v3988
      %v4014 = vsel %vm658, %v3961, %v3990
      %v4015 = vsel %vm658, %v3966, %v3996
      %v4016 = vsel %vm658, %v3967, %v3998
      %v4017 = vsel %vm658, %v3972, %v4004
      %v4018 = vsel %vm658, %v3973, %v4006
      %v4019 = vsel %vm658, %v3979, %v3990
      %v4020 = vsel %vm658, %v3980, %v4011
      %v4022 = vsel %vm658, %v3983, 0
      %v4025 = vsel %vm658, %v3984, 0
      %4027 = vmatprep.subr.mxu0 %v3741
      %4028 = vmatpush1.msra.mxu0 %v3740
      %4029 = vmatprep.subr.mxu0 %v3744
      %4030 = vmatpush1.msra.mxu0 %v3743
      %4031 = vmatprep.subr.mxu0 %v3747
      %4032 = vmatpush1.msra.mxu0 %v3746
      %4033 = vmatprep.subr.mxu0 %v3750
      %4034 = vmatpush1.msra.mxu0 %v3749
      %4035 = vmatprep.subr.mxu0 %v3753
      %4036 = vmatpush1.msra.mxu0 %v3752
      %4037 = vmatprep.subr.mxu0 %v3756
      %4038 = vmatpush1.msra.mxu0 %v3755
      %4039 = vmatprep.subr.mxu0 %v3759
      %4040 = vmatpush1.msra.mxu0 %v3758
      %4041 = vmatprep.subr.mxu0 %v3762
      %4042 = vmatpush1.msra.mxu0 %v3761
      %4043 = vmatprep.subr.mxu0 %v3765
      %4044 = vmatpush1.msra.mxu0 %v3764
      %4045 = vmatprep.subr.mxu0 %v3768
      %4046 = vmatpush1.msra.mxu0 %v3767
      %4047 = vmatprep.subr.mxu0 %v3771
      %4048 = vmatpush1.msra.mxu0 %v3770
      %4049 = vmatprep.subr.mxu0 %v3774
      %4050 = vmatpush1.msra.mxu0 %v3773
      %4051 = vmatprep.subr.mxu0 %v3777
      %4052 = vmatpush1.msra.mxu0 %v3776
      %4053 = vmatprep.subr.mxu0 %v3780
      %4054 = vmatpush1.msra.mxu0 %v3779
      %4055 = vmatprep.subr.mxu0 %v3783
      %4056 = vmatpush1.msra.mxu0 %v3782
      %4057 = vmatprep.subr.mxu0 %v3786
      %4058 = vmatpush1.msra.mxu0 %v3785
      %4059 = vmatprep.subr.mxu0 %v3789
      %4060 = vmatpush1.msra.mxu0 %v3788
      %4061 = vmatprep.subr.mxu0 %v3792
      %4062 = vmatpush1.msra.mxu0 %v3791
      %4063 = vmatprep.subr.mxu0 %v3795
      %4064 = vmatpush1.msra.mxu0 %v3794
      %4065 = vmatprep.subr.mxu0 %v3798
      %4066 = vmatpush1.msra.mxu0 %v3797
      %4067 = vmatprep.subr.mxu0 %v3801
      %4068 = vmatpush1.msra.mxu0 %v3800
      %4069 = vmatprep.subr.mxu0 %v3804
      %4070 = vmatpush1.msra.mxu0 %v3803
      %4071 = vmatprep.subr.mxu0 %v3807
      %4072 = vmatpush1.msra.mxu0 %v3806
      %4073 = vmatprep.subr.mxu0 %v3810
      %4074 = vmatpush1.msra.mxu0 %v3809
      %4075 = vmatprep.subr.mxu0 %v3813
      %4076 = vmatpush1.msra.mxu0 %v3812
      %4077 = vmatprep.subr.mxu0 %v3816
      %4078 = vmatpush1.msra.mxu0 %v3815
      %4079 = vmatprep.subr.mxu0 %v3819
      %4080 = vmatpush1.msra.mxu0 %v3818
      %4081 = vmatprep.subr.mxu0 %v3822
      %4082 = vmatpush1.msra.mxu0 %v3821
      %4083 = vmatprep.subr.mxu0 %v3825
      %4084 = vmatpush1.msra.mxu0 %v3824
      %4085 = vmatprep.subr.mxu0 %v3828
      %4086 = vmatpush1.msra.mxu0 %v3827
      %4087 = vmatprep.subr.mxu0 %v3831
      %4088 = vmatpush1.msra.mxu0 %v3830
      %4089 = vmatprep.subr.mxu0 %v3834
      %4090 = vmatpush1.msra.mxu0 %v3833
      %4091 = vmatprep.mubr.f32.mxu0 %v4015
      %4092 = vmatmul.mubr.f32.gmra.mrb[0].mxu0 %v4013
      %v4093 = vpop.f32.mrb[0].mxu0
      %v4094 = vadd.f32 0.0, %v4093
      %v4095 = vpop.f32.mrb[0].mxu0
      %v4096 = vadd.f32 0.0, %v4095
      %4097 = vmatprep.mubr.f32.mxu0 %v4016
      %4098 = vmatmul.mubr.f32.gmra.mrb[0].mxu0 %v4014
      %v4099 = vpop.f32.mrb[0].mxu0
      %v4100 = vadd.f32 0.0, %v4099
      %v4101 = vpop.f32.mrb[0].mxu0
      %v4102 = vadd.f32 0.0, %v4101
      %4103 = vdwg.mxu0
      %4104 = vmatprep.subr.mxu0 %v3837
      %4105 = vmatpush1.msra.mxu0 %v3836
      %4106 = vmatprep.subr.mxu0 %v3840
      %4107 = vmatpush1.msra.mxu0 %v3839
      %4108 = vmatprep.subr.mxu0 %v3843
      %4109 = vmatpush1.msra.mxu0 %v3842
      %4110 = vmatprep.subr.mxu0 %v3846
      %4111 = vmatpush1.msra.mxu0 %v3845
      %4112 = vmatprep.subr.mxu0 %v3849
      %4113 = vmatpush1.msra.mxu0 %v3848
      %4114 = vmatprep.subr.mxu0 %v3852
      %4115 = vmatpush1.msra.mxu0 %v3851
      %4116 = vmatprep.subr.mxu0 %v3855
      %4117 = vmatpush1.msra.mxu0 %v3854
      %4118 = vmatprep.subr.mxu0 %v3858
      %4119 = vmatpush1.msra.mxu0 %v3857
      %4120 = vmatprep.subr.mxu0 %v3861
      %4121 = vmatpush1.msra.mxu0 %v3860
      %4122 = vmatprep.subr.mxu0 %v3864
      %4123 = vmatpush1.msra.mxu0 %v3863
      %4124 = vmatprep.subr.mxu0 %v3867
      %4125 = vmatpush1.msra.mxu0 %v3866
      %4126 = vmatprep.subr.mxu0 %v3870
      %4127 = vmatpush1.msra.mxu0 %v3869
      %4128 = vmatprep.subr.mxu0 %v3873
      %4129 = vmatpush1.msra.mxu0 %v3872
      %4130 = vmatprep.subr.mxu0 %v3876
      %4131 = vmatpush1.msra.mxu0 %v3875
      %4132 = vmatprep.subr.mxu0 %v3879
      %4133 = vmatpush1.msra.mxu0 %v3878
      %4134 = vmatprep.subr.mxu0 %v3882
      %4135 = vmatpush1.msra.mxu0 %v3881
      %4136 = vmatprep.subr.mxu0 %v3885
      %4137 = vmatpush1.msra.mxu0 %v3884
      %4138 = vmatprep.subr.mxu0 %v3888
      %4139 = vmatpush1.msra.mxu0 %v3887
      %4140 = vmatprep.subr.mxu0 %v3891
      %4141 = vmatpush1.msra.mxu0 %v3890
      %4142 = vmatprep.subr.mxu0 %v3894
      %4143 = vmatpush1.msra.mxu0 %v3893
      %4144 = vmatprep.subr.mxu0 %v3897
      %4145 = vmatpush1.msra.mxu0 %v3896
      %4146 = vmatprep.subr.mxu0 %v3900
      %4147 = vmatpush1.msra.mxu0 %v3899
      %4148 = vmatprep.subr.mxu0 %v3903
      %4149 = vmatpush1.msra.mxu0 %v3902
      %4150 = vmatprep.subr.mxu0 %v3906
      %4151 = vmatpush1.msra.mxu0 %v3905
      %4152 = vmatprep.subr.mxu0 %v3909
      %4153 = vmatpush1.msra.mxu0 %v3908
      %4154 = vmatprep.subr.mxu0 %v3912
      %4155 = vmatpush1.msra.mxu0 %v3911
      %4156 = vmatprep.subr.mxu0 %v3915
      %4157 = vmatpush1.msra.mxu0 %v3914
      %4158 = vmatprep.subr.mxu0 %v3918
      %4159 = vmatpush1.msra.mxu0 %v3917
      %4160 = vmatprep.subr.mxu0 %v3921
      %4161 = vmatpush1.msra.mxu0 %v3920
      %4162 = vmatprep.subr.mxu0 %v3924
      %4163 = vmatpush1.msra.mxu0 %v3923
      %4164 = vmatprep.subr.mxu0 %v3927
      %4165 = vmatpush1.msra.mxu0 %v3926
      %4166 = vmatprep.subr.mxu0 %v3930
      %4167 = vmatpush1.msra.mxu0 %v3929
      %4168 = vmatprep.mubr.f32.mxu0 %v4019
      %4169 = vmatmul.mubr.f32.gmra.mrb[0].mxu0 %v4017
      %v4170 = vpop.f32.mrb[0].mxu0
      %v4171 = vadd.f32 %v4094, %v4170
      %v4172 = vpop.f32.mrb[0].mxu0
      %v4173 = vadd.f32 %v4096, %v4172
      %4174 = vmatprep.mubr.f32.mxu0 %v4020
      %4175 = vmatmul.mubr.f32.gmra.mrb[0].mxu0 %v4018
      %v4176 = vpop.f32.mrb[0].mxu0
      %v4177 = vadd.f32 %v4100, %v4176
      %v4178 = vpop.f32.mrb[0].mxu0
      %v4179 = vadd.f32 %v4102, %v4178
      %4180 = vdwg.mxu0
      %4181 = vmatprep.subr.mxu0 %v3933
      %4182 = vmatpush1.msra.mxu0 %v3932
      %4183 = vmatprep.subr.mxu0 %v3936
      %4184 = vmatpush1.msra.mxu0 %v3935
      %4185 = vmatprep.subr.mxu0 %v3939
      %4186 = vmatpush1.msra.mxu0 %v3938
      %4187 = vmatprep.subr.mxu0 %v3942
      %4188 = vmatpush1.msra.mxu0 %v3941
      %4189 = vmatprep.subr.mxu0 %v3945
      %4190 = vmatpush1.msra.mxu0 %v3944
      %4191 = vmatprep.subr.mxu0 %v3948
      %4192 = vmatpush1.msra.mxu0 %v3947
      %4193 = vmatprep.subr.mxu0 %v3951
      %4194 = vmatpush1.msra.mxu0 %v3950
      %4195 = vmatprep.subr.mxu0 %v3954
      %4196 = vmatpush1.msra.mxu0 %v3953
      %4197 = vmatprep.subr.mxu0 0.0
      %4198 = vmatpush1.msra.mxu0 0.0
      %4199 = vmatprep.subr.mxu0 0.0
      %4200 = vmatpush1.msra.mxu0 0.0
      %4201 = vmatprep.subr.mxu0 0.0
      %4202 = vmatpush1.msra.mxu0 0.0
      %4203 = vmatprep.subr.mxu0 0.0
      %4204 = vmatpush1.msra.mxu0 0.0
      %4205 = vmatprep.subr.mxu0 0.0
      %4206 = vmatpush1.msra.mxu0 0.0
      %4207 = vmatprep.subr.mxu0 0.0
      %4208 = vmatpush1.msra.mxu0 0.0
      %4209 = vmatprep.subr.mxu0 0.0
      %4210 = vmatpush1.msra.mxu0 0.0
      %4211 = vmatprep.subr.mxu0 0.0
      %4212 = vmatpush1.msra.mxu0 0.0
      %4213 = vmatprep.subr.mxu0 0.0
      %4214 = vmatpush1.msra.mxu0 0.0
      %4215 = vmatprep.subr.mxu0 0.0
      %4216 = vmatpush1.msra.mxu0 0.0
      %4217 = vmatprep.subr.mxu0 0.0
      %4218 = vmatpush1.msra.mxu0 0.0
      %4219 = vmatprep.subr.mxu0 0.0
      %4220 = vmatpush1.msra.mxu0 0.0
      %4221 = vmatprep.subr.mxu0 0.0
      %4222 = vmatpush1.msra.mxu0 0.0
      %4223 = vmatprep.subr.mxu0 0.0
      %4224 = vmatpush1.msra.mxu0 0.0
      %4225 = vmatprep.subr.mxu0 0.0
      %4226 = vmatpush1.msra.mxu0 0.0
      %4227 = vmatprep.subr.mxu0 0.0
      %4228 = vmatpush1.msra.mxu0 0.0
      %4229 = vmatprep.subr.mxu0 0.0
      %4230 = vmatpush1.msra.mxu0 0.0
      %4231 = vmatprep.subr.mxu0 0.0
      %4232 = vmatpush1.msra.mxu0 0.0
      %4233 = vmatprep.subr.mxu0 0.0
      %4234 = vmatpush1.msra.mxu0 0.0
      %4235 = vmatprep.subr.mxu0 0.0
      %4236 = vmatpush1.msra.mxu0 0.0
      %4237 = vmatprep.subr.mxu0 0.0
      %4238 = vmatpush1.msra.mxu0 0.0
      %4239 = vmatprep.subr.mxu0 0.0
      %4240 = vmatpush1.msra.mxu0 0.0
      %4241 = vmatprep.subr.mxu0 0.0
      %4242 = vmatpush1.msra.mxu0 0.0
      %4243 = vmatprep.subr.mxu0 0.0
      %4244 = vmatpush1.msra.mxu0 0.0
      %4245 = vmatprep.mubr.f32.mxu0 0.0
      %4246 = vmatmul.mubr.f32.gmra.mrb[0].mxu0 %v4022
      %v4247 = vpop.f32.mrb[0].mxu0
      %v4248 = vadd.f32 %v4171, %v4247
      %v4249 = vpop.f32.mrb[0].mxu0
      %v4250 = vadd.f32 %v4173, %v4249
      %4251 = vmatprep.mubr.f32.mxu0 0.0
      %4252 = vmatmul.mubr.f32.gmra.mrb[0].mxu0 %v4025
      %v4253 = vpop.f32.mrb[0].mxu0
      %v4254 = vadd.f32 %v4177, %v4253
      %v4255 = vpop.f32.mrb[0].mxu0
      %v4256 = vadd.f32 %v4179, %v4255
      %4257 = vdwg.mxu0
      %4258 = vmatprep.subr.mxu0 0.0
      %4259 = vmatpush1.msra.mxu0 %v3742
      %4260 = vmatprep.subr.mxu0 0.0
      %4261 = vmatpush1.msra.mxu0 %v3745
      %4262 = vmatprep.subr.mxu0 0.0
      %4263 = vmatpush1.msra.mxu0 %v3748
      %4264 = vmatprep.subr.mxu0 0.0
      %4265 = vmatpush1.msra.mxu0 %v3751
      %4266 = vmatprep.subr.mxu0 0.0
      %4267 = vmatpush1.msra.mxu0 %v3754
      %4268 = vmatprep.subr.mxu0 0.0
      %4269 = vmatpush1.msra.mxu0 %v3757
      %4270 = vmatprep.subr.mxu0 0.0
      %4271 = vmatpush1.msra.mxu0 %v3760
      %4272 = vmatprep.subr.mxu0 0.0
      %4273 = vmatpush1.msra.mxu0 %v3763
      %4274 = vmatprep.subr.mxu0 0.0
      %4275 = vmatpush1.msra.mxu0 %v3766
      %4276 = vmatprep.subr.mxu0 0.0
      %4277 = vmatpush1.msra.mxu0 %v3769
      %4278 = vmatprep.subr.mxu0 0.0
      %4279 = vmatpush1.msra.mxu0 %v3772
      %4280 = vmatprep.subr.mxu0 0.0
      %4281 = vmatpush1.msra.mxu0 %v3775
      %4282 = vmatprep.subr.mxu0 0.0
      %4283 = vmatpush1.msra.mxu0 %v3778
      %4284 = vmatprep.subr.mxu0 0.0
      %4285 = vmatpush1.msra.mxu0 %v3781
      %4286 = vmatprep.subr.mxu0 0.0
      %4287 = vmatpush1.msra.mxu0 %v3784
      %4288 = vmatprep.subr.mxu0 0.0
      %4289 = vmatpush1.msra.mxu0 %v3787
      %4290 = vmatprep.subr.mxu0 0.0
      %4291 = vmatpush1.msra.mxu0 %v3790
      %4292 = vmatprep.subr.mxu0 0.0
      %4293 = vmatpush1.msra.mxu0 %v3793
      %4294 = vmatprep.subr.mxu0 0.0
      %4295 = vmatpush1.msra.mxu0 %v3796
      %4296 = vmatprep.subr.mxu0 0.0
      %4297 = vmatpush1.msra.mxu0 %v3799
      %4298 = vmatprep.subr.mxu0 0.0
      %4299 = vmatpush1.msra.mxu0 %v3802
      %4300 = vmatprep.subr.mxu0 0.0
      %4301 = vmatpush1.msra.mxu0 %v3805
      %4302 = vmatprep.subr.mxu0 0.0
      %4303 = vmatpush1.msra.mxu0 %v3808
      %4304 = vmatprep.subr.mxu0 0.0
      %4305 = vmatpush1.msra.mxu0 %v3811
      %4306 = vmatprep.subr.mxu0 0.0
      %4307 = vmatpush1.msra.mxu0 %v3814
      %4308 = vmatprep.subr.mxu0 0.0
      %4309 = vmatpush1.msra.mxu0 %v3817
      %4310 = vmatprep.subr.mxu0 0.0
      %4311 = vmatpush1.msra.mxu0 %v3820
      %4312 = vmatprep.subr.mxu0 0.0
      %4313 = vmatpush1.msra.mxu0 %v3823
      %4314 = vmatprep.subr.mxu0 0.0
      %4315 = vmatpush1.msra.mxu0 %v3826
      %4316 = vmatprep.subr.mxu0 0.0
      %4317 = vmatpush1.msra.mxu0 %v3829
      %4318 = vmatprep.subr.mxu0 0.0
      %4319 = vmatpush1.msra.mxu0 %v3832
      %4320 = vmatprep.subr.mxu0 0.0
      %4321 = vmatpush1.msra.mxu0 %v3835
      %4322 = vmatprep.mubr.f32.mxu0 %v4015
      %4323 = vmatmul.mubr.f32.gmra.mrb[0].mxu0 %v4013
      %v4324 = vpop.f32.mrb[0].mxu0
      %v4325 = vadd.f32 0.0, %v4324
      %v4326 = vpop.f32.mrb[0].mxu0
      %4327 = vmatprep.mubr.f32.mxu0 %v4016
      %4328 = vmatmul.mubr.f32.gmra.mrb[0].mxu0 %v4014
      %v4329 = vpop.f32.mrb[0].mxu0
      %v4330 = vadd.f32 0.0, %v4329
      %v4331 = vpop.f32.mrb[0].mxu0
      %4332 = vdwg.mxu0
      %4333 = vmatprep.subr.mxu0 0.0
      %4334 = vmatpush1.msra.mxu0 %v3838
      %4335 = vmatprep.subr.mxu0 0.0
      %4336 = vmatpush1.msra.mxu0 %v3841
      %4337 = vmatprep.subr.mxu0 0.0
      %4338 = vmatpush1.msra.mxu0 %v3844
      %4339 = vmatprep.subr.mxu0 0.0
      %4340 = vmatpush1.msra.mxu0 %v3847
      %4341 = vmatprep.subr.mxu0 0.0
      %4342 = vmatpush1.msra.mxu0 %v3850
      %4343 = vmatprep.subr.mxu0 0.0
      %4344 = vmatpush1.msra.mxu0 %v3853
      %4345 = vmatprep.subr.mxu0 0.0
      %4346 = vmatpush1.msra.mxu0 %v3856
      %4347 = vmatprep.subr.mxu0 0.0
      %4348 = vmatpush1.msra.mxu0 %v3859
      %4349 = vmatprep.subr.mxu0 0.0
      %4350 = vmatpush1.msra.mxu0 %v3862
      %4351 = vmatprep.subr.mxu0 0.0
      %4352 = vmatpush1.msra.mxu0 %v3865
      %4353 = vmatprep.subr.mxu0 0.0
      %4354 = vmatpush1.msra.mxu0 %v3868
      %4355 = vmatprep.subr.mxu0 0.0
      %4356 = vmatpush1.msra.mxu0 %v3871
      %4357 = vmatprep.subr.mxu0 0.0
      %4358 = vmatpush1.msra.mxu0 %v3874
      %4359 = vmatprep.subr.mxu0 0.0
      %4360 = vmatpush1.msra.mxu0 %v3877
      %4361 = vmatprep.subr.mxu0 0.0
      %4362 = vmatpush1.msra.mxu0 %v3880
      %4363 = vmatprep.subr.mxu0 0.0
      %4364 = vmatpush1.msra.mxu0 %v3883
      %4365 = vmatprep.subr.mxu0 0.0
      %4366 = vmatpush1.msra.mxu0 %v3886
      %4367 = vmatprep.subr.mxu0 0.0
      %4368 = vmatpush1.msra.mxu0 %v3889
      %4369 = vmatprep.subr.mxu0 0.0
      %4370 = vmatpush1.msra.mxu0 %v3892
      %4371 = vmatprep.subr.mxu0 0.0
      %4372 = vmatpush1.msra.mxu0 %v3895
      %4373 = vmatprep.subr.mxu0 0.0
      %4374 = vmatpush1.msra.mxu0 %v3898
      %4375 = vmatprep.subr.mxu0 0.0
      %4376 = vmatpush1.msra.mxu0 %v3901
      %4377 = vmatprep.subr.mxu0 0.0
      %4378 = vmatpush1.msra.mxu0 %v3904
      %4379 = vmatprep.subr.mxu0 0.0
      %4380 = vmatpush1.msra.mxu0 %v3907
      %4381 = vmatprep.subr.mxu0 0.0
      %4382 = vmatpush1.msra.mxu0 %v3910
      %4383 = vmatprep.subr.mxu0 0.0
      %4384 = vmatpush1.msra.mxu0 %v3913
      %4385 = vmatprep.subr.mxu0 0.0
      %4386 = vmatpush1.msra.mxu0 %v3916
      %4387 = vmatprep.subr.mxu0 0.0
      %4388 = vmatpush1.msra.mxu0 %v3919
      %4389 = vmatprep.subr.mxu0 0.0
      %4390 = vmatpush1.msra.mxu0 %v3922
      %4391 = vmatprep.subr.mxu0 0.0
      %4392 = vmatpush1.msra.mxu0 %v3925
      %4393 = vmatprep.subr.mxu0 0.0
      %4394 = vmatpush1.msra.mxu0 %v3928
      %4395 = vmatprep.subr.mxu0 0.0
      %4396 = vmatpush1.msra.mxu0 %v3931
      %4397 = vmatprep.mubr.f32.mxu0 %v4019
      %4398 = vmatmul.mubr.f32.gmra.mrb[0].mxu0 %v4017
      %v4399 = vpop.f32.mrb[0].mxu0
      %v4400 = vadd.f32 %v4325, %v4399
      %v4401 = vpop.f32.mrb[0].mxu0
      %4402 = vmatprep.mubr.f32.mxu0 %v4020
      %4403 = vmatmul.mubr.f32.gmra.mrb[0].mxu0 %v4018
      %v4404 = vpop.f32.mrb[0].mxu0
      %v4405 = vadd.f32 %v4330, %v4404
      %v4406 = vpop.f32.mrb[0].mxu0
      %4407 = vdwg.mxu0
      %4408 = vmatprep.subr.mxu0 0.0
      %4409 = vmatpush1.msra.mxu0 %v3934
      %4410 = vmatprep.subr.mxu0 0.0
      %4411 = vmatpush1.msra.mxu0 %v3937
      %4412 = vmatprep.subr.mxu0 0.0
      %4413 = vmatpush1.msra.mxu0 %v3940
      %4414 = vmatprep.subr.mxu0 0.0
      %4415 = vmatpush1.msra.mxu0 %v3943
      %4416 = vmatprep.subr.mxu0 0.0
      %4417 = vmatpush1.msra.mxu0 %v3946
      %4418 = vmatprep.subr.mxu0 0.0
      %4419 = vmatpush1.msra.mxu0 %v3949
      %4420 = vmatprep.subr.mxu0 0.0
      %4421 = vmatpush1.msra.mxu0 %v3952
      %4422 = vmatprep.subr.mxu0 0.0
      %4423 = vmatpush1.msra.mxu0 %v3955
      %4424 = vmatprep.subr.mxu0 0.0
      %4425 = vmatpush1.msra.mxu0 0.0
      %4426 = vmatprep.subr.mxu0 0.0
      %4427 = vmatpush1.msra.mxu0 0.0
      %4428 = vmatprep.subr.mxu0 0.0
      %4429 = vmatpush1.msra.mxu0 0.0
      %4430 = vmatprep.subr.mxu0 0.0
      %4431 = vmatpush1.msra.mxu0 0.0
      %4432 = vmatprep.subr.mxu0 0.0
      %4433 = vmatpush1.msra.mxu0 0.0
      %4434 = vmatprep.subr.mxu0 0.0
      %4435 = vmatpush1.msra.mxu0 0.0
      %4436 = vmatprep.subr.mxu0 0.0
      %4437 = vmatpush1.msra.mxu0 0.0
      %4438 = vmatprep.subr.mxu0 0.0
      %4439 = vmatpush1.msra.mxu0 0.0
      %4440 = vmatprep.subr.mxu0 0.0
      %4441 = vmatpush1.msra.mxu0 0.0
      %4442 = vmatprep.subr.mxu0 0.0
      %4443 = vmatpush1.msra.mxu0 0.0
      %4444 = vmatprep.subr.mxu0 0.0
      %4445 = vmatpush1.msra.mxu0 0.0
      %4446 = vmatprep.subr.mxu0 0.0
      %4447 = vmatpush1.msra.mxu0 0.0
      %4448 = vmatprep.subr.mxu0 0.0
      %4449 = vmatpush1.msra.mxu0 0.0
      %4450 = vmatprep.subr.mxu0 0.0
      %4451 = vmatpush1.msra.mxu0 0.0
      %4452 = vmatprep.subr.mxu0 0.0
      %4453 = vmatpush1.msra.mxu0 0.0
      %4454 = vmatprep.subr.mxu0 0.0
      %4455 = vmatpush1.msra.mxu0 0.0
      %4456 = vmatprep.subr.mxu0 0.0
      %4457 = vmatpush1.msra.mxu0 0.0
      %4458 = vmatprep.subr.mxu0 0.0
      %4459 = vmatpush1.msra.mxu0 0.0
      %4460 = vmatprep.subr.mxu0 0.0
      %4461 = vmatpush1.msra.mxu0 0.0
      %4462 = vmatprep.subr.mxu0 0.0
      %4463 = vmatpush1.msra.mxu0 0.0
      %4464 = vmatprep.subr.mxu0 0.0
      %4465 = vmatpush1.msra.mxu0 0.0
      %4466 = vmatprep.subr.mxu0 0.0
      %4467 = vmatpush1.msra.mxu0 0.0
      %4468 = vmatprep.subr.mxu0 0.0
      %4469 = vmatpush1.msra.mxu0 0.0
      %4470 = vmatprep.subr.mxu0 0.0
      %4471 = vmatpush1.msra.mxu0 0.0
      %4472 = vmatprep.mubr.f32.mxu0 0.0
      %4473 = vmatmul.mubr.f32.gmra.mrb[0].mxu0 %v4022
      %v4474 = vpop.f32.mrb[0].mxu0
      %v4475 = vadd.f32 %v4400, %v4474
      %v4476 = vpop.f32.mrb[0].mxu0
      %4477 = vmatprep.mubr.f32.mxu0 0.0
      %4478 = vmatmul.mubr.f32.gmra.mrb[0].mxu0 %v4025
      %v4479 = vpop.f32.mrb[0].mxu0
      %v4480 = vadd.f32 %v4405, %v4479
      %v4481 = vpop.f32.mrb[0].mxu0
      %4482 = vdwg.mxu0
      %v4484 = vlaneseq
      %v4485 = vshrl.u32 %v4484, 7
      %v4486 = vsub.s32 0, %v4485
      %v4487 = vrot.slane %v3956, %v4486
      %v4488 = vlaneseq
      %v4489 = vshrl.u32 %v4488, 7
      %v4490 = vsub.s32 1, %v4489
      %v4491 = vrot.slane %v3956, %v4490
      %v4492 = vlaneseq
      %v4493 = vshrl.u32 %v4492, 7
      %v4494 = vsub.s32 2, %v4493
      %v4495 = vrot.slane %v3956, %v4494
      %v4499 = vmul.f32 %v4248, %v4487
      %v4500 = vmul.f32 %v4250, %v4491
      %v4501 = vmul.f32 %v4475, %v4495
      %v4502 = vmul.f32 %v4254, %v4487
      %v4503 = vmul.f32 %v4256, %v4491
      %v4504 = vmul.f32 %v4480, %v4495
      %v4506 = vlaneseq
      %v4507 = vshrl.u32 %v4506, 7
      %v4508 = vsub.s32 0, %v4507
      %v4509 = vrot.slane %v3957, %v4508
      %v4510 = vlaneseq
      %v4511 = vshrl.u32 %v4510, 7
      %v4512 = vsub.s32 1, %v4511
      %v4513 = vrot.slane %v3957, %v4512
      %v4514 = vlaneseq
      %v4515 = vshrl.u32 %v4514, 7
      %v4516 = vsub.s32 2, %v4515
      %v4517 = vrot.slane %v3957, %v4516
      %v4521 = vadd.f32 %v4499, %v4509
      %v4522 = vadd.f32 %v4500, %v4513
      %v4523 = vadd.f32 %v4501, %v4517
      %v4524 = vadd.f32 %v4502, %v4509
      %v4525 = vadd.f32 %v4503, %v4513
      %v4526 = vadd.f32 %v4504, %v4517
      %v4527 = vmax.f32 %v4521, 0.0
      %v4528 = vmax.f32 %v4522, 0.0
      %v4529 = vmax.f32 %v4523, 0.0
      %v4530 = vmax.f32 %v4524, 0.0
      %v4531 = vmax.f32 %v4525, 0.0
      %v4532 = vmax.f32 %v4526, 0.0
      %4533 = vst [vmem:[#allocation6 + $0x18] sm:$0xff] %v4527
      %4534 = vst [vmem:[#allocation6 + $0x20] sm:$0xff] %v4528
      %4535 = vst.msk [vmem:[#allocation6 + $0x28] sm:$0xff] %vm658, %v4529
      %4536 = vst [vmem:[#allocation6 + $0x30] sm:$0xff] %v4530
      %4537 = vst [vmem:[#allocation6 + $0x38] sm:$0xff] %v4531
      %4538 = vst.msk [vmem:[#allocation6 + $0x40] sm:$0xff] %vm658, %v4532
      %v4539 = vld [vmem:[#allocation6] sm:$0xf8]
      %v4540 = vld [vmem:[#allocation6 + $0x8] sm:$0xf8]
      %v4541 = vld [vmem:[#allocation6 + $0x10] sm:$0xf8]
      %v4542 = vld [vmem:[#allocation6 + $0x18] sm:$0xff]
      %v4543 = vld [vmem:[#allocation6 + $0x20] sm:$0xff]
      %v4544 = vld [vmem:[#allocation6 + $0x28] sm:$0xff]
      %v4545 = vld [vmem:[#allocation6 + $0x30] sm:$0x7]
      %v4546 = vld [vmem:[#allocation6 + $0x38] sm:$0x7]
      %v4547 = vld [vmem:[#allocation6 + $0x40] sm:$0x7]
      %vm4557 = vcmask 1044480
      %v4558 = vrot.slane %v4539, 3
      %v4559 = vrot.slane %v4542, 3
      %v4560 = vsel %vm4557, %v4558, %v4559
      %v4561 = vrot.slane %v4540, 3
      %v4562 = vrot.slane %v4543, 3
      %v4563 = vsel %vm4557, %v4561, %v4562
      %v4564 = vrot.slane %v4541, 3
      %v4565 = vrot.slane %v4544, 3
      %v4566 = vsel %vm4557, %v4564, %v4565
      %v4567 = vrot.slane %v4545, 3
      %v4568 = vsel %vm4557, %v4559, %v4567
      %v4569 = vrot.slane %v4546, 3
      %v4570 = vsel %vm4557, %v4562, %v4569
      %v4571 = vrot.slane %v4547, 3
      %v4572 = vsel %vm4557, %v4565, %v4571
      %v4579 = vsel %vm751, %v4560, 0.0
      %v4580 = vsel %vm751, %v4563, 0.0
      %v4581 = vsel %vm751, %v4566, 0.0
      %v4582 = vsel %vm752, %v4568, 0.0
      %v4583 = vsel %vm752, %v4570, 0.0
      %v4584 = vsel %vm752, %v4572, 0.0
      %v4585 = vld [vmem:[#allocation6] sm:$0xf0]
      %v4586 = vld [vmem:[#allocation6 + $0x8] sm:$0xf0]
      %v4587 = vld [vmem:[#allocation6 + $0x10] sm:$0xf0]
      %v4588 = vld [vmem:[#allocation6 + $0x30] sm:$0xf]
      %v4589 = vld [vmem:[#allocation6 + $0x38] sm:$0xf]
      %v4590 = vld [vmem:[#allocation6 + $0x40] sm:$0xf]
      %v4591 = vld [vmem:[#allocation6] sm:$0xe0]
      %v4592 = vld [vmem:[#allocation6 + $0x8] sm:$0xe0]
      %v4593 = vld [vmem:[#allocation6 + $0x10] sm:$0xe0]
      %v4594 = vld [vmem:[#allocation6 + $0x30] sm:$0x1f]
      %v4595 = vld [vmem:[#allocation6 + $0x38] sm:$0x1f]
      %v4596 = vld [vmem:[#allocation6 + $0x40] sm:$0x1f]
      %vm4603 = vcmask 1042432
      %v4604 = vrot.slane %v4591, 5
      %v4605 = vrot.slane %v4542, 5
      %v4606 = vsel %vm4603, %v4604, %v4605
      %v4607 = vrot.slane %v4592, 5
      %v4608 = vrot.slane %v4543, 5
      %v4609 = vsel %vm4603, %v4607, %v4608
      %v4610 = vrot.slane %v4593, 5
      %v4611 = vrot.slane %v4544, 5
      %v4612 = vsel %vm4603, %v4610, %v4611
      %v4613 = vrot.slane %v4594, 5
      %v4614 = vsel %vm4603, %v4605, %v4613
      %v4615 = vrot.slane %v4595, 5
      %v4616 = vsel %vm4603, %v4608, %v4615
      %v4617 = vrot.slane %v4596, 5
      %v4618 = vsel %vm4603, %v4611, %v4617
      %v4625 = vsel %vm1069, %v4606, 0.0
      %v4626 = vsel %vm1069, %v4609, 0.0
      %v4627 = vsel %vm1069, %v4612, 0.0
      %v4628 = vsel %vm1070, %v4614, 0.0
      %v4629 = vsel %vm1070, %v4616, 0.0
      %v4630 = vsel %vm1070, %v4618, 0.0
      %v4631 = vld [vmem:[#allocation6] sm:$0x80]
      %v4632 = vld [vmem:[#allocation6 + $0x8] sm:$0x80]
      %v4633 = vld [vmem:[#allocation6 + $0x10] sm:$0x80]
      %v4634 = vld [vmem:[#allocation6 + $0x30] sm:$0x7f]
      %v4635 = vld [vmem:[#allocation6 + $0x38] sm:$0x7f]
      %v4636 = vld [vmem:[#allocation6 + $0x40] sm:$0x7f]
      %vm4643 = vcmask 1040384
      %v4644 = vrot.slane %v4631, 7
      %v4645 = vrot.slane %v4542, 7
      %v4646 = vsel %vm4643, %v4644, %v4645
      %v4647 = vrot.slane %v4632, 7
      %v4648 = vrot.slane %v4543, 7
      %v4649 = vsel %vm4643, %v4647, %v4648
      %v4650 = vrot.slane %v4633, 7
      %v4651 = vrot.slane %v4544, 7
      %v4652 = vsel %vm4643, %v4650, %v4651
      %v4653 = vrot.slane %v4634, 7
      %v4654 = vsel %vm4643, %v4645, %v4653
      %v4655 = vrot.slane %v4635, 7
      %v4656 = vsel %vm4643, %v4648, %v4655
      %v4657 = vrot.slane %v4636, 7
      %v4658 = vsel %vm4643, %v4651, %v4657
      %v4665 = vsel %vm751, %v4646, 0.0
      %v4666 = vsel %vm751, %v4649, 0.0
      %v4667 = vsel %vm751, %v4652, 0.0
      %v4668 = vsel %vm752, %v4654, 0.0
      %v4669 = vsel %vm752, %v4656, 0.0
      %v4670 = vsel %vm752, %v4658, 0.0
      %v4671 = vld [vmem:[#allocation6 + $0x30] sm:$0xff]
      %v4672 = vld [vmem:[#allocation6 + $0x38] sm:$0xff]
      %v4673 = vld [vmem:[#allocation6 + $0x40] sm:$0xff]
      %v4674 = vld [vmem:[#allocation6 + $0x18] sm:$0xfe]
      %v4675 = vld [vmem:[#allocation6 + $0x20] sm:$0xfe]
      %v4676 = vld [vmem:[#allocation6 + $0x28] sm:$0xfe]
      %v4677 = vld [vmem:[#allocation6 + $0x48] sm:$0x1]
      %v4678 = vld [vmem:[#allocation6 + $0x50] sm:$0x1]
      %v4679 = vld [vmem:[#allocation6 + $0x58] sm:$0x1]
      %vm4689 = vcmask 1046528
      %v4690 = vrot.slane %v4674, 1
      %v4691 = vrot.slane %v4671, 1
      %v4692 = vsel %vm4689, %v4690, %v4691
      %v4693 = vrot.slane %v4675, 1
      %v4694 = vrot.slane %v4672, 1
      %v4695 = vsel %vm4689, %v4693, %v4694
      %v4696 = vrot.slane %v4676, 1
      %v4697 = vrot.slane %v4673, 1
      %v4698 = vsel %vm4689, %v4696, %v4697
      %v4699 = vrot.slane %v4677, 1
      %v4700 = vsel %vm4689, %v4691, %v4699
      %v4701 = vrot.slane %v4678, 1
      %v4702 = vsel %vm4689, %v4694, %v4701
      %v4703 = vrot.slane %v4679, 1
      %v4704 = vsel %vm4689, %v4697, %v4703
      %v4711 = vsel %vm1069, %v4692, 0.0
      %v4712 = vsel %vm1069, %v4695, 0.0
      %v4713 = vsel %vm1069, %v4698, 0.0
      %v4714 = vsel %vm1070, %v4700, 0.0
      %v4715 = vsel %vm1070, %v4702, 0.0
      %v4716 = vsel %vm1070, %v4704, 0.0
      %v4717 = vld [vmem:[#allocation6 + $0x18] sm:$0xf8]
      %v4718 = vld [vmem:[#allocation6 + $0x20] sm:$0xf8]
      %v4719 = vld [vmem:[#allocation6 + $0x28] sm:$0xf8]
      %v4720 = vld [vmem:[#allocation6 + $0x48] sm:$0x7]
      %v4721 = vld [vmem:[#allocation6 + $0x50] sm:$0x7]
      %v4722 = vld [vmem:[#allocation6 + $0x58] sm:$0x7]
      %v4729 = vrot.slane %v4717, 3
      %v4730 = vrot.slane %v4671, 3
      %v4731 = vsel %vm4557, %v4729, %v4730
      %v4732 = vrot.slane %v4718, 3
      %v4733 = vrot.slane %v4672, 3
      %v4734 = vsel %vm4557, %v4732, %v4733
      %v4735 = vrot.slane %v4719, 3
      %v4736 = vrot.slane %v4673, 3
      %v4737 = vsel %vm4557, %v4735, %v4736
      %v4738 = vrot.slane %v4720, 3
      %v4739 = vsel %vm4557, %v4730, %v4738
      %v4740 = vrot.slane %v4721, 3
      %v4741 = vsel %vm4557, %v4733, %v4740
      %v4742 = vrot.slane %v4722, 3
      %v4743 = vsel %vm4557, %v4736, %v4742
      %v4750 = vsel %vm751, %v4731, 0.0
      %v4751 = vsel %vm751, %v4734, 0.0
      %v4752 = vsel %vm751, %v4737, 0.0
      %v4753 = vsel %vm752, %v4739, 0.0
      %v4754 = vsel %vm752, %v4741, 0.0
      %v4755 = vsel %vm752, %v4743, 0.0
      %v4756 = vld [vmem:[#allocation6 + $0x18] sm:$0xf0]
      %v4757 = vld [vmem:[#allocation6 + $0x20] sm:$0xf0]
      %v4758 = vld [vmem:[#allocation6 + $0x28] sm:$0xf0]
      %v4759 = vld [vmem:[#allocation6 + $0x48] sm:$0xf]
      %v4760 = vld [vmem:[#allocation6 + $0x50] sm:$0xf]
      %v4761 = vld [vmem:[#allocation6 + $0x58] sm:$0xf]
      %v4762 = vld [vmem:[#allocation6 + $0x18] sm:$0xe0]
      %v4763 = vld [vmem:[#allocation6 + $0x20] sm:$0xe0]
      %v4764 = vld [vmem:[#allocation6 + $0x28] sm:$0xe0]
      %v4765 = vld [vmem:[#allocation6 + $0x48] sm:$0x1f]
      %v4766 = vld [vmem:[#allocation6 + $0x50] sm:$0x1f]
      %v4767 = vld [vmem:[#allocation6 + $0x58] sm:$0x1f]
      %v4774 = vrot.slane %v4762, 5
      %v4775 = vrot.slane %v4671, 5
      %v4776 = vsel %vm4603, %v4774, %v4775
      %v4777 = vrot.slane %v4763, 5
      %v4778 = vrot.slane %v4672, 5
      %v4779 = vsel %vm4603, %v4777, %v4778
      %v4780 = vrot.slane %v4764, 5
      %v4781 = vrot.slane %v4673, 5
      %v4782 = vsel %vm4603, %v4780, %v4781
      %v4783 = vrot.slane %v4765, 5
      %v4784 = vsel %vm4603, %v4775, %v4783
      %v4785 = vrot.slane %v4766, 5
      %v4786 = vsel %vm4603, %v4778, %v4785
      %v4787 = vrot.slane %v4767, 5
      %v4788 = vsel %vm4603, %v4781, %v4787
      %v4795 = vsel %vm1069, %v4776, 0.0
      %v4796 = vsel %vm1069, %v4779, 0.0
      %v4797 = vsel %vm1069, %v4782, 0.0
      %v4798 = vsel %vm1070, %v4784, 0.0
      %v4799 = vsel %vm1070, %v4786, 0.0
      %v4800 = vsel %vm1070, %v4788, 0.0
      %vm4807 = vcmask 1043456
      %v4808 = vrot.slane %v4585, 4
      %v4809 = vrot.slane %v4542, 4
      %v4810 = vsel %vm4807, %v4808, %v4809
      %v4811 = vrot.slane %v4586, 4
      %v4812 = vrot.slane %v4543, 4
      %v4813 = vsel %vm4807, %v4811, %v4812
      %v4814 = vrot.slane %v4587, 4
      %v4815 = vrot.slane %v4544, 4
      %v4816 = vsel %vm4807, %v4814, %v4815
      %v4817 = vrot.slane %v4588, 4
      %v4818 = vsel %vm4807, %v4809, %v4817
      %v4819 = vrot.slane %v4589, 4
      %v4820 = vsel %vm4807, %v4812, %v4819
      %v4821 = vrot.slane %v4590, 4
      %v4822 = vsel %vm4807, %v4815, %v4821
      %4823 = vrot.lane.b32.xlu0 %v4810, 64
      %v4824 = vpop.permute.xlu0 %4823
      %4825 = vrot.lane.b32.xlu0 %v4813, 64
      %v4826 = vpop.permute.xlu0 %4825
      %4827 = vrot.lane.b32.xlu0 %v4816, 64
      %v4828 = vpop.permute.xlu0 %4827
      %4829 = vrot.lane.b32.xlu0 %v4818, 64
      %v4830 = vpop.permute.xlu0 %4829
      %4831 = vrot.lane.b32.xlu0 %v4820, 64
      %v4832 = vpop.permute.xlu0 %4831
      %4833 = vrot.lane.b32.xlu0 %v4822, 64
      %v4834 = vpop.permute.xlu0 %4833
      %v4835 = vsel %vm658, %v4824, %v4826
      %v4836 = vsel %vm658, %v4826, %v4828
      %v4837 = vsel %vm658, %v4830, %v4832
      %v4838 = vsel %vm658, %v4832, %v4834
      %4851 = vrot.lane.b32.xlu0 %v4665, 64
      %v4852 = vpop.permute.xlu0 %4851
      %4853 = vrot.lane.b32.xlu0 %v4666, 64
      %v4854 = vpop.permute.xlu0 %4853
      %4855 = vrot.lane.b32.xlu0 %v4667, 64
      %v4856 = vpop.permute.xlu0 %4855
      %4857 = vrot.lane.b32.xlu0 %v4668, 64
      %v4858 = vpop.permute.xlu0 %4857
      %4859 = vrot.lane.b32.xlu0 %v4669, 64
      %v4860 = vpop.permute.xlu0 %4859
      %4861 = vrot.lane.b32.xlu0 %v4670, 64
      %v4862 = vpop.permute.xlu0 %4861
      %v4863 = vsel %vm658, %v4852, %v4854
      %v4864 = vsel %vm658, %v4854, %v4856
      %v4865 = vsel %vm658, %v4858, %v4860
      %v4866 = vsel %vm658, %v4860, %v4862
      %4879 = vrot.lane.b32.xlu0 %v4711, 64
      %v4880 = vpop.permute.xlu0 %4879
      %4881 = vrot.lane.b32.xlu0 %v4712, 64
      %v4882 = vpop.permute.xlu0 %4881
      %4883 = vrot.lane.b32.xlu0 %v4713, 64
      %v4884 = vpop.permute.xlu0 %4883
      %4885 = vrot.lane.b32.xlu0 %v4714, 64
      %v4886 = vpop.permute.xlu0 %4885
      %4887 = vrot.lane.b32.xlu0 %v4715, 64
      %v4888 = vpop.permute.xlu0 %4887
      %4889 = vrot.lane.b32.xlu0 %v4716, 64
      %v4890 = vpop.permute.xlu0 %4889
      %v4891 = vsel %vm658, %v4880, %v4882
      %v4892 = vsel %vm658, %v4882, %v4884
      %v4893 = vsel %vm658, %v4886, %v4888
      %v4894 = vsel %vm658, %v4888, %v4890
      %v4907 = vrot.slane %v4756, 4
      %v4908 = vrot.slane %v4671, 4
      %v4909 = vsel %vm4807, %v4907, %v4908
      %v4910 = vrot.slane %v4757, 4
      %v4911 = vrot.slane %v4672, 4
      %v4912 = vsel %vm4807, %v4910, %v4911
      %v4913 = vrot.slane %v4758, 4
      %v4914 = vrot.slane %v4673, 4
      %v4915 = vsel %vm4807, %v4913, %v4914
      %v4916 = vrot.slane %v4759, 4
      %v4917 = vsel %vm4807, %v4908, %v4916
      %v4918 = vrot.slane %v4760, 4
      %v4919 = vsel %vm4807, %v4911, %v4918
      %v4920 = vrot.slane %v4761, 4
      %v4921 = vsel %vm4807, %v4914, %v4920
      %4922 = vrot.lane.b32.xlu0 %v4909, 64
      %v4923 = vpop.permute.xlu0 %4922
      %4924 = vrot.lane.b32.xlu0 %v4912, 64
      %v4925 = vpop.permute.xlu0 %4924
      %4926 = vrot.lane.b32.xlu0 %v4915, 64
      %v4927 = vpop.permute.xlu0 %4926
      %4928 = vrot.lane.b32.xlu0 %v4917, 64
      %v4929 = vpop.permute.xlu0 %4928
      %4930 = vrot.lane.b32.xlu0 %v4919, 64
      %v4931 = vpop.permute.xlu0 %4930
      %4932 = vrot.lane.b32.xlu0 %v4921, 64
      %v4933 = vpop.permute.xlu0 %4932
      %v4934 = vsel %vm658, %v4923, %v4925
      %v4935 = vsel %vm658, %v4925, %v4927
      %v4936 = vsel %vm658, %v4929, %v4931
      %v4937 = vsel %vm658, %v4931, %v4933
      %v4944 = vsel %vm658, %v4581, %v4824
      %v4945 = vsel %vm658, %v4584, %v4830
      %v4946 = vsel %vm658, %v4627, %v4852
      %v4947 = vsel %vm658, %v4630, %v4858
      %v4948 = vsel %vm658, %v4544, %v4880
      %v4949 = vsel %vm658, %v4673, %v4886
      %v4950 = vsel %vm658, %v4752, %v4923
      %v4951 = vsel %vm658, %v4755, %v4929
      %v4952 = vld [vmem:[%s19] sm:$0xff]
      %v4953 = vld [vmem:[%s19 + $0x8] sm:$0xff]
      %v4954 = vld [vmem:[%s19 + $0x10] sm:$0xff]
      %v4955 = vld [vmem:[%s19 + $0x18] sm:$0xff]
      %v4956 = vld [vmem:[%s19 + $0x20] sm:$0xff]
      %v4957 = vld [vmem:[%s19 + $0x28] sm:$0xff]
      %v4958 = vld [vmem:[%s19 + $0x30] sm:$0xff]
      %v4959 = vld [vmem:[%s19 + $0x38] sm:$0xff]
      %v4960 = vld [vmem:[%s19 + $0x40] sm:$0xff]
      %v4961 = vld [vmem:[%s19 + $0x48] sm:$0xff]
      %v4962 = vld [vmem:[%s19 + $0x50] sm:$0xff]
      %v4963 = vld [vmem:[%s19 + $0x58] sm:$0xff]
      %v4964 = vld [vmem:[%s19 + $0x60] sm:$0xff]
      %v4965 = vld [vmem:[%s19 + $0x68] sm:$0xff]
      %v4966 = vld [vmem:[%s19 + $0x70] sm:$0xff]
      %v4967 = vld [vmem:[%s19 + $0x78] sm:$0xff]
      %v4968 = vld [vmem:[%s19 + $0x80] sm:$0xff]
      %v4969 = vld [vmem:[%s19 + $0x88] sm:$0xff]
      %v4970 = vld [vmem:[%s19 + $0x90] sm:$0xff]
      %v4971 = vld [vmem:[%s19 + $0x98] sm:$0xff]
      %v4972 = vld [vmem:[%s19 + $0xa0] sm:$0xff]
      %v4973 = vld [vmem:[%s19 + $0xa8] sm:$0xff]
      %v4974 = vld [vmem:[%s19 + $0xb0] sm:$0xff]
      %v4975 = vld [vmem:[%s19 + $0xb8] sm:$0x1]
      %v4976 = vld [vmem:[%s19 + $0xc0] sm:$0x1]
      %v4977 = vld [vmem:[%s19 + $0xc8] sm:$0x1]
      %v4978 = vld [vmem:[%s19 + $0xd0] sm:$0x1]
      %v4979 = vld [vmem:[%s19 + $0xd8] sm:$0x1]
      %v4980 = vld [vmem:[%s19 + $0xe0] sm:$0x1]
      %v4981 = vld [vmem:[%s19 + $0xe8] sm:$0x1]
      %v4982 = vld [vmem:[%s19 + $0xf0] sm:$0x1]
      %v4983 = vld [vmem:[%s19 + $0xf8] sm:$0x1]
      %v4984 = vld [vmem:[%s19 + $0x100] sm:$0x1]
      %v4985 = vld [vmem:[%s19 + $0x108] sm:$0x1]
      %v4986 = vld [vmem:[%s19 + $0x110] sm:$0x1]
      %v4987 = vld [vmem:[%s19 + $0x118] sm:$0x1]
      %v4988 = vld [vmem:[%s19 + $0x120] sm:$0x1]
      %v4989 = vld [vmem:[%s19 + $0x128] sm:$0x1]
      %v4990 = vld [vmem:[%s19 + $0x130] sm:$0x1]
      %v4991 = vld [vmem:[%s19 + $0x138] sm:$0x1]
      %v4992 = vld [vmem:[%s19 + $0x140] sm:$0x1]
      %v4993 = vld [vmem:[%s19 + $0x148] sm:$0x1]
      %v4994 = vld [vmem:[%s19 + $0x150] sm:$0x1]
      %v4995 = vld [vmem:[%s19 + $0x158] sm:$0x1]
      %v4996 = vld [vmem:[%s19 + $0x160] sm:$0x1]
      %v4997 = vld [vmem:[%s19 + $0x168] sm:$0x1]
      %v4998 = vld [vmem:[%s20] sm:$0xff]
      %v4999 = vld [vmem:[%s20 + $0x8] sm:$0x1]
      %5001 = vset.pattern.permute.xlu0 0
      %5002 = vperm.xlu0 %5001, %v4998
      %v5003 = vpop.permute.xlu0 %5002
      %5006 = vset.pattern.permute.xlu0 0
      %5007 = vperm.xlu0 %5006, %v4999
      %v5008 = vpop.permute.xlu0 %5007
      %v5011 = vsel %vm658, %v4974, 0
      %v5014 = vsel %vm658, %v4997, 0
      %v5017 = vsel %vm658, %v4797, 0
      %v5020 = vsel %vm658, %v4800, 0
      %5022 = vmatprep.subr.mxu0 %v4580
      %5023 = vmatpush1.xpose.msra.mxu0 %v4579
      %5024 = vmatprep.subr.mxu0 %v4583
      %5025 = vmatpush1.xpose.msra.mxu0 %v4582
      %5026 = vmatprep.subr.mxu0 0.0
      %5027 = vmatpush1.xpose.msra.mxu0 0.0
      %5028 = vmatprep.subr.mxu0 0.0
      %5029 = vmatpush1.xpose.msra.mxu0 0.0
      %5030 = vmatprep.subr.mxu0 0.0
      %5031 = vmatpush1.xpose.msra.mxu0 0.0
      %5032 = vmatprep.subr.mxu0 0.0
      %5033 = vmatpush1.xpose.msra.mxu0 0.0
      %5034 = vmatprep.subr.mxu0 0.0
      %5035 = vmatpush1.xpose.msra.mxu0 0.0
      %5036 = vmatprep.subr.mxu0 0.0
      %5037 = vmatpush1.xpose.msra.mxu0 0.0
      %5038 = vmatprep.subr.mxu0 0.0
      %5039 = vmatpush1.xpose.msra.mxu0 0.0
      %5040 = vmatprep.subr.mxu0 0.0
      %5041 = vmatpush1.xpose.msra.mxu0 0.0
      %5042 = vmatprep.subr.mxu0 0.0
      %5043 = vmatpush1.xpose.msra.mxu0 0.0
      %5044 = vmatprep.subr.mxu0 0.0
      %5045 = vmatpush1.xpose.msra.mxu0 0.0
      %5046 = vmatprep.subr.mxu0 0.0
      %5047 = vmatpush1.xpose.msra.mxu0 0.0
      %5048 = vmatprep.subr.mxu0 0.0
      %5049 = vmatpush1.xpose.msra.mxu0 0.0
      %5050 = vmatprep.subr.mxu0 0.0
      %5051 = vmatpush1.xpose.msra.mxu0 0.0
      %5052 = vmatprep.subr.mxu0 0.0
      %5053 = vmatpush1.xpose.msra.mxu0 0.0
      %5054 = vmatprep.subr.mxu0 0.0
      %5055 = vmatpush1.xpose.msra.mxu0 0.0
      %5056 = vmatprep.subr.mxu0 0.0
      %5057 = vmatpush1.xpose.msra.mxu0 0.0
      %5058 = vmatprep.subr.mxu0 0.0
      %5059 = vmatpush1.xpose.msra.mxu0 0.0
      %5060 = vmatprep.subr.mxu0 0.0
      %5061 = vmatpush1.xpose.msra.mxu0 0.0
      %5062 = vmatprep.subr.mxu0 0.0
      %5063 = vmatpush1.xpose.msra.mxu0 0.0
      %5064 = vmatprep.subr.mxu0 0.0
      %5065 = vmatpush1.xpose.msra.mxu0 0.0
      %5066 = vmatprep.subr.mxu0 0.0
      %5067 = vmatpush1.xpose.msra.mxu0 0.0
      %5068 = vmatprep.subr.mxu0 0.0
      %5069 = vmatpush1.xpose.msra.mxu0 0.0
      %5070 = vmatprep.subr.mxu0 0.0
      %5071 = vmatpush1.xpose.msra.mxu0 0.0
      %5072 = vmatprep.subr.mxu0 0.0
      %5073 = vmatpush1.xpose.msra.mxu0 0.0
      %5074 = vmatprep.subr.mxu0 0.0
      %5075 = vmatpush1.xpose.msra.mxu0 0.0
      %5076 = vmatprep.subr.mxu0 0.0
      %5077 = vmatpush1.xpose.msra.mxu0 0.0
      %5078 = vmatprep.subr.mxu0 0.0
      %5079 = vmatpush1.xpose.msra.mxu0 0.0
      %5080 = vmatprep.subr.mxu0 0.0
      %5081 = vmatpush1.xpose.msra.mxu0 0.0
      %5082 = vmatprep.subr.mxu0 0.0
      %5083 = vmatpush1.xpose.msra.mxu0 0.0
      %5084 = vmatprep.subr.mxu0 0.0
      %5085 = vmatpush1.xpose.msra.mxu0 0.0
      %5086 = vmatprep.mubr.f32.mxu0 %v4953
      %5087 = vmatmul.mubr.f32.gmra.mrb[0].mxu0 %v4952
      %v5088 = vpop.f32.mrb[0].mxu0
      %v5089 = vadd.f32 %v5003, %v5088
      %v5090 = vpop.f32.mrb[0].mxu0
      %5091 = vmatprep.mubr.f32.mxu0 %v4976
      %5092 = vmatmul.mubr.f32.gmra.mrb[0].mxu0 %v4975
      %v5093 = vpop.f32.mrb[0].mxu0
      %v5094 = vadd.f32 %v5008, %v5093
      %v5095 = vpop.f32.mrb[0].mxu0
      %5096 = vdwg.mxu0
      %5097 = vmatprep.subr.mxu0 %v4835
      %5098 = vmatpush1.xpose.msra.mxu0 %v4944
      %5099 = vmatprep.subr.mxu0 %v4837
      %5100 = vmatpush1.xpose.msra.mxu0 %v4945
      %5101 = vmatprep.subr.mxu0 0.0
      %5102 = vmatpush1.xpose.msra.mxu0 0.0
      %5103 = vmatprep.subr.mxu0 0.0
      %5104 = vmatpush1.xpose.msra.mxu0 0.0
      %5105 = vmatprep.subr.mxu0 0.0
      %5106 = vmatpush1.xpose.msra.mxu0 0.0
      %5107 = vmatprep.subr.mxu0 0.0
      %5108 = vmatpush1.xpose.msra.mxu0 0.0
      %5109 = vmatprep.subr.mxu0 0.0
      %5110 = vmatpush1.xpose.msra.mxu0 0.0
      %5111 = vmatprep.subr.mxu0 0.0
      %5112 = vmatpush1.xpose.msra.mxu0 0.0
      %5113 = vmatprep.subr.mxu0 0.0
      %5114 = vmatpush1.xpose.msra.mxu0 0.0
      %5115 = vmatprep.subr.mxu0 0.0
      %5116 = vmatpush1.xpose.msra.mxu0 0.0
      %5117 = vmatprep.subr.mxu0 0.0
      %5118 = vmatpush1.xpose.msra.mxu0 0.0
      %5119 = vmatprep.subr.mxu0 0.0
      %5120 = vmatpush1.xpose.msra.mxu0 0.0
      %5121 = vmatprep.subr.mxu0 0.0
      %5122 = vmatpush1.xpose.msra.mxu0 0.0
      %5123 = vmatprep.subr.mxu0 0.0
      %5124 = vmatpush1.xpose.msra.mxu0 0.0
      %5125 = vmatprep.subr.mxu0 0.0
      %5126 = vmatpush1.xpose.msra.mxu0 0.0
      %5127 = vmatprep.subr.mxu0 0.0
      %5128 = vmatpush1.xpose.msra.mxu0 0.0
      %5129 = vmatprep.subr.mxu0 0.0
      %5130 = vmatpush1.xpose.msra.mxu0 0.0
      %5131 = vmatprep.subr.mxu0 0.0
      %5132 = vmatpush1.xpose.msra.mxu0 0.0
      %5133 = vmatprep.subr.mxu0 0.0
      %5134 = vmatpush1.xpose.msra.mxu0 0.0
      %5135 = vmatprep.subr.mxu0 0.0
      %5136 = vmatpush1.xpose.msra.mxu0 0.0
      %5137 = vmatprep.subr.mxu0 0.0
      %5138 = vmatpush1.xpose.msra.mxu0 0.0
      %5139 = vmatprep.subr.mxu0 0.0
      %5140 = vmatpush1.xpose.msra.mxu0 0.0
      %5141 = vmatprep.subr.mxu0 0.0
      %5142 = vmatpush1.xpose.msra.mxu0 0.0
      %5143 = vmatprep.subr.mxu0 0.0
      %5144 = vmatpush1.xpose.msra.mxu0 0.0
      %5145 = vmatprep.subr.mxu0 0.0
      %5146 = vmatpush1.xpose.msra.mxu0 0.0
      %5147 = vmatprep.subr.mxu0 0.0
      %5148 = vmatpush1.xpose.msra.mxu0 0.0
      %5149 = vmatprep.subr.mxu0 0.0
      %5150 = vmatpush1.xpose.msra.mxu0 0.0
      %5151 = vmatprep.subr.mxu0 0.0
      %5152 = vmatpush1.xpose.msra.mxu0 0.0
      %5153 = vmatprep.subr.mxu0 0.0
      %5154 = vmatpush1.xpose.msra.mxu0 0.0
      %5155 = vmatprep.subr.mxu0 0.0
      %5156 = vmatpush1.xpose.msra.mxu0 0.0
      %5157 = vmatprep.subr.mxu0 0.0
      %5158 = vmatpush1.xpose.msra.mxu0 0.0
      %5159 = vmatprep.subr.mxu0 0.0
      %5160 = vmatpush1.xpose.msra.mxu0 0.0
      %5161 = vmatprep.mubr.f32.mxu0 %v4955
      %5162 = vmatmul.mubr.f32.gmra.mrb[0].mxu0 %v4954
      %v5163 = vpop.f32.mrb[0].mxu0
      %v5164 = vadd.f32 %v5089, %v5163
      %v5165 = vpop.f32.mrb[0].mxu0
      %5166 = vmatprep.mubr.f32.mxu0 %v4978
      %5167 = vmatmul.mubr.f32.gmra.mrb[0].mxu0 %v4977
      %v5168 = vpop.f32.mrb[0].mxu0
      %v5169 = vadd.f32 %v5094, %v5168
      %v5170 = vpop.f32.mrb[0].mxu0
      %5171 = vdwg.mxu0
      %5172 = vmatprep.subr.mxu0 %v4625
      %5173 = vmatpush1.xpose.msra.mxu0 %v4836
      %5174 = vmatprep.subr.mxu0 %v4628
      %5175 = vmatpush1.xpose.msra.mxu0 %v4838
      %5176 = vmatprep.subr.mxu0 0.0
      %5177 = vmatpush1.xpose.msra.mxu0 0.0
      %5178 = vmatprep.subr.mxu0 0.0
      %5179 = vmatpush1.xpose.msra.mxu0 0.0
      %5180 = vmatprep.subr.mxu0 0.0
      %5181 = vmatpush1.xpose.msra.mxu0 0.0
      %5182 = vmatprep.subr.mxu0 0.0
      %5183 = vmatpush1.xpose.msra.mxu0 0.0
      %5184 = vmatprep.subr.mxu0 0.0
      %5185 = vmatpush1.xpose.msra.mxu0 0.0
      %5186 = vmatprep.subr.mxu0 0.0
      %5187 = vmatpush1.xpose.msra.mxu0 0.0
      %5188 = vmatprep.subr.mxu0 0.0
      %5189 = vmatpush1.xpose.msra.mxu0 0.0
      %5190 = vmatprep.subr.mxu0 0.0
      %5191 = vmatpush1.xpose.msra.mxu0 0.0
      %5192 = vmatprep.subr.mxu0 0.0
      %5193 = vmatpush1.xpose.msra.mxu0 0.0
      %5194 = vmatprep.subr.mxu0 0.0
      %5195 = vmatpush1.xpose.msra.mxu0 0.0
      %5196 = vmatprep.subr.mxu0 0.0
      %5197 = vmatpush1.xpose.msra.mxu0 0.0
      %5198 = vmatprep.subr.mxu0 0.0
      %5199 = vmatpush1.xpose.msra.mxu0 0.0
      %5200 = vmatprep.subr.mxu0 0.0
      %5201 = vmatpush1.xpose.msra.mxu0 0.0
      %5202 = vmatprep.subr.mxu0 0.0
      %5203 = vmatpush1.xpose.msra.mxu0 0.0
      %5204 = vmatprep.subr.mxu0 0.0
      %5205 = vmatpush1.xpose.msra.mxu0 0.0
      %5206 = vmatprep.subr.mxu0 0.0
      %5207 = vmatpush1.xpose.msra.mxu0 0.0
      %5208 = vmatprep.subr.mxu0 0.0
      %5209 = vmatpush1.xpose.msra.mxu0 0.0
      %5210 = vmatprep.subr.mxu0 0.0
      %5211 = vmatpush1.xpose.msra.mxu0 0.0
      %5212 = vmatprep.subr.mxu0 0.0
      %5213 = vmatpush1.xpose.msra.mxu0 0.0
      %5214 = vmatprep.subr.mxu0 0.0
      %5215 = vmatpush1.xpose.msra.mxu0 0.0
      %5216 = vmatprep.subr.mxu0 0.0
      %5217 = vmatpush1.xpose.msra.mxu0 0.0
      %5218 = vmatprep.subr.mxu0 0.0
      %5219 = vmatpush1.xpose.msra.mxu0 0.0
      %5220 = vmatprep.subr.mxu0 0.0
      %5221 = vmatpush1.xpose.msra.mxu0 0.0
      %5222 = vmatprep.subr.mxu0 0.0
      %5223 = vmatpush1.xpose.msra.mxu0 0.0
      %5224 = vmatprep.subr.mxu0 0.0
      %5225 = vmatpush1.xpose.msra.mxu0 0.0
      %5226 = vmatprep.subr.mxu0 0.0
      %5227 = vmatpush1.xpose.msra.mxu0 0.0
      %5228 = vmatprep.subr.mxu0 0.0
      %5229 = vmatpush1.xpose.msra.mxu0 0.0
      %5230 = vmatprep.subr.mxu0 0.0
      %5231 = vmatpush1.xpose.msra.mxu0 0.0
      %5232 = vmatprep.subr.mxu0 0.0
      %5233 = vmatpush1.xpose.msra.mxu0 0.0
      %5234 = vmatprep.subr.mxu0 0.0
      %5235 = vmatpush1.xpose.msra.mxu0 0.0
      %5236 = vmatprep.mubr.f32.mxu0 %v4957
      %5237 = vmatmul.mubr.f32.gmra.mrb[0].mxu0 %v4956
      %v5238 = vpop.f32.mrb[0].mxu0
      %v5239 = vadd.f32 %v5164, %v5238
      %v5240 = vpop.f32.mrb[0].mxu0
      %5241 = vmatprep.mubr.f32.mxu0 %v4980
      %5242 = vmatmul.mubr.f32.gmra.mrb[0].mxu0 %v4979
      %v5243 = vpop.f32.mrb[0].mxu0
      %v5244 = vadd.f32 %v5169, %v5243
      %v5245 = vpop.f32.mrb[0].mxu0
      %5246 = vdwg.mxu0
      %5247 = vmatprep.subr.mxu0 %v4946
      %5248 = vmatpush1.xpose.msra.mxu0 %v4626
      %5249 = vmatprep.subr.mxu0 %v4947
      %5250 = vmatpush1.xpose.msra.mxu0 %v4629
      %5251 = vmatprep.subr.mxu0 0.0
      %5252 = vmatpush1.xpose.msra.mxu0 0.0
      %5253 = vmatprep.subr.mxu0 0.0
      %5254 = vmatpush1.xpose.msra.mxu0 0.0
      %5255 = vmatprep.subr.mxu0 0.0
      %5256 = vmatpush1.xpose.msra.mxu0 0.0
      %5257 = vmatprep.subr.mxu0 0.0
      %5258 = vmatpush1.xpose.msra.mxu0 0.0
      %5259 = vmatprep.subr.mxu0 0.0
      %5260 = vmatpush1.xpose.msra.mxu0 0.0
      %5261 = vmatprep.subr.mxu0 0.0
      %5262 = vmatpush1.xpose.msra.mxu0 0.0
      %5263 = vmatprep.subr.mxu0 0.0
      %5264 = vmatpush1.xpose.msra.mxu0 0.0
      %5265 = vmatprep.subr.mxu0 0.0
      %5266 = vmatpush1.xpose.msra.mxu0 0.0
      %5267 = vmatprep.subr.mxu0 0.0
      %5268 = vmatpush1.xpose.msra.mxu0 0.0
      %5269 = vmatprep.subr.mxu0 0.0
      %5270 = vmatpush1.xpose.msra.mxu0 0.0
      %5271 = vmatprep.subr.mxu0 0.0
      %5272 = vmatpush1.xpose.msra.mxu0 0.0
      %5273 = vmatprep.subr.mxu0 0.0
      %5274 = vmatpush1.xpose.msra.mxu0 0.0
      %5275 = vmatprep.subr.mxu0 0.0
      %5276 = vmatpush1.xpose.msra.mxu0 0.0
      %5277 = vmatprep.subr.mxu0 0.0
      %5278 = vmatpush1.xpose.msra.mxu0 0.0
      %5279 = vmatprep.subr.mxu0 0.0
      %5280 = vmatpush1.xpose.msra.mxu0 0.0
      %5281 = vmatprep.subr.mxu0 0.0
      %5282 = vmatpush1.xpose.msra.mxu0 0.0
      %5283 = vmatprep.subr.mxu0 0.0
      %5284 = vmatpush1.xpose.msra.mxu0 0.0
      %5285 = vmatprep.subr.mxu0 0.0
      %5286 = vmatpush1.xpose.msra.mxu0 0.0
      %5287 = vmatprep.subr.mxu0 0.0
      %5288 = vmatpush1.xpose.msra.mxu0 0.0
      %5289 = vmatprep.subr.mxu0 0.0
      %5290 = vmatpush1.xpose.msra.mxu0 0.0
      %5291 = vmatprep.subr.mxu0 0.0
      %5292 = vmatpush1.xpose.msra.mxu0 0.0
      %5293 = vmatprep.subr.mxu0 0.0
      %5294 = vmatpush1.xpose.msra.mxu0 0.0
      %5295 = vmatprep.subr.mxu0 0.0
      %5296 = vmatpush1.xpose.msra.mxu0 0.0
      %5297 = vmatprep.subr.mxu0 0.0
      %5298 = vmatpush1.xpose.msra.mxu0 0.0
      %5299 = vmatprep.subr.mxu0 0.0
      %5300 = vmatpush1.xpose.msra.mxu0 0.0
      %5301 = vmatprep.subr.mxu0 0.0
      %5302 = vmatpush1.xpose.msra.mxu0 0.0
      %5303 = vmatprep.subr.mxu0 0.0
      %5304 = vmatpush1.xpose.msra.mxu0 0.0
      %5305 = vmatprep.subr.mxu0 0.0
      %5306 = vmatpush1.xpose.msra.mxu0 0.0
      %5307 = vmatprep.subr.mxu0 0.0
      %5308 = vmatpush1.xpose.msra.mxu0 0.0
      %5309 = vmatprep.subr.mxu0 0.0
      %5310 = vmatpush1.xpose.msra.mxu0 0.0
      %5311 = vmatprep.mubr.f32.mxu0 %v4959
      %5312 = vmatmul.mubr.f32.gmra.mrb[0].mxu0 %v4958
      %v5313 = vpop.f32.mrb[0].mxu0
      %v5314 = vadd.f32 %v5239, %v5313
      %v5315 = vpop.f32.mrb[0].mxu0
      %5316 = vmatprep.mubr.f32.mxu0 %v4982
      %5317 = vmatmul.mubr.f32.gmra.mrb[0].mxu0 %v4981
      %v5318 = vpop.f32.mrb[0].mxu0
      %v5319 = vadd.f32 %v5244, %v5318
      %v5320 = vpop.f32.mrb[0].mxu0
      %5321 = vdwg.mxu0
      %5322 = vmatprep.subr.mxu0 %v4864
      %5323 = vmatpush1.xpose.msra.mxu0 %v4863
      %5324 = vmatprep.subr.mxu0 %v4866
      %5325 = vmatpush1.xpose.msra.mxu0 %v4865
      %5326 = vmatprep.subr.mxu0 0.0
      %5327 = vmatpush1.xpose.msra.mxu0 0.0
      %5328 = vmatprep.subr.mxu0 0.0
      %5329 = vmatpush1.xpose.msra.mxu0 0.0
      %5330 = vmatprep.subr.mxu0 0.0
      %5331 = vmatpush1.xpose.msra.mxu0 0.0
      %5332 = vmatprep.subr.mxu0 0.0
      %5333 = vmatpush1.xpose.msra.mxu0 0.0
      %5334 = vmatprep.subr.mxu0 0.0
      %5335 = vmatpush1.xpose.msra.mxu0 0.0
      %5336 = vmatprep.subr.mxu0 0.0
      %5337 = vmatpush1.xpose.msra.mxu0 0.0
      %5338 = vmatprep.subr.mxu0 0.0
      %5339 = vmatpush1.xpose.msra.mxu0 0.0
      %5340 = vmatprep.subr.mxu0 0.0
      %5341 = vmatpush1.xpose.msra.mxu0 0.0
      %5342 = vmatprep.subr.mxu0 0.0
      %5343 = vmatpush1.xpose.msra.mxu0 0.0
      %5344 = vmatprep.subr.mxu0 0.0
      %5345 = vmatpush1.xpose.msra.mxu0 0.0
      %5346 = vmatprep.subr.mxu0 0.0
      %5347 = vmatpush1.xpose.msra.mxu0 0.0
      %5348 = vmatprep.subr.mxu0 0.0
      %5349 = vmatpush1.xpose.msra.mxu0 0.0
      %5350 = vmatprep.subr.mxu0 0.0
      %5351 = vmatpush1.xpose.msra.mxu0 0.0
      %5352 = vmatprep.subr.mxu0 0.0
      %5353 = vmatpush1.xpose.msra.mxu0 0.0
      %5354 = vmatprep.subr.mxu0 0.0
      %5355 = vmatpush1.xpose.msra.mxu0 0.0
      %5356 = vmatprep.subr.mxu0 0.0
      %5357 = vmatpush1.xpose.msra.mxu0 0.0
      %5358 = vmatprep.subr.mxu0 0.0
      %5359 = vmatpush1.xpose.msra.mxu0 0.0
      %5360 = vmatprep.subr.mxu0 0.0
      %5361 = vmatpush1.xpose.msra.mxu0 0.0
      %5362 = vmatprep.subr.mxu0 0.0
      %5363 = vmatpush1.xpose.msra.mxu0 0.0
      %5364 = vmatprep.subr.mxu0 0.0
      %5365 = vmatpush1.xpose.msra.mxu0 0.0
      %5366 = vmatprep.subr.mxu0 0.0
      %5367 = vmatpush1.xpose.msra.mxu0 0.0
      %5368 = vmatprep.subr.mxu0 0.0
      %5369 = vmatpush1.xpose.msra.mxu0 0.0
      %5370 = vmatprep.subr.mxu0 0.0
      %5371 = vmatpush1.xpose.msra.mxu0 0.0
      %5372 = vmatprep.subr.mxu0 0.0
      %5373 = vmatpush1.xpose.msra.mxu0 0.0
      %5374 = vmatprep.subr.mxu0 0.0
      %5375 = vmatpush1.xpose.msra.mxu0 0.0
      %5376 = vmatprep.subr.mxu0 0.0
      %5377 = vmatpush1.xpose.msra.mxu0 0.0
      %5378 = vmatprep.subr.mxu0 0.0
      %5379 = vmatpush1.xpose.msra.mxu0 0.0
      %5380 = vmatprep.subr.mxu0 0.0
      %5381 = vmatpush1.xpose.msra.mxu0 0.0
      %5382 = vmatprep.subr.mxu0 0.0
      %5383 = vmatpush1.xpose.msra.mxu0 0.0
      %5384 = vmatprep.subr.mxu0 0.0
      %5385 = vmatpush1.xpose.msra.mxu0 0.0
      %5386 = vmatprep.mubr.f32.mxu0 %v4961
      %5387 = vmatmul.mubr.f32.gmra.mrb[0].mxu0 %v4960
      %v5388 = vpop.f32.mrb[0].mxu0
      %v5389 = vadd.f32 %v5314, %v5388
      %v5390 = vpop.f32.mrb[0].mxu0
      %5391 = vmatprep.mubr.f32.mxu0 %v4984
      %5392 = vmatmul.mubr.f32.gmra.mrb[0].mxu0 %v4983
      %v5393 = vpop.f32.mrb[0].mxu0
      %v5394 = vadd.f32 %v5319, %v5393
      %v5395 = vpop.f32.mrb[0].mxu0
      %5396 = vdwg.mxu0
      %5397 = vmatprep.subr.mxu0 %v4543
      %5398 = vmatpush1.xpose.msra.mxu0 %v4542
      %5399 = vmatprep.subr.mxu0 %v4672
      %5400 = vmatpush1.xpose.msra.mxu0 %v4671
      %5401 = vmatprep.subr.mxu0 0.0
      %5402 = vmatpush1.xpose.msra.mxu0 0.0
      %5403 = vmatprep.subr.mxu0 0.0
      %5404 = vmatpush1.xpose.msra.mxu0 0.0
      %5405 = vmatprep.subr.mxu0 0.0
      %5406 = vmatpush1.xpose.msra.mxu0 0.0
      %5407 = vmatprep.subr.mxu0 0.0
      %5408 = vmatpush1.xpose.msra.mxu0 0.0
      %5409 = vmatprep.subr.mxu0 0.0
      %5410 = vmatpush1.xpose.msra.mxu0 0.0
      %5411 = vmatprep.subr.mxu0 0.0
      %5412 = vmatpush1.xpose.msra.mxu0 0.0
      %5413 = vmatprep.subr.mxu0 0.0
      %5414 = vmatpush1.xpose.msra.mxu0 0.0
      %5415 = vmatprep.subr.mxu0 0.0
      %5416 = vmatpush1.xpose.msra.mxu0 0.0
      %5417 = vmatprep.subr.mxu0 0.0
      %5418 = vmatpush1.xpose.msra.mxu0 0.0
      %5419 = vmatprep.subr.mxu0 0.0
      %5420 = vmatpush1.xpose.msra.mxu0 0.0
      %5421 = vmatprep.subr.mxu0 0.0
      %5422 = vmatpush1.xpose.msra.mxu0 0.0
      %5423 = vmatprep.subr.mxu0 0.0
      %5424 = vmatpush1.xpose.msra.mxu0 0.0
      %5425 = vmatprep.subr.mxu0 0.0
      %5426 = vmatpush1.xpose.msra.mxu0 0.0
      %5427 = vmatprep.subr.mxu0 0.0
      %5428 = vmatpush1.xpose.msra.mxu0 0.0
      %5429 = vmatprep.subr.mxu0 0.0
      %5430 = vmatpush1.xpose.msra.mxu0 0.0
      %5431 = vmatprep.subr.mxu0 0.0
      %5432 = vmatpush1.xpose.msra.mxu0 0.0
      %5433 = vmatprep.subr.mxu0 0.0
      %5434 = vmatpush1.xpose.msra.mxu0 0.0
      %5435 = vmatprep.subr.mxu0 0.0
      %5436 = vmatpush1.xpose.msra.mxu0 0.0
      %5437 = vmatprep.subr.mxu0 0.0
      %5438 = vmatpush1.xpose.msra.mxu0 0.0
      %5439 = vmatprep.subr.mxu0 0.0
      %5440 = vmatpush1.xpose.msra.mxu0 0.0
      %5441 = vmatprep.subr.mxu0 0.0
      %5442 = vmatpush1.xpose.msra.mxu0 0.0
      %5443 = vmatprep.subr.mxu0 0.0
      %5444 = vmatpush1.xpose.msra.mxu0 0.0
      %5445 = vmatprep.subr.mxu0 0.0
      %5446 = vmatpush1.xpose.msra.mxu0 0.0
      %5447 = vmatprep.subr.mxu0 0.0
      %5448 = vmatpush1.xpose.msra.mxu0 0.0
      %5449 = vmatprep.subr.mxu0 0.0
      %5450 = vmatpush1.xpose.msra.mxu0 0.0
      %5451 = vmatprep.subr.mxu0 0.0
      %5452 = vmatpush1.xpose.msra.mxu0 0.0
      %5453 = vmatprep.subr.mxu0 0.0
      %5454 = vmatpush1.xpose.msra.mxu0 0.0
      %5455 = vmatprep.subr.mxu0 0.0
      %5456 = vmatpush1.xpose.msra.mxu0 0.0
      %5457 = vmatprep.subr.mxu0 0.0
      %5458 = vmatpush1.xpose.msra.mxu0 0.0
      %5459 = vmatprep.subr.mxu0 0.0
      %5460 = vmatpush1.xpose.msra.mxu0 0.0
      %5461 = vmatprep.mubr.f32.mxu0 %v4963
      %5462 = vmatmul.mubr.f32.gmra.mrb[0].mxu0 %v4962
      %v5463 = vpop.f32.mrb[0].mxu0
      %v5464 = vadd.f32 %v5389, %v5463
      %v5465 = vpop.f32.mrb[0].mxu0
      %5466 = vmatprep.mubr.f32.mxu0 %v4986
      %5467 = vmatmul.mubr.f32.gmra.mrb[0].mxu0 %v4985
      %v5468 = vpop.f32.mrb[0].mxu0
      %v5469 = vadd.f32 %v5394, %v5468
      %v5470 = vpop.f32.mrb[0].mxu0
      %5471 = vdwg.mxu0
      %5472 = vmatprep.subr.mxu0 %v4891
      %5473 = vmatpush1.xpose.msra.mxu0 %v4948
      %5474 = vmatprep.subr.mxu0 %v4893
      %5475 = vmatpush1.xpose.msra.mxu0 %v4949
      %5476 = vmatprep.subr.mxu0 0.0
      %5477 = vmatpush1.xpose.msra.mxu0 0.0
      %5478 = vmatprep.subr.mxu0 0.0
      %5479 = vmatpush1.xpose.msra.mxu0 0.0
      %5480 = vmatprep.subr.mxu0 0.0
      %5481 = vmatpush1.xpose.msra.mxu0 0.0
      %5482 = vmatprep.subr.mxu0 0.0
      %5483 = vmatpush1.xpose.msra.mxu0 0.0
      %5484 = vmatprep.subr.mxu0 0.0
      %5485 = vmatpush1.xpose.msra.mxu0 0.0
      %5486 = vmatprep.subr.mxu0 0.0
      %5487 = vmatpush1.xpose.msra.mxu0 0.0
      %5488 = vmatprep.subr.mxu0 0.0
      %5489 = vmatpush1.xpose.msra.mxu0 0.0
      %5490 = vmatprep.subr.mxu0 0.0
      %5491 = vmatpush1.xpose.msra.mxu0 0.0
      %5492 = vmatprep.subr.mxu0 0.0
      %5493 = vmatpush1.xpose.msra.mxu0 0.0
      %5494 = vmatprep.subr.mxu0 0.0
      %5495 = vmatpush1.xpose.msra.mxu0 0.0
      %5496 = vmatprep.subr.mxu0 0.0
      %5497 = vmatpush1.xpose.msra.mxu0 0.0
      %5498 = vmatprep.subr.mxu0 0.0
      %5499 = vmatpush1.xpose.msra.mxu0 0.0
      %5500 = vmatprep.subr.mxu0 0.0
      %5501 = vmatpush1.xpose.msra.mxu0 0.0
      %5502 = vmatprep.subr.mxu0 0.0
      %5503 = vmatpush1.xpose.msra.mxu0 0.0
      %5504 = vmatprep.subr.mxu0 0.0
      %5505 = vmatpush1.xpose.msra.mxu0 0.0
      %5506 = vmatprep.subr.mxu0 0.0
      %5507 = vmatpush1.xpose.msra.mxu0 0.0
      %5508 = vmatprep.subr.mxu0 0.0
      %5509 = vmatpush1.xpose.msra.mxu0 0.0
      %5510 = vmatprep.subr.mxu0 0.0
      %5511 = vmatpush1.xpose.msra.mxu0 0.0
      %5512 = vmatprep.subr.mxu0 0.0
      %5513 = vmatpush1.xpose.msra.mxu0 0.0
      %5514 = vmatprep.subr.mxu0 0.0
      %5515 = vmatpush1.xpose.msra.mxu0 0.0
      %5516 = vmatprep.subr.mxu0 0.0
      %5517 = vmatpush1.xpose.msra.mxu0 0.0
      %5518 = vmatprep.subr.mxu0 0.0
      %5519 = vmatpush1.xpose.msra.mxu0 0.0
      %5520 = vmatprep.subr.mxu0 0.0
      %5521 = vmatpush1.xpose.msra.mxu0 0.0
      %5522 = vmatprep.subr.mxu0 0.0
      %5523 = vmatpush1.xpose.msra.mxu0 0.0
      %5524 = vmatprep.subr.mxu0 0.0
      %5525 = vmatpush1.xpose.msra.mxu0 0.0
      %5526 = vmatprep.subr.mxu0 0.0
      %5527 = vmatpush1.xpose.msra.mxu0 0.0
      %5528 = vmatprep.subr.mxu0 0.0
      %5529 = vmatpush1.xpose.msra.mxu0 0.0
      %5530 = vmatprep.subr.mxu0 0.0
      %5531 = vmatpush1.xpose.msra.mxu0 0.0
      %5532 = vmatprep.subr.mxu0 0.0
      %5533 = vmatpush1.xpose.msra.mxu0 0.0
      %5534 = vmatprep.subr.mxu0 0.0
      %5535 = vmatpush1.xpose.msra.mxu0 0.0
      %5536 = vmatprep.mubr.f32.mxu0 %v4965
      %5537 = vmatmul.mubr.f32.gmra.mrb[0].mxu0 %v4964
      %v5538 = vpop.f32.mrb[0].mxu0
      %v5539 = vadd.f32 %v5464, %v5538
      %v5540 = vpop.f32.mrb[0].mxu0
      %5541 = vmatprep.mubr.f32.mxu0 %v4988
      %5542 = vmatmul.mubr.f32.gmra.mrb[0].mxu0 %v4987
      %v5543 = vpop.f32.mrb[0].mxu0
      %v5544 = vadd.f32 %v5469, %v5543
      %v5545 = vpop.f32.mrb[0].mxu0
      %5546 = vdwg.mxu0
      %5547 = vmatprep.subr.mxu0 %v4750
      %5548 = vmatpush1.xpose.msra.mxu0 %v4892
      %5549 = vmatprep.subr.mxu0 %v4753
      %5550 = vmatpush1.xpose.msra.mxu0 %v4894
      %5551 = vmatprep.subr.mxu0 0.0
      %5552 = vmatpush1.xpose.msra.mxu0 0.0
      %5553 = vmatprep.subr.mxu0 0.0
      %5554 = vmatpush1.xpose.msra.mxu0 0.0
      %5555 = vmatprep.subr.mxu0 0.0
      %5556 = vmatpush1.xpose.msra.mxu0 0.0
      %5557 = vmatprep.subr.mxu0 0.0
      %5558 = vmatpush1.xpose.msra.mxu0 0.0
      %5559 = vmatprep.subr.mxu0 0.0
      %5560 = vmatpush1.xpose.msra.mxu0 0.0
      %5561 = vmatprep.subr.mxu0 0.0
      %5562 = vmatpush1.xpose.msra.mxu0 0.0
      %5563 = vmatprep.subr.mxu0 0.0
      %5564 = vmatpush1.xpose.msra.mxu0 0.0
      %5565 = vmatprep.subr.mxu0 0.0
      %5566 = vmatpush1.xpose.msra.mxu0 0.0
      %5567 = vmatprep.subr.mxu0 0.0
      %5568 = vmatpush1.xpose.msra.mxu0 0.0
      %5569 = vmatprep.subr.mxu0 0.0
      %5570 = vmatpush1.xpose.msra.mxu0 0.0
      %5571 = vmatprep.subr.mxu0 0.0
      %5572 = vmatpush1.xpose.msra.mxu0 0.0
      %5573 = vmatprep.subr.mxu0 0.0
      %5574 = vmatpush1.xpose.msra.mxu0 0.0
      %5575 = vmatprep.subr.mxu0 0.0
      %5576 = vmatpush1.xpose.msra.mxu0 0.0
      %5577 = vmatprep.subr.mxu0 0.0
      %5578 = vmatpush1.xpose.msra.mxu0 0.0
      %5579 = vmatprep.subr.mxu0 0.0
      %5580 = vmatpush1.xpose.msra.mxu0 0.0
      %5581 = vmatprep.subr.mxu0 0.0
      %5582 = vmatpush1.xpose.msra.mxu0 0.0
      %5583 = vmatprep.subr.mxu0 0.0
      %5584 = vmatpush1.xpose.msra.mxu0 0.0
      %5585 = vmatprep.subr.mxu0 0.0
      %5586 = vmatpush1.xpose.msra.mxu0 0.0
      %5587 = vmatprep.subr.mxu0 0.0
      %5588 = vmatpush1.xpose.msra.mxu0 0.0
      %5589 = vmatprep.subr.mxu0 0.0
      %5590 = vmatpush1.xpose.msra.mxu0 0.0
      %5591 = vmatprep.subr.mxu0 0.0
      %5592 = vmatpush1.xpose.msra.mxu0 0.0
      %5593 = vmatprep.subr.mxu0 0.0
      %5594 = vmatpush1.xpose.msra.mxu0 0.0
      %5595 = vmatprep.subr.mxu0 0.0
      %5596 = vmatpush1.xpose.msra.mxu0 0.0
      %5597 = vmatprep.subr.mxu0 0.0
      %5598 = vmatpush1.xpose.msra.mxu0 0.0
      %5599 = vmatprep.subr.mxu0 0.0
      %5600 = vmatpush1.xpose.msra.mxu0 0.0
      %5601 = vmatprep.subr.mxu0 0.0
      %5602 = vmatpush1.xpose.msra.mxu0 0.0
      %5603 = vmatprep.subr.mxu0 0.0
      %5604 = vmatpush1.xpose.msra.mxu0 0.0
      %5605 = vmatprep.subr.mxu0 0.0
      %5606 = vmatpush1.xpose.msra.mxu0 0.0
      %5607 = vmatprep.subr.mxu0 0.0
      %5608 = vmatpush1.xpose.msra.mxu0 0.0
      %5609 = vmatprep.subr.mxu0 0.0
      %5610 = vmatpush1.xpose.msra.mxu0 0.0
      %5611 = vmatprep.mubr.f32.mxu0 %v4967
      %5612 = vmatmul.mubr.f32.gmra.mrb[0].mxu0 %v4966
      %v5613 = vpop.f32.mrb[0].mxu0
      %v5614 = vadd.f32 %v5539, %v5613
      %v5615 = vpop.f32.mrb[0].mxu0
      %5616 = vmatprep.mubr.f32.mxu0 %v4990
      %5617 = vmatmul.mubr.f32.gmra.mrb[0].mxu0 %v4989
      %v5618 = vpop.f32.mrb[0].mxu0
      %v5619 = vadd.f32 %v5544, %v5618
      %v5620 = vpop.f32.mrb[0].mxu0
      %5621 = vdwg.mxu0
      %5622 = vmatprep.subr.mxu0 %v4950
      %5623 = vmatpush1.xpose.msra.mxu0 %v4751
      %5624 = vmatprep.subr.mxu0 %v4951
      %5625 = vmatpush1.xpose.msra.mxu0 %v4754
      %5626 = vmatprep.subr.mxu0 0.0
      %5627 = vmatpush1.xpose.msra.mxu0 0.0
      %5628 = vmatprep.subr.mxu0 0.0
      %5629 = vmatpush1.xpose.msra.mxu0 0.0
      %5630 = vmatprep.subr.mxu0 0.0
      %5631 = vmatpush1.xpose.msra.mxu0 0.0
      %5632 = vmatprep.subr.mxu0 0.0
      %5633 = vmatpush1.xpose.msra.mxu0 0.0
      %5634 = vmatprep.subr.mxu0 0.0
      %5635 = vmatpush1.xpose.msra.mxu0 0.0
      %5636 = vmatprep.subr.mxu0 0.0
      %5637 = vmatpush1.xpose.msra.mxu0 0.0
      %5638 = vmatprep.subr.mxu0 0.0
      %5639 = vmatpush1.xpose.msra.mxu0 0.0
      %5640 = vmatprep.subr.mxu0 0.0
      %5641 = vmatpush1.xpose.msra.mxu0 0.0
      %5642 = vmatprep.subr.mxu0 0.0
      %5643 = vmatpush1.xpose.msra.mxu0 0.0
      %5644 = vmatprep.subr.mxu0 0.0
      %5645 = vmatpush1.xpose.msra.mxu0 0.0
      %5646 = vmatprep.subr.mxu0 0.0
      %5647 = vmatpush1.xpose.msra.mxu0 0.0
      %5648 = vmatprep.subr.mxu0 0.0
      %5649 = vmatpush1.xpose.msra.mxu0 0.0
      %5650 = vmatprep.subr.mxu0 0.0
      %5651 = vmatpush1.xpose.msra.mxu0 0.0
      %5652 = vmatprep.subr.mxu0 0.0
      %5653 = vmatpush1.xpose.msra.mxu0 0.0
      %5654 = vmatprep.subr.mxu0 0.0
      %5655 = vmatpush1.xpose.msra.mxu0 0.0
      %5656 = vmatprep.subr.mxu0 0.0
      %5657 = vmatpush1.xpose.msra.mxu0 0.0
      %5658 = vmatprep.subr.mxu0 0.0
      %5659 = vmatpush1.xpose.msra.mxu0 0.0
      %5660 = vmatprep.subr.mxu0 0.0
      %5661 = vmatpush1.xpose.msra.mxu0 0.0
      %5662 = vmatprep.subr.mxu0 0.0
      %5663 = vmatpush1.xpose.msra.mxu0 0.0
      %5664 = vmatprep.subr.mxu0 0.0
      %5665 = vmatpush1.xpose.msra.mxu0 0.0
      %5666 = vmatprep.subr.mxu0 0.0
      %5667 = vmatpush1.xpose.msra.mxu0 0.0
      %5668 = vmatprep.subr.mxu0 0.0
      %5669 = vmatpush1.xpose.msra.mxu0 0.0
      %5670 = vmatprep.subr.mxu0 0.0
      %5671 = vmatpush1.xpose.msra.mxu0 0.0
      %5672 = vmatprep.subr.mxu0 0.0
      %5673 = vmatpush1.xpose.msra.mxu0 0.0
      %5674 = vmatprep.subr.mxu0 0.0
      %5675 = vmatpush1.xpose.msra.mxu0 0.0
      %5676 = vmatprep.subr.mxu0 0.0
      %5677 = vmatpush1.xpose.msra.mxu0 0.0
      %5678 = vmatprep.subr.mxu0 0.0
      %5679 = vmatpush1.xpose.msra.mxu0 0.0
      %5680 = vmatprep.subr.mxu0 0.0
      %5681 = vmatpush1.xpose.msra.mxu0 0.0
      %5682 = vmatprep.subr.mxu0 0.0
      %5683 = vmatpush1.xpose.msra.mxu0 0.0
      %5684 = vmatprep.subr.mxu0 0.0
      %5685 = vmatpush1.xpose.msra.mxu0 0.0
      %5686 = vmatprep.mubr.f32.mxu0 %v4969
      %5687 = vmatmul.mubr.f32.gmra.mrb[0].mxu0 %v4968
      %v5688 = vpop.f32.mrb[0].mxu0
      %v5689 = vadd.f32 %v5614, %v5688
      %v5690 = vpop.f32.mrb[0].mxu0
      %5691 = vmatprep.mubr.f32.mxu0 %v4992
      %5692 = vmatmul.mubr.f32.gmra.mrb[0].mxu0 %v4991
      %v5693 = vpop.f32.mrb[0].mxu0
      %v5694 = vadd.f32 %v5619, %v5693
      %v5695 = vpop.f32.mrb[0].mxu0
      %5696 = vdwg.mxu0
      %5697 = vmatprep.subr.mxu0 %v4935
      %5698 = vmatpush1.xpose.msra.mxu0 %v4934
      %5699 = vmatprep.subr.mxu0 %v4937
      %5700 = vmatpush1.xpose.msra.mxu0 %v4936
      %5701 = vmatprep.subr.mxu0 0.0
      %5702 = vmatpush1.xpose.msra.mxu0 0.0
      %5703 = vmatprep.subr.mxu0 0.0
      %5704 = vmatpush1.xpose.msra.mxu0 0.0
      %5705 = vmatprep.subr.mxu0 0.0
      %5706 = vmatpush1.xpose.msra.mxu0 0.0
      %5707 = vmatprep.subr.mxu0 0.0
      %5708 = vmatpush1.xpose.msra.mxu0 0.0
      %5709 = vmatprep.subr.mxu0 0.0
      %5710 = vmatpush1.xpose.msra.mxu0 0.0
      %5711 = vmatprep.subr.mxu0 0.0
      %5712 = vmatpush1.xpose.msra.mxu0 0.0
      %5713 = vmatprep.subr.mxu0 0.0
      %5714 = vmatpush1.xpose.msra.mxu0 0.0
      %5715 = vmatprep.subr.mxu0 0.0
      %5716 = vmatpush1.xpose.msra.mxu0 0.0
      %5717 = vmatprep.subr.mxu0 0.0
      %5718 = vmatpush1.xpose.msra.mxu0 0.0
      %5719 = vmatprep.subr.mxu0 0.0
      %5720 = vmatpush1.xpose.msra.mxu0 0.0
      %5721 = vmatprep.subr.mxu0 0.0
      %5722 = vmatpush1.xpose.msra.mxu0 0.0
      %5723 = vmatprep.subr.mxu0 0.0
      %5724 = vmatpush1.xpose.msra.mxu0 0.0
      %5725 = vmatprep.subr.mxu0 0.0
      %5726 = vmatpush1.xpose.msra.mxu0 0.0
      %5727 = vmatprep.subr.mxu0 0.0
      %5728 = vmatpush1.xpose.msra.mxu0 0.0
      %5729 = vmatprep.subr.mxu0 0.0
      %5730 = vmatpush1.xpose.msra.mxu0 0.0
      %5731 = vmatprep.subr.mxu0 0.0
      %5732 = vmatpush1.xpose.msra.mxu0 0.0
      %5733 = vmatprep.subr.mxu0 0.0
      %5734 = vmatpush1.xpose.msra.mxu0 0.0
      %5735 = vmatprep.subr.mxu0 0.0
      %5736 = vmatpush1.xpose.msra.mxu0 0.0
      %5737 = vmatprep.subr.mxu0 0.0
      %5738 = vmatpush1.xpose.msra.mxu0 0.0
      %5739 = vmatprep.subr.mxu0 0.0
      %5740 = vmatpush1.xpose.msra.mxu0 0.0
      %5741 = vmatprep.subr.mxu0 0.0
      %5742 = vmatpush1.xpose.msra.mxu0 0.0
      %5743 = vmatprep.subr.mxu0 0.0
      %5744 = vmatpush1.xpose.msra.mxu0 0.0
      %5745 = vmatprep.subr.mxu0 0.0
      %5746 = vmatpush1.xpose.msra.mxu0 0.0
      %5747 = vmatprep.subr.mxu0 0.0
      %5748 = vmatpush1.xpose.msra.mxu0 0.0
      %5749 = vmatprep.subr.mxu0 0.0
      %5750 = vmatpush1.xpose.msra.mxu0 0.0
      %5751 = vmatprep.subr.mxu0 0.0
      %5752 = vmatpush1.xpose.msra.mxu0 0.0
      %5753 = vmatprep.subr.mxu0 0.0
      %5754 = vmatpush1.xpose.msra.mxu0 0.0
      %5755 = vmatprep.subr.mxu0 0.0
      %5756 = vmatpush1.xpose.msra.mxu0 0.0
      %5757 = vmatprep.subr.mxu0 0.0
      %5758 = vmatpush1.xpose.msra.mxu0 0.0
      %5759 = vmatprep.subr.mxu0 0.0
      %5760 = vmatpush1.xpose.msra.mxu0 0.0
      %5761 = vmatprep.mubr.f32.mxu0 %v4971
      %5762 = vmatmul.mubr.f32.gmra.mrb[0].mxu0 %v4970
      %v5763 = vpop.f32.mrb[0].mxu0
      %v5764 = vadd.f32 %v5689, %v5763
      %v5765 = vpop.f32.mrb[0].mxu0
      %5766 = vmatprep.mubr.f32.mxu0 %v4994
      %5767 = vmatmul.mubr.f32.gmra.mrb[0].mxu0 %v4993
      %v5768 = vpop.f32.mrb[0].mxu0
      %v5769 = vadd.f32 %v5694, %v5768
      %v5770 = vpop.f32.mrb[0].mxu0
      %5771 = vdwg.mxu0
      %5772 = vmatprep.subr.mxu0 %v4796
      %5773 = vmatpush1.xpose.msra.mxu0 %v4795
      %5774 = vmatprep.subr.mxu0 %v4799
      %5775 = vmatpush1.xpose.msra.mxu0 %v4798
      %5776 = vmatprep.subr.mxu0 0.0
      %5777 = vmatpush1.xpose.msra.mxu0 0.0
      %5778 = vmatprep.subr.mxu0 0.0
      %5779 = vmatpush1.xpose.msra.mxu0 0.0
      %5780 = vmatprep.subr.mxu0 0.0
      %5781 = vmatpush1.xpose.msra.mxu0 0.0
      %5782 = vmatprep.subr.mxu0 0.0
      %5783 = vmatpush1.xpose.msra.mxu0 0.0
      %5784 = vmatprep.subr.mxu0 0.0
      %5785 = vmatpush1.xpose.msra.mxu0 0.0
      %5786 = vmatprep.subr.mxu0 0.0
      %5787 = vmatpush1.xpose.msra.mxu0 0.0
      %5788 = vmatprep.subr.mxu0 0.0
      %5789 = vmatpush1.xpose.msra.mxu0 0.0
      %5790 = vmatprep.subr.mxu0 0.0
      %5791 = vmatpush1.xpose.msra.mxu0 0.0
      %5792 = vmatprep.subr.mxu0 0.0
      %5793 = vmatpush1.xpose.msra.mxu0 0.0
      %5794 = vmatprep.subr.mxu0 0.0
      %5795 = vmatpush1.xpose.msra.mxu0 0.0
      %5796 = vmatprep.subr.mxu0 0.0
      %5797 = vmatpush1.xpose.msra.mxu0 0.0
      %5798 = vmatprep.subr.mxu0 0.0
      %5799 = vmatpush1.xpose.msra.mxu0 0.0
      %5800 = vmatprep.subr.mxu0 0.0
      %5801 = vmatpush1.xpose.msra.mxu0 0.0
      %5802 = vmatprep.subr.mxu0 0.0
      %5803 = vmatpush1.xpose.msra.mxu0 0.0
      %5804 = vmatprep.subr.mxu0 0.0
      %5805 = vmatpush1.xpose.msra.mxu0 0.0
      %5806 = vmatprep.subr.mxu0 0.0
      %5807 = vmatpush1.xpose.msra.mxu0 0.0
      %5808 = vmatprep.subr.mxu0 0.0
      %5809 = vmatpush1.xpose.msra.mxu0 0.0
      %5810 = vmatprep.subr.mxu0 0.0
      %5811 = vmatpush1.xpose.msra.mxu0 0.0
      %5812 = vmatprep.subr.mxu0 0.0
      %5813 = vmatpush1.xpose.msra.mxu0 0.0
      %5814 = vmatprep.subr.mxu0 0.0
      %5815 = vmatpush1.xpose.msra.mxu0 0.0
      %5816 = vmatprep.subr.mxu0 0.0
      %5817 = vmatpush1.xpose.msra.mxu0 0.0
      %5818 = vmatprep.subr.mxu0 0.0
      %5819 = vmatpush1.xpose.msra.mxu0 0.0
      %5820 = vmatprep.subr.mxu0 0.0
      %5821 = vmatpush1.xpose.msra.mxu0 0.0
      %5822 = vmatprep.subr.mxu0 0.0
      %5823 = vmatpush1.xpose.msra.mxu0 0.0
      %5824 = vmatprep.subr.mxu0 0.0
      %5825 = vmatpush1.xpose.msra.mxu0 0.0
      %5826 = vmatprep.subr.mxu0 0.0
      %5827 = vmatpush1.xpose.msra.mxu0 0.0
      %5828 = vmatprep.subr.mxu0 0.0
      %5829 = vmatpush1.xpose.msra.mxu0 0.0
      %5830 = vmatprep.subr.mxu0 0.0
      %5831 = vmatpush1.xpose.msra.mxu0 0.0
      %5832 = vmatprep.subr.mxu0 0.0
      %5833 = vmatpush1.xpose.msra.mxu0 0.0
      %5834 = vmatprep.subr.mxu0 0.0
      %5835 = vmatpush1.xpose.msra.mxu0 0.0
      %5836 = vmatprep.mubr.f32.mxu0 %v4973
      %5837 = vmatmul.mubr.f32.gmra.mrb[0].mxu0 %v4972
      %v5838 = vpop.f32.mrb[0].mxu0
      %v5839 = vadd.f32 %v5764, %v5838
      %v5840 = vpop.f32.mrb[0].mxu0
      %5841 = vmatprep.mubr.f32.mxu0 %v4996
      %5842 = vmatmul.mubr.f32.gmra.mrb[0].mxu0 %v4995
      %v5843 = vpop.f32.mrb[0].mxu0
      %v5844 = vadd.f32 %v5769, %v5843
      %v5845 = vpop.f32.mrb[0].mxu0
      %5846 = vdwg.mxu0
      %5847 = vmatprep.subr.mxu0 0.0
      %5848 = vmatpush1.xpose.msra.mxu0 %v5017
      %5849 = vmatprep.subr.mxu0 0.0
      %5850 = vmatpush1.xpose.msra.mxu0 %v5020
      %5851 = vmatprep.subr.mxu0 0.0
      %5852 = vmatpush1.xpose.msra.mxu0 0.0
      %5853 = vmatprep.subr.mxu0 0.0
      %5854 = vmatpush1.xpose.msra.mxu0 0.0
      %5855 = vmatprep.subr.mxu0 0.0
      %5856 = vmatpush1.xpose.msra.mxu0 0.0
      %5857 = vmatprep.subr.mxu0 0.0
      %5858 = vmatpush1.xpose.msra.mxu0 0.0
      %5859 = vmatprep.subr.mxu0 0.0
      %5860 = vmatpush1.xpose.msra.mxu0 0.0
      %5861 = vmatprep.subr.mxu0 0.0
      %5862 = vmatpush1.xpose.msra.mxu0 0.0
      %5863 = vmatprep.subr.mxu0 0.0
      %5864 = vmatpush1.xpose.msra.mxu0 0.0
      %5865 = vmatprep.subr.mxu0 0.0
      %5866 = vmatpush1.xpose.msra.mxu0 0.0
      %5867 = vmatprep.subr.mxu0 0.0
      %5868 = vmatpush1.xpose.msra.mxu0 0.0
      %5869 = vmatprep.subr.mxu0 0.0
      %5870 = vmatpush1.xpose.msra.mxu0 0.0
      %5871 = vmatprep.subr.mxu0 0.0
      %5872 = vmatpush1.xpose.msra.mxu0 0.0
      %5873 = vmatprep.subr.mxu0 0.0
      %5874 = vmatpush1.xpose.msra.mxu0 0.0
      %5875 = vmatprep.subr.mxu0 0.0
      %5876 = vmatpush1.xpose.msra.mxu0 0.0
      %5877 = vmatprep.subr.mxu0 0.0
      %5878 = vmatpush1.xpose.msra.mxu0 0.0
      %5879 = vmatprep.subr.mxu0 0.0
      %5880 = vmatpush1.xpose.msra.mxu0 0.0
      %5881 = vmatprep.subr.mxu0 0.0
      %5882 = vmatpush1.xpose.msra.mxu0 0.0
      %5883 = vmatprep.subr.mxu0 0.0
      %5884 = vmatpush1.xpose.msra.mxu0 0.0
      %5885 = vmatprep.subr.mxu0 0.0
      %5886 = vmatpush1.xpose.msra.mxu0 0.0
      %5887 = vmatprep.subr.mxu0 0.0
      %5888 = vmatpush1.xpose.msra.mxu0 0.0
      %5889 = vmatprep.subr.mxu0 0.0
      %5890 = vmatpush1.xpose.msra.mxu0 0.0
      %5891 = vmatprep.subr.mxu0 0.0
      %5892 = vmatpush1.xpose.msra.mxu0 0.0
      %5893 = vmatprep.subr.mxu0 0.0
      %5894 = vmatpush1.xpose.msra.mxu0 0.0
      %5895 = vmatprep.subr.mxu0 0.0
      %5896 = vmatpush1.xpose.msra.mxu0 0.0
      %5897 = vmatprep.subr.mxu0 0.0
      %5898 = vmatpush1.xpose.msra.mxu0 0.0
      %5899 = vmatprep.subr.mxu0 0.0
      %5900 = vmatpush1.xpose.msra.mxu0 0.0
      %5901 = vmatprep.subr.mxu0 0.0
      %5902 = vmatpush1.xpose.msra.mxu0 0.0
      %5903 = vmatprep.subr.mxu0 0.0
      %5904 = vmatpush1.xpose.msra.mxu0 0.0
      %5905 = vmatprep.subr.mxu0 0.0
      %5906 = vmatpush1.xpose.msra.mxu0 0.0
      %5907 = vmatprep.subr.mxu0 0.0
      %5908 = vmatpush1.xpose.msra.mxu0 0.0
      %5909 = vmatprep.subr.mxu0 0.0
      %5910 = vmatpush1.xpose.msra.mxu0 0.0
      %5911 = vmatprep.mubr.f32.mxu0 0.0
      %5912 = vmatmul.mubr.f32.gmra.mrb[0].mxu0 %v5011
      %v5913 = vpop.f32.mrb[0].mxu0
      %v5914 = vadd.f32 %v5839, %v5913
      %v5915 = vpop.f32.mrb[0].mxu0
      %5916 = vmatprep.mubr.f32.mxu0 0.0
      %5917 = vmatmul.mubr.f32.gmra.mrb[0].mxu0 %v5014
      %v5918 = vpop.f32.mrb[0].mxu0
      %v5919 = vadd.f32 %v5844, %v5918
      %v5920 = vpop.f32.mrb[0].mxu0
      %5921 = vdwg.mxu0
      %vm5922 = vcmask 130048
      %5923 = vst.msk [vmem:[%s656] sm:$0xff] %vm5922, %v5914
      %vm5924 = vcmask 122880
      %5925 = vst.msk [vmem:[%s656 + $0x8] sm:$0x1] %vm5924, %v5919
      %p5926 = scmp.lt.s32.totalorder %s32, 1
      %s5927 = scalar_select %p5926, %s32, 1
      %s5928 = smul.addr %s5927, 2
      %s5929 = smul.addr %s5928, 8
      %s5930 = scalar_lea.vmem %s21, %s5929
      // Predicated region
      $region105: #{centerpoint_style_net_forward.5} parent=103 // pred_check
        %p5931 = pneg %p496
      $region106: #{centerpoint_style_net_forward.5} parent=103 // pred_check_branch
        %5933 = sbr.rel (%p5931) target = $region108
      $region107: #{centerpoint_style_net_forward.5} parent=103 // pred_region
        _
      $region108: #{centerpoint_style_net_forward.5} parent=103 // pred_fallthru
        _
    $region104: #{centerpoint_style_net_forward.5} parent=5 // pred_fallthru
      _
    %p5934 = scmp.le.s32.totalorder 2, %s27
    // Predicated region
    $region109: #{centerpoint_style_net_forward.5} parent=5 // pred_check
      %p5935 = pneg %p5934
    $region110: #{centerpoint_style_net_forward.5} parent=5 // pred_check_branch
      %5937 = sbr.rel (%p5935) target = $region112
    $region111: #{centerpoint_style_net_forward.5} parent=5 // pred_region
      %s5938 = ssub.s32 %s27, 2
      // Predicated region
      $region113: #{centerpoint_style_net_forward.5} parent=111 // pred_check
        %p5939 = pneg %p502
      $region114: #{centerpoint_style_net_forward.5} parent=111 // pred_check_branch
        %5941 = sbr.rel (%p5939) target = $region116
      $region115: #{centerpoint_style_net_forward.5} parent=111 // pred_region
        %p5942 = scmp.lt.s32.totalorder %s33, 1
        %s5943 = scalar_select %p5942, %s33, 1
        %s5944 = smul.addr %s5943, 2
        %s5945 = smul.addr %s5944, 8
        %s5946 = scalar_lea.vmem %s21, %s5945
      $region116: #{centerpoint_style_net_forward.5} parent=111 // pred_fallthru
        _
    $region112: #{centerpoint_style_net_forward.5} parent=5 // pred_fallthru
      _
  $region6: #{centerpoint_style_net_forward.5} parent=0 // loop_footer
    %s31 = sadd.s32 1, %s27
  $region7: #{centerpoint_style_net_forward.5} parent=0 // loop_footer_branch
    %26 = sbr.rel target = $region3
  $region8: #{centerpoint_style_net_forward.5} parent=0 // loop_exit
    _

</llo_original>
